<compile_context>
chip_gen: v7x
topology: tpu7x:2x2x1
jax: 0.10.0
libtpu: 0.0.40
codegen_flags: <defaults>
</compile_context>

<pallas_src>
from functools import partial

import numpy as np
import jax
import jax.numpy as jnp
from jax.experimental import pallas as pl
from jax.experimental.pallas import tpu as pltpu


def _silu(x):
    return x * jax.nn.sigmoid(x)


# ---------------------------------------------------------------------------
# Fused kernel, gridded over edge tiles.
#   step 0       : hr = h @ w1r + b1, hc = h @ w1c  -> [hr; hc] VMEM scratch,
#                  zero the aggregation accumulators.
#   every step   : in-kernel gather via stacked one-hot MXU matmul -> pre,
#                  edge-MLP tail (SiLU -> Linear -> SiLU) -> mij tile (stored),
#                  transposed one-hot segment-sum into persistent accumulator.
#   last step    : normalize aggregation, node MLP, residual -> h_new.
# ---------------------------------------------------------------------------
def fused_gcl_kernel(row_t_ref, row_s_ref, col_s_ref, h_ref,
                     w1r_ref, w1c_ref, b1_ref, w2_ref, b2_ref,
                     w3h_ref, w3a_ref, b3_ref, w4_ref, b4_ref,
                     mij_ref, hout_ref,
                     hrc_sc, agg_sc, cnt_sc, *,
                     normalization_factor, aggregation_method):
    step = pl.program_id(0)
    te = mij_ref.shape[0]
    n_pad = agg_sc.shape[0]

    @pl.when(step == 0)
    def _init():
        h_bf = h_ref[...].astype(jnp.bfloat16)
        hr = jnp.dot(h_bf, w1r_ref[...],
                     preferred_element_type=jnp.float32) + b1_ref[...]
        hc = jnp.dot(h_bf, w1c_ref[...],
                     preferred_element_type=jnp.float32)
        hrc_sc[0:n_pad, :] = hr.astype(jnp.bfloat16)
        hrc_sc[n_pad:2 * n_pad, :] = hc.astype(jnp.bfloat16)
        agg_sc[...] = jnp.zeros_like(agg_sc)
        if aggregation_method == 'mean':
            cnt_sc[...] = jnp.zeros_like(cnt_sc)

    # ---- this tile's edge ids (sliced from resident VMEM id arrays) ----------
    base = pl.multiple_of(step * te, te)
    rsel = row_s_ref[pl.ds(base, te), :]                 # (TE, 1) int32
    csel = col_s_ref[pl.ds(base, te), :] + n_pad         # (TE, 1) int32
    row_lane = row_t_ref[pl.ds(step, 1), :]              # (1, TE) int32

    # ---- in-kernel gather: pre = hr[row] + hc[col] as ONE stacked MXU matmul -
    gidx = jax.lax.broadcasted_iota(jnp.int32, (te, 2 * n_pad), 1)
    onehot_g = jnp.logical_or(gidx == rsel, gidx == csel).astype(jnp.bfloat16)
    pre = jnp.dot(onehot_g, hrc_sc[...],                 # (TE, 2N)@(2N, H)
                  preferred_element_type=jnp.float32)    # (TE, H) f32

    # ---- edge MLP tail (f32 elementwise, bf16 MXU operands) ------------------
    h1 = _silu(pre)
    mij = _silu(jnp.dot(h1.astype(jnp.bfloat16), w2_ref[...],
                        preferred_element_type=jnp.float32) + b2_ref[...])
    mij_ref[...] = mij.astype(mij_ref.dtype)

    # ---- segment sum: transposed one-hot (N_pad, TE) @ mij (TE, H) on the MXU
    aidx = jax.lax.broadcasted_iota(jnp.int32, (n_pad, te), 0)
    onehot_a = (aidx == row_lane).astype(jnp.bfloat16)   # padded edges: row = -1
    agg_sc[...] += jnp.dot(onehot_a, mij.astype(jnp.bfloat16),
                           preferred_element_type=jnp.float32)
    if aggregation_method == 'mean':
        cnt_sc[...] += jnp.sum(onehot_a.astype(jnp.float32), axis=1,
                               keepdims=True)

    # ---- node MLP + residual once every edge tile has been aggregated -------
    @pl.when(step == pl.num_programs(0) - 1)
    def _finalize():
        agg = agg_sc[...]
        if aggregation_method == 'sum':
            agg = agg * jnp.float32(1.0 / normalization_factor)
        elif aggregation_method == 'mean':
            cnt = jnp.where(cnt_sc[...] == 0.0, 1.0, cnt_sc[...])
            agg = agg / cnt
        h = h_ref[...]
        z = _silu(jnp.dot(h.astype(jnp.bfloat16), w3h_ref[...],
                          preferred_element_type=jnp.float32)
                  + jnp.dot(agg.astype(jnp.bfloat16), w3a_ref[...],
                            preferred_element_type=jnp.float32)
                  + b3_ref[...])
        hout_ref[...] = (h
                         + jnp.dot(z.astype(jnp.bfloat16), w4_ref[...],
                                   preferred_element_type=jnp.float32)
                         + b4_ref[...]).astype(hout_ref.dtype)


# ---------------------------------------------------------------------------
# VMEM residency estimate (padded tiles, double-buffer aware) for the budget.
# ---------------------------------------------------------------------------
def _padded_vmem_bytes(shape, dtype):
    item = np.dtype(dtype).itemsize
    sub = {1: 32, 2: 16, 4: 8}[item]
    r = shape[-2] if len(shape) > 1 else 1
    c = shape[-1]
    lead = 1
    for s in shape[:-2]:
        lead *= int(s)
    rp = -(-max(int(r), 1) // sub) * sub
    cp = -(-max(int(c), 1) // 128) * 128
    return lead * rp * cp * item


# ---------------------------------------------------------------------------
# Wrapper
# ---------------------------------------------------------------------------
def gcl_forward(h, row, col, params, *, normalization_factor=1.0,
                aggregation_method='sum', edge_tile=1024):
    assert aggregation_method in ('sum', 'mean')
    N, F = h.shape
    H = params['w2'].shape[1]
    O = params['w4'].shape[1]
    E = int(row.shape[0])

    # node axis padded to a multiple of 16 so the bf16 [hr; hc] scratch halves
    # stay sublane-tile aligned
    N_pad = max(16, ((N + 15) // 16) * 16)
    h_pad = jnp.pad(h.astype(jnp.float32), ((0, N_pad - N), (0, 0)))

    TE = max(128, ((edge_tile + 127) // 128) * 128)
    E_pad = ((E + TE - 1) // TE) * TE
    n_tiles = E_pad // TE

    row32 = row.astype(jnp.int32)
    col32 = col.astype(jnp.int32)
    # sentinels so padded edges select no node in any one-hot
    row_pad = jnp.pad(row32, (0, E_pad - E), constant_values=-1)
    col_pad = jnp.pad(col32, (0, E_pad - E), constant_values=-(N_pad + 1))
    row_t = row_pad.reshape(n_tiles, TE)   # (1, TE) slices for the aggregation
    row_s = row_pad.reshape(E_pad, 1)      # (TE, 1) slices for the gather
    col_s = col_pad.reshape(E_pad, 1)

    # weights in bf16 (MXU operands + halved weight DMA), biases stay f32
    bf = lambda w: w.astype(jnp.bfloat16)
    w1r, w1c = bf(params['w1r']), bf(params['w1c'])
    w2, w3h, w3a, w4 = bf(params['w2']), bf(params['w3h']), bf(params['w3a']), bf(params['w4'])
    b1 = params['b1'].astype(jnp.float32)
    b2 = params['b2'].astype(jnp.float32)
    b3 = params['b3'].astype(jnp.float32)
    b4 = params['b4'].astype(jnp.float32)

    in_block_info = [
        ((n_tiles, TE), jnp.int32),   # row_t
        ((E_pad, 1), jnp.int32),      # row_s
        ((E_pad, 1), jnp.int32),      # col_s
        ((N_pad, F), jnp.float32),    # h
        ((F, H), jnp.bfloat16),       # w1r
        ((F, H), jnp.bfloat16),       # w1c
        ((1, H), jnp.float32),        # b1
        ((H, H), jnp.bfloat16),       # w2
        ((1, H), jnp.float32),        # b2
        ((F, H), jnp.bfloat16),       # w3h
        ((H, H), jnp.bfloat16),       # w3a
        ((1, H), jnp.float32),        # b3
        ((H, O), jnp.bfloat16),       # w4
        ((1, O), jnp.float32),        # b4
    ]
    out_block_info = [((TE, H), jnp.float32), ((N_pad, O), jnp.float32)]
    scratch_info = [((2 * N_pad, H), jnp.bfloat16),
                    ((N_pad, H), jnp.float32),
                    ((N_pad, 1), jnp.float32)]

    # VMEM budget: actual padded residency (x2 for pipeline double-buffering of
    # blocks) + scratch, with 2x margin, clamped to v7x's 64 MiB per-core VMEM.
    vmem_est = sum(2 * _padded_vmem_bytes(s, d) for s, d in in_block_info + out_block_info)
    vmem_est += sum(_padded_vmem_bytes(s, d) for s, d in scratch_info)
    vmem_limit = int(min(64 * 2**20, max(32 * 2**20, 2 * vmem_est)))

    in_specs = [pl.BlockSpec(shape, lambda e: (0, 0)) for shape, _ in in_block_info]
    out_specs = (
        pl.BlockSpec((TE, H), lambda e: (e, 0)),       # mij streamed per edge tile
        pl.BlockSpec((N_pad, O), lambda e: (0, 0)),    # h_new resident
    )
    scratch_shapes = [pltpu.VMEM(shape, dtype) for shape, dtype in scratch_info]

    flops = int(4 * N_pad * F * H                          # hr/hc projection (step 0)
                + 2 * E_pad * (2 * N_pad) * H              # stacked one-hot gather
                + 2 * E_pad * H * H                        # edge MLP second linear
                + 2 * E_pad * N_pad * H                    # one-hot aggregation
                + 2 * N_pad * (F * H + H * H + H * O))     # node MLP
    transcendentals = int(2 * E_pad * H + N_pad * H)
    bytes_accessed = int(4 * (3 * E_pad + N_pad * F + E_pad * H + N_pad * O)
                         + 2 * (2 * F * H + 2 * H * H + H * O)
                         + 4 * (3 * H + O))
    cost = pl.CostEstimate(flops=flops, transcendentals=transcendentals,
                           bytes_accessed=bytes_accessed)

    mij_pad, h_new_pad = pl.pallas_call(
        partial(fused_gcl_kernel,
                normalization_factor=normalization_factor,
                aggregation_method=aggregation_method),
        out_shape=(jax.ShapeDtypeStruct((E_pad, H), jnp.float32),
                   jax.ShapeDtypeStruct((N_pad, O), jnp.float32)),
        grid_spec=pltpu.PrefetchScalarGridSpec(
            num_scalar_prefetch=0,
            grid=(n_tiles,),
            in_specs=in_specs,
            out_specs=out_specs,
            scratch_shapes=scratch_shapes),
        compiler_params=pltpu.CompilerParams(
            # edge axis carries the aggregation accumulator -> "arbitrary"
            dimension_semantics=("arbitrary",),
            vmem_limit_bytes=vmem_limit),
        cost_estimate=cost,
    )(row_t, row_s, col_s, h_pad, w1r, w1c, b1, w2, b2, w3h, w3a, b3, w4, b4)

    return h_new_pad[:N], mij_pad[:E]


# ---------------------------------------------------------------------------
# Pure-JAX f32 reference (mirrors the PyTorch module semantics exactly)
# ---------------------------------------------------------------------------
def gcl_reference(h, row, col, params, *, normalization_factor=1.0,
                  aggregation_method='sum'):
    hr = h @ params['w1r'] + params['b1']
    hc = h @ params['w1c']
    pre = hr[row] + hc[col]                       # == cat([h[row], h[col]]) @ w1 + b1
    h1 = jax.nn.silu(pre)
    mij = jax.nn.silu(h1 @ params['w2'] + params['b2'])

    N = h.shape[0]
    agg = jnp.zeros((N, mij.shape[1]), jnp.float32).at[row].add(mij)
    if aggregation_method == 'sum':
        agg = agg / normalization_factor
    elif aggregation_method == 'mean':
        counts = jnp.zeros((N, 1), jnp.float32).at[row].add(1.0)
        counts = jnp.where(counts == 0.0, 1.0, counts)
        agg = agg / counts

    z = jax.nn.silu(h @ params['w3h'] + agg @ params['w3a'] + params['b3'])
    h_new = h + (z @ params['w4'] + params['b4'])
    return h_new, mij


def init_params(key, input_nf, hidden_nf, output_nf):
    ks = jax.random.split(key, 8)

    def lin(k, fan_in, fan_out):
        return (jax.random.normal(k, (fan_in, fan_out), jnp.float32)
                / np.sqrt(fan_in)).astype(jnp.float32)

    w1 = lin(ks[0], 2 * input_nf, hidden_nf)          # edge_mlp Linear 1, stored [in, out]
    w3 = lin(ks[4], input_nf + hidden_nf, hidden_nf)  # node_mlp Linear 1 ([h | agg] halves)
    return {
        'w1r': w1[:input_nf, :],
        'w1c': w1[input_nf:, :],
        'b1': 0.01 * jax.random.normal(ks[1], (1, hidden_nf), jnp.float32),
        'w2': lin(ks[2], hidden_nf, hidden_nf),
        'b2': 0.01 * jax.random.normal(ks[3], (1, hidden_nf), jnp.float32),
        'w3h': w3[:input_nf, :],
        'w3a': w3[input_nf:, :],
        'b3': 0.01 * jax.random.normal(ks[5], (1, hidden_nf), jnp.float32),
        'w4': lin(ks[6], hidden_nf, output_nf),
        'b4': 0.01 * jax.random.normal(ks[7], (1, output_nf), jnp.float32),
    }


if __name__ == "__main__":
    key = jax.random.PRNGKey(0)
    k_h, k_p = jax.random.split(key)

    N = 32                                     # nodes
    input_nf = hidden_nf = output_nf = 128     # lane-dense feature dims (x128)
    normalization_factor = 100.0

    # fully connected directed graph without self loops -> E = N*(N-1) = 992
    idx = np.arange(N)
    rr, cc = np.meshgrid(idx, idx, indexing='ij')
    mask = rr != cc
    row = jnp.asarray(rr[mask], dtype=jnp.int32)
    col = jnp.asarray(cc[mask], dtype=jnp.int32)

    h = jax.random.normal(k_h, (N, input_nf), jnp.float32)
    params = init_params(k_p, input_nf, hidden_nf, output_nf)

    for aggregation_method in ('sum', 'mean'):
        h_new, mij = gcl_forward(h, row, col, params,
                                 normalization_factor=normalization_factor,
                                 aggregation_method=aggregation_method,
                                 edge_tile=1024)
        h_new = jax.block_until_ready(h_new)
        mij = jax.block_until_ready(mij)

        h_ref, mij_ref = gcl_reference(h, row, col, params,
                                       normalization_factor=normalization_factor,
                                       aggregation_method=aggregation_method)
        # bf16 MXU operands -> relaxed tolerances vs. the f32 reference
        np.testing.assert_allclose(np.asarray(mij), np.asarray(mij_ref),
                                   rtol=3e-2, atol=3e-2)
        np.testing.assert_allclose(np.asarray(h_new), np.asarray(h_ref),
                                   rtol=3e-2, atol=3e-2)

    print("KERNEL_OK")
</pallas_src>

<mosaic_0001>
module attributes {stable_mosaic.version = 11 : i64} {
  func.func @fused_gcl_kernel(%arg0: i32, %arg1: memref<1x1024xi32, #tpu.memory_space<vmem>>, %arg2: memref<1024x1xi32, #tpu.memory_space<vmem>>, %arg3: memref<1024x1xi32, #tpu.memory_space<vmem>>, %arg4: memref<32x128xf32, #tpu.memory_space<vmem>>, %arg5: memref<128x128xbf16, #tpu.memory_space<vmem>>, %arg6: memref<128x128xbf16, #tpu.memory_space<vmem>>, %arg7: memref<1x128xf32, #tpu.memory_space<vmem>>, %arg8: memref<128x128xbf16, #tpu.memory_space<vmem>>, %arg9: memref<1x128xf32, #tpu.memory_space<vmem>>, %arg10: memref<128x128xbf16, #tpu.memory_space<vmem>>, %arg11: memref<128x128xbf16, #tpu.memory_space<vmem>>, %arg12: memref<1x128xf32, #tpu.memory_space<vmem>>, %arg13: memref<128x128xbf16, #tpu.memory_space<vmem>>, %arg14: memref<1x128xf32, #tpu.memory_space<vmem>>, %arg15: memref<1024x128xf32, #tpu.memory_space<vmem>>, %arg16: memref<32x128xf32, #tpu.memory_space<vmem>>, %arg17: memref<64x128xbf16, #tpu.memory_space<vmem>>, %arg18: memref<32x128xf32, #tpu.memory_space<vmem>>, %arg19: memref<32x1xf32, #tpu.memory_space<vmem>>) attributes {dimension_semantics = [#tpu.dimension_semantics<arbitrary>], iteration_bounds = array<i64: 1>, scalar_prefetch = 0 : i64, scratch_operands = 3 : i64, tpu.core_type = #tpu.core_type<tc>, window_params = [{pipeline_mode = #tpu.pipeline_mode<synchronous>, transform_indices = @transform_0, window_bounds = array<i64: 1, 1024>}, {pipeline_mode = #tpu.pipeline_mode<synchronous>, transform_indices = @transform_1, window_bounds = array<i64: 1024, 1>}, {pipeline_mode = #tpu.pipeline_mode<synchronous>, transform_indices = @transform_2, window_bounds = array<i64: 1024, 1>}, {pipeline_mode = #tpu.pipeline_mode<synchronous>, transform_indices = @transform_3, window_bounds = array<i64: 32, 128>}, {pipeline_mode = #tpu.pipeline_mode<synchronous>, transform_indices = @transform_4, window_bounds = array<i64: 128, 128>}, {pipeline_mode = #tpu.pipeline_mode<synchronous>, transform_indices = @transform_5, window_bounds = array<i64: 128, 128>}, {pipeline_mode = #tpu.pipeline_mode<synchronous>, transform_indices = @transform_6, window_bounds = array<i64: 1, 128>}, {pipeline_mode = #tpu.pipeline_mode<synchronous>, transform_indices = @transform_7, window_bounds = array<i64: 128, 128>}, {pipeline_mode = #tpu.pipeline_mode<synchronous>, transform_indices = @transform_8, window_bounds = array<i64: 1, 128>}, {pipeline_mode = #tpu.pipeline_mode<synchronous>, transform_indices = @transform_9, window_bounds = array<i64: 128, 128>}, {pipeline_mode = #tpu.pipeline_mode<synchronous>, transform_indices = @transform_10, window_bounds = array<i64: 128, 128>}, {pipeline_mode = #tpu.pipeline_mode<synchronous>, transform_indices = @transform_11, window_bounds = array<i64: 1, 128>}, {pipeline_mode = #tpu.pipeline_mode<synchronous>, transform_indices = @transform_12, window_bounds = array<i64: 128, 128>}, {pipeline_mode = #tpu.pipeline_mode<synchronous>, transform_indices = @transform_13, window_bounds = array<i64: 1, 128>}, {transform_indices = @transform_14, window_bounds = array<i64: 1024, 128>}, {pipeline_mode = #tpu.pipeline_mode<synchronous>, transform_indices = @transform_15, window_bounds = array<i64: 32, 128>}]} {
    %c0_i32 = arith.constant 0 : i32
    %0 = arith.cmpi eq, %arg0, %c0_i32 : i32
    %1 = arith.extui %0 : i1 to i32
    %c0_i32_0 = arith.constant 0 : i32
    %2 = arith.cmpi ne, %1, %c0_i32_0 : i32
    scf.if %2 {
      %c0_21 = arith.constant 0 : index
      %c0_22 = arith.constant 0 : index
      %57 = vector.load %arg4[%c0_21, %c0_22] : memref<32x128xf32, #tpu.memory_space<vmem>>, vector<32x128xf32>
      %58 = arith.truncf %57 : vector<32x128xf32> to vector<32x128xbf16>
      %c0_23 = arith.constant 0 : index
      %c0_24 = arith.constant 0 : index
      %59 = vector.load %arg5[%c0_23, %c0_24] : memref<128x128xbf16, #tpu.memory_space<vmem>>, vector<128x128xbf16>
      %cst_25 = arith.constant dense<0.000000e+00> : vector<32x128xf32>
      %60 = tpu.matmul %58, %59, %cst_25 {dimension_numbers = #tpu.dot_dimension_numbers<[1], [0], [0], [1], [0, 0, 1, 1], [], []>} : vector<32x128xbf16>, vector<128x128xbf16>, vector<32x128xf32> -> vector<32x128xf32>
      %c0_26 = arith.constant 0 : index
      %c0_27 = arith.constant 0 : index
      %61 = vector.load %arg7[%c0_26, %c0_27] : memref<1x128xf32, #tpu.memory_space<vmem>>, vector<1x128xf32>
      %62 = vector.broadcast %61 : vector<1x128xf32> to vector<32x128xf32>
      %63 = arith.addf %60, %62 : vector<32x128xf32>
      %c0_28 = arith.constant 0 : index
      %c0_29 = arith.constant 0 : index
      %64 = vector.load %arg6[%c0_28, %c0_29] : memref<128x128xbf16, #tpu.memory_space<vmem>>, vector<128x128xbf16>
      %cst_30 = arith.constant dense<0.000000e+00> : vector<32x128xf32>
      %65 = tpu.matmul %58, %64, %cst_30 {dimension_numbers = #tpu.dot_dimension_numbers<[1], [0], [0], [1], [0, 0, 1, 1], [], []>} : vector<32x128xbf16>, vector<128x128xbf16>, vector<32x128xf32> -> vector<32x128xf32>
      %66 = arith.truncf %63 : vector<32x128xf32> to vector<32x128xbf16>
      %c0_31 = arith.constant 0 : index
      %c0_32 = arith.constant 0 : index
      %67 = vector.load %arg17[%c0_31, %c0_32] : memref<64x128xbf16, #tpu.memory_space<vmem>>, vector<32x128xbf16>
      tpu.vector_store %arg17[%c0_31, %c0_32], %66 {strides = array<i32>} : memref<64x128xbf16, #tpu.memory_space<vmem>>, vector<32x128xbf16>,
      %68 = arith.truncf %65 : vector<32x128xf32> to vector<32x128xbf16>
      %c32 = arith.constant 32 : index
      %c0_33 = arith.constant 0 : index
      %69 = vector.load %arg17[%c32, %c0_33] : memref<64x128xbf16, #tpu.memory_space<vmem>>, vector<32x128xbf16>
      tpu.vector_store %arg17[%c32, %c0_33], %68 {strides = array<i32>} : memref<64x128xbf16, #tpu.memory_space<vmem>>, vector<32x128xbf16>,
      %cst_34 = arith.constant 0.000000e+00 : f32
      %70 = vector.broadcast %cst_34 : f32 to vector<32x128xf32>
      %c0_35 = arith.constant 0 : index
      %c0_36 = arith.constant 0 : index
      %71 = vector.load %arg18[%c0_35, %c0_36] : memref<32x128xf32, #tpu.memory_space<vmem>>, vector<32x128xf32>
      tpu.vector_store %arg18[%c0_35, %c0_36], %70 {strides = array<i32>} : memref<32x128xf32, #tpu.memory_space<vmem>>, vector<32x128xf32>,
    } else {
    }
    %c1024_i32 = arith.constant 1024 : i32
    %3 = arith.muli %arg0, %c1024_i32 : i32
    %4 = tpu.assume_multiple %3, 1024 : i32
    %5 = arith.index_cast %4 : i32 to index
    %c0 = arith.constant 0 : index
    %6 = vector.load %arg2[%5, %c0] : memref<1024x1xi32, #tpu.memory_space<vmem>>, vector<1024x1xi32>
    %7 = arith.index_cast %4 : i32 to index
    %c0_1 = arith.constant 0 : index
    %8 = vector.load %arg3[%7, %c0_1] : memref<1024x1xi32, #tpu.memory_space<vmem>>, vector<1024x1xi32>
    %c32_i32 = arith.constant 32 : i32
    %9 = vector.broadcast %c32_i32 : i32 to vector<1024x1xi32>
    %10 = arith.addi %8, %9 : vector<1024x1xi32>
    %11 = arith.index_cast %arg0 : i32 to index
    %c0_2 = arith.constant 0 : index
    %12 = vector.load %arg1[%11, %c0_2] : memref<1x1024xi32, #tpu.memory_space<vmem>>, vector<1x1024xi32>
    %13 = tpu.iota {dimensions = array<i32: 1>} : vector<1024x64xi32>
    %14 = vector.broadcast %6 : vector<1024x1xi32> to vector<1024x64xi32>
    %15 = arith.cmpi eq, %13, %14 : vector<1024x64xi32>
    %16 = vector.broadcast %10 : vector<1024x1xi32> to vector<1024x64xi32>
    %17 = arith.cmpi eq, %13, %16 : vector<1024x64xi32>
    %18 = arith.ori %15, %17 : vector<1024x64xi1>
    %19 = arith.extui %18 : vector<1024x64xi1> to vector<1024x64xi32>
    %20 = arith.sitofp %19 : vector<1024x64xi32> to vector<1024x64xf32>
    %21 = arith.truncf %20 : vector<1024x64xf32> to vector<1024x64xbf16>
    %c0_3 = arith.constant 0 : index
    %c0_4 = arith.constant 0 : index
    %22 = vector.load %arg17[%c0_3, %c0_4] : memref<64x128xbf16, #tpu.memory_space<vmem>>, vector<64x128xbf16>
    %cst = arith.constant dense<0.000000e+00> : vector<1024x128xf32>
    %23 = tpu.matmul %21, %22, %cst {dimension_numbers = #tpu.dot_dimension_numbers<[1], [0], [0], [1], [0, 0, 1, 1], [], []>} : vector<1024x64xbf16>, vector<64x128xbf16>, vector<1024x128xf32> -> vector<1024x128xf32>
    %24 = arith.negf %23 : vector<1024x128xf32>
    %25 = math.exp %24 : vector<1024x128xf32>
    %cst_5 = arith.constant 1.000000e+00 : f32
    %26 = vector.broadcast %cst_5 : f32 to vector<1024x128xf32>
    %27 = arith.addf %26, %25 : vector<1024x128xf32>
    %28 = arith.divf %26, %27 : vector<1024x128xf32>
    %29 = arith.mulf %23, %28 : vector<1024x128xf32>
    %30 = arith.truncf %29 : vector<1024x128xf32> to vector<1024x128xbf16>
    %c0_6 = arith.constant 0 : index
    %c0_7 = arith.constant 0 : index
    %31 = vector.load %arg8[%c0_6, %c0_7] : memref<128x128xbf16, #tpu.memory_space<vmem>>, vector<128x128xbf16>
    %cst_8 = arith.constant dense<0.000000e+00> : vector<1024x128xf32>
    %32 = tpu.matmul %30, %31, %cst_8 {dimension_numbers = #tpu.dot_dimension_numbers<[1], [0], [0], [1], [0, 0, 1, 1], [], []>} : vector<1024x128xbf16>, vector<128x128xbf16>, vector<1024x128xf32> -> vector<1024x128xf32>
    %c0_9 = arith.constant 0 : index
    %c0_10 = arith.constant 0 : index
    %33 = vector.load %arg9[%c0_9, %c0_10] : memref<1x128xf32, #tpu.memory_space<vmem>>, vector<1x128xf32>
    %34 = vector.broadcast %33 : vector<1x128xf32> to vector<1024x128xf32>
    %35 = arith.addf %32, %34 : vector<1024x128xf32>
    %36 = arith.negf %35 : vector<1024x128xf32>
    %37 = math.exp %36 : vector<1024x128xf32>
    %cst_11 = arith.constant 1.000000e+00 : f32
    %38 = vector.broadcast %cst_11 : f32 to vector<1024x128xf32>
    %39 = arith.addf %38, %37 : vector<1024x128xf32>
    %40 = arith.divf %38, %39 : vector<1024x128xf32>
    %41 = arith.mulf %35, %40 : vector<1024x128xf32>
    %c0_12 = arith.constant 0 : index
    %c0_13 = arith.constant 0 : index
    %42 = vector.load %arg15[%c0_12, %c0_13] : memref<1024x128xf32, #tpu.memory_space<vmem>>, vector<1024x128xf32>
    tpu.vector_store %arg15[%c0_12, %c0_13], %41 {strides = array<i32>} : memref<1024x128xf32, #tpu.memory_space<vmem>>, vector<1024x128xf32>,
    %43 = tpu.iota {dimensions = array<i32: 0>} : vector<32x1024xi32>
    %44 = vector.broadcast %12 : vector<1x1024xi32> to vector<32x1024xi32>
    %45 = arith.cmpi eq, %43, %44 : vector<32x1024xi32>
    %46 = arith.extui %45 : vector<32x1024xi1> to vector<32x1024xi32>
    %47 = arith.sitofp %46 : vector<32x1024xi32> to vector<32x1024xf32>
    %48 = arith.truncf %47 : vector<32x1024xf32> to vector<32x1024xbf16>
    %c0_14 = arith.constant 0 : index
    %c0_15 = arith.constant 0 : index
    %49 = vector.load %arg18[%c0_14, %c0_15] : memref<32x128xf32, #tpu.memory_space<vmem>>, vector<32x128xf32>
    %50 = arith.truncf %41 : vector<1024x128xf32> to vector<1024x128xbf16>
    %cst_16 = arith.constant dense<0.000000e+00> : vector<32x128xf32>
    %51 = tpu.matmul %48, %50, %cst_16 {dimension_numbers = #tpu.dot_dimension_numbers<[1], [0], [0], [1], [0, 0, 1, 1], [], []>} : vector<32x1024xbf16>, vector<1024x128xbf16>, vector<32x128xf32> -> vector<32x128xf32>
    %52 = arith.addf %49, %51 : vector<32x128xf32>
    %c0_17 = arith.constant 0 : index
    %c0_18 = arith.constant 0 : index
    %53 = vector.load %arg18[%c0_17, %c0_18] : memref<32x128xf32, #tpu.memory_space<vmem>>, vector<32x128xf32>
    tpu.vector_store %arg18[%c0_17, %c0_18], %52 {strides = array<i32>} : memref<32x128xf32, #tpu.memory_space<vmem>>, vector<32x128xf32>,
    %c0_i32_19 = arith.constant 0 : i32
    %54 = arith.cmpi eq, %arg0, %c0_i32_19 : i32
    %55 = arith.extui %54 : i1 to i32
    %c0_i32_20 = arith.constant 0 : i32
    %56 = arith.cmpi ne, %55, %c0_i32_20 : i32
    scf.if %56 {
      %c0_21 = arith.constant 0 : index
      %c0_22 = arith.constant 0 : index
      %57 = vector.load %arg18[%c0_21, %c0_22] : memref<32x128xf32, #tpu.memory_space<vmem>>, vector<32x128xf32>
      %cst_23 = arith.constant 0.00999999977 : f32
      %58 = vector.broadcast %cst_23 : f32 to vector<32x128xf32>
      %59 = arith.mulf %57, %58 : vector<32x128xf32>
      %c0_24 = arith.constant 0 : index
      %c0_25 = arith.constant 0 : index
      %60 = vector.load %arg4[%c0_24, %c0_25] : memref<32x128xf32, #tpu.memory_space<vmem>>, vector<32x128xf32>
      %61 = arith.truncf %60 : vector<32x128xf32> to vector<32x128xbf16>
      %c0_26 = arith.constant 0 : index
      %c0_27 = arith.constant 0 : index
      %62 = vector.load %arg10[%c0_26, %c0_27] : memref<128x128xbf16, #tpu.memory_space<vmem>>, vector<128x128xbf16>
      %cst_28 = arith.constant dense<0.000000e+00> : vector<32x128xf32>
      %63 = tpu.matmul %61, %62, %cst_28 {dimension_numbers = #tpu.dot_dimension_numbers<[1], [0], [0], [1], [0, 0, 1, 1], [], []>} : vector<32x128xbf16>, vector<128x128xbf16>, vector<32x128xf32> -> vector<32x128xf32>
      %64 = arith.truncf %59 : vector<32x128xf32> to vector<32x128xbf16>
      %c0_29 = arith.constant 0 : index
      %c0_30 = arith.constant 0 : index
      %65 = vector.load %arg11[%c0_29, %c0_30] : memref<128x128xbf16, #tpu.memory_space<vmem>>, vector<128x128xbf16>
      %cst_31 = arith.constant dense<0.000000e+00> : vector<32x128xf32>
      %66 = tpu.matmul %64, %65, %cst_31 {dimension_numbers = #tpu.dot_dimension_numbers<[1], [0], [0], [1], [0, 0, 1, 1], [], []>} : vector<32x128xbf16>, vector<128x128xbf16>, vector<32x128xf32> -> vector<32x128xf32>
      %67 = arith.addf %63, %66 : vector<32x128xf32>
      %c0_32 = arith.constant 0 : index
      %c0_33 = arith.constant 0 : index
      %68 = vector.load %arg12[%c0_32, %c0_33] : memref<1x128xf32, #tpu.memory_space<vmem>>, vector<1x128xf32>
      %69 = vector.broadcast %68 : vector<1x128xf32> to vector<32x128xf32>
      %70 = arith.addf %67, %69 : vector<32x128xf32>
      %71 = arith.negf %70 : vector<32x128xf32>
      %72 = math.exp %71 : vector<32x128xf32>
      %cst_34 = arith.constant 1.000000e+00 : f32
      %73 = vector.broadcast %cst_34 : f32 to vector<32x128xf32>
      %74 = arith.addf %73, %72 : vector<32x128xf32>
      %75 = arith.divf %73, %74 : vector<32x128xf32>
      %76 = arith.mulf %70, %75 : vector<32x128xf32>
      %77 = arith.truncf %76 : vector<32x128xf32> to vector<32x128xbf16>
      %c0_35 = arith.constant 0 : index
      %c0_36 = arith.constant 0 : index
      %78 = vector.load %arg13[%c0_35, %c0_36] : memref<128x128xbf16, #tpu.memory_space<vmem>>, vector<128x128xbf16>
      %cst_37 = arith.constant dense<0.000000e+00> : vector<32x128xf32>
      %79 = tpu.matmul %77, %78, %cst_37 {dimension_numbers = #tpu.dot_dimension_numbers<[1], [0], [0], [1], [0, 0, 1, 1], [], []>} : vector<32x128xbf16>, vector<128x128xbf16>, vector<32x128xf32> -> vector<32x128xf32>
      %80 = arith.addf %60, %79 : vector<32x128xf32>
      %c0_38 = arith.constant 0 : index
      %c0_39 = arith.constant 0 : index
      %81 = vector.load %arg14[%c0_38, %c0_39] : memref<1x128xf32, #tpu.memory_space<vmem>>, vector<1x128xf32>
      %82 = vector.broadcast %81 : vector<1x128xf32> to vector<32x128xf32>
      %83 = arith.addf %80, %82 : vector<32x128xf32>
      %c0_40 = arith.constant 0 : index
      %c0_41 = arith.constant 0 : index
      %84 = vector.load %arg16[%c0_40, %c0_41] : memref<32x128xf32, #tpu.memory_space<vmem>>, vector<32x128xf32>
      tpu.vector_store %arg16[%c0_40, %c0_41], %83 {strides = array<i32>} : memref<32x128xf32, #tpu.memory_space<vmem>>, vector<32x128xf32>,
    } else {
    }
    return
  }
  func.func @transform_0(%arg0: i32) -> (i32, i32) {
    %c0_i32 = arith.constant 0 : i32
    %c0_i32_0 = arith.constant 0 : i32
    %c0_i32_1 = arith.constant 0 : i32
    return %c0_i32, %c0_i32_0 : i32, i32
  }
  func.func @transform_1(%arg0: i32) -> (i32, i32) {
    %c0_i32 = arith.constant 0 : i32
    %c0_i32_0 = arith.constant 0 : i32
    %c0_i32_1 = arith.constant 0 : i32
    return %c0_i32, %c0_i32_0 : i32, i32
  }
  func.func @transform_2(%arg0: i32) -> (i32, i32) {
    %c0_i32 = arith.constant 0 : i32
    %c0_i32_0 = arith.constant 0 : i32
    %c0_i32_1 = arith.constant 0 : i32
    return %c0_i32, %c0_i32_0 : i32, i32
  }
  func.func @transform_3(%arg0: i32) -> (i32, i32) {
    %c0_i32 = arith.constant 0 : i32
    %c0_i32_0 = arith.constant 0 : i32
    %c0_i32_1 = arith.constant 0 : i32
    return %c0_i32, %c0_i32_0 : i32, i32
  }
  func.func @transform_4(%arg0: i32) -> (i32, i32) {
    %c0_i32 = arith.constant 0 : i32
    %c0_i32_0 = arith.constant 0 : i32
    %c0_i32_1 = arith.constant 0 : i32
    return %c0_i32, %c0_i32_0 : i32, i32
  }
  func.func @transform_5(%arg0: i32) -> (i32, i32) {
    %c0_i32 = arith.constant 0 : i32
    %c0_i32_0 = arith.constant 0 : i32
    %c0_i32_1 = arith.constant 0 : i32
    return %c0_i32, %c0_i32_0 : i32, i32
  }
  func.func @transform_6(%arg0: i32) -> (i32, i32) {
    %c0_i32 = arith.constant 0 : i32
    %c0_i32_0 = arith.constant 0 : i32
    %c0_i32_1 = arith.constant 0 : i32
    return %c0_i32, %c0_i32_0 : i32, i32
  }
  func.func @transform_7(%arg0: i32) -> (i32, i32) {
    %c0_i32 = arith.constant 0 : i32
    %c0_i32_0 = arith.constant 0 : i32
    %c0_i32_1 = arith.constant 0 : i32
    return %c0_i32, %c0_i32_0 : i32, i32
  }
  func.func @transform_8(%arg0: i32) -> (i32, i32) {
    %c0_i32 = arith.constant 0 : i32
    %c0_i32_0 = arith.constant 0 : i32
    %c0_i32_1 = arith.constant 0 : i32
    return %c0_i32, %c0_i32_0 : i32, i32
  }
  func.func @transform_9(%arg0: i32) -> (i32, i32) {
    %c0_i32 = arith.constant 0 : i32
    %c0_i32_0 = arith.constant 0 : i32
    %c0_i32_1 = arith.constant 0 : i32
    return %c0_i32, %c0_i32_0 : i32, i32
  }
  func.func @transform_10(%arg0: i32) -> (i32, i32) {
    %c0_i32 = arith.constant 0 : i32
    %c0_i32_0 = arith.constant 0 : i32
    %c0_i32_1 = arith.constant 0 : i32
    return %c0_i32, %c0_i32_0 : i32, i32
  }
  func.func @transform_11(%arg0: i32) -> (i32, i32) {
    %c0_i32 = arith.constant 0 : i32
    %c0_i32_0 = arith.constant 0 : i32
    %c0_i32_1 = arith.constant 0 : i32
    return %c0_i32, %c0_i32_0 : i32, i32
  }
  func.func @transform_12(%arg0: i32) -> (i32, i32) {
    %c0_i32 = arith.constant 0 : i32
    %c0_i32_0 = arith.constant 0 : i32
    %c0_i32_1 = arith.constant 0 : i32
    return %c0_i32, %c0_i32_0 : i32, i32
  }
  func.func @transform_13(%arg0: i32) -> (i32, i32) {
    %c0_i32 = arith.constant 0 : i32
    %c0_i32_0 = arith.constant 0 : i32
    %c0_i32_1 = arith.constant 0 : i32
    return %c0_i32, %c0_i32_0 : i32, i32
  }
  func.func @transform_14(%arg0: i32) -> (i32, i32) {
    %c0_i32 = arith.constant 0 : i32
    %c0_i32_0 = arith.constant 0 : i32
    return %arg0, %c0_i32 : i32, i32
  }
  func.func @transform_15(%arg0: i32) -> (i32, i32) {
    %c0_i32 = arith.constant 0 : i32
    %c0_i32_0 = arith.constant 0 : i32
    %c0_i32_1 = arith.constant 0 : i32
    return %c0_i32, %c0_i32_0 : i32, i32
  }
}

</mosaic_0001>

<llo_original>
// kernel: tpu_custom_call.1
$region0: #{tpu_custom_call.1}
  #allocation0 [shape = 'u32[]', space=smem, size = 0x4, offset = 0x4, fixed_abs, tag = 'smem constant byte address 0x4 - core index']
  #allocation1 [shape = 'u32[144,128]{1,0:T(1,128)}', space=vmem, size = 0x12000, scoped, tag = 'internal scratch']
  #allocation2 [shape = 'bf16[64,128]{1,0:T(16,128)(2,1)}', space=vmem, size = 0x4000, scoped, tag = 'scratch operand']
  #allocation3 [shape = 'f32[32,128]{1,0:T(8,128)}', space=vmem, size = 0x4000, scoped, tag = 'scratch operand']
  #allocation4 [shape = 'f32[32,1]{1,0:T(8,128)}', space=vmem, size = 0x4000, scoped, tag = 'scratch operand']
  %s0 = inlined_call_operand.vmem [shape: s32[1,1024], index: 0, kind: input, shape index: {}]
  %s1 = inlined_call_operand.vmem [shape: s32[1024,1], index: 1, kind: input, shape index: {}]
  %s2 = inlined_call_operand.vmem [shape: s32[1024,1], index: 2, kind: input, shape index: {}]
  %s3 = inlined_call_operand.vmem [shape: f32[32,128], index: 3, kind: input, shape index: {}]
  %s4 = inlined_call_operand.vmem [shape: bf16[128,128], index: 4, kind: input, shape index: {}]
  %s5 = inlined_call_operand.vmem [shape: bf16[128,128], index: 5, kind: input, shape index: {}]
  %s6 = inlined_call_operand.vmem [shape: f32[1,128], index: 6, kind: input, shape index: {}]
  %s7 = inlined_call_operand.vmem [shape: bf16[128,128], index: 7, kind: input, shape index: {}]
  %s8 = inlined_call_operand.vmem [shape: f32[1,128], index: 8, kind: input, shape index: {}]
  %s9 = inlined_call_operand.vmem [shape: bf16[128,128], index: 9, kind: input, shape index: {}]
  %s10 = inlined_call_operand.vmem [shape: bf16[128,128], index: 10, kind: input, shape index: {}]
  %s11 = inlined_call_operand.vmem [shape: f32[1,128], index: 11, kind: input, shape index: {}]
  %s12 = inlined_call_operand.vmem [shape: bf16[128,128], index: 12, kind: input, shape index: {}]
  %s13 = inlined_call_operand.vmem [shape: f32[1,128], index: 13, kind: input, shape index: {}]
  %s14 = inlined_call_operand.hbm [shape: f32[1024,128], index: 14, kind: output, shape index: {0}]
  %s15 = inlined_call_operand.hbm [shape: f32[32,128], index: 15, kind: output, shape index: {1}]
  %16 = xla_tuple %s14, %s15
  %s17 = sld [smem:[#allocation0]]
  $region82: #{tpu_custom_call.1} parent=0
    _
  %s19 = ssub.s32 1, %s17
  %s20 = scalar_select 0, %s19, %s17
  $region1: #{tpu_custom_call.1} parent=0
    #allocation5 [shape = 'u8[524288]{0}', space=vmem, size = 0x80000, scoped, tag = 'output window, operand 0, single buffered']
    #allocation6 [shape = 's32[1]{0}', space=sflag, size = 0x4, scoped, tag = 'scoped memory for tpu_custom_call.1']
    #allocation7 [shape = 'u8[16384]{0}', space=vmem, size = 0x4000, scoped, tag = 'output window, operand 1, single buffered']
    #allocation8 [shape = 's32[1]{0}', space=sflag, size = 0x4, scoped, tag = 'scoped memory for tpu_custom_call.1']
    %21 = vsyncpa [#allocation6], 0
    %22 = vsyncpa [#allocation8], 0
    // Predicated region
    $region2: #{tpu_custom_call.1} parent=1 // pred_check
      _
    $region3: #{tpu_custom_call.1} parent=1 // pred_check_branch
      %24 = sbr.rel (0) target = $region5
    $region4: #{tpu_custom_call.1} parent=1 // pred_region
      _
    $region5: #{tpu_custom_call.1} parent=1 // pred_fallthru
      _
    // Predicated region
    $region6: #{tpu_custom_call.1} parent=1 // pred_check
      _
    $region7: #{tpu_custom_call.1} parent=1 // pred_check_branch
      %26 = sbr.rel (0) target = $region9
    $region8: #{tpu_custom_call.1} parent=1 // pred_region
      _
    $region9: #{tpu_custom_call.1} parent=1 // pred_fallthru
      _
    // Predicated region
    $region10: #{tpu_custom_call.1} parent=1 // pred_check
      _
    $region11: #{tpu_custom_call.1} parent=1 // pred_check_branch
      %28 = sbr.rel (0) target = $region13
    $region12: #{tpu_custom_call.1} parent=1 // pred_region
      _
    $region13: #{tpu_custom_call.1} parent=1 // pred_fallthru
      _
    // Predicated region
    $region14: #{tpu_custom_call.1} parent=1 // pred_check
      _
    $region15: #{tpu_custom_call.1} parent=1 // pred_check_branch
      %30 = sbr.rel (0) target = $region17
    $region16: #{tpu_custom_call.1} parent=1 // pred_region
      _
    $region17: #{tpu_custom_call.1} parent=1 // pred_fallthru
      _
    // Predicated region
    $region18: #{tpu_custom_call.1} parent=1 // pred_check
      _
    $region19: #{tpu_custom_call.1} parent=1 // pred_check_branch
      %32 = sbr.rel (0) target = $region21
    $region20: #{tpu_custom_call.1} parent=1 // pred_region
      _
    $region21: #{tpu_custom_call.1} parent=1 // pred_fallthru
      _
    // Predicated region
    $region22: #{tpu_custom_call.1} parent=1 // pred_check
      _
    $region23: #{tpu_custom_call.1} parent=1 // pred_check_branch
      %34 = sbr.rel (0) target = $region25
    $region24: #{tpu_custom_call.1} parent=1 // pred_region
      _
    $region25: #{tpu_custom_call.1} parent=1 // pred_fallthru
      _
    // Predicated region
    $region26: #{tpu_custom_call.1} parent=1 // pred_check
      _
    $region27: #{tpu_custom_call.1} parent=1 // pred_check_branch
      %36 = sbr.rel (0) target = $region29
    $region28: #{tpu_custom_call.1} parent=1 // pred_region
      _
    $region29: #{tpu_custom_call.1} parent=1 // pred_fallthru
      _
    // Predicated region
    $region30: #{tpu_custom_call.1} parent=1 // pred_check
      _
    $region31: #{tpu_custom_call.1} parent=1 // pred_check_branch
      %38 = sbr.rel (0) target = $region33
    $region32: #{tpu_custom_call.1} parent=1 // pred_region
      _
    $region33: #{tpu_custom_call.1} parent=1 // pred_fallthru
      _
    // Predicated region
    $region34: #{tpu_custom_call.1} parent=1 // pred_check
      _
    $region35: #{tpu_custom_call.1} parent=1 // pred_check_branch
      %40 = sbr.rel (0) target = $region37
    $region36: #{tpu_custom_call.1} parent=1 // pred_region
      _
    $region37: #{tpu_custom_call.1} parent=1 // pred_fallthru
      _
    // Predicated region
    $region38: #{tpu_custom_call.1} parent=1 // pred_check
      _
    $region39: #{tpu_custom_call.1} parent=1 // pred_check_branch
      %42 = sbr.rel (0) target = $region41
    $region40: #{tpu_custom_call.1} parent=1 // pred_region
      _
    $region41: #{tpu_custom_call.1} parent=1 // pred_fallthru
      _
    // Predicated region
    $region42: #{tpu_custom_call.1} parent=1 // pred_check
      _
    $region43: #{tpu_custom_call.1} parent=1 // pred_check_branch
      %44 = sbr.rel (0) target = $region45
    $region44: #{tpu_custom_call.1} parent=1 // pred_region
      _
    $region45: #{tpu_custom_call.1} parent=1 // pred_fallthru
      _
    // Predicated region
    $region46: #{tpu_custom_call.1} parent=1 // pred_check
      _
    $region47: #{tpu_custom_call.1} parent=1 // pred_check_branch
      %46 = sbr.rel (0) target = $region49
    $region48: #{tpu_custom_call.1} parent=1 // pred_region
      _
    $region49: #{tpu_custom_call.1} parent=1 // pred_fallthru
      _
    // Predicated region
    $region50: #{tpu_custom_call.1} parent=1 // pred_check
      _
    $region51: #{tpu_custom_call.1} parent=1 // pred_check_branch
      %48 = sbr.rel (0) target = $region53
    $region52: #{tpu_custom_call.1} parent=1 // pred_region
      _
    $region53: #{tpu_custom_call.1} parent=1 // pred_fallthru
      _
    // Predicated region
    $region54: #{tpu_custom_call.1} parent=1 // pred_check
      _
    $region55: #{tpu_custom_call.1} parent=1 // pred_check_branch
      %50 = sbr.rel (0) target = $region57
    $region56: #{tpu_custom_call.1} parent=1 // pred_region
      _
    $region57: #{tpu_custom_call.1} parent=1 // pred_fallthru
      _
    %p52 = scmp.eq.s32.totalorder 0, 0
    // Predicated region
    $region58: #{tpu_custom_call.1} parent=1 // pred_check
      %p53 = pneg %p52
    $region59: #{tpu_custom_call.1} parent=1 // pred_check_branch
      %55 = sbr.rel (%p53) target = $region61
    $region60: #{tpu_custom_call.1} parent=1 // pred_region
      %v56 = vld [vmem:[%s3] sm:$0xff]
      %v57 = vld [vmem:[%s3 + $0x8] sm:$0xff]
      %v58 = vld [vmem:[%s3 + $0x10] sm:$0xff]
      %v59 = vld [vmem:[%s3 + $0x18] sm:$0xff]
      %v60 = vpack.c.bf16 %v57, %v56
      %v61 = vpack.c.bf16 %v59, %v58
      %v62 = vld [vmem:[%s4] sm:$0xf]
      %v63 = vld [vmem:[%s4 + $0x4] sm:$0xf]
      %v64 = vld [vmem:[%s4 + $0x8] sm:$0xf]
      %v65 = vld [vmem:[%s4 + $0xc] sm:$0xf]
      %v66 = vld [vmem:[%s4 + $0x10] sm:$0xf]
      %v67 = vld [vmem:[%s4 + $0x14] sm:$0xf]
      %v68 = vld [vmem:[%s4 + $0x18] sm:$0xf]
      %v69 = vld [vmem:[%s4 + $0x1c] sm:$0xf]
      %v70 = vld [vmem:[%s4 + $0x20] sm:$0xf]
      %v71 = vld [vmem:[%s4 + $0x24] sm:$0xf]
      %v72 = vld [vmem:[%s4 + $0x28] sm:$0xf]
      %v73 = vld [vmem:[%s4 + $0x2c] sm:$0xf]
      %v74 = vld [vmem:[%s4 + $0x30] sm:$0xf]
      %v75 = vld [vmem:[%s4 + $0x34] sm:$0xf]
      %v76 = vld [vmem:[%s4 + $0x38] sm:$0xf]
      %v77 = vld [vmem:[%s4 + $0x3c] sm:$0xf]
      %v78 = vld [vmem:[%s6] sm:$0x1]
      %v80 = vlaneseq
      %v81 = vshrl.u32 %v80, 7
      %v82 = vsub.s32 0, %v81
      %v83 = vrot.slane %v78, %v82
      %v101 = vunpack.c.l.b16 %v62
      %v102 = vunpack.c.l.b16 %v63
      %v103 = vunpack.c.l.b16 %v64
      %v104 = vunpack.c.l.b16 %v65
      %v105 = vunpack.c.l.b16 %v66
      %v106 = vunpack.c.l.b16 %v67
      %v107 = vunpack.c.l.b16 %v68
      %v108 = vunpack.c.l.b16 %v69
      %v109 = vunpack.c.l.b16 %v70
      %v110 = vunpack.c.l.b16 %v71
      %v111 = vunpack.c.l.b16 %v72
      %v112 = vunpack.c.l.b16 %v73
      %v113 = vunpack.c.l.b16 %v74
      %v114 = vunpack.c.l.b16 %v75
      %v115 = vunpack.c.l.b16 %v76
      %v116 = vunpack.c.l.b16 %v77
      %v117 = vpack.c.b16 %v102, %v101
      %v118 = vpack.c.b16 %v104, %v103
      %v119 = vpack.c.b16 %v106, %v105
      %v120 = vpack.c.b16 %v108, %v107
      %v121 = vpack.c.b16 %v110, %v109
      %v122 = vpack.c.b16 %v112, %v111
      %v123 = vpack.c.b16 %v114, %v113
      %v124 = vpack.c.b16 %v116, %v115
      %133 = vmatprep.subr.bf16.mxu0 0
      %134 = vmatpush1.bf16.msra.mxu0 %v117
      %135 = vmatprep.subr.bf16.mxu0 0
      %136 = vmatpush1.bf16.msra.mxu0 %v118
      %137 = vmatprep.subr.bf16.mxu0 0
      %138 = vmatpush1.bf16.msra.mxu0 %v119
      %139 = vmatprep.subr.bf16.mxu0 0
      %140 = vmatpush1.bf16.msra.mxu0 %v120
      %141 = vmatprep.subr.bf16.mxu0 0
      %142 = vmatpush1.bf16.msra.mxu0 %v121
      %143 = vmatprep.subr.bf16.mxu0 0
      %144 = vmatpush1.bf16.msra.mxu0 %v122
      %145 = vmatprep.subr.bf16.mxu0 0
      %146 = vmatpush1.bf16.msra.mxu0 %v123
      %147 = vmatprep.subr.bf16.mxu0 0
      %148 = vmatpush1.bf16.msra.mxu0 %v124
      %149 = vmatprep.subr.bf16.mxu0 0
      %150 = vmatpush1.bf16.msra.mxu0 0
      %151 = vmatprep.subr.bf16.mxu0 0
      %152 = vmatpush1.bf16.msra.mxu0 0
      %153 = vmatprep.subr.bf16.mxu0 0
      %154 = vmatpush1.bf16.msra.mxu0 0
      %155 = vmatprep.subr.bf16.mxu0 0
      %156 = vmatpush1.bf16.msra.mxu0 0
      %157 = vmatprep.subr.bf16.mxu0 0
      %158 = vmatpush1.bf16.msra.mxu0 0
      %159 = vmatprep.subr.bf16.mxu0 0
      %160 = vmatpush1.bf16.msra.mxu0 0
      %161 = vmatprep.subr.bf16.mxu0 0
      %162 = vmatpush1.bf16.msra.mxu0 0
      %163 = vmatprep.subr.bf16.mxu0 0
      %164 = vmatpush1.bf16.msra.mxu0 0
      %165 = vmatprep.mubr.bf16.mxu0 0
      %166 = vmatmul.mubr.bf16.gmra.mrb[0].mxu0 %v60
      %v167 = vpop.f32.mrb[0].mxu0
      %v168 = vadd.f32 %v83, %v167
      %v169 = vpop.f32.mrb[0].mxu0
      %v170 = vpop.f32.mrb[0].mxu0
      %v171 = vadd.f32 %v83, %v170
      %v172 = vpop.f32.mrb[0].mxu0
      %173 = vmatprep.mubr.bf16.mxu0 0
      %174 = vmatmul.mubr.bf16.gmra.mrb[0].mxu0 %v61
      %v175 = vpop.f32.mrb[0].mxu0
      %v176 = vadd.f32 %v83, %v175
      %v177 = vpop.f32.mrb[0].mxu0
      %v178 = vpop.f32.mrb[0].mxu0
      %v179 = vadd.f32 %v83, %v178
      %v180 = vpop.f32.mrb[0].mxu0
      %181 = vdwg.mxu0
      %v182 = vld [vmem:[%s5] sm:$0xf]
      %v183 = vld [vmem:[%s5 + $0x4] sm:$0xf]
      %v184 = vld [vmem:[%s5 + $0x8] sm:$0xf]
      %v185 = vld [vmem:[%s5 + $0xc] sm:$0xf]
      %v186 = vld [vmem:[%s5 + $0x10] sm:$0xf]
      %v187 = vld [vmem:[%s5 + $0x14] sm:$0xf]
      %v188 = vld [vmem:[%s5 + $0x18] sm:$0xf]
      %v189 = vld [vmem:[%s5 + $0x1c] sm:$0xf]
      %v190 = vld [vmem:[%s5 + $0x20] sm:$0xf]
      %v191 = vld [vmem:[%s5 + $0x24] sm:$0xf]
      %v192 = vld [vmem:[%s5 + $0x28] sm:$0xf]
      %v193 = vld [vmem:[%s5 + $0x2c] sm:$0xf]
      %v194 = vld [vmem:[%s5 + $0x30] sm:$0xf]
      %v195 = vld [vmem:[%s5 + $0x34] sm:$0xf]
      %v196 = vld [vmem:[%s5 + $0x38] sm:$0xf]
      %v197 = vld [vmem:[%s5 + $0x3c] sm:$0xf]
      %v214 = vunpack.c.l.b16 %v182
      %v215 = vunpack.c.l.b16 %v183
      %v216 = vunpack.c.l.b16 %v184
      %v217 = vunpack.c.l.b16 %v185
      %v218 = vunpack.c.l.b16 %v186
      %v219 = vunpack.c.l.b16 %v187
      %v220 = vunpack.c.l.b16 %v188
      %v221 = vunpack.c.l.b16 %v189
      %v222 = vunpack.c.l.b16 %v190
      %v223 = vunpack.c.l.b16 %v191
      %v224 = vunpack.c.l.b16 %v192
      %v225 = vunpack.c.l.b16 %v193
      %v226 = vunpack.c.l.b16 %v194
      %v227 = vunpack.c.l.b16 %v195
      %v228 = vunpack.c.l.b16 %v196
      %v229 = vunpack.c.l.b16 %v197
      %v230 = vpack.c.b16 %v215, %v214
      %v231 = vpack.c.b16 %v217, %v216
      %v232 = vpack.c.b16 %v219, %v218
      %v233 = vpack.c.b16 %v221, %v220
      %v234 = vpack.c.b16 %v223, %v222
      %v235 = vpack.c.b16 %v225, %v224
      %v236 = vpack.c.b16 %v227, %v226
      %v237 = vpack.c.b16 %v229, %v228
      %246 = vmatprep.subr.bf16.mxu0 0
      %247 = vmatpush1.bf16.msra.mxu0 %v230
      %248 = vmatprep.subr.bf16.mxu0 0
      %249 = vmatpush1.bf16.msra.mxu0 %v231
      %250 = vmatprep.subr.bf16.mxu0 0
      %251 = vmatpush1.bf16.msra.mxu0 %v232
      %252 = vmatprep.subr.bf16.mxu0 0
      %253 = vmatpush1.bf16.msra.mxu0 %v233
      %254 = vmatprep.subr.bf16.mxu0 0
      %255 = vmatpush1.bf16.msra.mxu0 %v234
      %256 = vmatprep.subr.bf16.mxu0 0
      %257 = vmatpush1.bf16.msra.mxu0 %v235
      %258 = vmatprep.subr.bf16.mxu0 0
      %259 = vmatpush1.bf16.msra.mxu0 %v236
      %260 = vmatprep.subr.bf16.mxu0 0
      %261 = vmatpush1.bf16.msra.mxu0 %v237
      %262 = vmatprep.subr.bf16.mxu0 0
      %263 = vmatpush1.bf16.msra.mxu0 0
      %264 = vmatprep.subr.bf16.mxu0 0
      %265 = vmatpush1.bf16.msra.mxu0 0
      %266 = vmatprep.subr.bf16.mxu0 0
      %267 = vmatpush1.bf16.msra.mxu0 0
      %268 = vmatprep.subr.bf16.mxu0 0
      %269 = vmatpush1.bf16.msra.mxu0 0
      %270 = vmatprep.subr.bf16.mxu0 0
      %271 = vmatpush1.bf16.msra.mxu0 0
      %272 = vmatprep.subr.bf16.mxu0 0
      %273 = vmatpush1.bf16.msra.mxu0 0
      %274 = vmatprep.subr.bf16.mxu0 0
      %275 = vmatpush1.bf16.msra.mxu0 0
      %276 = vmatprep.subr.bf16.mxu0 0
      %277 = vmatpush1.bf16.msra.mxu0 0
      %278 = vmatprep.mubr.bf16.mxu0 0
      %279 = vmatmul.mubr.bf16.gmra.mrb[0].mxu0 %v60
      %v280 = vpop.f32.mrb[0].mxu0
      %v281 = vadd.f32 0.0, %v280
      %v282 = vpop.f32.mrb[0].mxu0
      %v283 = vpop.f32.mrb[0].mxu0
      %v284 = vadd.f32 0.0, %v283
      %v285 = vpop.f32.mrb[0].mxu0
      %286 = vmatprep.mubr.bf16.mxu0 0
      %287 = vmatmul.mubr.bf16.gmra.mrb[0].mxu0 %v61
      %v288 = vpop.f32.mrb[0].mxu0
      %v289 = vadd.f32 0.0, %v288
      %v290 = vpop.f32.mrb[0].mxu0
      %v291 = vpop.f32.mrb[0].mxu0
      %v292 = vadd.f32 0.0, %v291
      %v293 = vpop.f32.mrb[0].mxu0
      %294 = vdwg.mxu0
      %v295 = vpack.c.bf16 %v171, %v168
      %v296 = vpack.c.bf16 %v179, %v176
      %297 = vst [vmem:[#allocation2] sm:$0xff] %v295
      %298 = vst [vmem:[#allocation2 + $0x8] sm:$0xff] %v296
      %v299 = vpack.c.bf16 %v284, %v281
      %v300 = vpack.c.bf16 %v292, %v289
      %301 = vst [vmem:[#allocation2 + $0x10] sm:$0xff] %v299
      %302 = vst [vmem:[#allocation2 + $0x18] sm:$0xff] %v300
      %303 = vst [vmem:[#allocation3] sm:$0xff] 0.0
      %304 = vst [vmem:[#allocation3 + $0x8] sm:$0xff] 0.0
      %305 = vst [vmem:[#allocation3 + $0x10] sm:$0xff] 0.0
      %306 = vst [vmem:[#allocation3 + $0x18] sm:$0xff] 0.0
    $region61: #{tpu_custom_call.1} parent=1 // pred_fallthru
      _
    %s307 = smul.u32 0, 1024
    %s308 = scalar_lea.vmem %s1, %s307
    %v309 = vld [vmem:[%s308] sm:$0xff]
    %v310 = vld [vmem:[%s308 + $0x8] sm:$0xff]
    %v311 = vld [vmem:[%s308 + $0x10] sm:$0xff]
    %v312 = vld [vmem:[%s308 + $0x18] sm:$0xff]
    %v313 = vld [vmem:[%s308 + $0x20] sm:$0xff]
    %v314 = vld [vmem:[%s308 + $0x28] sm:$0xff]
    %v315 = vld [vmem:[%s308 + $0x30] sm:$0xff]
    %v316 = vld [vmem:[%s308 + $0x38] sm:$0xff]
    %v317 = vld [vmem:[%s308 + $0x40] sm:$0xff]
    %v318 = vld [vmem:[%s308 + $0x48] sm:$0xff]
    %v319 = vld [vmem:[%s308 + $0x50] sm:$0xff]
    %v320 = vld [vmem:[%s308 + $0x58] sm:$0xff]
    %v321 = vld [vmem:[%s308 + $0x60] sm:$0xff]
    %v322 = vld [vmem:[%s308 + $0x68] sm:$0xff]
    %v323 = vld [vmem:[%s308 + $0x70] sm:$0xff]
    %v324 = vld [vmem:[%s308 + $0x78] sm:$0xff]
    %v325 = vld [vmem:[%s308 + $0x80] sm:$0xff]
    %v326 = vld [vmem:[%s308 + $0x88] sm:$0xff]
    %v327 = vld [vmem:[%s308 + $0x90] sm:$0xff]
    %v328 = vld [vmem:[%s308 + $0x98] sm:$0xff]
    %v329 = vld [vmem:[%s308 + $0xa0] sm:$0xff]
    %v330 = vld [vmem:[%s308 + $0xa8] sm:$0xff]
    %v331 = vld [vmem:[%s308 + $0xb0] sm:$0xff]
    %v332 = vld [vmem:[%s308 + $0xb8] sm:$0xff]
    %v333 = vld [vmem:[%s308 + $0xc0] sm:$0xff]
    %v334 = vld [vmem:[%s308 + $0xc8] sm:$0xff]
    %v335 = vld [vmem:[%s308 + $0xd0] sm:$0xff]
    %v336 = vld [vmem:[%s308 + $0xd8] sm:$0xff]
    %v337 = vld [vmem:[%s308 + $0xe0] sm:$0xff]
    %v338 = vld [vmem:[%s308 + $0xe8] sm:$0xff]
    %v339 = vld [vmem:[%s308 + $0xf0] sm:$0xff]
    %v340 = vld [vmem:[%s308 + $0xf8] sm:$0xff]
    %v341 = vld [vmem:[%s308 + $0x100] sm:$0xff]
    %v342 = vld [vmem:[%s308 + $0x108] sm:$0xff]
    %v343 = vld [vmem:[%s308 + $0x110] sm:$0xff]
    %v344 = vld [vmem:[%s308 + $0x118] sm:$0xff]
    %v345 = vld [vmem:[%s308 + $0x120] sm:$0xff]
    %v346 = vld [vmem:[%s308 + $0x128] sm:$0xff]
    %v347 = vld [vmem:[%s308 + $0x130] sm:$0xff]
    %v348 = vld [vmem:[%s308 + $0x138] sm:$0xff]
    %v349 = vld [vmem:[%s308 + $0x140] sm:$0xff]
    %v350 = vld [vmem:[%s308 + $0x148] sm:$0xff]
    %v351 = vld [vmem:[%s308 + $0x150] sm:$0xff]
    %v352 = vld [vmem:[%s308 + $0x158] sm:$0xff]
    %v353 = vld [vmem:[%s308 + $0x160] sm:$0xff]
    %v354 = vld [vmem:[%s308 + $0x168] sm:$0xff]
    %v355 = vld [vmem:[%s308 + $0x170] sm:$0xff]
    %v356 = vld [vmem:[%s308 + $0x178] sm:$0xff]
    %v357 = vld [vmem:[%s308 + $0x180] sm:$0xff]
    %v358 = vld [vmem:[%s308 + $0x188] sm:$0xff]
    %v359 = vld [vmem:[%s308 + $0x190] sm:$0xff]
    %v360 = vld [vmem:[%s308 + $0x198] sm:$0xff]
    %v361 = vld [vmem:[%s308 + $0x1a0] sm:$0xff]
    %v362 = vld [vmem:[%s308 + $0x1a8] sm:$0xff]
    %v363 = vld [vmem:[%s308 + $0x1b0] sm:$0xff]
    %v364 = vld [vmem:[%s308 + $0x1b8] sm:$0xff]
    %v365 = vld [vmem:[%s308 + $0x1c0] sm:$0xff]
    %v366 = vld [vmem:[%s308 + $0x1c8] sm:$0xff]
    %v367 = vld [vmem:[%s308 + $0x1d0] sm:$0xff]
    %v368 = vld [vmem:[%s308 + $0x1d8] sm:$0xff]
    %v369 = vld [vmem:[%s308 + $0x1e0] sm:$0xff]
    %v370 = vld [vmem:[%s308 + $0x1e8] sm:$0xff]
    %v371 = vld [vmem:[%s308 + $0x1f0] sm:$0xff]
    %v372 = vld [vmem:[%s308 + $0x1f8] sm:$0xff]
    %v373 = vld [vmem:[%s308 + $0x200] sm:$0xff]
    %v374 = vld [vmem:[%s308 + $0x208] sm:$0xff]
    %v375 = vld [vmem:[%s308 + $0x210] sm:$0xff]
    %v376 = vld [vmem:[%s308 + $0x218] sm:$0xff]
    %v377 = vld [vmem:[%s308 + $0x220] sm:$0xff]
    %v378 = vld [vmem:[%s308 + $0x228] sm:$0xff]
    %v379 = vld [vmem:[%s308 + $0x230] sm:$0xff]
    %v380 = vld [vmem:[%s308 + $0x238] sm:$0xff]
    %v381 = vld [vmem:[%s308 + $0x240] sm:$0xff]
    %v382 = vld [vmem:[%s308 + $0x248] sm:$0xff]
    %v383 = vld [vmem:[%s308 + $0x250] sm:$0xff]
    %v384 = vld [vmem:[%s308 + $0x258] sm:$0xff]
    %v385 = vld [vmem:[%s308 + $0x260] sm:$0xff]
    %v386 = vld [vmem:[%s308 + $0x268] sm:$0xff]
    %v387 = vld [vmem:[%s308 + $0x270] sm:$0xff]
    %v388 = vld [vmem:[%s308 + $0x278] sm:$0xff]
    %v389 = vld [vmem:[%s308 + $0x280] sm:$0xff]
    %v390 = vld [vmem:[%s308 + $0x288] sm:$0xff]
    %v391 = vld [vmem:[%s308 + $0x290] sm:$0xff]
    %v392 = vld [vmem:[%s308 + $0x298] sm:$0xff]
    %v393 = vld [vmem:[%s308 + $0x2a0] sm:$0xff]
    %v394 = vld [vmem:[%s308 + $0x2a8] sm:$0xff]
    %v395 = vld [vmem:[%s308 + $0x2b0] sm:$0xff]
    %v396 = vld [vmem:[%s308 + $0x2b8] sm:$0xff]
    %v397 = vld [vmem:[%s308 + $0x2c0] sm:$0xff]
    %v398 = vld [vmem:[%s308 + $0x2c8] sm:$0xff]
    %v399 = vld [vmem:[%s308 + $0x2d0] sm:$0xff]
    %v400 = vld [vmem:[%s308 + $0x2d8] sm:$0xff]
    %v401 = vld [vmem:[%s308 + $0x2e0] sm:$0xff]
    %v402 = vld [vmem:[%s308 + $0x2e8] sm:$0xff]
    %v403 = vld [vmem:[%s308 + $0x2f0] sm:$0xff]
    %v404 = vld [vmem:[%s308 + $0x2f8] sm:$0xff]
    %v405 = vld [vmem:[%s308 + $0x300] sm:$0xff]
    %v406 = vld [vmem:[%s308 + $0x308] sm:$0xff]
    %v407 = vld [vmem:[%s308 + $0x310] sm:$0xff]
    %v408 = vld [vmem:[%s308 + $0x318] sm:$0xff]
    %v409 = vld [vmem:[%s308 + $0x320] sm:$0xff]
    %v410 = vld [vmem:[%s308 + $0x328] sm:$0xff]
    %v411 = vld [vmem:[%s308 + $0x330] sm:$0xff]
    %v412 = vld [vmem:[%s308 + $0x338] sm:$0xff]
    %v413 = vld [vmem:[%s308 + $0x340] sm:$0xff]
    %v414 = vld [vmem:[%s308 + $0x348] sm:$0xff]
    %v415 = vld [vmem:[%s308 + $0x350] sm:$0xff]
    %v416 = vld [vmem:[%s308 + $0x358] sm:$0xff]
    %v417 = vld [vmem:[%s308 + $0x360] sm:$0xff]
    %v418 = vld [vmem:[%s308 + $0x368] sm:$0xff]
    %v419 = vld [vmem:[%s308 + $0x370] sm:$0xff]
    %v420 = vld [vmem:[%s308 + $0x378] sm:$0xff]
    %v421 = vld [vmem:[%s308 + $0x380] sm:$0xff]
    %v422 = vld [vmem:[%s308 + $0x388] sm:$0xff]
    %v423 = vld [vmem:[%s308 + $0x390] sm:$0xff]
    %v424 = vld [vmem:[%s308 + $0x398] sm:$0xff]
    %v425 = vld [vmem:[%s308 + $0x3a0] sm:$0xff]
    %v426 = vld [vmem:[%s308 + $0x3a8] sm:$0xff]
    %v427 = vld [vmem:[%s308 + $0x3b0] sm:$0xff]
    %v428 = vld [vmem:[%s308 + $0x3b8] sm:$0xff]
    %v429 = vld [vmem:[%s308 + $0x3c0] sm:$0xff]
    %v430 = vld [vmem:[%s308 + $0x3c8] sm:$0xff]
    %v431 = vld [vmem:[%s308 + $0x3d0] sm:$0xff]
    %v432 = vld [vmem:[%s308 + $0x3d8] sm:$0xff]
    %v433 = vld [vmem:[%s308 + $0x3e0] sm:$0xff]
    %v434 = vld [vmem:[%s308 + $0x3e8] sm:$0xff]
    %v435 = vld [vmem:[%s308 + $0x3f0] sm:$0xff]
    %v436 = vld [vmem:[%s308 + $0x3f8] sm:$0xff]
    %s437 = scalar_lea.vmem %s2, %s307
    %v438 = vld [vmem:[%s437] sm:$0xff]
    %v439 = vld [vmem:[%s437 + $0x8] sm:$0xff]
    %v440 = vld [vmem:[%s437 + $0x10] sm:$0xff]
    %v441 = vld [vmem:[%s437 + $0x18] sm:$0xff]
    %v442 = vld [vmem:[%s437 + $0x20] sm:$0xff]
    %v443 = vld [vmem:[%s437 + $0x28] sm:$0xff]
    %v444 = vld [vmem:[%s437 + $0x30] sm:$0xff]
    %v445 = vld [vmem:[%s437 + $0x38] sm:$0xff]
    %v446 = vld [vmem:[%s437 + $0x40] sm:$0xff]
    %v447 = vld [vmem:[%s437 + $0x48] sm:$0xff]
    %v448 = vld [vmem:[%s437 + $0x50] sm:$0xff]
    %v449 = vld [vmem:[%s437 + $0x58] sm:$0xff]
    %v450 = vld [vmem:[%s437 + $0x60] sm:$0xff]
    %v451 = vld [vmem:[%s437 + $0x68] sm:$0xff]
    %v452 = vld [vmem:[%s437 + $0x70] sm:$0xff]
    %v453 = vld [vmem:[%s437 + $0x78] sm:$0xff]
    %v454 = vld [vmem:[%s437 + $0x80] sm:$0xff]
    %v455 = vld [vmem:[%s437 + $0x88] sm:$0xff]
    %v456 = vld [vmem:[%s437 + $0x90] sm:$0xff]
    %v457 = vld [vmem:[%s437 + $0x98] sm:$0xff]
    %v458 = vld [vmem:[%s437 + $0xa0] sm:$0xff]
    %v459 = vld [vmem:[%s437 + $0xa8] sm:$0xff]
    %v460 = vld [vmem:[%s437 + $0xb0] sm:$0xff]
    %v461 = vld [vmem:[%s437 + $0xb8] sm:$0xff]
    %v462 = vld [vmem:[%s437 + $0xc0] sm:$0xff]
    %v463 = vld [vmem:[%s437 + $0xc8] sm:$0xff]
    %v464 = vld [vmem:[%s437 + $0xd0] sm:$0xff]
    %v465 = vld [vmem:[%s437 + $0xd8] sm:$0xff]
    %v466 = vld [vmem:[%s437 + $0xe0] sm:$0xff]
    %v467 = vld [vmem:[%s437 + $0xe8] sm:$0xff]
    %v468 = vld [vmem:[%s437 + $0xf0] sm:$0xff]
    %v469 = vld [vmem:[%s437 + $0xf8] sm:$0xff]
    %v470 = vld [vmem:[%s437 + $0x100] sm:$0xff]
    %v471 = vld [vmem:[%s437 + $0x108] sm:$0xff]
    %v472 = vld [vmem:[%s437 + $0x110] sm:$0xff]
    %v473 = vld [vmem:[%s437 + $0x118] sm:$0xff]
    %v474 = vld [vmem:[%s437 + $0x120] sm:$0xff]
    %v475 = vld [vmem:[%s437 + $0x128] sm:$0xff]
    %v476 = vld [vmem:[%s437 + $0x130] sm:$0xff]
    %v477 = vld [vmem:[%s437 + $0x138] sm:$0xff]
    %v478 = vld [vmem:[%s437 + $0x140] sm:$0xff]
    %v479 = vld [vmem:[%s437 + $0x148] sm:$0xff]
    %v480 = vld [vmem:[%s437 + $0x150] sm:$0xff]
    %v481 = vld [vmem:[%s437 + $0x158] sm:$0xff]
    %v482 = vld [vmem:[%s437 + $0x160] sm:$0xff]
    %v483 = vld [vmem:[%s437 + $0x168] sm:$0xff]
    %v484 = vld [vmem:[%s437 + $0x170] sm:$0xff]
    %v485 = vld [vmem:[%s437 + $0x178] sm:$0xff]
    %v486 = vld [vmem:[%s437 + $0x180] sm:$0xff]
    %v487 = vld [vmem:[%s437 + $0x188] sm:$0xff]
    %v488 = vld [vmem:[%s437 + $0x190] sm:$0xff]
    %v489 = vld [vmem:[%s437 + $0x198] sm:$0xff]
    %v490 = vld [vmem:[%s437 + $0x1a0] sm:$0xff]
    %v491 = vld [vmem:[%s437 + $0x1a8] sm:$0xff]
    %v492 = vld [vmem:[%s437 + $0x1b0] sm:$0xff]
    %v493 = vld [vmem:[%s437 + $0x1b8] sm:$0xff]
    %v494 = vld [vmem:[%s437 + $0x1c0] sm:$0xff]
    %v495 = vld [vmem:[%s437 + $0x1c8] sm:$0xff]
    %v496 = vld [vmem:[%s437 + $0x1d0] sm:$0xff]
    %v497 = vld [vmem:[%s437 + $0x1d8] sm:$0xff]
    %v498 = vld [vmem:[%s437 + $0x1e0] sm:$0xff]
    %v499 = vld [vmem:[%s437 + $0x1e8] sm:$0xff]
    %v500 = vld [vmem:[%s437 + $0x1f0] sm:$0xff]
    %v501 = vld [vmem:[%s437 + $0x1f8] sm:$0xff]
    %v502 = vld [vmem:[%s437 + $0x200] sm:$0xff]
    %v503 = vld [vmem:[%s437 + $0x208] sm:$0xff]
    %v504 = vld [vmem:[%s437 + $0x210] sm:$0xff]
    %v505 = vld [vmem:[%s437 + $0x218] sm:$0xff]
    %v506 = vld [vmem:[%s437 + $0x220] sm:$0xff]
    %v507 = vld [vmem:[%s437 + $0x228] sm:$0xff]
    %v508 = vld [vmem:[%s437 + $0x230] sm:$0xff]
    %v509 = vld [vmem:[%s437 + $0x238] sm:$0xff]
    %v510 = vld [vmem:[%s437 + $0x240] sm:$0xff]
    %v511 = vld [vmem:[%s437 + $0x248] sm:$0xff]
    %v512 = vld [vmem:[%s437 + $0x250] sm:$0xff]
    %v513 = vld [vmem:[%s437 + $0x258] sm:$0xff]
    %v514 = vld [vmem:[%s437 + $0x260] sm:$0xff]
    %v515 = vld [vmem:[%s437 + $0x268] sm:$0xff]
    %v516 = vld [vmem:[%s437 + $0x270] sm:$0xff]
    %v517 = vld [vmem:[%s437 + $0x278] sm:$0xff]
    %v518 = vld [vmem:[%s437 + $0x280] sm:$0xff]
    %v519 = vld [vmem:[%s437 + $0x288] sm:$0xff]
    %v520 = vld [vmem:[%s437 + $0x290] sm:$0xff]
    %v521 = vld [vmem:[%s437 + $0x298] sm:$0xff]
    %v522 = vld [vmem:[%s437 + $0x2a0] sm:$0xff]
    %v523 = vld [vmem:[%s437 + $0x2a8] sm:$0xff]
    %v524 = vld [vmem:[%s437 + $0x2b0] sm:$0xff]
    %v525 = vld [vmem:[%s437 + $0x2b8] sm:$0xff]
    %v526 = vld [vmem:[%s437 + $0x2c0] sm:$0xff]
    %v527 = vld [vmem:[%s437 + $0x2c8] sm:$0xff]
    %v528 = vld [vmem:[%s437 + $0x2d0] sm:$0xff]
    %v529 = vld [vmem:[%s437 + $0x2d8] sm:$0xff]
    %v530 = vld [vmem:[%s437 + $0x2e0] sm:$0xff]
    %v531 = vld [vmem:[%s437 + $0x2e8] sm:$0xff]
    %v532 = vld [vmem:[%s437 + $0x2f0] sm:$0xff]
    %v533 = vld [vmem:[%s437 + $0x2f8] sm:$0xff]
    %v534 = vld [vmem:[%s437 + $0x300] sm:$0xff]
    %v535 = vld [vmem:[%s437 + $0x308] sm:$0xff]
    %v536 = vld [vmem:[%s437 + $0x310] sm:$0xff]
    %v537 = vld [vmem:[%s437 + $0x318] sm:$0xff]
    %v538 = vld [vmem:[%s437 + $0x320] sm:$0xff]
    %v539 = vld [vmem:[%s437 + $0x328] sm:$0xff]
    %v540 = vld [vmem:[%s437 + $0x330] sm:$0xff]
    %v541 = vld [vmem:[%s437 + $0x338] sm:$0xff]
    %v542 = vld [vmem:[%s437 + $0x340] sm:$0xff]
    %v543 = vld [vmem:[%s437 + $0x348] sm:$0xff]
    %v544 = vld [vmem:[%s437 + $0x350] sm:$0xff]
    %v545 = vld [vmem:[%s437 + $0x358] sm:$0xff]
    %v546 = vld [vmem:[%s437 + $0x360] sm:$0xff]
    %v547 = vld [vmem:[%s437 + $0x368] sm:$0xff]
    %v548 = vld [vmem:[%s437 + $0x370] sm:$0xff]
    %v549 = vld [vmem:[%s437 + $0x378] sm:$0xff]
    %v550 = vld [vmem:[%s437 + $0x380] sm:$0xff]
    %v551 = vld [vmem:[%s437 + $0x388] sm:$0xff]
    %v552 = vld [vmem:[%s437 + $0x390] sm:$0xff]
    %v553 = vld [vmem:[%s437 + $0x398] sm:$0xff]
    %v554 = vld [vmem:[%s437 + $0x3a0] sm:$0xff]
    %v555 = vld [vmem:[%s437 + $0x3a8] sm:$0xff]
    %v556 = vld [vmem:[%s437 + $0x3b0] sm:$0xff]
    %v557 = vld [vmem:[%s437 + $0x3b8] sm:$0xff]
    %v558 = vld [vmem:[%s437 + $0x3c0] sm:$0xff]
    %v559 = vld [vmem:[%s437 + $0x3c8] sm:$0xff]
    %v560 = vld [vmem:[%s437 + $0x3d0] sm:$0xff]
    %v561 = vld [vmem:[%s437 + $0x3d8] sm:$0xff]
    %v562 = vld [vmem:[%s437 + $0x3e0] sm:$0xff]
    %v563 = vld [vmem:[%s437 + $0x3e8] sm:$0xff]
    %v564 = vld [vmem:[%s437 + $0x3f0] sm:$0xff]
    %v565 = vld [vmem:[%s437 + $0x3f8] sm:$0xff]
    %v566 = vadd.s32 %v438, 32
    %v567 = vadd.s32 %v439, 32
    %v568 = vadd.s32 %v440, 32
    %v569 = vadd.s32 %v441, 32
    %v570 = vadd.s32 %v442, 32
    %v571 = vadd.s32 %v443, 32
    %v572 = vadd.s32 %v444, 32
    %v573 = vadd.s32 %v445, 32
    %v574 = vadd.s32 %v446, 32
    %v575 = vadd.s32 %v447, 32
    %v576 = vadd.s32 %v448, 32
    %v577 = vadd.s32 %v449, 32
    %v578 = vadd.s32 %v450, 32
    %v579 = vadd.s32 %v451, 32
    %v580 = vadd.s32 %v452, 32
    %v581 = vadd.s32 %v453, 32
    %v582 = vadd.s32 %v454, 32
    %v583 = vadd.s32 %v455, 32
    %v584 = vadd.s32 %v456, 32
    %v585 = vadd.s32 %v457, 32
    %v586 = vadd.s32 %v458, 32
    %v587 = vadd.s32 %v459, 32
    %v588 = vadd.s32 %v460, 32
    %v589 = vadd.s32 %v461, 32
    %v590 = vadd.s32 %v462, 32
    %v591 = vadd.s32 %v463, 32
    %v592 = vadd.s32 %v464, 32
    %v593 = vadd.s32 %v465, 32
    %v594 = vadd.s32 %v466, 32
    %v595 = vadd.s32 %v467, 32
    %v596 = vadd.s32 %v468, 32
    %v597 = vadd.s32 %v469, 32
    %v598 = vadd.s32 %v470, 32
    %v599 = vadd.s32 %v471, 32
    %v600 = vadd.s32 %v472, 32
    %v601 = vadd.s32 %v473, 32
    %v602 = vadd.s32 %v474, 32
    %v603 = vadd.s32 %v475, 32
    %v604 = vadd.s32 %v476, 32
    %v605 = vadd.s32 %v477, 32
    %v606 = vadd.s32 %v478, 32
    %v607 = vadd.s32 %v479, 32
    %v608 = vadd.s32 %v480, 32
    %v609 = vadd.s32 %v481, 32
    %v610 = vadd.s32 %v482, 32
    %v611 = vadd.s32 %v483, 32
    %v612 = vadd.s32 %v484, 32
    %v613 = vadd.s32 %v485, 32
    %v614 = vadd.s32 %v486, 32
    %v615 = vadd.s32 %v487, 32
    %v616 = vadd.s32 %v488, 32
    %v617 = vadd.s32 %v489, 32
    %v618 = vadd.s32 %v490, 32
    %v619 = vadd.s32 %v491, 32
    %v620 = vadd.s32 %v492, 32
    %v621 = vadd.s32 %v493, 32
    %v622 = vadd.s32 %v494, 32
    %v623 = vadd.s32 %v495, 32
    %v624 = vadd.s32 %v496, 32
    %v625 = vadd.s32 %v497, 32
    %v626 = vadd.s32 %v498, 32
    %v627 = vadd.s32 %v499, 32
    %v628 = vadd.s32 %v500, 32
    %v629 = vadd.s32 %v501, 32
    %v630 = vadd.s32 %v502, 32
    %v631 = vadd.s32 %v503, 32
    %v632 = vadd.s32 %v504, 32
    %v633 = vadd.s32 %v505, 32
    %v634 = vadd.s32 %v506, 32
    %v635 = vadd.s32 %v507, 32
    %v636 = vadd.s32 %v508, 32
    %v637 = vadd.s32 %v509, 32
    %v638 = vadd.s32 %v510, 32
    %v639 = vadd.s32 %v511, 32
    %v640 = vadd.s32 %v512, 32
    %v641 = vadd.s32 %v513, 32
    %v642 = vadd.s32 %v514, 32
    %v643 = vadd.s32 %v515, 32
    %v644 = vadd.s32 %v516, 32
    %v645 = vadd.s32 %v517, 32
    %v646 = vadd.s32 %v518, 32
    %v647 = vadd.s32 %v519, 32
    %v648 = vadd.s32 %v520, 32
    %v649 = vadd.s32 %v521, 32
    %v650 = vadd.s32 %v522, 32
    %v651 = vadd.s32 %v523, 32
    %v652 = vadd.s32 %v524, 32
    %v653 = vadd.s32 %v525, 32
    %v654 = vadd.s32 %v526, 32
    %v655 = vadd.s32 %v527, 32
    %v656 = vadd.s32 %v528, 32
    %v657 = vadd.s32 %v529, 32
    %v658 = vadd.s32 %v530, 32
    %v659 = vadd.s32 %v531, 32
    %v660 = vadd.s32 %v532, 32
    %v661 = vadd.s32 %v533, 32
    %v662 = vadd.s32 %v534, 32
    %v663 = vadd.s32 %v535, 32
    %v664 = vadd.s32 %v536, 32
    %v665 = vadd.s32 %v537, 32
    %v666 = vadd.s32 %v538, 32
    %v667 = vadd.s32 %v539, 32
    %v668 = vadd.s32 %v540, 32
    %v669 = vadd.s32 %v541, 32
    %v670 = vadd.s32 %v542, 32
    %v671 = vadd.s32 %v543, 32
    %v672 = vadd.s32 %v544, 32
    %v673 = vadd.s32 %v545, 32
    %v674 = vadd.s32 %v546, 32
    %v675 = vadd.s32 %v547, 32
    %v676 = vadd.s32 %v548, 32
    %v677 = vadd.s32 %v549, 32
    %v678 = vadd.s32 %v550, 32
    %v679 = vadd.s32 %v551, 32
    %v680 = vadd.s32 %v552, 32
    %v681 = vadd.s32 %v553, 32
    %v682 = vadd.s32 %v554, 32
    %v683 = vadd.s32 %v555, 32
    %v684 = vadd.s32 %v556, 32
    %v685 = vadd.s32 %v557, 32
    %v686 = vadd.s32 %v558, 32
    %v687 = vadd.s32 %v559, 32
    %v688 = vadd.s32 %v560, 32
    %v689 = vadd.s32 %v561, 32
    %v690 = vadd.s32 %v562, 32
    %v691 = vadd.s32 %v563, 32
    %v692 = vadd.s32 %v564, 32
    %v693 = vadd.s32 %v565, 32
    %s694 = smul.u32 0, 8
    %s695 = scalar_lea.vmem %s0, %s694
    %v696 = vld [vmem:[%s695] sm:$0xff]
    %v697 = vlaneseq
    %v698 = vand.u32 %v697, 127
    %699 = vset.pattern.permute.xlu0 0
    %700 = vperm.xlu0 %699, %v309
    %v701 = vpop.permute.xlu0 %700
    %702 = vset.pattern.permute.xlu0 0
    %703 = vperm.xlu0 %702, %v310
    %v704 = vpop.permute.xlu0 %703
    %705 = vset.pattern.permute.xlu0 0
    %706 = vperm.xlu0 %705, %v311
    %v707 = vpop.permute.xlu0 %706
    %708 = vset.pattern.permute.xlu0 0
    %709 = vperm.xlu0 %708, %v312
    %v710 = vpop.permute.xlu0 %709
    %711 = vset.pattern.permute.xlu0 0
    %712 = vperm.xlu0 %711, %v313
    %v713 = vpop.permute.xlu0 %712
    %714 = vset.pattern.permute.xlu0 0
    %715 = vperm.xlu0 %714, %v314
    %v716 = vpop.permute.xlu0 %715
    %717 = vset.pattern.permute.xlu0 0
    %718 = vperm.xlu0 %717, %v315
    %v719 = vpop.permute.xlu0 %718
    %720 = vset.pattern.permute.xlu0 0
    %721 = vperm.xlu0 %720, %v316
    %v722 = vpop.permute.xlu0 %721
    %723 = vset.pattern.permute.xlu0 0
    %724 = vperm.xlu0 %723, %v317
    %v725 = vpop.permute.xlu0 %724
    %726 = vset.pattern.permute.xlu0 0
    %727 = vperm.xlu0 %726, %v318
    %v728 = vpop.permute.xlu0 %727
    %729 = vset.pattern.permute.xlu0 0
    %730 = vperm.xlu0 %729, %v319
    %v731 = vpop.permute.xlu0 %730
    %732 = vset.pattern.permute.xlu0 0
    %733 = vperm.xlu0 %732, %v320
    %v734 = vpop.permute.xlu0 %733
    %735 = vset.pattern.permute.xlu0 0
    %736 = vperm.xlu0 %735, %v321
    %v737 = vpop.permute.xlu0 %736
    %738 = vset.pattern.permute.xlu0 0
    %739 = vperm.xlu0 %738, %v322
    %v740 = vpop.permute.xlu0 %739
    %741 = vset.pattern.permute.xlu0 0
    %742 = vperm.xlu0 %741, %v323
    %v743 = vpop.permute.xlu0 %742
    %744 = vset.pattern.permute.xlu0 0
    %745 = vperm.xlu0 %744, %v324
    %v746 = vpop.permute.xlu0 %745
    %747 = vset.pattern.permute.xlu0 0
    %748 = vperm.xlu0 %747, %v325
    %v749 = vpop.permute.xlu0 %748
    %750 = vset.pattern.permute.xlu0 0
    %751 = vperm.xlu0 %750, %v326
    %v752 = vpop.permute.xlu0 %751
    %753 = vset.pattern.permute.xlu0 0
    %754 = vperm.xlu0 %753, %v327
    %v755 = vpop.permute.xlu0 %754
    %756 = vset.pattern.permute.xlu0 0
    %757 = vperm.xlu0 %756, %v328
    %v758 = vpop.permute.xlu0 %757
    %759 = vset.pattern.permute.xlu0 0
    %760 = vperm.xlu0 %759, %v329
    %v761 = vpop.permute.xlu0 %760
    %762 = vset.pattern.permute.xlu0 0
    %763 = vperm.xlu0 %762, %v330
    %v764 = vpop.permute.xlu0 %763
    %765 = vset.pattern.permute.xlu0 0
    %766 = vperm.xlu0 %765, %v331
    %v767 = vpop.permute.xlu0 %766
    %768 = vset.pattern.permute.xlu0 0
    %769 = vperm.xlu0 %768, %v332
    %v770 = vpop.permute.xlu0 %769
    %771 = vset.pattern.permute.xlu0 0
    %772 = vperm.xlu0 %771, %v333
    %v773 = vpop.permute.xlu0 %772
    %774 = vset.pattern.permute.xlu0 0
    %775 = vperm.xlu0 %774, %v334
    %v776 = vpop.permute.xlu0 %775
    %777 = vset.pattern.permute.xlu0 0
    %778 = vperm.xlu0 %777, %v335
    %v779 = vpop.permute.xlu0 %778
    %780 = vset.pattern.permute.xlu0 0
    %781 = vperm.xlu0 %780, %v336
    %v782 = vpop.permute.xlu0 %781
    %783 = vset.pattern.permute.xlu0 0
    %784 = vperm.xlu0 %783, %v337
    %v785 = vpop.permute.xlu0 %784
    %786 = vset.pattern.permute.xlu0 0
    %787 = vperm.xlu0 %786, %v338
    %v788 = vpop.permute.xlu0 %787
    %789 = vset.pattern.permute.xlu0 0
    %790 = vperm.xlu0 %789, %v339
    %v791 = vpop.permute.xlu0 %790
    %792 = vset.pattern.permute.xlu0 0
    %793 = vperm.xlu0 %792, %v340
    %v794 = vpop.permute.xlu0 %793
    %795 = vset.pattern.permute.xlu0 0
    %796 = vperm.xlu0 %795, %v341
    %v797 = vpop.permute.xlu0 %796
    %798 = vset.pattern.permute.xlu0 0
    %799 = vperm.xlu0 %798, %v342
    %v800 = vpop.permute.xlu0 %799
    %801 = vset.pattern.permute.xlu0 0
    %802 = vperm.xlu0 %801, %v343
    %v803 = vpop.permute.xlu0 %802
    %804 = vset.pattern.permute.xlu0 0
    %805 = vperm.xlu0 %804, %v344
    %v806 = vpop.permute.xlu0 %805
    %807 = vset.pattern.permute.xlu0 0
    %808 = vperm.xlu0 %807, %v345
    %v809 = vpop.permute.xlu0 %808
    %810 = vset.pattern.permute.xlu0 0
    %811 = vperm.xlu0 %810, %v346
    %v812 = vpop.permute.xlu0 %811
    %813 = vset.pattern.permute.xlu0 0
    %814 = vperm.xlu0 %813, %v347
    %v815 = vpop.permute.xlu0 %814
    %816 = vset.pattern.permute.xlu0 0
    %817 = vperm.xlu0 %816, %v348
    %v818 = vpop.permute.xlu0 %817
    %819 = vset.pattern.permute.xlu0 0
    %820 = vperm.xlu0 %819, %v349
    %v821 = vpop.permute.xlu0 %820
    %822 = vset.pattern.permute.xlu0 0
    %823 = vperm.xlu0 %822, %v350
    %v824 = vpop.permute.xlu0 %823
    %825 = vset.pattern.permute.xlu0 0
    %826 = vperm.xlu0 %825, %v351
    %v827 = vpop.permute.xlu0 %826
    %828 = vset.pattern.permute.xlu0 0
    %829 = vperm.xlu0 %828, %v352
    %v830 = vpop.permute.xlu0 %829
    %831 = vset.pattern.permute.xlu0 0
    %832 = vperm.xlu0 %831, %v353
    %v833 = vpop.permute.xlu0 %832
    %834 = vset.pattern.permute.xlu0 0
    %835 = vperm.xlu0 %834, %v354
    %v836 = vpop.permute.xlu0 %835
    %837 = vset.pattern.permute.xlu0 0
    %838 = vperm.xlu0 %837, %v355
    %v839 = vpop.permute.xlu0 %838
    %840 = vset.pattern.permute.xlu0 0
    %841 = vperm.xlu0 %840, %v356
    %v842 = vpop.permute.xlu0 %841
    %843 = vset.pattern.permute.xlu0 0
    %844 = vperm.xlu0 %843, %v357
    %v845 = vpop.permute.xlu0 %844
    %846 = vset.pattern.permute.xlu0 0
    %847 = vperm.xlu0 %846, %v358
    %v848 = vpop.permute.xlu0 %847
    %849 = vset.pattern.permute.xlu0 0
    %850 = vperm.xlu0 %849, %v359
    %v851 = vpop.permute.xlu0 %850
    %852 = vset.pattern.permute.xlu0 0
    %853 = vperm.xlu0 %852, %v360
    %v854 = vpop.permute.xlu0 %853
    %855 = vset.pattern.permute.xlu0 0
    %856 = vperm.xlu0 %855, %v361
    %v857 = vpop.permute.xlu0 %856
    %858 = vset.pattern.permute.xlu0 0
    %859 = vperm.xlu0 %858, %v362
    %v860 = vpop.permute.xlu0 %859
    %861 = vset.pattern.permute.xlu0 0
    %862 = vperm.xlu0 %861, %v363
    %v863 = vpop.permute.xlu0 %862
    %864 = vset.pattern.permute.xlu0 0
    %865 = vperm.xlu0 %864, %v364
    %v866 = vpop.permute.xlu0 %865
    %867 = vset.pattern.permute.xlu0 0
    %868 = vperm.xlu0 %867, %v365
    %v869 = vpop.permute.xlu0 %868
    %870 = vset.pattern.permute.xlu0 0
    %871 = vperm.xlu0 %870, %v366
    %v872 = vpop.permute.xlu0 %871
    %873 = vset.pattern.permute.xlu0 0
    %874 = vperm.xlu0 %873, %v367
    %v875 = vpop.permute.xlu0 %874
    %876 = vset.pattern.permute.xlu0 0
    %877 = vperm.xlu0 %876, %v368
    %v878 = vpop.permute.xlu0 %877
    %879 = vset.pattern.permute.xlu0 0
    %880 = vperm.xlu0 %879, %v369
    %v881 = vpop.permute.xlu0 %880
    %882 = vset.pattern.permute.xlu0 0
    %883 = vperm.xlu0 %882, %v370
    %v884 = vpop.permute.xlu0 %883
    %885 = vset.pattern.permute.xlu0 0
    %886 = vperm.xlu0 %885, %v371
    %v887 = vpop.permute.xlu0 %886
    %888 = vset.pattern.permute.xlu0 0
    %889 = vperm.xlu0 %888, %v372
    %v890 = vpop.permute.xlu0 %889
    %891 = vset.pattern.permute.xlu0 0
    %892 = vperm.xlu0 %891, %v373
    %v893 = vpop.permute.xlu0 %892
    %894 = vset.pattern.permute.xlu0 0
    %895 = vperm.xlu0 %894, %v374
    %v896 = vpop.permute.xlu0 %895
    %897 = vset.pattern.permute.xlu0 0
    %898 = vperm.xlu0 %897, %v375
    %v899 = vpop.permute.xlu0 %898
    %900 = vset.pattern.permute.xlu0 0
    %901 = vperm.xlu0 %900, %v376
    %v902 = vpop.permute.xlu0 %901
    %903 = vset.pattern.permute.xlu0 0
    %904 = vperm.xlu0 %903, %v377
    %v905 = vpop.permute.xlu0 %904
    %906 = vset.pattern.permute.xlu0 0
    %907 = vperm.xlu0 %906, %v378
    %v908 = vpop.permute.xlu0 %907
    %909 = vset.pattern.permute.xlu0 0
    %910 = vperm.xlu0 %909, %v379
    %v911 = vpop.permute.xlu0 %910
    %912 = vset.pattern.permute.xlu0 0
    %913 = vperm.xlu0 %912, %v380
    %v914 = vpop.permute.xlu0 %913
    %915 = vset.pattern.permute.xlu0 0
    %916 = vperm.xlu0 %915, %v381
    %v917 = vpop.permute.xlu0 %916
    %918 = vset.pattern.permute.xlu0 0
    %919 = vperm.xlu0 %918, %v382
    %v920 = vpop.permute.xlu0 %919
    %921 = vset.pattern.permute.xlu0 0
    %922 = vperm.xlu0 %921, %v383
    %v923 = vpop.permute.xlu0 %922
    %924 = vset.pattern.permute.xlu0 0
    %925 = vperm.xlu0 %924, %v384
    %v926 = vpop.permute.xlu0 %925
    %927 = vset.pattern.permute.xlu0 0
    %928 = vperm.xlu0 %927, %v385
    %v929 = vpop.permute.xlu0 %928
    %930 = vset.pattern.permute.xlu0 0
    %931 = vperm.xlu0 %930, %v386
    %v932 = vpop.permute.xlu0 %931
    %933 = vset.pattern.permute.xlu0 0
    %934 = vperm.xlu0 %933, %v387
    %v935 = vpop.permute.xlu0 %934
    %936 = vset.pattern.permute.xlu0 0
    %937 = vperm.xlu0 %936, %v388
    %v938 = vpop.permute.xlu0 %937
    %939 = vset.pattern.permute.xlu0 0
    %940 = vperm.xlu0 %939, %v389
    %v941 = vpop.permute.xlu0 %940
    %942 = vset.pattern.permute.xlu0 0
    %943 = vperm.xlu0 %942, %v390
    %v944 = vpop.permute.xlu0 %943
    %945 = vset.pattern.permute.xlu0 0
    %946 = vperm.xlu0 %945, %v391
    %v947 = vpop.permute.xlu0 %946
    %948 = vset.pattern.permute.xlu0 0
    %949 = vperm.xlu0 %948, %v392
    %v950 = vpop.permute.xlu0 %949
    %951 = vset.pattern.permute.xlu0 0
    %952 = vperm.xlu0 %951, %v393
    %v953 = vpop.permute.xlu0 %952
    %954 = vset.pattern.permute.xlu0 0
    %955 = vperm.xlu0 %954, %v394
    %v956 = vpop.permute.xlu0 %955
    %957 = vset.pattern.permute.xlu0 0
    %958 = vperm.xlu0 %957, %v395
    %v959 = vpop.permute.xlu0 %958
    %960 = vset.pattern.permute.xlu0 0
    %961 = vperm.xlu0 %960, %v396
    %v962 = vpop.permute.xlu0 %961
    %963 = vset.pattern.permute.xlu0 0
    %964 = vperm.xlu0 %963, %v397
    %v965 = vpop.permute.xlu0 %964
    %966 = vset.pattern.permute.xlu0 0
    %967 = vperm.xlu0 %966, %v398
    %v968 = vpop.permute.xlu0 %967
    %969 = vset.pattern.permute.xlu0 0
    %970 = vperm.xlu0 %969, %v399
    %v971 = vpop.permute.xlu0 %970
    %972 = vset.pattern.permute.xlu0 0
    %973 = vperm.xlu0 %972, %v400
    %v974 = vpop.permute.xlu0 %973
    %975 = vset.pattern.permute.xlu0 0
    %976 = vperm.xlu0 %975, %v401
    %v977 = vpop.permute.xlu0 %976
    %978 = vset.pattern.permute.xlu0 0
    %979 = vperm.xlu0 %978, %v402
    %v980 = vpop.permute.xlu0 %979
    %981 = vset.pattern.permute.xlu0 0
    %982 = vperm.xlu0 %981, %v403
    %v983 = vpop.permute.xlu0 %982
    %984 = vset.pattern.permute.xlu0 0
    %985 = vperm.xlu0 %984, %v404
    %v986 = vpop.permute.xlu0 %985
    %987 = vset.pattern.permute.xlu0 0
    %988 = vperm.xlu0 %987, %v405
    %v989 = vpop.permute.xlu0 %988
    %990 = vset.pattern.permute.xlu0 0
    %991 = vperm.xlu0 %990, %v406
    %v992 = vpop.permute.xlu0 %991
    %993 = vset.pattern.permute.xlu0 0
    %994 = vperm.xlu0 %993, %v407
    %v995 = vpop.permute.xlu0 %994
    %996 = vset.pattern.permute.xlu0 0
    %997 = vperm.xlu0 %996, %v408
    %v998 = vpop.permute.xlu0 %997
    %999 = vset.pattern.permute.xlu0 0
    %1000 = vperm.xlu0 %999, %v409
    %v1001 = vpop.permute.xlu0 %1000
    %1002 = vset.pattern.permute.xlu0 0
    %1003 = vperm.xlu0 %1002, %v410
    %v1004 = vpop.permute.xlu0 %1003
    %1005 = vset.pattern.permute.xlu0 0
    %1006 = vperm.xlu0 %1005, %v411
    %v1007 = vpop.permute.xlu0 %1006
    %1008 = vset.pattern.permute.xlu0 0
    %1009 = vperm.xlu0 %1008, %v412
    %v1010 = vpop.permute.xlu0 %1009
    %1011 = vset.pattern.permute.xlu0 0
    %1012 = vperm.xlu0 %1011, %v413
    %v1013 = vpop.permute.xlu0 %1012
    %1014 = vset.pattern.permute.xlu0 0
    %1015 = vperm.xlu0 %1014, %v414
    %v1016 = vpop.permute.xlu0 %1015
    %1017 = vset.pattern.permute.xlu0 0
    %1018 = vperm.xlu0 %1017, %v415
    %v1019 = vpop.permute.xlu0 %1018
    %1020 = vset.pattern.permute.xlu0 0
    %1021 = vperm.xlu0 %1020, %v416
    %v1022 = vpop.permute.xlu0 %1021
    %1023 = vset.pattern.permute.xlu0 0
    %1024 = vperm.xlu0 %1023, %v417
    %v1025 = vpop.permute.xlu0 %1024
    %1026 = vset.pattern.permute.xlu0 0
    %1027 = vperm.xlu0 %1026, %v418
    %v1028 = vpop.permute.xlu0 %1027
    %1029 = vset.pattern.permute.xlu0 0
    %1030 = vperm.xlu0 %1029, %v419
    %v1031 = vpop.permute.xlu0 %1030
    %1032 = vset.pattern.permute.xlu0 0
    %1033 = vperm.xlu0 %1032, %v420
    %v1034 = vpop.permute.xlu0 %1033
    %1035 = vset.pattern.permute.xlu0 0
    %1036 = vperm.xlu0 %1035, %v421
    %v1037 = vpop.permute.xlu0 %1036
    %1038 = vset.pattern.permute.xlu0 0
    %1039 = vperm.xlu0 %1038, %v422
    %v1040 = vpop.permute.xlu0 %1039
    %1041 = vset.pattern.permute.xlu0 0
    %1042 = vperm.xlu0 %1041, %v423
    %v1043 = vpop.permute.xlu0 %1042
    %1044 = vset.pattern.permute.xlu0 0
    %1045 = vperm.xlu0 %1044, %v424
    %v1046 = vpop.permute.xlu0 %1045
    %1047 = vset.pattern.permute.xlu0 0
    %1048 = vperm.xlu0 %1047, %v425
    %v1049 = vpop.permute.xlu0 %1048
    %1050 = vset.pattern.permute.xlu0 0
    %1051 = vperm.xlu0 %1050, %v426
    %v1052 = vpop.permute.xlu0 %1051
    %1053 = vset.pattern.permute.xlu0 0
    %1054 = vperm.xlu0 %1053, %v427
    %v1055 = vpop.permute.xlu0 %1054
    %1056 = vset.pattern.permute.xlu0 0
    %1057 = vperm.xlu0 %1056, %v428
    %v1058 = vpop.permute.xlu0 %1057
    %1059 = vset.pattern.permute.xlu0 0
    %1060 = vperm.xlu0 %1059, %v429
    %v1061 = vpop.permute.xlu0 %1060
    %1062 = vset.pattern.permute.xlu0 0
    %1063 = vperm.xlu0 %1062, %v430
    %v1064 = vpop.permute.xlu0 %1063
    %1065 = vset.pattern.permute.xlu0 0
    %1066 = vperm.xlu0 %1065, %v431
    %v1067 = vpop.permute.xlu0 %1066
    %1068 = vset.pattern.permute.xlu0 0
    %1069 = vperm.xlu0 %1068, %v432
    %v1070 = vpop.permute.xlu0 %1069
    %1071 = vset.pattern.permute.xlu0 0
    %1072 = vperm.xlu0 %1071, %v433
    %v1073 = vpop.permute.xlu0 %1072
    %1074 = vset.pattern.permute.xlu0 0
    %1075 = vperm.xlu0 %1074, %v434
    %v1076 = vpop.permute.xlu0 %1075
    %1077 = vset.pattern.permute.xlu0 0
    %1078 = vperm.xlu0 %1077, %v435
    %v1079 = vpop.permute.xlu0 %1078
    %1080 = vset.pattern.permute.xlu0 0
    %1081 = vperm.xlu0 %1080, %v436
    %v1082 = vpop.permute.xlu0 %1081
    %vm1083 = vcmp.eq.s32.totalorder %v698, %v701
    %vm1084 = vcmp.eq.s32.totalorder %v698, %v704
    %vm1085 = vcmp.eq.s32.totalorder %v698, %v707
    %vm1086 = vcmp.eq.s32.totalorder %v698, %v710
    %vm1087 = vcmp.eq.s32.totalorder %v698, %v713
    %vm1088 = vcmp.eq.s32.totalorder %v698, %v716
    %vm1089 = vcmp.eq.s32.totalorder %v698, %v719
    %vm1090 = vcmp.eq.s32.totalorder %v698, %v722
    %vm1091 = vcmp.eq.s32.totalorder %v698, %v725
    %vm1092 = vcmp.eq.s32.totalorder %v698, %v728
    %vm1093 = vcmp.eq.s32.totalorder %v698, %v731
    %vm1094 = vcmp.eq.s32.totalorder %v698, %v734
    %vm1095 = vcmp.eq.s32.totalorder %v698, %v737
    %vm1096 = vcmp.eq.s32.totalorder %v698, %v740
    %vm1097 = vcmp.eq.s32.totalorder %v698, %v743
    %vm1098 = vcmp.eq.s32.totalorder %v698, %v746
    %vm1099 = vcmp.eq.s32.totalorder %v698, %v749
    %vm1100 = vcmp.eq.s32.totalorder %v698, %v752
    %vm1101 = vcmp.eq.s32.totalorder %v698, %v755
    %vm1102 = vcmp.eq.s32.totalorder %v698, %v758
    %vm1103 = vcmp.eq.s32.totalorder %v698, %v761
    %vm1104 = vcmp.eq.s32.totalorder %v698, %v764
    %vm1105 = vcmp.eq.s32.totalorder %v698, %v767
    %vm1106 = vcmp.eq.s32.totalorder %v698, %v770
    %vm1107 = vcmp.eq.s32.totalorder %v698, %v773
    %vm1108 = vcmp.eq.s32.totalorder %v698, %v776
    %vm1109 = vcmp.eq.s32.totalorder %v698, %v779
    %vm1110 = vcmp.eq.s32.totalorder %v698, %v782
    %vm1111 = vcmp.eq.s32.totalorder %v698, %v785
    %vm1112 = vcmp.eq.s32.totalorder %v698, %v788
    %vm1113 = vcmp.eq.s32.totalorder %v698, %v791
    %vm1114 = vcmp.eq.s32.totalorder %v698, %v794
    %vm1115 = vcmp.eq.s32.totalorder %v698, %v797
    %vm1116 = vcmp.eq.s32.totalorder %v698, %v800
    %vm1117 = vcmp.eq.s32.totalorder %v698, %v803
    %vm1118 = vcmp.eq.s32.totalorder %v698, %v806
    %vm1119 = vcmp.eq.s32.totalorder %v698, %v809
    %vm1120 = vcmp.eq.s32.totalorder %v698, %v812
    %vm1121 = vcmp.eq.s32.totalorder %v698, %v815
    %vm1122 = vcmp.eq.s32.totalorder %v698, %v818
    %vm1123 = vcmp.eq.s32.totalorder %v698, %v821
    %vm1124 = vcmp.eq.s32.totalorder %v698, %v824
    %vm1125 = vcmp.eq.s32.totalorder %v698, %v827
    %vm1126 = vcmp.eq.s32.totalorder %v698, %v830
    %vm1127 = vcmp.eq.s32.totalorder %v698, %v833
    %vm1128 = vcmp.eq.s32.totalorder %v698, %v836
    %vm1129 = vcmp.eq.s32.totalorder %v698, %v839
    %vm1130 = vcmp.eq.s32.totalorder %v698, %v842
    %vm1131 = vcmp.eq.s32.totalorder %v698, %v845
    %vm1132 = vcmp.eq.s32.totalorder %v698, %v848
    %vm1133 = vcmp.eq.s32.totalorder %v698, %v851
    %vm1134 = vcmp.eq.s32.totalorder %v698, %v854
    %vm1135 = vcmp.eq.s32.totalorder %v698, %v857
    %vm1136 = vcmp.eq.s32.totalorder %v698, %v860
    %vm1137 = vcmp.eq.s32.totalorder %v698, %v863
    %vm1138 = vcmp.eq.s32.totalorder %v698, %v866
    %vm1139 = vcmp.eq.s32.totalorder %v698, %v869
    %vm1140 = vcmp.eq.s32.totalorder %v698, %v872
    %vm1141 = vcmp.eq.s32.totalorder %v698, %v875
    %vm1142 = vcmp.eq.s32.totalorder %v698, %v878
    %vm1143 = vcmp.eq.s32.totalorder %v698, %v881
    %vm1144 = vcmp.eq.s32.totalorder %v698, %v884
    %vm1145 = vcmp.eq.s32.totalorder %v698, %v887
    %vm1146 = vcmp.eq.s32.totalorder %v698, %v890
    %vm1147 = vcmp.eq.s32.totalorder %v698, %v893
    %vm1148 = vcmp.eq.s32.totalorder %v698, %v896
    %vm1149 = vcmp.eq.s32.totalorder %v698, %v899
    %vm1150 = vcmp.eq.s32.totalorder %v698, %v902
    %vm1151 = vcmp.eq.s32.totalorder %v698, %v905
    %vm1152 = vcmp.eq.s32.totalorder %v698, %v908
    %vm1153 = vcmp.eq.s32.totalorder %v698, %v911
    %vm1154 = vcmp.eq.s32.totalorder %v698, %v914
    %vm1155 = vcmp.eq.s32.totalorder %v698, %v917
    %vm1156 = vcmp.eq.s32.totalorder %v698, %v920
    %vm1157 = vcmp.eq.s32.totalorder %v698, %v923
    %vm1158 = vcmp.eq.s32.totalorder %v698, %v926
    %vm1159 = vcmp.eq.s32.totalorder %v698, %v929
    %vm1160 = vcmp.eq.s32.totalorder %v698, %v932
    %vm1161 = vcmp.eq.s32.totalorder %v698, %v935
    %vm1162 = vcmp.eq.s32.totalorder %v698, %v938
    %vm1163 = vcmp.eq.s32.totalorder %v698, %v941
    %vm1164 = vcmp.eq.s32.totalorder %v698, %v944
    %vm1165 = vcmp.eq.s32.totalorder %v698, %v947
    %vm1166 = vcmp.eq.s32.totalorder %v698, %v950
    %vm1167 = vcmp.eq.s32.totalorder %v698, %v953
    %vm1168 = vcmp.eq.s32.totalorder %v698, %v956
    %vm1169 = vcmp.eq.s32.totalorder %v698, %v959
    %vm1170 = vcmp.eq.s32.totalorder %v698, %v962
    %vm1171 = vcmp.eq.s32.totalorder %v698, %v965
    %vm1172 = vcmp.eq.s32.totalorder %v698, %v968
    %vm1173 = vcmp.eq.s32.totalorder %v698, %v971
    %vm1174 = vcmp.eq.s32.totalorder %v698, %v974
    %vm1175 = vcmp.eq.s32.totalorder %v698, %v977
    %vm1176 = vcmp.eq.s32.totalorder %v698, %v980
    %vm1177 = vcmp.eq.s32.totalorder %v698, %v983
    %vm1178 = vcmp.eq.s32.totalorder %v698, %v986
    %vm1179 = vcmp.eq.s32.totalorder %v698, %v989
    %vm1180 = vcmp.eq.s32.totalorder %v698, %v992
    %vm1181 = vcmp.eq.s32.totalorder %v698, %v995
    %vm1182 = vcmp.eq.s32.totalorder %v698, %v998
    %vm1183 = vcmp.eq.s32.totalorder %v698, %v1001
    %vm1184 = vcmp.eq.s32.totalorder %v698, %v1004
    %vm1185 = vcmp.eq.s32.totalorder %v698, %v1007
    %vm1186 = vcmp.eq.s32.totalorder %v698, %v1010
    %vm1187 = vcmp.eq.s32.totalorder %v698, %v1013
    %vm1188 = vcmp.eq.s32.totalorder %v698, %v1016
    %vm1189 = vcmp.eq.s32.totalorder %v698, %v1019
    %vm1190 = vcmp.eq.s32.totalorder %v698, %v1022
    %vm1191 = vcmp.eq.s32.totalorder %v698, %v1025
    %vm1192 = vcmp.eq.s32.totalorder %v698, %v1028
    %vm1193 = vcmp.eq.s32.totalorder %v698, %v1031
    %vm1194 = vcmp.eq.s32.totalorder %v698, %v1034
    %vm1195 = vcmp.eq.s32.totalorder %v698, %v1037
    %vm1196 = vcmp.eq.s32.totalorder %v698, %v1040
    %vm1197 = vcmp.eq.s32.totalorder %v698, %v1043
    %vm1198 = vcmp.eq.s32.totalorder %v698, %v1046
    %vm1199 = vcmp.eq.s32.totalorder %v698, %v1049
    %vm1200 = vcmp.eq.s32.totalorder %v698, %v1052
    %vm1201 = vcmp.eq.s32.totalorder %v698, %v1055
    %vm1202 = vcmp.eq.s32.totalorder %v698, %v1058
    %vm1203 = vcmp.eq.s32.totalorder %v698, %v1061
    %vm1204 = vcmp.eq.s32.totalorder %v698, %v1064
    %vm1205 = vcmp.eq.s32.totalorder %v698, %v1067
    %vm1206 = vcmp.eq.s32.totalorder %v698, %v1070
    %vm1207 = vcmp.eq.s32.totalorder %v698, %v1073
    %vm1208 = vcmp.eq.s32.totalorder %v698, %v1076
    %vm1209 = vcmp.eq.s32.totalorder %v698, %v1079
    %vm1210 = vcmp.eq.s32.totalorder %v698, %v1082
    %1211 = vset.pattern.permute.xlu0 0
    %1212 = vperm.xlu0 %1211, %v566
    %v1213 = vpop.permute.xlu0 %1212
    %1214 = vset.pattern.permute.xlu0 0
    %1215 = vperm.xlu0 %1214, %v567
    %v1216 = vpop.permute.xlu0 %1215
    %1217 = vset.pattern.permute.xlu0 0
    %1218 = vperm.xlu0 %1217, %v568
    %v1219 = vpop.permute.xlu0 %1218
    %1220 = vset.pattern.permute.xlu0 0
    %1221 = vperm.xlu0 %1220, %v569
    %v1222 = vpop.permute.xlu0 %1221
    %1223 = vset.pattern.permute.xlu0 0
    %1224 = vperm.xlu0 %1223, %v570
    %v1225 = vpop.permute.xlu0 %1224
    %1226 = vset.pattern.permute.xlu0 0
    %1227 = vperm.xlu0 %1226, %v571
    %v1228 = vpop.permute.xlu0 %1227
    %1229 = vset.pattern.permute.xlu0 0
    %1230 = vperm.xlu0 %1229, %v572
    %v1231 = vpop.permute.xlu0 %1230
    %1232 = vset.pattern.permute.xlu0 0
    %1233 = vperm.xlu0 %1232, %v573
    %v1234 = vpop.permute.xlu0 %1233
    %1235 = vset.pattern.permute.xlu0 0
    %1236 = vperm.xlu0 %1235, %v574
    %v1237 = vpop.permute.xlu0 %1236
    %1238 = vset.pattern.permute.xlu0 0
    %1239 = vperm.xlu0 %1238, %v575
    %v1240 = vpop.permute.xlu0 %1239
    %1241 = vset.pattern.permute.xlu0 0
    %1242 = vperm.xlu0 %1241, %v576
    %v1243 = vpop.permute.xlu0 %1242
    %1244 = vset.pattern.permute.xlu0 0
    %1245 = vperm.xlu0 %1244, %v577
    %v1246 = vpop.permute.xlu0 %1245
    %1247 = vset.pattern.permute.xlu0 0
    %1248 = vperm.xlu0 %1247, %v578
    %v1249 = vpop.permute.xlu0 %1248
    %1250 = vset.pattern.permute.xlu0 0
    %1251 = vperm.xlu0 %1250, %v579
    %v1252 = vpop.permute.xlu0 %1251
    %1253 = vset.pattern.permute.xlu0 0
    %1254 = vperm.xlu0 %1253, %v580
    %v1255 = vpop.permute.xlu0 %1254
    %1256 = vset.pattern.permute.xlu0 0
    %1257 = vperm.xlu0 %1256, %v581
    %v1258 = vpop.permute.xlu0 %1257
    %1259 = vset.pattern.permute.xlu0 0
    %1260 = vperm.xlu0 %1259, %v582
    %v1261 = vpop.permute.xlu0 %1260
    %1262 = vset.pattern.permute.xlu0 0
    %1263 = vperm.xlu0 %1262, %v583
    %v1264 = vpop.permute.xlu0 %1263
    %1265 = vset.pattern.permute.xlu0 0
    %1266 = vperm.xlu0 %1265, %v584
    %v1267 = vpop.permute.xlu0 %1266
    %1268 = vset.pattern.permute.xlu0 0
    %1269 = vperm.xlu0 %1268, %v585
    %v1270 = vpop.permute.xlu0 %1269
    %1271 = vset.pattern.permute.xlu0 0
    %1272 = vperm.xlu0 %1271, %v586
    %v1273 = vpop.permute.xlu0 %1272
    %1274 = vset.pattern.permute.xlu0 0
    %1275 = vperm.xlu0 %1274, %v587
    %v1276 = vpop.permute.xlu0 %1275
    %1277 = vset.pattern.permute.xlu0 0
    %1278 = vperm.xlu0 %1277, %v588
    %v1279 = vpop.permute.xlu0 %1278
    %1280 = vset.pattern.permute.xlu0 0
    %1281 = vperm.xlu0 %1280, %v589
    %v1282 = vpop.permute.xlu0 %1281
    %1283 = vset.pattern.permute.xlu0 0
    %1284 = vperm.xlu0 %1283, %v590
    %v1285 = vpop.permute.xlu0 %1284
    %1286 = vset.pattern.permute.xlu0 0
    %1287 = vperm.xlu0 %1286, %v591
    %v1288 = vpop.permute.xlu0 %1287
    %1289 = vset.pattern.permute.xlu0 0
    %1290 = vperm.xlu0 %1289, %v592
    %v1291 = vpop.permute.xlu0 %1290
    %1292 = vset.pattern.permute.xlu0 0
    %1293 = vperm.xlu0 %1292, %v593
    %v1294 = vpop.permute.xlu0 %1293
    %1295 = vset.pattern.permute.xlu0 0
    %1296 = vperm.xlu0 %1295, %v594
    %v1297 = vpop.permute.xlu0 %1296
    %1298 = vset.pattern.permute.xlu0 0
    %1299 = vperm.xlu0 %1298, %v595
    %v1300 = vpop.permute.xlu0 %1299
    %1301 = vset.pattern.permute.xlu0 0
    %1302 = vperm.xlu0 %1301, %v596
    %v1303 = vpop.permute.xlu0 %1302
    %1304 = vset.pattern.permute.xlu0 0
    %1305 = vperm.xlu0 %1304, %v597
    %v1306 = vpop.permute.xlu0 %1305
    %1307 = vset.pattern.permute.xlu0 0
    %1308 = vperm.xlu0 %1307, %v598
    %v1309 = vpop.permute.xlu0 %1308
    %1310 = vset.pattern.permute.xlu0 0
    %1311 = vperm.xlu0 %1310, %v599
    %v1312 = vpop.permute.xlu0 %1311
    %1313 = vset.pattern.permute.xlu0 0
    %1314 = vperm.xlu0 %1313, %v600
    %v1315 = vpop.permute.xlu0 %1314
    %1316 = vset.pattern.permute.xlu0 0
    %1317 = vperm.xlu0 %1316, %v601
    %v1318 = vpop.permute.xlu0 %1317
    %1319 = vset.pattern.permute.xlu0 0
    %1320 = vperm.xlu0 %1319, %v602
    %v1321 = vpop.permute.xlu0 %1320
    %1322 = vset.pattern.permute.xlu0 0
    %1323 = vperm.xlu0 %1322, %v603
    %v1324 = vpop.permute.xlu0 %1323
    %1325 = vset.pattern.permute.xlu0 0
    %1326 = vperm.xlu0 %1325, %v604
    %v1327 = vpop.permute.xlu0 %1326
    %1328 = vset.pattern.permute.xlu0 0
    %1329 = vperm.xlu0 %1328, %v605
    %v1330 = vpop.permute.xlu0 %1329
    %1331 = vset.pattern.permute.xlu0 0
    %1332 = vperm.xlu0 %1331, %v606
    %v1333 = vpop.permute.xlu0 %1332
    %1334 = vset.pattern.permute.xlu0 0
    %1335 = vperm.xlu0 %1334, %v607
    %v1336 = vpop.permute.xlu0 %1335
    %1337 = vset.pattern.permute.xlu0 0
    %1338 = vperm.xlu0 %1337, %v608
    %v1339 = vpop.permute.xlu0 %1338
    %1340 = vset.pattern.permute.xlu0 0
    %1341 = vperm.xlu0 %1340, %v609
    %v1342 = vpop.permute.xlu0 %1341
    %1343 = vset.pattern.permute.xlu0 0
    %1344 = vperm.xlu0 %1343, %v610
    %v1345 = vpop.permute.xlu0 %1344
    %1346 = vset.pattern.permute.xlu0 0
    %1347 = vperm.xlu0 %1346, %v611
    %v1348 = vpop.permute.xlu0 %1347
    %1349 = vset.pattern.permute.xlu0 0
    %1350 = vperm.xlu0 %1349, %v612
    %v1351 = vpop.permute.xlu0 %1350
    %1352 = vset.pattern.permute.xlu0 0
    %1353 = vperm.xlu0 %1352, %v613
    %v1354 = vpop.permute.xlu0 %1353
    %1355 = vset.pattern.permute.xlu0 0
    %1356 = vperm.xlu0 %1355, %v614
    %v1357 = vpop.permute.xlu0 %1356
    %1358 = vset.pattern.permute.xlu0 0
    %1359 = vperm.xlu0 %1358, %v615
    %v1360 = vpop.permute.xlu0 %1359
    %1361 = vset.pattern.permute.xlu0 0
    %1362 = vperm.xlu0 %1361, %v616
    %v1363 = vpop.permute.xlu0 %1362
    %1364 = vset.pattern.permute.xlu0 0
    %1365 = vperm.xlu0 %1364, %v617
    %v1366 = vpop.permute.xlu0 %1365
    %1367 = vset.pattern.permute.xlu0 0
    %1368 = vperm.xlu0 %1367, %v618
    %v1369 = vpop.permute.xlu0 %1368
    %1370 = vset.pattern.permute.xlu0 0
    %1371 = vperm.xlu0 %1370, %v619
    %v1372 = vpop.permute.xlu0 %1371
    %1373 = vset.pattern.permute.xlu0 0
    %1374 = vperm.xlu0 %1373, %v620
    %v1375 = vpop.permute.xlu0 %1374
    %1376 = vset.pattern.permute.xlu0 0
    %1377 = vperm.xlu0 %1376, %v621
    %v1378 = vpop.permute.xlu0 %1377
    %1379 = vset.pattern.permute.xlu0 0
    %1380 = vperm.xlu0 %1379, %v622
    %v1381 = vpop.permute.xlu0 %1380
    %1382 = vset.pattern.permute.xlu0 0
    %1383 = vperm.xlu0 %1382, %v623
    %v1384 = vpop.permute.xlu0 %1383
    %1385 = vset.pattern.permute.xlu0 0
    %1386 = vperm.xlu0 %1385, %v624
    %v1387 = vpop.permute.xlu0 %1386
    %1388 = vset.pattern.permute.xlu0 0
    %1389 = vperm.xlu0 %1388, %v625
    %v1390 = vpop.permute.xlu0 %1389
    %1391 = vset.pattern.permute.xlu0 0
    %1392 = vperm.xlu0 %1391, %v626
    %v1393 = vpop.permute.xlu0 %1392
    %1394 = vset.pattern.permute.xlu0 0
    %1395 = vperm.xlu0 %1394, %v627
    %v1396 = vpop.permute.xlu0 %1395
    %1397 = vset.pattern.permute.xlu0 0
    %1398 = vperm.xlu0 %1397, %v628
    %v1399 = vpop.permute.xlu0 %1398
    %1400 = vset.pattern.permute.xlu0 0
    %1401 = vperm.xlu0 %1400, %v629
    %v1402 = vpop.permute.xlu0 %1401
    %1403 = vset.pattern.permute.xlu0 0
    %1404 = vperm.xlu0 %1403, %v630
    %v1405 = vpop.permute.xlu0 %1404
    %1406 = vset.pattern.permute.xlu0 0
    %1407 = vperm.xlu0 %1406, %v631
    %v1408 = vpop.permute.xlu0 %1407
    %1409 = vset.pattern.permute.xlu0 0
    %1410 = vperm.xlu0 %1409, %v632
    %v1411 = vpop.permute.xlu0 %1410
    %1412 = vset.pattern.permute.xlu0 0
    %1413 = vperm.xlu0 %1412, %v633
    %v1414 = vpop.permute.xlu0 %1413
    %1415 = vset.pattern.permute.xlu0 0
    %1416 = vperm.xlu0 %1415, %v634
    %v1417 = vpop.permute.xlu0 %1416
    %1418 = vset.pattern.permute.xlu0 0
    %1419 = vperm.xlu0 %1418, %v635
    %v1420 = vpop.permute.xlu0 %1419
    %1421 = vset.pattern.permute.xlu0 0
    %1422 = vperm.xlu0 %1421, %v636
    %v1423 = vpop.permute.xlu0 %1422
    %1424 = vset.pattern.permute.xlu0 0
    %1425 = vperm.xlu0 %1424, %v637
    %v1426 = vpop.permute.xlu0 %1425
    %1427 = vset.pattern.permute.xlu0 0
    %1428 = vperm.xlu0 %1427, %v638
    %v1429 = vpop.permute.xlu0 %1428
    %1430 = vset.pattern.permute.xlu0 0
    %1431 = vperm.xlu0 %1430, %v639
    %v1432 = vpop.permute.xlu0 %1431
    %1433 = vset.pattern.permute.xlu0 0
    %1434 = vperm.xlu0 %1433, %v640
    %v1435 = vpop.permute.xlu0 %1434
    %1436 = vset.pattern.permute.xlu0 0
    %1437 = vperm.xlu0 %1436, %v641
    %v1438 = vpop.permute.xlu0 %1437
    %1439 = vset.pattern.permute.xlu0 0
    %1440 = vperm.xlu0 %1439, %v642
    %v1441 = vpop.permute.xlu0 %1440
    %1442 = vset.pattern.permute.xlu0 0
    %1443 = vperm.xlu0 %1442, %v643
    %v1444 = vpop.permute.xlu0 %1443
    %1445 = vset.pattern.permute.xlu0 0
    %1446 = vperm.xlu0 %1445, %v644
    %v1447 = vpop.permute.xlu0 %1446
    %1448 = vset.pattern.permute.xlu0 0
    %1449 = vperm.xlu0 %1448, %v645
    %v1450 = vpop.permute.xlu0 %1449
    %1451 = vset.pattern.permute.xlu0 0
    %1452 = vperm.xlu0 %1451, %v646
    %v1453 = vpop.permute.xlu0 %1452
    %1454 = vset.pattern.permute.xlu0 0
    %1455 = vperm.xlu0 %1454, %v647
    %v1456 = vpop.permute.xlu0 %1455
    %1457 = vset.pattern.permute.xlu0 0
    %1458 = vperm.xlu0 %1457, %v648
    %v1459 = vpop.permute.xlu0 %1458
    %1460 = vset.pattern.permute.xlu0 0
    %1461 = vperm.xlu0 %1460, %v649
    %v1462 = vpop.permute.xlu0 %1461
    %1463 = vset.pattern.permute.xlu0 0
    %1464 = vperm.xlu0 %1463, %v650
    %v1465 = vpop.permute.xlu0 %1464
    %1466 = vset.pattern.permute.xlu0 0
    %1467 = vperm.xlu0 %1466, %v651
    %v1468 = vpop.permute.xlu0 %1467
    %1469 = vset.pattern.permute.xlu0 0
    %1470 = vperm.xlu0 %1469, %v652
    %v1471 = vpop.permute.xlu0 %1470
    %1472 = vset.pattern.permute.xlu0 0
    %1473 = vperm.xlu0 %1472, %v653
    %v1474 = vpop.permute.xlu0 %1473
    %1475 = vset.pattern.permute.xlu0 0
    %1476 = vperm.xlu0 %1475, %v654
    %v1477 = vpop.permute.xlu0 %1476
    %1478 = vset.pattern.permute.xlu0 0
    %1479 = vperm.xlu0 %1478, %v655
    %v1480 = vpop.permute.xlu0 %1479
    %1481 = vset.pattern.permute.xlu0 0
    %1482 = vperm.xlu0 %1481, %v656
    %v1483 = vpop.permute.xlu0 %1482
    %1484 = vset.pattern.permute.xlu0 0
    %1485 = vperm.xlu0 %1484, %v657
    %v1486 = vpop.permute.xlu0 %1485
    %1487 = vset.pattern.permute.xlu0 0
    %1488 = vperm.xlu0 %1487, %v658
    %v1489 = vpop.permute.xlu0 %1488
    %1490 = vset.pattern.permute.xlu0 0
    %1491 = vperm.xlu0 %1490, %v659
    %v1492 = vpop.permute.xlu0 %1491
    %1493 = vset.pattern.permute.xlu0 0
    %1494 = vperm.xlu0 %1493, %v660
    %v1495 = vpop.permute.xlu0 %1494
    %1496 = vset.pattern.permute.xlu0 0
    %1497 = vperm.xlu0 %1496, %v661
    %v1498 = vpop.permute.xlu0 %1497
    %1499 = vset.pattern.permute.xlu0 0
    %1500 = vperm.xlu0 %1499, %v662
    %v1501 = vpop.permute.xlu0 %1500
    %1502 = vset.pattern.permute.xlu0 0
    %1503 = vperm.xlu0 %1502, %v663
    %v1504 = vpop.permute.xlu0 %1503
    %1505 = vset.pattern.permute.xlu0 0
    %1506 = vperm.xlu0 %1505, %v664
    %v1507 = vpop.permute.xlu0 %1506
    %1508 = vset.pattern.permute.xlu0 0
    %1509 = vperm.xlu0 %1508, %v665
    %v1510 = vpop.permute.xlu0 %1509
    %1511 = vset.pattern.permute.xlu0 0
    %1512 = vperm.xlu0 %1511, %v666
    %v1513 = vpop.permute.xlu0 %1512
    %1514 = vset.pattern.permute.xlu0 0
    %1515 = vperm.xlu0 %1514, %v667
    %v1516 = vpop.permute.xlu0 %1515
    %1517 = vset.pattern.permute.xlu0 0
    %1518 = vperm.xlu0 %1517, %v668
    %v1519 = vpop.permute.xlu0 %1518
    %1520 = vset.pattern.permute.xlu0 0
    %1521 = vperm.xlu0 %1520, %v669
    %v1522 = vpop.permute.xlu0 %1521
    %1523 = vset.pattern.permute.xlu0 0
    %1524 = vperm.xlu0 %1523, %v670
    %v1525 = vpop.permute.xlu0 %1524
    %1526 = vset.pattern.permute.xlu0 0
    %1527 = vperm.xlu0 %1526, %v671
    %v1528 = vpop.permute.xlu0 %1527
    %1529 = vset.pattern.permute.xlu0 0
    %1530 = vperm.xlu0 %1529, %v672
    %v1531 = vpop.permute.xlu0 %1530
    %1532 = vset.pattern.permute.xlu0 0
    %1533 = vperm.xlu0 %1532, %v673
    %v1534 = vpop.permute.xlu0 %1533
    %1535 = vset.pattern.permute.xlu0 0
    %1536 = vperm.xlu0 %1535, %v674
    %v1537 = vpop.permute.xlu0 %1536
    %1538 = vset.pattern.permute.xlu0 0
    %1539 = vperm.xlu0 %1538, %v675
    %v1540 = vpop.permute.xlu0 %1539
    %1541 = vset.pattern.permute.xlu0 0
    %1542 = vperm.xlu0 %1541, %v676
    %v1543 = vpop.permute.xlu0 %1542
    %1544 = vset.pattern.permute.xlu0 0
    %1545 = vperm.xlu0 %1544, %v677
    %v1546 = vpop.permute.xlu0 %1545
    %1547 = vset.pattern.permute.xlu0 0
    %1548 = vperm.xlu0 %1547, %v678
    %v1549 = vpop.permute.xlu0 %1548
    %1550 = vset.pattern.permute.xlu0 0
    %1551 = vperm.xlu0 %1550, %v679
    %v1552 = vpop.permute.xlu0 %1551
    %1553 = vset.pattern.permute.xlu0 0
    %1554 = vperm.xlu0 %1553, %v680
    %v1555 = vpop.permute.xlu0 %1554
    %1556 = vset.pattern.permute.xlu0 0
    %1557 = vperm.xlu0 %1556, %v681
    %v1558 = vpop.permute.xlu0 %1557
    %1559 = vset.pattern.permute.xlu0 0
    %1560 = vperm.xlu0 %1559, %v682
    %v1561 = vpop.permute.xlu0 %1560
    %1562 = vset.pattern.permute.xlu0 0
    %1563 = vperm.xlu0 %1562, %v683
    %v1564 = vpop.permute.xlu0 %1563
    %1565 = vset.pattern.permute.xlu0 0
    %1566 = vperm.xlu0 %1565, %v684
    %v1567 = vpop.permute.xlu0 %1566
    %1568 = vset.pattern.permute.xlu0 0
    %1569 = vperm.xlu0 %1568, %v685
    %v1570 = vpop.permute.xlu0 %1569
    %1571 = vset.pattern.permute.xlu0 0
    %1572 = vperm.xlu0 %1571, %v686
    %v1573 = vpop.permute.xlu0 %1572
    %1574 = vset.pattern.permute.xlu0 0
    %1575 = vperm.xlu0 %1574, %v687
    %v1576 = vpop.permute.xlu0 %1575
    %1577 = vset.pattern.permute.xlu0 0
    %1578 = vperm.xlu0 %1577, %v688
    %v1579 = vpop.permute.xlu0 %1578
    %1580 = vset.pattern.permute.xlu0 0
    %1581 = vperm.xlu0 %1580, %v689
    %v1582 = vpop.permute.xlu0 %1581
    %1583 = vset.pattern.permute.xlu0 0
    %1584 = vperm.xlu0 %1583, %v690
    %v1585 = vpop.permute.xlu0 %1584
    %1586 = vset.pattern.permute.xlu0 0
    %1587 = vperm.xlu0 %1586, %v691
    %v1588 = vpop.permute.xlu0 %1587
    %1589 = vset.pattern.permute.xlu0 0
    %1590 = vperm.xlu0 %1589, %v692
    %v1591 = vpop.permute.xlu0 %1590
    %1592 = vset.pattern.permute.xlu0 0
    %1593 = vperm.xlu0 %1592, %v693
    %v1594 = vpop.permute.xlu0 %1593
    %vm1595 = vcmp.eq.s32.totalorder %v698, %v1213
    %vm1596 = vcmp.eq.s32.totalorder %v698, %v1216
    %vm1597 = vcmp.eq.s32.totalorder %v698, %v1219
    %vm1598 = vcmp.eq.s32.totalorder %v698, %v1222
    %vm1599 = vcmp.eq.s32.totalorder %v698, %v1225
    %vm1600 = vcmp.eq.s32.totalorder %v698, %v1228
    %vm1601 = vcmp.eq.s32.totalorder %v698, %v1231
    %vm1602 = vcmp.eq.s32.totalorder %v698, %v1234
    %vm1603 = vcmp.eq.s32.totalorder %v698, %v1237
    %vm1604 = vcmp.eq.s32.totalorder %v698, %v1240
    %vm1605 = vcmp.eq.s32.totalorder %v698, %v1243
    %vm1606 = vcmp.eq.s32.totalorder %v698, %v1246
    %vm1607 = vcmp.eq.s32.totalorder %v698, %v1249
    %vm1608 = vcmp.eq.s32.totalorder %v698, %v1252
    %vm1609 = vcmp.eq.s32.totalorder %v698, %v1255
    %vm1610 = vcmp.eq.s32.totalorder %v698, %v1258
    %vm1611 = vcmp.eq.s32.totalorder %v698, %v1261
    %vm1612 = vcmp.eq.s32.totalorder %v698, %v1264
    %vm1613 = vcmp.eq.s32.totalorder %v698, %v1267
    %vm1614 = vcmp.eq.s32.totalorder %v698, %v1270
    %vm1615 = vcmp.eq.s32.totalorder %v698, %v1273
    %vm1616 = vcmp.eq.s32.totalorder %v698, %v1276
    %vm1617 = vcmp.eq.s32.totalorder %v698, %v1279
    %vm1618 = vcmp.eq.s32.totalorder %v698, %v1282
    %vm1619 = vcmp.eq.s32.totalorder %v698, %v1285
    %vm1620 = vcmp.eq.s32.totalorder %v698, %v1288
    %vm1621 = vcmp.eq.s32.totalorder %v698, %v1291
    %vm1622 = vcmp.eq.s32.totalorder %v698, %v1294
    %vm1623 = vcmp.eq.s32.totalorder %v698, %v1297
    %vm1624 = vcmp.eq.s32.totalorder %v698, %v1300
    %vm1625 = vcmp.eq.s32.totalorder %v698, %v1303
    %vm1626 = vcmp.eq.s32.totalorder %v698, %v1306
    %vm1627 = vcmp.eq.s32.totalorder %v698, %v1309
    %vm1628 = vcmp.eq.s32.totalorder %v698, %v1312
    %vm1629 = vcmp.eq.s32.totalorder %v698, %v1315
    %vm1630 = vcmp.eq.s32.totalorder %v698, %v1318
    %vm1631 = vcmp.eq.s32.totalorder %v698, %v1321
    %vm1632 = vcmp.eq.s32.totalorder %v698, %v1324
    %vm1633 = vcmp.eq.s32.totalorder %v698, %v1327
    %vm1634 = vcmp.eq.s32.totalorder %v698, %v1330
    %vm1635 = vcmp.eq.s32.totalorder %v698, %v1333
    %vm1636 = vcmp.eq.s32.totalorder %v698, %v1336
    %vm1637 = vcmp.eq.s32.totalorder %v698, %v1339
    %vm1638 = vcmp.eq.s32.totalorder %v698, %v1342
    %vm1639 = vcmp.eq.s32.totalorder %v698, %v1345
    %vm1640 = vcmp.eq.s32.totalorder %v698, %v1348
    %vm1641 = vcmp.eq.s32.totalorder %v698, %v1351
    %vm1642 = vcmp.eq.s32.totalorder %v698, %v1354
    %vm1643 = vcmp.eq.s32.totalorder %v698, %v1357
    %vm1644 = vcmp.eq.s32.totalorder %v698, %v1360
    %vm1645 = vcmp.eq.s32.totalorder %v698, %v1363
    %vm1646 = vcmp.eq.s32.totalorder %v698, %v1366
    %vm1647 = vcmp.eq.s32.totalorder %v698, %v1369
    %vm1648 = vcmp.eq.s32.totalorder %v698, %v1372
    %vm1649 = vcmp.eq.s32.totalorder %v698, %v1375
    %vm1650 = vcmp.eq.s32.totalorder %v698, %v1378
    %vm1651 = vcmp.eq.s32.totalorder %v698, %v1381
    %vm1652 = vcmp.eq.s32.totalorder %v698, %v1384
    %vm1653 = vcmp.eq.s32.totalorder %v698, %v1387
    %vm1654 = vcmp.eq.s32.totalorder %v698, %v1390
    %vm1655 = vcmp.eq.s32.totalorder %v698, %v1393
    %vm1656 = vcmp.eq.s32.totalorder %v698, %v1396
    %vm1657 = vcmp.eq.s32.totalorder %v698, %v1399
    %vm1658 = vcmp.eq.s32.totalorder %v698, %v1402
    %vm1659 = vcmp.eq.s32.totalorder %v698, %v1405
    %vm1660 = vcmp.eq.s32.totalorder %v698, %v1408
    %vm1661 = vcmp.eq.s32.totalorder %v698, %v1411
    %vm1662 = vcmp.eq.s32.totalorder %v698, %v1414
    %vm1663 = vcmp.eq.s32.totalorder %v698, %v1417
    %vm1664 = vcmp.eq.s32.totalorder %v698, %v1420
    %vm1665 = vcmp.eq.s32.totalorder %v698, %v1423
    %vm1666 = vcmp.eq.s32.totalorder %v698, %v1426
    %vm1667 = vcmp.eq.s32.totalorder %v698, %v1429
    %vm1668 = vcmp.eq.s32.totalorder %v698, %v1432
    %vm1669 = vcmp.eq.s32.totalorder %v698, %v1435
    %vm1670 = vcmp.eq.s32.totalorder %v698, %v1438
    %vm1671 = vcmp.eq.s32.totalorder %v698, %v1441
    %vm1672 = vcmp.eq.s32.totalorder %v698, %v1444
    %vm1673 = vcmp.eq.s32.totalorder %v698, %v1447
    %vm1674 = vcmp.eq.s32.totalorder %v698, %v1450
    %vm1675 = vcmp.eq.s32.totalorder %v698, %v1453
    %vm1676 = vcmp.eq.s32.totalorder %v698, %v1456
    %vm1677 = vcmp.eq.s32.totalorder %v698, %v1459
    %vm1678 = vcmp.eq.s32.totalorder %v698, %v1462
    %vm1679 = vcmp.eq.s32.totalorder %v698, %v1465
    %vm1680 = vcmp.eq.s32.totalorder %v698, %v1468
    %vm1681 = vcmp.eq.s32.totalorder %v698, %v1471
    %vm1682 = vcmp.eq.s32.totalorder %v698, %v1474
    %vm1683 = vcmp.eq.s32.totalorder %v698, %v1477
    %vm1684 = vcmp.eq.s32.totalorder %v698, %v1480
    %vm1685 = vcmp.eq.s32.totalorder %v698, %v1483
    %vm1686 = vcmp.eq.s32.totalorder %v698, %v1486
    %vm1687 = vcmp.eq.s32.totalorder %v698, %v1489
    %vm1688 = vcmp.eq.s32.totalorder %v698, %v1492
    %vm1689 = vcmp.eq.s32.totalorder %v698, %v1495
    %vm1690 = vcmp.eq.s32.totalorder %v698, %v1498
    %vm1691 = vcmp.eq.s32.totalorder %v698, %v1501
    %vm1692 = vcmp.eq.s32.totalorder %v698, %v1504
    %vm1693 = vcmp.eq.s32.totalorder %v698, %v1507
    %vm1694 = vcmp.eq.s32.totalorder %v698, %v1510
    %vm1695 = vcmp.eq.s32.totalorder %v698, %v1513
    %vm1696 = vcmp.eq.s32.totalorder %v698, %v1516
    %vm1697 = vcmp.eq.s32.totalorder %v698, %v1519
    %vm1698 = vcmp.eq.s32.totalorder %v698, %v1522
    %vm1699 = vcmp.eq.s32.totalorder %v698, %v1525
    %vm1700 = vcmp.eq.s32.totalorder %v698, %v1528
    %vm1701 = vcmp.eq.s32.totalorder %v698, %v1531
    %vm1702 = vcmp.eq.s32.totalorder %v698, %v1534
    %vm1703 = vcmp.eq.s32.totalorder %v698, %v1537
    %vm1704 = vcmp.eq.s32.totalorder %v698, %v1540
    %vm1705 = vcmp.eq.s32.totalorder %v698, %v1543
    %vm1706 = vcmp.eq.s32.totalorder %v698, %v1546
    %vm1707 = vcmp.eq.s32.totalorder %v698, %v1549
    %vm1708 = vcmp.eq.s32.totalorder %v698, %v1552
    %vm1709 = vcmp.eq.s32.totalorder %v698, %v1555
    %vm1710 = vcmp.eq.s32.totalorder %v698, %v1558
    %vm1711 = vcmp.eq.s32.totalorder %v698, %v1561
    %vm1712 = vcmp.eq.s32.totalorder %v698, %v1564
    %vm1713 = vcmp.eq.s32.totalorder %v698, %v1567
    %vm1714 = vcmp.eq.s32.totalorder %v698, %v1570
    %vm1715 = vcmp.eq.s32.totalorder %v698, %v1573
    %vm1716 = vcmp.eq.s32.totalorder %v698, %v1576
    %vm1717 = vcmp.eq.s32.totalorder %v698, %v1579
    %vm1718 = vcmp.eq.s32.totalorder %v698, %v1582
    %vm1719 = vcmp.eq.s32.totalorder %v698, %v1585
    %vm1720 = vcmp.eq.s32.totalorder %v698, %v1588
    %vm1721 = vcmp.eq.s32.totalorder %v698, %v1591
    %vm1722 = vcmp.eq.s32.totalorder %v698, %v1594
    %vm1723 = vmor %vm1083, %vm1595
    %vm1724 = vmor %vm1084, %vm1596
    %vm1725 = vmor %vm1085, %vm1597
    %vm1726 = vmor %vm1086, %vm1598
    %vm1727 = vmor %vm1087, %vm1599
    %vm1728 = vmor %vm1088, %vm1600
    %vm1729 = vmor %vm1089, %vm1601
    %vm1730 = vmor %vm1090, %vm1602
    %vm1731 = vmor %vm1091, %vm1603
    %vm1732 = vmor %vm1092, %vm1604
    %vm1733 = vmor %vm1093, %vm1605
    %vm1734 = vmor %vm1094, %vm1606
    %vm1735 = vmor %vm1095, %vm1607
    %vm1736 = vmor %vm1096, %vm1608
    %vm1737 = vmor %vm1097, %vm1609
    %vm1738 = vmor %vm1098, %vm1610
    %vm1739 = vmor %vm1099, %vm1611
    %vm1740 = vmor %vm1100, %vm1612
    %vm1741 = vmor %vm1101, %vm1613
    %vm1742 = vmor %vm1102, %vm1614
    %vm1743 = vmor %vm1103, %vm1615
    %vm1744 = vmor %vm1104, %vm1616
    %vm1745 = vmor %vm1105, %vm1617
    %vm1746 = vmor %vm1106, %vm1618
    %vm1747 = vmor %vm1107, %vm1619
    %vm1748 = vmor %vm1108, %vm1620
    %vm1749 = vmor %vm1109, %vm1621
    %vm1750 = vmor %vm1110, %vm1622
    %vm1751 = vmor %vm1111, %vm1623
    %vm1752 = vmor %vm1112, %vm1624
    %vm1753 = vmor %vm1113, %vm1625
    %vm1754 = vmor %vm1114, %vm1626
    %vm1755 = vmor %vm1115, %vm1627
    %vm1756 = vmor %vm1116, %vm1628
    %vm1757 = vmor %vm1117, %vm1629
    %vm1758 = vmor %vm1118, %vm1630
    %vm1759 = vmor %vm1119, %vm1631
    %vm1760 = vmor %vm1120, %vm1632
    %vm1761 = vmor %vm1121, %vm1633
    %vm1762 = vmor %vm1122, %vm1634
    %vm1763 = vmor %vm1123, %vm1635
    %vm1764 = vmor %vm1124, %vm1636
    %vm1765 = vmor %vm1125, %vm1637
    %vm1766 = vmor %vm1126, %vm1638
    %vm1767 = vmor %vm1127, %vm1639
    %vm1768 = vmor %vm1128, %vm1640
    %vm1769 = vmor %vm1129, %vm1641
    %vm1770 = vmor %vm1130, %vm1642
    %vm1771 = vmor %vm1131, %vm1643
    %vm1772 = vmor %vm1132, %vm1644
    %vm1773 = vmor %vm1133, %vm1645
    %vm1774 = vmor %vm1134, %vm1646
    %vm1775 = vmor %vm1135, %vm1647
    %vm1776 = vmor %vm1136, %vm1648
    %vm1777 = vmor %vm1137, %vm1649
    %vm1778 = vmor %vm1138, %vm1650
    %vm1779 = vmor %vm1139, %vm1651
    %vm1780 = vmor %vm1140, %vm1652
    %vm1781 = vmor %vm1141, %vm1653
    %vm1782 = vmor %vm1142, %vm1654
    %vm1783 = vmor %vm1143, %vm1655
    %vm1784 = vmor %vm1144, %vm1656
    %vm1785 = vmor %vm1145, %vm1657
    %vm1786 = vmor %vm1146, %vm1658
    %vm1787 = vmor %vm1147, %vm1659
    %vm1788 = vmor %vm1148, %vm1660
    %vm1789 = vmor %vm1149, %vm1661
    %vm1790 = vmor %vm1150, %vm1662
    %vm1791 = vmor %vm1151, %vm1663
    %vm1792 = vmor %vm1152, %vm1664
    %vm1793 = vmor %vm1153, %vm1665
    %vm1794 = vmor %vm1154, %vm1666
    %vm1795 = vmor %vm1155, %vm1667
    %vm1796 = vmor %vm1156, %vm1668
    %vm1797 = vmor %vm1157, %vm1669
    %vm1798 = vmor %vm1158, %vm1670
    %vm1799 = vmor %vm1159, %vm1671
    %vm1800 = vmor %vm1160, %vm1672
    %vm1801 = vmor %vm1161, %vm1673
    %vm1802 = vmor %vm1162, %vm1674
    %vm1803 = vmor %vm1163, %vm1675
    %vm1804 = vmor %vm1164, %vm1676
    %vm1805 = vmor %vm1165, %vm1677
    %vm1806 = vmor %vm1166, %vm1678
    %vm1807 = vmor %vm1167, %vm1679
    %vm1808 = vmor %vm1168, %vm1680
    %vm1809 = vmor %vm1169, %vm1681
    %vm1810 = vmor %vm1170, %vm1682
    %vm1811 = vmor %vm1171, %vm1683
    %vm1812 = vmor %vm1172, %vm1684
    %vm1813 = vmor %vm1173, %vm1685
    %vm1814 = vmor %vm1174, %vm1686
    %vm1815 = vmor %vm1175, %vm1687
    %vm1816 = vmor %vm1176, %vm1688
    %vm1817 = vmor %vm1177, %vm1689
    %vm1818 = vmor %vm1178, %vm1690
    %vm1819 = vmor %vm1179, %vm1691
    %vm1820 = vmor %vm1180, %vm1692
    %vm1821 = vmor %vm1181, %vm1693
    %vm1822 = vmor %vm1182, %vm1694
    %vm1823 = vmor %vm1183, %vm1695
    %vm1824 = vmor %vm1184, %vm1696
    %vm1825 = vmor %vm1185, %vm1697
    %vm1826 = vmor %vm1186, %vm1698
    %vm1827 = vmor %vm1187, %vm1699
    %vm1828 = vmor %vm1188, %vm1700
    %vm1829 = vmor %vm1189, %vm1701
    %vm1830 = vmor %vm1190, %vm1702
    %vm1831 = vmor %vm1191, %vm1703
    %vm1832 = vmor %vm1192, %vm1704
    %vm1833 = vmor %vm1193, %vm1705
    %vm1834 = vmor %vm1194, %vm1706
    %vm1835 = vmor %vm1195, %vm1707
    %vm1836 = vmor %vm1196, %vm1708
    %vm1837 = vmor %vm1197, %vm1709
    %vm1838 = vmor %vm1198, %vm1710
    %vm1839 = vmor %vm1199, %vm1711
    %vm1840 = vmor %vm1200, %vm1712
    %vm1841 = vmor %vm1201, %vm1713
    %vm1842 = vmor %vm1202, %vm1714
    %vm1843 = vmor %vm1203, %vm1715
    %vm1844 = vmor %vm1204, %vm1716
    %vm1845 = vmor %vm1205, %vm1717
    %vm1846 = vmor %vm1206, %vm1718
    %vm1847 = vmor %vm1207, %vm1719
    %vm1848 = vmor %vm1208, %vm1720
    %vm1849 = vmor %vm1209, %vm1721
    %vm1850 = vmor %vm1210, %vm1722
    %v1851 = vsel %vm1723, 1, 0
    %v1852 = vsel %vm1724, 1, 0
    %v1853 = vsel %vm1725, 1, 0
    %v1854 = vsel %vm1726, 1, 0
    %v1855 = vsel %vm1727, 1, 0
    %v1856 = vsel %vm1728, 1, 0
    %v1857 = vsel %vm1729, 1, 0
    %v1858 = vsel %vm1730, 1, 0
    %v1859 = vsel %vm1731, 1, 0
    %v1860 = vsel %vm1732, 1, 0
    %v1861 = vsel %vm1733, 1, 0
    %v1862 = vsel %vm1734, 1, 0
    %v1863 = vsel %vm1735, 1, 0
    %v1864 = vsel %vm1736, 1, 0
    %v1865 = vsel %vm1737, 1, 0
    %v1866 = vsel %vm1738, 1, 0
    %v1867 = vsel %vm1739, 1, 0
    %v1868 = vsel %vm1740, 1, 0
    %v1869 = vsel %vm1741, 1, 0
    %v1870 = vsel %vm1742, 1, 0
    %v1871 = vsel %vm1743, 1, 0
    %v1872 = vsel %vm1744, 1, 0
    %v1873 = vsel %vm1745, 1, 0
    %v1874 = vsel %vm1746, 1, 0
    %v1875 = vsel %vm1747, 1, 0
    %v1876 = vsel %vm1748, 1, 0
    %v1877 = vsel %vm1749, 1, 0
    %v1878 = vsel %vm1750, 1, 0
    %v1879 = vsel %vm1751, 1, 0
    %v1880 = vsel %vm1752, 1, 0
    %v1881 = vsel %vm1753, 1, 0
    %v1882 = vsel %vm1754, 1, 0
    %v1883 = vsel %vm1755, 1, 0
    %v1884 = vsel %vm1756, 1, 0
    %v1885 = vsel %vm1757, 1, 0
    %v1886 = vsel %vm1758, 1, 0
    %v1887 = vsel %vm1759, 1, 0
    %v1888 = vsel %vm1760, 1, 0
    %v1889 = vsel %vm1761, 1, 0
    %v1890 = vsel %vm1762, 1, 0
    %v1891 = vsel %vm1763, 1, 0
    %v1892 = vsel %vm1764, 1, 0
    %v1893 = vsel %vm1765, 1, 0
    %v1894 = vsel %vm1766, 1, 0
    %v1895 = vsel %vm1767, 1, 0
    %v1896 = vsel %vm1768, 1, 0
    %v1897 = vsel %vm1769, 1, 0
    %v1898 = vsel %vm1770, 1, 0
    %v1899 = vsel %vm1771, 1, 0
    %v1900 = vsel %vm1772, 1, 0
    %v1901 = vsel %vm1773, 1, 0
    %v1902 = vsel %vm1774, 1, 0
    %v1903 = vsel %vm1775, 1, 0
    %v1904 = vsel %vm1776, 1, 0
    %v1905 = vsel %vm1777, 1, 0
    %v1906 = vsel %vm1778, 1, 0
    %v1907 = vsel %vm1779, 1, 0
    %v1908 = vsel %vm1780, 1, 0
    %v1909 = vsel %vm1781, 1, 0
    %v1910 = vsel %vm1782, 1, 0
    %v1911 = vsel %vm1783, 1, 0
    %v1912 = vsel %vm1784, 1, 0
    %v1913 = vsel %vm1785, 1, 0
    %v1914 = vsel %vm1786, 1, 0
    %v1915 = vsel %vm1787, 1, 0
    %v1916 = vsel %vm1788, 1, 0
    %v1917 = vsel %vm1789, 1, 0
    %v1918 = vsel %vm1790, 1, 0
    %v1919 = vsel %vm1791, 1, 0
    %v1920 = vsel %vm1792, 1, 0
    %v1921 = vsel %vm1793, 1, 0
    %v1922 = vsel %vm1794, 1, 0
    %v1923 = vsel %vm1795, 1, 0
    %v1924 = vsel %vm1796, 1, 0
    %v1925 = vsel %vm1797, 1, 0
    %v1926 = vsel %vm1798, 1, 0
    %v1927 = vsel %vm1799, 1, 0
    %v1928 = vsel %vm1800, 1, 0
    %v1929 = vsel %vm1801, 1, 0
    %v1930 = vsel %vm1802, 1, 0
    %v1931 = vsel %vm1803, 1, 0
    %v1932 = vsel %vm1804, 1, 0
    %v1933 = vsel %vm1805, 1, 0
    %v1934 = vsel %vm1806, 1, 0
    %v1935 = vsel %vm1807, 1, 0
    %v1936 = vsel %vm1808, 1, 0
    %v1937 = vsel %vm1809, 1, 0
    %v1938 = vsel %vm1810, 1, 0
    %v1939 = vsel %vm1811, 1, 0
    %v1940 = vsel %vm1812, 1, 0
    %v1941 = vsel %vm1813, 1, 0
    %v1942 = vsel %vm1814, 1, 0
    %v1943 = vsel %vm1815, 1, 0
    %v1944 = vsel %vm1816, 1, 0
    %v1945 = vsel %vm1817, 1, 0
    %v1946 = vsel %vm1818, 1, 0
    %v1947 = vsel %vm1819, 1, 0
    %v1948 = vsel %vm1820, 1, 0
    %v1949 = vsel %vm1821, 1, 0
    %v1950 = vsel %vm1822, 1, 0
    %v1951 = vsel %vm1823, 1, 0
    %v1952 = vsel %vm1824, 1, 0
    %v1953 = vsel %vm1825, 1, 0
    %v1954 = vsel %vm1826, 1, 0
    %v1955 = vsel %vm1827, 1, 0
    %v1956 = vsel %vm1828, 1, 0
    %v1957 = vsel %vm1829, 1, 0
    %v1958 = vsel %vm1830, 1, 0
    %v1959 = vsel %vm1831, 1, 0
    %v1960 = vsel %vm1832, 1, 0
    %v1961 = vsel %vm1833, 1, 0
    %v1962 = vsel %vm1834, 1, 0
    %v1963 = vsel %vm1835, 1, 0
    %v1964 = vsel %vm1836, 1, 0
    %v1965 = vsel %vm1837, 1, 0
    %v1966 = vsel %vm1838, 1, 0
    %v1967 = vsel %vm1839, 1, 0
    %v1968 = vsel %vm1840, 1, 0
    %v1969 = vsel %vm1841, 1, 0
    %v1970 = vsel %vm1842, 1, 0
    %v1971 = vsel %vm1843, 1, 0
    %v1972 = vsel %vm1844, 1, 0
    %v1973 = vsel %vm1845, 1, 0
    %v1974 = vsel %vm1846, 1, 0
    %v1975 = vsel %vm1847, 1, 0
    %v1976 = vsel %vm1848, 1, 0
    %v1977 = vsel %vm1849, 1, 0
    %v1978 = vsel %vm1850, 1, 0
    %v1979 = vcvt.s32.f32 %v1851
    %v1980 = vcvt.s32.f32 %v1852
    %v1981 = vcvt.s32.f32 %v1853
    %v1982 = vcvt.s32.f32 %v1854
    %v1983 = vcvt.s32.f32 %v1855
    %v1984 = vcvt.s32.f32 %v1856
    %v1985 = vcvt.s32.f32 %v1857
    %v1986 = vcvt.s32.f32 %v1858
    %v1987 = vcvt.s32.f32 %v1859
    %v1988 = vcvt.s32.f32 %v1860
    %v1989 = vcvt.s32.f32 %v1861
    %v1990 = vcvt.s32.f32 %v1862
    %v1991 = vcvt.s32.f32 %v1863
    %v1992 = vcvt.s32.f32 %v1864
    %v1993 = vcvt.s32.f32 %v1865
    %v1994 = vcvt.s32.f32 %v1866
    %v1995 = vcvt.s32.f32 %v1867
    %v1996 = vcvt.s32.f32 %v1868
    %v1997 = vcvt.s32.f32 %v1869
    %v1998 = vcvt.s32.f32 %v1870
    %v1999 = vcvt.s32.f32 %v1871
    %v2000 = vcvt.s32.f32 %v1872
    %v2001 = vcvt.s32.f32 %v1873
    %v2002 = vcvt.s32.f32 %v1874
    %v2003 = vcvt.s32.f32 %v1875
    %v2004 = vcvt.s32.f32 %v1876
    %v2005 = vcvt.s32.f32 %v1877
    %v2006 = vcvt.s32.f32 %v1878
    %v2007 = vcvt.s32.f32 %v1879
    %v2008 = vcvt.s32.f32 %v1880
    %v2009 = vcvt.s32.f32 %v1881
    %v2010 = vcvt.s32.f32 %v1882
    %v2011 = vcvt.s32.f32 %v1883
    %v2012 = vcvt.s32.f32 %v1884
    %v2013 = vcvt.s32.f32 %v1885
    %v2014 = vcvt.s32.f32 %v1886
    %v2015 = vcvt.s32.f32 %v1887
    %v2016 = vcvt.s32.f32 %v1888
    %v2017 = vcvt.s32.f32 %v1889
    %v2018 = vcvt.s32.f32 %v1890
    %v2019 = vcvt.s32.f32 %v1891
    %v2020 = vcvt.s32.f32 %v1892
    %v2021 = vcvt.s32.f32 %v1893
    %v2022 = vcvt.s32.f32 %v1894
    %v2023 = vcvt.s32.f32 %v1895
    %v2024 = vcvt.s32.f32 %v1896
    %v2025 = vcvt.s32.f32 %v1897
    %v2026 = vcvt.s32.f32 %v1898
    %v2027 = vcvt.s32.f32 %v1899
    %v2028 = vcvt.s32.f32 %v1900
    %v2029 = vcvt.s32.f32 %v1901
    %v2030 = vcvt.s32.f32 %v1902
    %v2031 = vcvt.s32.f32 %v1903
    %v2032 = vcvt.s32.f32 %v1904
    %v2033 = vcvt.s32.f32 %v1905
    %v2034 = vcvt.s32.f32 %v1906
    %v2035 = vcvt.s32.f32 %v1907
    %v2036 = vcvt.s32.f32 %v1908
    %v2037 = vcvt.s32.f32 %v1909
    %v2038 = vcvt.s32.f32 %v1910
    %v2039 = vcvt.s32.f32 %v1911
    %v2040 = vcvt.s32.f32 %v1912
    %v2041 = vcvt.s32.f32 %v1913
    %v2042 = vcvt.s32.f32 %v1914
    %v2043 = vcvt.s32.f32 %v1915
    %v2044 = vcvt.s32.f32 %v1916
    %v2045 = vcvt.s32.f32 %v1917
    %v2046 = vcvt.s32.f32 %v1918
    %v2047 = vcvt.s32.f32 %v1919
    %v2048 = vcvt.s32.f32 %v1920
    %v2049 = vcvt.s32.f32 %v1921
    %v2050 = vcvt.s32.f32 %v1922
    %v2051 = vcvt.s32.f32 %v1923
    %v2052 = vcvt.s32.f32 %v1924
    %v2053 = vcvt.s32.f32 %v1925
    %v2054 = vcvt.s32.f32 %v1926
    %v2055 = vcvt.s32.f32 %v1927
    %v2056 = vcvt.s32.f32 %v1928
    %v2057 = vcvt.s32.f32 %v1929
    %v2058 = vcvt.s32.f32 %v1930
    %v2059 = vcvt.s32.f32 %v1931
    %v2060 = vcvt.s32.f32 %v1932
    %v2061 = vcvt.s32.f32 %v1933
    %v2062 = vcvt.s32.f32 %v1934
    %v2063 = vcvt.s32.f32 %v1935
    %v2064 = vcvt.s32.f32 %v1936
    %v2065 = vcvt.s32.f32 %v1937
    %v2066 = vcvt.s32.f32 %v1938
    %v2067 = vcvt.s32.f32 %v1939
    %v2068 = vcvt.s32.f32 %v1940
    %v2069 = vcvt.s32.f32 %v1941
    %v2070 = vcvt.s32.f32 %v1942
    %v2071 = vcvt.s32.f32 %v1943
    %v2072 = vcvt.s32.f32 %v1944
    %v2073 = vcvt.s32.f32 %v1945
    %v2074 = vcvt.s32.f32 %v1946
    %v2075 = vcvt.s32.f32 %v1947
    %v2076 = vcvt.s32.f32 %v1948
    %v2077 = vcvt.s32.f32 %v1949
    %v2078 = vcvt.s32.f32 %v1950
    %v2079 = vcvt.s32.f32 %v1951
    %v2080 = vcvt.s32.f32 %v1952
    %v2081 = vcvt.s32.f32 %v1953
    %v2082 = vcvt.s32.f32 %v1954
    %v2083 = vcvt.s32.f32 %v1955
    %v2084 = vcvt.s32.f32 %v1956
    %v2085 = vcvt.s32.f32 %v1957
    %v2086 = vcvt.s32.f32 %v1958
    %v2087 = vcvt.s32.f32 %v1959
    %v2088 = vcvt.s32.f32 %v1960
    %v2089 = vcvt.s32.f32 %v1961
    %v2090 = vcvt.s32.f32 %v1962
    %v2091 = vcvt.s32.f32 %v1963
    %v2092 = vcvt.s32.f32 %v1964
    %v2093 = vcvt.s32.f32 %v1965
    %v2094 = vcvt.s32.f32 %v1966
    %v2095 = vcvt.s32.f32 %v1967
    %v2096 = vcvt.s32.f32 %v1968
    %v2097 = vcvt.s32.f32 %v1969
    %v2098 = vcvt.s32.f32 %v1970
    %v2099 = vcvt.s32.f32 %v1971
    %v2100 = vcvt.s32.f32 %v1972
    %v2101 = vcvt.s32.f32 %v1973
    %v2102 = vcvt.s32.f32 %v1974
    %v2103 = vcvt.s32.f32 %v1975
    %v2104 = vcvt.s32.f32 %v1976
    %v2105 = vcvt.s32.f32 %v1977
    %v2106 = vcvt.s32.f32 %v1978
    %v2107 = vpack.c.bf16 %v1980, %v1979
    %v2108 = vpack.c.bf16 %v1982, %v1981
    %v2109 = vpack.c.bf16 %v1984, %v1983
    %v2110 = vpack.c.bf16 %v1986, %v1985
    %v2111 = vpack.c.bf16 %v1988, %v1987
    %v2112 = vpack.c.bf16 %v1990, %v1989
    %v2113 = vpack.c.bf16 %v1992, %v1991
    %v2114 = vpack.c.bf16 %v1994, %v1993
    %v2115 = vpack.c.bf16 %v1996, %v1995
    %v2116 = vpack.c.bf16 %v1998, %v1997
    %v2117 = vpack.c.bf16 %v2000, %v1999
    %v2118 = vpack.c.bf16 %v2002, %v2001
    %v2119 = vpack.c.bf16 %v2004, %v2003
    %v2120 = vpack.c.bf16 %v2006, %v2005
    %v2121 = vpack.c.bf16 %v2008, %v2007
    %v2122 = vpack.c.bf16 %v2010, %v2009
    %v2123 = vpack.c.bf16 %v2012, %v2011
    %v2124 = vpack.c.bf16 %v2014, %v2013
    %v2125 = vpack.c.bf16 %v2016, %v2015
    %v2126 = vpack.c.bf16 %v2018, %v2017
    %v2127 = vpack.c.bf16 %v2020, %v2019
    %v2128 = vpack.c.bf16 %v2022, %v2021
    %v2129 = vpack.c.bf16 %v2024, %v2023
    %v2130 = vpack.c.bf16 %v2026, %v2025
    %v2131 = vpack.c.bf16 %v2028, %v2027
    %v2132 = vpack.c.bf16 %v2030, %v2029
    %v2133 = vpack.c.bf16 %v2032, %v2031
    %v2134 = vpack.c.bf16 %v2034, %v2033
    %v2135 = vpack.c.bf16 %v2036, %v2035
    %v2136 = vpack.c.bf16 %v2038, %v2037
    %v2137 = vpack.c.bf16 %v2040, %v2039
    %v2138 = vpack.c.bf16 %v2042, %v2041
    %v2139 = vpack.c.bf16 %v2044, %v2043
    %v2140 = vpack.c.bf16 %v2046, %v2045
    %v2141 = vpack.c.bf16 %v2048, %v2047
    %v2142 = vpack.c.bf16 %v2050, %v2049
    %v2143 = vpack.c.bf16 %v2052, %v2051
    %v2144 = vpack.c.bf16 %v2054, %v2053
    %v2145 = vpack.c.bf16 %v2056, %v2055
    %v2146 = vpack.c.bf16 %v2058, %v2057
    %v2147 = vpack.c.bf16 %v2060, %v2059
    %v2148 = vpack.c.bf16 %v2062, %v2061
    %v2149 = vpack.c.bf16 %v2064, %v2063
    %v2150 = vpack.c.bf16 %v2066, %v2065
    %v2151 = vpack.c.bf16 %v2068, %v2067
    %v2152 = vpack.c.bf16 %v2070, %v2069
    %v2153 = vpack.c.bf16 %v2072, %v2071
    %v2154 = vpack.c.bf16 %v2074, %v2073
    %v2155 = vpack.c.bf16 %v2076, %v2075
    %v2156 = vpack.c.bf16 %v2078, %v2077
    %v2157 = vpack.c.bf16 %v2080, %v2079
    %v2158 = vpack.c.bf16 %v2082, %v2081
    %v2159 = vpack.c.bf16 %v2084, %v2083
    %v2160 = vpack.c.bf16 %v2086, %v2085
    %v2161 = vpack.c.bf16 %v2088, %v2087
    %v2162 = vpack.c.bf16 %v2090, %v2089
    %v2163 = vpack.c.bf16 %v2092, %v2091
    %v2164 = vpack.c.bf16 %v2094, %v2093
    %v2165 = vpack.c.bf16 %v2096, %v2095
    %v2166 = vpack.c.bf16 %v2098, %v2097
    %v2167 = vpack.c.bf16 %v2100, %v2099
    %v2168 = vpack.c.bf16 %v2102, %v2101
    %v2169 = vpack.c.bf16 %v2104, %v2103
    %v2170 = vpack.c.bf16 %v2106, %v2105
    %v2171 = vld [vmem:[#allocation2] sm:$0xff]
    %v2172 = vld [vmem:[#allocation2 + $0x8] sm:$0xff]
    %v2173 = vld [vmem:[#allocation2 + $0x10] sm:$0xff]
    %v2174 = vld [vmem:[#allocation2 + $0x18] sm:$0xff]
    %vm2175 = vcmask 523264
    %v2177 = vsel %vm2175, %v2107, 0
    %v2180 = vsel %vm2175, %v2108, 0
    %v2183 = vsel %vm2175, %v2109, 0
    %v2186 = vsel %vm2175, %v2110, 0
    %v2189 = vsel %vm2175, %v2111, 0
    %v2192 = vsel %vm2175, %v2112, 0
    %v2195 = vsel %vm2175, %v2113, 0
    %v2198 = vsel %vm2175, %v2114, 0
    %v2201 = vsel %vm2175, %v2115, 0
    %v2204 = vsel %vm2175, %v2116, 0
    %v2207 = vsel %vm2175, %v2117, 0
    %v2210 = vsel %vm2175, %v2118, 0
    %v2213 = vsel %vm2175, %v2119, 0
    %v2216 = vsel %vm2175, %v2120, 0
    %v2219 = vsel %vm2175, %v2121, 0
    %v2222 = vsel %vm2175, %v2122, 0
    %v2225 = vsel %vm2175, %v2123, 0
    %v2228 = vsel %vm2175, %v2124, 0
    %v2231 = vsel %vm2175, %v2125, 0
    %v2234 = vsel %vm2175, %v2126, 0
    %v2237 = vsel %vm2175, %v2127, 0
    %v2240 = vsel %vm2175, %v2128, 0
    %v2243 = vsel %vm2175, %v2129, 0
    %v2246 = vsel %vm2175, %v2130, 0
    %v2249 = vsel %vm2175, %v2131, 0
    %v2252 = vsel %vm2175, %v2132, 0
    %v2255 = vsel %vm2175, %v2133, 0
    %v2258 = vsel %vm2175, %v2134, 0
    %v2261 = vsel %vm2175, %v2135, 0
    %v2264 = vsel %vm2175, %v2136, 0
    %v2267 = vsel %vm2175, %v2137, 0
    %v2270 = vsel %vm2175, %v2138, 0
    %v2273 = vsel %vm2175, %v2139, 0
    %v2276 = vsel %vm2175, %v2140, 0
    %v2279 = vsel %vm2175, %v2141, 0
    %v2282 = vsel %vm2175, %v2142, 0
    %v2285 = vsel %vm2175, %v2143, 0
    %v2288 = vsel %vm2175, %v2144, 0
    %v2291 = vsel %vm2175, %v2145, 0
    %v2294 = vsel %vm2175, %v2146, 0
    %v2297 = vsel %vm2175, %v2147, 0
    %v2300 = vsel %vm2175, %v2148, 0
    %v2303 = vsel %vm2175, %v2149, 0
    %v2306 = vsel %vm2175, %v2150, 0
    %v2309 = vsel %vm2175, %v2151, 0
    %v2312 = vsel %vm2175, %v2152, 0
    %v2315 = vsel %vm2175, %v2153, 0
    %v2318 = vsel %vm2175, %v2154, 0
    %v2321 = vsel %vm2175, %v2155, 0
    %v2324 = vsel %vm2175, %v2156, 0
    %v2327 = vsel %vm2175, %v2157, 0
    %v2330 = vsel %vm2175, %v2158, 0
    %v2333 = vsel %vm2175, %v2159, 0
    %v2336 = vsel %vm2175, %v2160, 0
    %v2339 = vsel %vm2175, %v2161, 0
    %v2342 = vsel %vm2175, %v2162, 0
    %v2345 = vsel %vm2175, %v2163, 0
    %v2348 = vsel %vm2175, %v2164, 0
    %v2351 = vsel %vm2175, %v2165, 0
    %v2354 = vsel %vm2175, %v2166, 0
    %v2357 = vsel %vm2175, %v2167, 0
    %v2360 = vsel %vm2175, %v2168, 0
    %v2363 = vsel %vm2175, %v2169, 0
    %v2366 = vsel %vm2175, %v2170, 0
    %2368 = vmatprep.subr.bf16.mxu0 0
    %2369 = vmatpush1.bf16.msra.mxu0 %v2171
    %2370 = vmatprep.subr.bf16.mxu0 0
    %2371 = vmatpush1.bf16.msra.mxu0 %v2172
    %2372 = vmatprep.subr.bf16.mxu0 0
    %2373 = vmatpush1.bf16.msra.mxu0 %v2173
    %2374 = vmatprep.subr.bf16.mxu0 0
    %2375 = vmatpush1.bf16.msra.mxu0 %v2174
    %2376 = vmatprep.subr.bf16.mxu0 0
    %2377 = vmatpush1.bf16.msra.mxu0 0
    %2378 = vmatprep.subr.bf16.mxu0 0
    %2379 = vmatpush1.bf16.msra.mxu0 0
    %2380 = vmatprep.subr.bf16.mxu0 0
    %2381 = vmatpush1.bf16.msra.mxu0 0
    %2382 = vmatprep.subr.bf16.mxu0 0
    %2383 = vmatpush1.bf16.msra.mxu0 0
    %2384 = vmatprep.subr.bf16.mxu0 0
    %2385 = vmatpush1.bf16.msra.mxu0 0
    %2386 = vmatprep.subr.bf16.mxu0 0
    %2387 = vmatpush1.bf16.msra.mxu0 0
    %2388 = vmatprep.subr.bf16.mxu0 0
    %2389 = vmatpush1.bf16.msra.mxu0 0
    %2390 = vmatprep.subr.bf16.mxu0 0
    %2391 = vmatpush1.bf16.msra.mxu0 0
    %2392 = vmatprep.subr.bf16.mxu0 0
    %2393 = vmatpush1.bf16.msra.mxu0 0
    %2394 = vmatprep.subr.bf16.mxu0 0
    %2395 = vmatpush1.bf16.msra.mxu0 0
    %2396 = vmatprep.subr.bf16.mxu0 0
    %2397 = vmatpush1.bf16.msra.mxu0 0
    %2398 = vmatprep.subr.bf16.mxu0 0
    %2399 = vmatpush1.bf16.msra.mxu0 0
    %2400 = vmatprep.mubr.bf16.mxu0 0
    %2401 = vmatmul.mubr.bf16.gmra.mrb[0].mxu0 %v2177
    %v2402 = vpop.f32.mrb[0].mxu0
    %v2403 = vadd.f32 0.0, %v2402
    %v2404 = vpop.f32.mrb[0].mxu0
    %v2405 = vpop.f32.mrb[0].mxu0
    %v2406 = vadd.f32 0.0, %v2405
    %v2407 = vpop.f32.mrb[0].mxu0
    %2408 = vmatprep.mubr.bf16.mxu0 0
    %2409 = vmatmul.mubr.bf16.gmra.mrb[0].mxu0 %v2180
    %v2410 = vpop.f32.mrb[0].mxu0
    %v2411 = vadd.f32 0.0, %v2410
    %v2412 = vpop.f32.mrb[0].mxu0
    %v2413 = vpop.f32.mrb[0].mxu0
    %v2414 = vadd.f32 0.0, %v2413
    %v2415 = vpop.f32.mrb[0].mxu0
    %2416 = vmatprep.mubr.bf16.mxu0 0
    %2417 = vmatmul.mubr.bf16.gmra.mrb[0].mxu0 %v2183
    %v2418 = vpop.f32.mrb[0].mxu0
    %v2419 = vadd.f32 0.0, %v2418
    %v2420 = vpop.f32.mrb[0].mxu0
    %v2421 = vpop.f32.mrb[0].mxu0
    %v2422 = vadd.f32 0.0, %v2421
    %v2423 = vpop.f32.mrb[0].mxu0
    %2424 = vmatprep.mubr.bf16.mxu0 0
    %2425 = vmatmul.mubr.bf16.gmra.mrb[0].mxu0 %v2186
    %v2426 = vpop.f32.mrb[0].mxu0
    %v2427 = vadd.f32 0.0, %v2426
    %v2428 = vpop.f32.mrb[0].mxu0
    %v2429 = vpop.f32.mrb[0].mxu0
    %v2430 = vadd.f32 0.0, %v2429
    %v2431 = vpop.f32.mrb[0].mxu0
    %2432 = vmatprep.mubr.bf16.mxu0 0
    %2433 = vmatmul.mubr.bf16.gmra.mrb[0].mxu0 %v2189
    %v2434 = vpop.f32.mrb[0].mxu0
    %v2435 = vadd.f32 0.0, %v2434
    %v2436 = vpop.f32.mrb[0].mxu0
    %v2437 = vpop.f32.mrb[0].mxu0
    %v2438 = vadd.f32 0.0, %v2437
    %v2439 = vpop.f32.mrb[0].mxu0
    %2440 = vmatprep.mubr.bf16.mxu0 0
    %2441 = vmatmul.mubr.bf16.gmra.mrb[0].mxu0 %v2192
    %v2442 = vpop.f32.mrb[0].mxu0
    %v2443 = vadd.f32 0.0, %v2442
    %v2444 = vpop.f32.mrb[0].mxu0
    %v2445 = vpop.f32.mrb[0].mxu0
    %v2446 = vadd.f32 0.0, %v2445
    %v2447 = vpop.f32.mrb[0].mxu0
    %2448 = vmatprep.mubr.bf16.mxu0 0
    %2449 = vmatmul.mubr.bf16.gmra.mrb[0].mxu0 %v2195
    %v2450 = vpop.f32.mrb[0].mxu0
    %v2451 = vadd.f32 0.0, %v2450
    %v2452 = vpop.f32.mrb[0].mxu0
    %v2453 = vpop.f32.mrb[0].mxu0
    %v2454 = vadd.f32 0.0, %v2453
    %v2455 = vpop.f32.mrb[0].mxu0
    %2456 = vmatprep.mubr.bf16.mxu0 0
    %2457 = vmatmul.mubr.bf16.gmra.mrb[0].mxu0 %v2198
    %v2458 = vpop.f32.mrb[0].mxu0
    %v2459 = vadd.f32 0.0, %v2458
    %v2460 = vpop.f32.mrb[0].mxu0
    %v2461 = vpop.f32.mrb[0].mxu0
    %v2462 = vadd.f32 0.0, %v2461
    %v2463 = vpop.f32.mrb[0].mxu0
    %2464 = vmatprep.mubr.bf16.mxu0 0
    %2465 = vmatmul.mubr.bf16.gmra.mrb[0].mxu0 %v2201
    %v2466 = vpop.f32.mrb[0].mxu0
    %v2467 = vadd.f32 0.0, %v2466
    %v2468 = vpop.f32.mrb[0].mxu0
    %v2469 = vpop.f32.mrb[0].mxu0
    %v2470 = vadd.f32 0.0, %v2469
    %v2471 = vpop.f32.mrb[0].mxu0
    %2472 = vmatprep.mubr.bf16.mxu0 0
    %2473 = vmatmul.mubr.bf16.gmra.mrb[0].mxu0 %v2204
    %v2474 = vpop.f32.mrb[0].mxu0
    %v2475 = vadd.f32 0.0, %v2474
    %v2476 = vpop.f32.mrb[0].mxu0
    %v2477 = vpop.f32.mrb[0].mxu0
    %v2478 = vadd.f32 0.0, %v2477
    %v2479 = vpop.f32.mrb[0].mxu0
    %2480 = vmatprep.mubr.bf16.mxu0 0
    %2481 = vmatmul.mubr.bf16.gmra.mrb[0].mxu0 %v2207
    %v2482 = vpop.f32.mrb[0].mxu0
    %v2483 = vadd.f32 0.0, %v2482
    %v2484 = vpop.f32.mrb[0].mxu0
    %v2485 = vpop.f32.mrb[0].mxu0
    %v2486 = vadd.f32 0.0, %v2485
    %v2487 = vpop.f32.mrb[0].mxu0
    %2488 = vmatprep.mubr.bf16.mxu0 0
    %2489 = vmatmul.mubr.bf16.gmra.mrb[0].mxu0 %v2210
    %v2490 = vpop.f32.mrb[0].mxu0
    %v2491 = vadd.f32 0.0, %v2490
    %v2492 = vpop.f32.mrb[0].mxu0
    %v2493 = vpop.f32.mrb[0].mxu0
    %v2494 = vadd.f32 0.0, %v2493
    %v2495 = vpop.f32.mrb[0].mxu0
    %2496 = vmatprep.mubr.bf16.mxu0 0
    %2497 = vmatmul.mubr.bf16.gmra.mrb[0].mxu0 %v2213
    %v2498 = vpop.f32.mrb[0].mxu0
    %v2499 = vadd.f32 0.0, %v2498
    %v2500 = vpop.f32.mrb[0].mxu0
    %v2501 = vpop.f32.mrb[0].mxu0
    %v2502 = vadd.f32 0.0, %v2501
    %v2503 = vpop.f32.mrb[0].mxu0
    %2504 = vmatprep.mubr.bf16.mxu0 0
    %2505 = vmatmul.mubr.bf16.gmra.mrb[0].mxu0 %v2216
    %v2506 = vpop.f32.mrb[0].mxu0
    %v2507 = vadd.f32 0.0, %v2506
    %v2508 = vpop.f32.mrb[0].mxu0
    %v2509 = vpop.f32.mrb[0].mxu0
    %v2510 = vadd.f32 0.0, %v2509
    %v2511 = vpop.f32.mrb[0].mxu0
    %2512 = vmatprep.mubr.bf16.mxu0 0
    %2513 = vmatmul.mubr.bf16.gmra.mrb[0].mxu0 %v2219
    %v2514 = vpop.f32.mrb[0].mxu0
    %v2515 = vadd.f32 0.0, %v2514
    %v2516 = vpop.f32.mrb[0].mxu0
    %v2517 = vpop.f32.mrb[0].mxu0
    %v2518 = vadd.f32 0.0, %v2517
    %v2519 = vpop.f32.mrb[0].mxu0
    %2520 = vmatprep.mubr.bf16.mxu0 0
    %2521 = vmatmul.mubr.bf16.gmra.mrb[0].mxu0 %v2222
    %v2522 = vpop.f32.mrb[0].mxu0
    %v2523 = vadd.f32 0.0, %v2522
    %v2524 = vpop.f32.mrb[0].mxu0
    %v2525 = vpop.f32.mrb[0].mxu0
    %v2526 = vadd.f32 0.0, %v2525
    %v2527 = vpop.f32.mrb[0].mxu0
    %2528 = vmatprep.mubr.bf16.mxu0 0
    %2529 = vmatmul.mubr.bf16.gmra.mrb[0].mxu0 %v2225
    %v2530 = vpop.f32.mrb[0].mxu0
    %v2531 = vadd.f32 0.0, %v2530
    %v2532 = vpop.f32.mrb[0].mxu0
    %v2533 = vpop.f32.mrb[0].mxu0
    %v2534 = vadd.f32 0.0, %v2533
    %v2535 = vpop.f32.mrb[0].mxu0
    %2536 = vmatprep.mubr.bf16.mxu0 0
    %2537 = vmatmul.mubr.bf16.gmra.mrb[0].mxu0 %v2228
    %v2538 = vpop.f32.mrb[0].mxu0
    %v2539 = vadd.f32 0.0, %v2538
    %v2540 = vpop.f32.mrb[0].mxu0
    %v2541 = vpop.f32.mrb[0].mxu0
    %v2542 = vadd.f32 0.0, %v2541
    %v2543 = vpop.f32.mrb[0].mxu0
    %2544 = vmatprep.mubr.bf16.mxu0 0
    %2545 = vmatmul.mubr.bf16.gmra.mrb[0].mxu0 %v2231
    %v2546 = vpop.f32.mrb[0].mxu0
    %v2547 = vadd.f32 0.0, %v2546
    %v2548 = vpop.f32.mrb[0].mxu0
    %v2549 = vpop.f32.mrb[0].mxu0
    %v2550 = vadd.f32 0.0, %v2549
    %v2551 = vpop.f32.mrb[0].mxu0
    %2552 = vmatprep.mubr.bf16.mxu0 0
    %2553 = vmatmul.mubr.bf16.gmra.mrb[0].mxu0 %v2234
    %v2554 = vpop.f32.mrb[0].mxu0
    %v2555 = vadd.f32 0.0, %v2554
    %v2556 = vpop.f32.mrb[0].mxu0
    %v2557 = vpop.f32.mrb[0].mxu0
    %v2558 = vadd.f32 0.0, %v2557
    %v2559 = vpop.f32.mrb[0].mxu0
    %2560 = vmatprep.mubr.bf16.mxu0 0
    %2561 = vmatmul.mubr.bf16.gmra.mrb[0].mxu0 %v2237
    %v2562 = vpop.f32.mrb[0].mxu0
    %v2563 = vadd.f32 0.0, %v2562
    %v2564 = vpop.f32.mrb[0].mxu0
    %v2565 = vpop.f32.mrb[0].mxu0
    %v2566 = vadd.f32 0.0, %v2565
    %v2567 = vpop.f32.mrb[0].mxu0
    %2568 = vmatprep.mubr.bf16.mxu0 0
    %2569 = vmatmul.mubr.bf16.gmra.mrb[0].mxu0 %v2240
    %v2570 = vpop.f32.mrb[0].mxu0
    %v2571 = vadd.f32 0.0, %v2570
    %v2572 = vpop.f32.mrb[0].mxu0
    %v2573 = vpop.f32.mrb[0].mxu0
    %v2574 = vadd.f32 0.0, %v2573
    %v2575 = vpop.f32.mrb[0].mxu0
    %2576 = vmatprep.mubr.bf16.mxu0 0
    %2577 = vmatmul.mubr.bf16.gmra.mrb[0].mxu0 %v2243
    %v2578 = vpop.f32.mrb[0].mxu0
    %v2579 = vadd.f32 0.0, %v2578
    %v2580 = vpop.f32.mrb[0].mxu0
    %v2581 = vpop.f32.mrb[0].mxu0
    %v2582 = vadd.f32 0.0, %v2581
    %v2583 = vpop.f32.mrb[0].mxu0
    %2584 = vmatprep.mubr.bf16.mxu0 0
    %2585 = vmatmul.mubr.bf16.gmra.mrb[0].mxu0 %v2246
    %v2586 = vpop.f32.mrb[0].mxu0
    %v2587 = vadd.f32 0.0, %v2586
    %v2588 = vpop.f32.mrb[0].mxu0
    %v2589 = vpop.f32.mrb[0].mxu0
    %v2590 = vadd.f32 0.0, %v2589
    %v2591 = vpop.f32.mrb[0].mxu0
    %2592 = vmatprep.mubr.bf16.mxu0 0
    %2593 = vmatmul.mubr.bf16.gmra.mrb[0].mxu0 %v2249
    %v2594 = vpop.f32.mrb[0].mxu0
    %v2595 = vadd.f32 0.0, %v2594
    %v2596 = vpop.f32.mrb[0].mxu0
    %v2597 = vpop.f32.mrb[0].mxu0
    %v2598 = vadd.f32 0.0, %v2597
    %v2599 = vpop.f32.mrb[0].mxu0
    %2600 = vmatprep.mubr.bf16.mxu0 0
    %2601 = vmatmul.mubr.bf16.gmra.mrb[0].mxu0 %v2252
    %v2602 = vpop.f32.mrb[0].mxu0
    %v2603 = vadd.f32 0.0, %v2602
    %v2604 = vpop.f32.mrb[0].mxu0
    %v2605 = vpop.f32.mrb[0].mxu0
    %v2606 = vadd.f32 0.0, %v2605
    %v2607 = vpop.f32.mrb[0].mxu0
    %2608 = vmatprep.mubr.bf16.mxu0 0
    %2609 = vmatmul.mubr.bf16.gmra.mrb[0].mxu0 %v2255
    %v2610 = vpop.f32.mrb[0].mxu0
    %v2611 = vadd.f32 0.0, %v2610
    %v2612 = vpop.f32.mrb[0].mxu0
    %v2613 = vpop.f32.mrb[0].mxu0
    %v2614 = vadd.f32 0.0, %v2613
    %v2615 = vpop.f32.mrb[0].mxu0
    %2616 = vmatprep.mubr.bf16.mxu0 0
    %2617 = vmatmul.mubr.bf16.gmra.mrb[0].mxu0 %v2258
    %v2618 = vpop.f32.mrb[0].mxu0
    %v2619 = vadd.f32 0.0, %v2618
    %v2620 = vpop.f32.mrb[0].mxu0
    %v2621 = vpop.f32.mrb[0].mxu0
    %v2622 = vadd.f32 0.0, %v2621
    %v2623 = vpop.f32.mrb[0].mxu0
    %2624 = vmatprep.mubr.bf16.mxu0 0
    %2625 = vmatmul.mubr.bf16.gmra.mrb[0].mxu0 %v2261
    %v2626 = vpop.f32.mrb[0].mxu0
    %v2627 = vadd.f32 0.0, %v2626
    %v2628 = vpop.f32.mrb[0].mxu0
    %v2629 = vpop.f32.mrb[0].mxu0
    %v2630 = vadd.f32 0.0, %v2629
    %v2631 = vpop.f32.mrb[0].mxu0
    %2632 = vmatprep.mubr.bf16.mxu0 0
    %2633 = vmatmul.mubr.bf16.gmra.mrb[0].mxu0 %v2264
    %v2634 = vpop.f32.mrb[0].mxu0
    %v2635 = vadd.f32 0.0, %v2634
    %v2636 = vpop.f32.mrb[0].mxu0
    %v2637 = vpop.f32.mrb[0].mxu0
    %v2638 = vadd.f32 0.0, %v2637
    %v2639 = vpop.f32.mrb[0].mxu0
    %2640 = vmatprep.mubr.bf16.mxu0 0
    %2641 = vmatmul.mubr.bf16.gmra.mrb[0].mxu0 %v2267
    %v2642 = vpop.f32.mrb[0].mxu0
    %v2643 = vadd.f32 0.0, %v2642
    %v2644 = vpop.f32.mrb[0].mxu0
    %v2645 = vpop.f32.mrb[0].mxu0
    %v2646 = vadd.f32 0.0, %v2645
    %v2647 = vpop.f32.mrb[0].mxu0
    %2648 = vmatprep.mubr.bf16.mxu0 0
    %2649 = vmatmul.mubr.bf16.gmra.mrb[0].mxu0 %v2270
    %v2650 = vpop.f32.mrb[0].mxu0
    %v2651 = vadd.f32 0.0, %v2650
    %v2652 = vpop.f32.mrb[0].mxu0
    %v2653 = vpop.f32.mrb[0].mxu0
    %v2654 = vadd.f32 0.0, %v2653
    %v2655 = vpop.f32.mrb[0].mxu0
    %2656 = vmatprep.mubr.bf16.mxu0 0
    %2657 = vmatmul.mubr.bf16.gmra.mrb[0].mxu0 %v2273
    %v2658 = vpop.f32.mrb[0].mxu0
    %v2659 = vadd.f32 0.0, %v2658
    %v2660 = vpop.f32.mrb[0].mxu0
    %v2661 = vpop.f32.mrb[0].mxu0
    %v2662 = vadd.f32 0.0, %v2661
    %v2663 = vpop.f32.mrb[0].mxu0
    %2664 = vmatprep.mubr.bf16.mxu0 0
    %2665 = vmatmul.mubr.bf16.gmra.mrb[0].mxu0 %v2276
    %v2666 = vpop.f32.mrb[0].mxu0
    %v2667 = vadd.f32 0.0, %v2666
    %v2668 = vpop.f32.mrb[0].mxu0
    %v2669 = vpop.f32.mrb[0].mxu0
    %v2670 = vadd.f32 0.0, %v2669
    %v2671 = vpop.f32.mrb[0].mxu0
    %2672 = vmatprep.mubr.bf16.mxu0 0
    %2673 = vmatmul.mubr.bf16.gmra.mrb[0].mxu0 %v2279
    %v2674 = vpop.f32.mrb[0].mxu0
    %v2675 = vadd.f32 0.0, %v2674
    %v2676 = vpop.f32.mrb[0].mxu0
    %v2677 = vpop.f32.mrb[0].mxu0
    %v2678 = vadd.f32 0.0, %v2677
    %v2679 = vpop.f32.mrb[0].mxu0
    %2680 = vmatprep.mubr.bf16.mxu0 0
    %2681 = vmatmul.mubr.bf16.gmra.mrb[0].mxu0 %v2282
    %v2682 = vpop.f32.mrb[0].mxu0
    %v2683 = vadd.f32 0.0, %v2682
    %v2684 = vpop.f32.mrb[0].mxu0
    %v2685 = vpop.f32.mrb[0].mxu0
    %v2686 = vadd.f32 0.0, %v2685
    %v2687 = vpop.f32.mrb[0].mxu0
    %2688 = vmatprep.mubr.bf16.mxu0 0
    %2689 = vmatmul.mubr.bf16.gmra.mrb[0].mxu0 %v2285
    %v2690 = vpop.f32.mrb[0].mxu0
    %v2691 = vadd.f32 0.0, %v2690
    %v2692 = vpop.f32.mrb[0].mxu0
    %v2693 = vpop.f32.mrb[0].mxu0
    %v2694 = vadd.f32 0.0, %v2693
    %v2695 = vpop.f32.mrb[0].mxu0
    %2696 = vmatprep.mubr.bf16.mxu0 0
    %2697 = vmatmul.mubr.bf16.gmra.mrb[0].mxu0 %v2288
    %v2698 = vpop.f32.mrb[0].mxu0
    %v2699 = vadd.f32 0.0, %v2698
    %v2700 = vpop.f32.mrb[0].mxu0
    %v2701 = vpop.f32.mrb[0].mxu0
    %v2702 = vadd.f32 0.0, %v2701
    %v2703 = vpop.f32.mrb[0].mxu0
    %2704 = vmatprep.mubr.bf16.mxu0 0
    %2705 = vmatmul.mubr.bf16.gmra.mrb[0].mxu0 %v2291
    %v2706 = vpop.f32.mrb[0].mxu0
    %v2707 = vadd.f32 0.0, %v2706
    %v2708 = vpop.f32.mrb[0].mxu0
    %v2709 = vpop.f32.mrb[0].mxu0
    %v2710 = vadd.f32 0.0, %v2709
    %v2711 = vpop.f32.mrb[0].mxu0
    %2712 = vmatprep.mubr.bf16.mxu0 0
    %2713 = vmatmul.mubr.bf16.gmra.mrb[0].mxu0 %v2294
    %v2714 = vpop.f32.mrb[0].mxu0
    %v2715 = vadd.f32 0.0, %v2714
    %v2716 = vpop.f32.mrb[0].mxu0
    %v2717 = vpop.f32.mrb[0].mxu0
    %v2718 = vadd.f32 0.0, %v2717
    %v2719 = vpop.f32.mrb[0].mxu0
    %2720 = vmatprep.mubr.bf16.mxu0 0
    %2721 = vmatmul.mubr.bf16.gmra.mrb[0].mxu0 %v2297
    %v2722 = vpop.f32.mrb[0].mxu0
    %v2723 = vadd.f32 0.0, %v2722
    %v2724 = vpop.f32.mrb[0].mxu0
    %v2725 = vpop.f32.mrb[0].mxu0
    %v2726 = vadd.f32 0.0, %v2725
    %v2727 = vpop.f32.mrb[0].mxu0
    %2728 = vmatprep.mubr.bf16.mxu0 0
    %2729 = vmatmul.mubr.bf16.gmra.mrb[0].mxu0 %v2300
    %v2730 = vpop.f32.mrb[0].mxu0
    %v2731 = vadd.f32 0.0, %v2730
    %v2732 = vpop.f32.mrb[0].mxu0
    %v2733 = vpop.f32.mrb[0].mxu0
    %v2734 = vadd.f32 0.0, %v2733
    %v2735 = vpop.f32.mrb[0].mxu0
    %2736 = vmatprep.mubr.bf16.mxu0 0
    %2737 = vmatmul.mubr.bf16.gmra.mrb[0].mxu0 %v2303
    %v2738 = vpop.f32.mrb[0].mxu0
    %v2739 = vadd.f32 0.0, %v2738
    %v2740 = vpop.f32.mrb[0].mxu0
    %v2741 = vpop.f32.mrb[0].mxu0
    %v2742 = vadd.f32 0.0, %v2741
    %v2743 = vpop.f32.mrb[0].mxu0
    %2744 = vmatprep.mubr.bf16.mxu0 0
    %2745 = vmatmul.mubr.bf16.gmra.mrb[0].mxu0 %v2306
    %v2746 = vpop.f32.mrb[0].mxu0
    %v2747 = vadd.f32 0.0, %v2746
    %v2748 = vpop.f32.mrb[0].mxu0
    %v2749 = vpop.f32.mrb[0].mxu0
    %v2750 = vadd.f32 0.0, %v2749
    %v2751 = vpop.f32.mrb[0].mxu0
    %2752 = vmatprep.mubr.bf16.mxu0 0
    %2753 = vmatmul.mubr.bf16.gmra.mrb[0].mxu0 %v2309
    %v2754 = vpop.f32.mrb[0].mxu0
    %v2755 = vadd.f32 0.0, %v2754
    %v2756 = vpop.f32.mrb[0].mxu0
    %v2757 = vpop.f32.mrb[0].mxu0
    %v2758 = vadd.f32 0.0, %v2757
    %v2759 = vpop.f32.mrb[0].mxu0
    %2760 = vmatprep.mubr.bf16.mxu0 0
    %2761 = vmatmul.mubr.bf16.gmra.mrb[0].mxu0 %v2312
    %v2762 = vpop.f32.mrb[0].mxu0
    %v2763 = vadd.f32 0.0, %v2762
    %v2764 = vpop.f32.mrb[0].mxu0
    %v2765 = vpop.f32.mrb[0].mxu0
    %v2766 = vadd.f32 0.0, %v2765
    %v2767 = vpop.f32.mrb[0].mxu0
    %2768 = vmatprep.mubr.bf16.mxu0 0
    %2769 = vmatmul.mubr.bf16.gmra.mrb[0].mxu0 %v2315
    %v2770 = vpop.f32.mrb[0].mxu0
    %v2771 = vadd.f32 0.0, %v2770
    %v2772 = vpop.f32.mrb[0].mxu0
    %v2773 = vpop.f32.mrb[0].mxu0
    %v2774 = vadd.f32 0.0, %v2773
    %v2775 = vpop.f32.mrb[0].mxu0
    %2776 = vmatprep.mubr.bf16.mxu0 0
    %2777 = vmatmul.mubr.bf16.gmra.mrb[0].mxu0 %v2318
    %v2778 = vpop.f32.mrb[0].mxu0
    %v2779 = vadd.f32 0.0, %v2778
    %v2780 = vpop.f32.mrb[0].mxu0
    %v2781 = vpop.f32.mrb[0].mxu0
    %v2782 = vadd.f32 0.0, %v2781
    %v2783 = vpop.f32.mrb[0].mxu0
    %2784 = vmatprep.mubr.bf16.mxu0 0
    %2785 = vmatmul.mubr.bf16.gmra.mrb[0].mxu0 %v2321
    %v2786 = vpop.f32.mrb[0].mxu0
    %v2787 = vadd.f32 0.0, %v2786
    %v2788 = vpop.f32.mrb[0].mxu0
    %v2789 = vpop.f32.mrb[0].mxu0
    %v2790 = vadd.f32 0.0, %v2789
    %v2791 = vpop.f32.mrb[0].mxu0
    %2792 = vmatprep.mubr.bf16.mxu0 0
    %2793 = vmatmul.mubr.bf16.gmra.mrb[0].mxu0 %v2324
    %v2794 = vpop.f32.mrb[0].mxu0
    %v2795 = vadd.f32 0.0, %v2794
    %v2796 = vpop.f32.mrb[0].mxu0
    %v2797 = vpop.f32.mrb[0].mxu0
    %v2798 = vadd.f32 0.0, %v2797
    %v2799 = vpop.f32.mrb[0].mxu0
    %2800 = vmatprep.mubr.bf16.mxu0 0
    %2801 = vmatmul.mubr.bf16.gmra.mrb[0].mxu0 %v2327
    %v2802 = vpop.f32.mrb[0].mxu0
    %v2803 = vadd.f32 0.0, %v2802
    %v2804 = vpop.f32.mrb[0].mxu0
    %v2805 = vpop.f32.mrb[0].mxu0
    %v2806 = vadd.f32 0.0, %v2805
    %v2807 = vpop.f32.mrb[0].mxu0
    %2808 = vmatprep.mubr.bf16.mxu0 0
    %2809 = vmatmul.mubr.bf16.gmra.mrb[0].mxu0 %v2330
    %v2810 = vpop.f32.mrb[0].mxu0
    %v2811 = vadd.f32 0.0, %v2810
    %v2812 = vpop.f32.mrb[0].mxu0
    %v2813 = vpop.f32.mrb[0].mxu0
    %v2814 = vadd.f32 0.0, %v2813
    %v2815 = vpop.f32.mrb[0].mxu0
    %2816 = vmatprep.mubr.bf16.mxu0 0
    %2817 = vmatmul.mubr.bf16.gmra.mrb[0].mxu0 %v2333
    %v2818 = vpop.f32.mrb[0].mxu0
    %v2819 = vadd.f32 0.0, %v2818
    %v2820 = vpop.f32.mrb[0].mxu0
    %v2821 = vpop.f32.mrb[0].mxu0
    %v2822 = vadd.f32 0.0, %v2821
    %v2823 = vpop.f32.mrb[0].mxu0
    %2824 = vmatprep.mubr.bf16.mxu0 0
    %2825 = vmatmul.mubr.bf16.gmra.mrb[0].mxu0 %v2336
    %v2826 = vpop.f32.mrb[0].mxu0
    %v2827 = vadd.f32 0.0, %v2826
    %v2828 = vpop.f32.mrb[0].mxu0
    %v2829 = vpop.f32.mrb[0].mxu0
    %v2830 = vadd.f32 0.0, %v2829
    %v2831 = vpop.f32.mrb[0].mxu0
    %2832 = vmatprep.mubr.bf16.mxu0 0
    %2833 = vmatmul.mubr.bf16.gmra.mrb[0].mxu0 %v2339
    %v2834 = vpop.f32.mrb[0].mxu0
    %v2835 = vadd.f32 0.0, %v2834
    %v2836 = vpop.f32.mrb[0].mxu0
    %v2837 = vpop.f32.mrb[0].mxu0
    %v2838 = vadd.f32 0.0, %v2837
    %v2839 = vpop.f32.mrb[0].mxu0
    %2840 = vmatprep.mubr.bf16.mxu0 0
    %2841 = vmatmul.mubr.bf16.gmra.mrb[0].mxu0 %v2342
    %v2842 = vpop.f32.mrb[0].mxu0
    %v2843 = vadd.f32 0.0, %v2842
    %v2844 = vpop.f32.mrb[0].mxu0
    %v2845 = vpop.f32.mrb[0].mxu0
    %v2846 = vadd.f32 0.0, %v2845
    %v2847 = vpop.f32.mrb[0].mxu0
    %2848 = vmatprep.mubr.bf16.mxu0 0
    %2849 = vmatmul.mubr.bf16.gmra.mrb[0].mxu0 %v2345
    %v2850 = vpop.f32.mrb[0].mxu0
    %v2851 = vadd.f32 0.0, %v2850
    %v2852 = vpop.f32.mrb[0].mxu0
    %v2853 = vpop.f32.mrb[0].mxu0
    %v2854 = vadd.f32 0.0, %v2853
    %v2855 = vpop.f32.mrb[0].mxu0
    %2856 = vmatprep.mubr.bf16.mxu0 0
    %2857 = vmatmul.mubr.bf16.gmra.mrb[0].mxu0 %v2348
    %v2858 = vpop.f32.mrb[0].mxu0
    %v2859 = vadd.f32 0.0, %v2858
    %v2860 = vpop.f32.mrb[0].mxu0
    %v2861 = vpop.f32.mrb[0].mxu0
    %v2862 = vadd.f32 0.0, %v2861
    %v2863 = vpop.f32.mrb[0].mxu0
    %2864 = vmatprep.mubr.bf16.mxu0 0
    %2865 = vmatmul.mubr.bf16.gmra.mrb[0].mxu0 %v2351
    %v2866 = vpop.f32.mrb[0].mxu0
    %v2867 = vadd.f32 0.0, %v2866
    %v2868 = vpop.f32.mrb[0].mxu0
    %v2869 = vpop.f32.mrb[0].mxu0
    %v2870 = vadd.f32 0.0, %v2869
    %v2871 = vpop.f32.mrb[0].mxu0
    %2872 = vmatprep.mubr.bf16.mxu0 0
    %2873 = vmatmul.mubr.bf16.gmra.mrb[0].mxu0 %v2354
    %v2874 = vpop.f32.mrb[0].mxu0
    %v2875 = vadd.f32 0.0, %v2874
    %v2876 = vpop.f32.mrb[0].mxu0
    %v2877 = vpop.f32.mrb[0].mxu0
    %v2878 = vadd.f32 0.0, %v2877
    %v2879 = vpop.f32.mrb[0].mxu0
    %2880 = vmatprep.mubr.bf16.mxu0 0
    %2881 = vmatmul.mubr.bf16.gmra.mrb[0].mxu0 %v2357
    %v2882 = vpop.f32.mrb[0].mxu0
    %v2883 = vadd.f32 0.0, %v2882
    %v2884 = vpop.f32.mrb[0].mxu0
    %v2885 = vpop.f32.mrb[0].mxu0
    %v2886 = vadd.f32 0.0, %v2885
    %v2887 = vpop.f32.mrb[0].mxu0
    %2888 = vmatprep.mubr.bf16.mxu0 0
    %2889 = vmatmul.mubr.bf16.gmra.mrb[0].mxu0 %v2360
    %v2890 = vpop.f32.mrb[0].mxu0
    %v2891 = vadd.f32 0.0, %v2890
    %v2892 = vpop.f32.mrb[0].mxu0
    %v2893 = vpop.f32.mrb[0].mxu0
    %v2894 = vadd.f32 0.0, %v2893
    %v2895 = vpop.f32.mrb[0].mxu0
    %2896 = vmatprep.mubr.bf16.mxu0 0
    %2897 = vmatmul.mubr.bf16.gmra.mrb[0].mxu0 %v2363
    %v2898 = vpop.f32.mrb[0].mxu0
    %v2899 = vadd.f32 0.0, %v2898
    %v2900 = vpop.f32.mrb[0].mxu0
    %v2901 = vpop.f32.mrb[0].mxu0
    %v2902 = vadd.f32 0.0, %v2901
    %v2903 = vpop.f32.mrb[0].mxu0
    %2904 = vmatprep.mubr.bf16.mxu0 0
    %2905 = vmatmul.mubr.bf16.gmra.mrb[0].mxu0 %v2366
    %v2906 = vpop.f32.mrb[0].mxu0
    %v2907 = vadd.f32 0.0, %v2906
    %v2908 = vpop.f32.mrb[0].mxu0
    %v2909 = vpop.f32.mrb[0].mxu0
    %v2910 = vadd.f32 0.0, %v2909
    %v2911 = vpop.f32.mrb[0].mxu0
    %2912 = vdwg.mxu0
    %v2913 = vxor.u32 %v2403, 2147483648
    %v2914 = vxor.u32 %v2406, 2147483648
    %v2915 = vxor.u32 %v2411, 2147483648
    %v2916 = vxor.u32 %v2414, 2147483648
    %v2917 = vxor.u32 %v2419, 2147483648
    %v2918 = vxor.u32 %v2422, 2147483648
    %v2919 = vxor.u32 %v2427, 2147483648
    %v2920 = vxor.u32 %v2430, 2147483648
    %v2921 = vxor.u32 %v2435, 2147483648
    %v2922 = vxor.u32 %v2438, 2147483648
    %v2923 = vxor.u32 %v2443, 2147483648
    %v2924 = vxor.u32 %v2446, 2147483648
    %v2925 = vxor.u32 %v2451, 2147483648
    %v2926 = vxor.u32 %v2454, 2147483648
    %v2927 = vxor.u32 %v2459, 2147483648
    %v2928 = vxor.u32 %v2462, 2147483648
    %v2929 = vxor.u32 %v2467, 2147483648
    %v2930 = vxor.u32 %v2470, 2147483648
    %v2931 = vxor.u32 %v2475, 2147483648
    %v2932 = vxor.u32 %v2478, 2147483648
    %v2933 = vxor.u32 %v2483, 2147483648
    %v2934 = vxor.u32 %v2486, 2147483648
    %v2935 = vxor.u32 %v2491, 2147483648
    %v2936 = vxor.u32 %v2494, 2147483648
    %v2937 = vxor.u32 %v2499, 2147483648
    %v2938 = vxor.u32 %v2502, 2147483648
    %v2939 = vxor.u32 %v2507, 2147483648
    %v2940 = vxor.u32 %v2510, 2147483648
    %v2941 = vxor.u32 %v2515, 2147483648
    %v2942 = vxor.u32 %v2518, 2147483648
    %v2943 = vxor.u32 %v2523, 2147483648
    %v2944 = vxor.u32 %v2526, 2147483648
    %v2945 = vxor.u32 %v2531, 2147483648
    %v2946 = vxor.u32 %v2534, 2147483648
    %v2947 = vxor.u32 %v2539, 2147483648
    %v2948 = vxor.u32 %v2542, 2147483648
    %v2949 = vxor.u32 %v2547, 2147483648
    %v2950 = vxor.u32 %v2550, 2147483648
    %v2951 = vxor.u32 %v2555, 2147483648
    %v2952 = vxor.u32 %v2558, 2147483648
    %v2953 = vxor.u32 %v2563, 2147483648
    %v2954 = vxor.u32 %v2566, 2147483648
    %v2955 = vxor.u32 %v2571, 2147483648
    %v2956 = vxor.u32 %v2574, 2147483648
    %v2957 = vxor.u32 %v2579, 2147483648
    %v2958 = vxor.u32 %v2582, 2147483648
    %v2959 = vxor.u32 %v2587, 2147483648
    %v2960 = vxor.u32 %v2590, 2147483648
    %v2961 = vxor.u32 %v2595, 2147483648
    %v2962 = vxor.u32 %v2598, 2147483648
    %v2963 = vxor.u32 %v2603, 2147483648
    %v2964 = vxor.u32 %v2606, 2147483648
    %v2965 = vxor.u32 %v2611, 2147483648
    %v2966 = vxor.u32 %v2614, 2147483648
    %v2967 = vxor.u32 %v2619, 2147483648
    %v2968 = vxor.u32 %v2622, 2147483648
    %v2969 = vxor.u32 %v2627, 2147483648
    %v2970 = vxor.u32 %v2630, 2147483648
    %v2971 = vxor.u32 %v2635, 2147483648
    %v2972 = vxor.u32 %v2638, 2147483648
    %v2973 = vxor.u32 %v2643, 2147483648
    %v2974 = vxor.u32 %v2646, 2147483648
    %v2975 = vxor.u32 %v2651, 2147483648
    %v2976 = vxor.u32 %v2654, 2147483648
    %v2977 = vxor.u32 %v2659, 2147483648
    %v2978 = vxor.u32 %v2662, 2147483648
    %v2979 = vxor.u32 %v2667, 2147483648
    %v2980 = vxor.u32 %v2670, 2147483648
    %v2981 = vxor.u32 %v2675, 2147483648
    %v2982 = vxor.u32 %v2678, 2147483648
    %v2983 = vxor.u32 %v2683, 2147483648
    %v2984 = vxor.u32 %v2686, 2147483648
    %v2985 = vxor.u32 %v2691, 2147483648
    %v2986 = vxor.u32 %v2694, 2147483648
    %v2987 = vxor.u32 %v2699, 2147483648
    %v2988 = vxor.u32 %v2702, 2147483648
    %v2989 = vxor.u32 %v2707, 2147483648
    %v2990 = vxor.u32 %v2710, 2147483648
    %v2991 = vxor.u32 %v2715, 2147483648
    %v2992 = vxor.u32 %v2718, 2147483648
    %v2993 = vxor.u32 %v2723, 2147483648
    %v2994 = vxor.u32 %v2726, 2147483648
    %v2995 = vxor.u32 %v2731, 2147483648
    %v2996 = vxor.u32 %v2734, 2147483648
    %v2997 = vxor.u32 %v2739, 2147483648
    %v2998 = vxor.u32 %v2742, 2147483648
    %v2999 = vxor.u32 %v2747, 2147483648
    %v3000 = vxor.u32 %v2750, 2147483648
    %v3001 = vxor.u32 %v2755, 2147483648
    %v3002 = vxor.u32 %v2758, 2147483648
    %v3003 = vxor.u32 %v2763, 2147483648
    %v3004 = vxor.u32 %v2766, 2147483648
    %v3005 = vxor.u32 %v2771, 2147483648
    %v3006 = vxor.u32 %v2774, 2147483648
    %v3007 = vxor.u32 %v2779, 2147483648
    %v3008 = vxor.u32 %v2782, 2147483648
    %v3009 = vxor.u32 %v2787, 2147483648
    %v3010 = vxor.u32 %v2790, 2147483648
    %v3011 = vxor.u32 %v2795, 2147483648
    %v3012 = vxor.u32 %v2798, 2147483648
    %v3013 = vxor.u32 %v2803, 2147483648
    %v3014 = vxor.u32 %v2806, 2147483648
    %v3015 = vxor.u32 %v2811, 2147483648
    %v3016 = vxor.u32 %v2814, 2147483648
    %v3017 = vxor.u32 %v2819, 2147483648
    %v3018 = vxor.u32 %v2822, 2147483648
    %v3019 = vxor.u32 %v2827, 2147483648
    %v3020 = vxor.u32 %v2830, 2147483648
    %v3021 = vxor.u32 %v2835, 2147483648
    %v3022 = vxor.u32 %v2838, 2147483648
    %v3023 = vxor.u32 %v2843, 2147483648
    %v3024 = vxor.u32 %v2846, 2147483648
    %v3025 = vxor.u32 %v2851, 2147483648
    %v3026 = vxor.u32 %v2854, 2147483648
    %v3027 = vxor.u32 %v2859, 2147483648
    %v3028 = vxor.u32 %v2862, 2147483648
    %v3029 = vxor.u32 %v2867, 2147483648
    %v3030 = vxor.u32 %v2870, 2147483648
    %v3031 = vxor.u32 %v2875, 2147483648
    %v3032 = vxor.u32 %v2878, 2147483648
    %v3033 = vxor.u32 %v2883, 2147483648
    %v3034 = vxor.u32 %v2886, 2147483648
    %v3035 = vxor.u32 %v2891, 2147483648
    %v3036 = vxor.u32 %v2894, 2147483648
    %v3037 = vxor.u32 %v2899, 2147483648
    %v3038 = vxor.u32 %v2902, 2147483648
    %v3039 = vxor.u32 %v2907, 2147483648
    %v3040 = vxor.u32 %v2910, 2147483648
    %v3041 = vmul.f32 %v2913, 1.442695
    %v3042 = vpow.pop %v3041
    %v3043 = vmul.f32 %v2914, 1.442695
    %v3044 = vpow.pop %v3043
    %v3045 = vmul.f32 %v2915, 1.442695
    %v3046 = vpow.pop %v3045
    %v3047 = vmul.f32 %v2916, 1.442695
    %v3048 = vpow.pop %v3047
    %v3049 = vmul.f32 %v2917, 1.442695
    %v3050 = vpow.pop %v3049
    %v3051 = vmul.f32 %v2918, 1.442695
    %v3052 = vpow.pop %v3051
    %v3053 = vmul.f32 %v2919, 1.442695
    %v3054 = vpow.pop %v3053
    %v3055 = vmul.f32 %v2920, 1.442695
    %v3056 = vpow.pop %v3055
    %v3057 = vmul.f32 %v2921, 1.442695
    %v3058 = vpow.pop %v3057
    %v3059 = vmul.f32 %v2922, 1.442695
    %v3060 = vpow.pop %v3059
    %v3061 = vmul.f32 %v2923, 1.442695
    %v3062 = vpow.pop %v3061
    %v3063 = vmul.f32 %v2924, 1.442695
    %v3064 = vpow.pop %v3063
    %v3065 = vmul.f32 %v2925, 1.442695
    %v3066 = vpow.pop %v3065
    %v3067 = vmul.f32 %v2926, 1.442695
    %v3068 = vpow.pop %v3067
    %v3069 = vmul.f32 %v2927, 1.442695
    %v3070 = vpow.pop %v3069
    %v3071 = vmul.f32 %v2928, 1.442695
    %v3072 = vpow.pop %v3071
    %v3073 = vmul.f32 %v2929, 1.442695
    %v3074 = vpow.pop %v3073
    %v3075 = vmul.f32 %v2930, 1.442695
    %v3076 = vpow.pop %v3075
    %v3077 = vmul.f32 %v2931, 1.442695
    %v3078 = vpow.pop %v3077
    %v3079 = vmul.f32 %v2932, 1.442695
    %v3080 = vpow.pop %v3079
    %v3081 = vmul.f32 %v2933, 1.442695
    %v3082 = vpow.pop %v3081
    %v3083 = vmul.f32 %v2934, 1.442695
    %v3084 = vpow.pop %v3083
    %v3085 = vmul.f32 %v2935, 1.442695
    %v3086 = vpow.pop %v3085
    %v3087 = vmul.f32 %v2936, 1.442695
    %v3088 = vpow.pop %v3087
    %v3089 = vmul.f32 %v2937, 1.442695
    %v3090 = vpow.pop %v3089
    %v3091 = vmul.f32 %v2938, 1.442695
    %v3092 = vpow.pop %v3091
    %v3093 = vmul.f32 %v2939, 1.442695
    %v3094 = vpow.pop %v3093
    %v3095 = vmul.f32 %v2940, 1.442695
    %v3096 = vpow.pop %v3095
    %v3097 = vmul.f32 %v2941, 1.442695
    %v3098 = vpow.pop %v3097
    %v3099 = vmul.f32 %v2942, 1.442695
    %v3100 = vpow.pop %v3099
    %v3101 = vmul.f32 %v2943, 1.442695
    %v3102 = vpow.pop %v3101
    %v3103 = vmul.f32 %v2944, 1.442695
    %v3104 = vpow.pop %v3103
    %v3105 = vmul.f32 %v2945, 1.442695
    %v3106 = vpow.pop %v3105
    %v3107 = vmul.f32 %v2946, 1.442695
    %v3108 = vpow.pop %v3107
    %v3109 = vmul.f32 %v2947, 1.442695
    %v3110 = vpow.pop %v3109
    %v3111 = vmul.f32 %v2948, 1.442695
    %v3112 = vpow.pop %v3111
    %v3113 = vmul.f32 %v2949, 1.442695
    %v3114 = vpow.pop %v3113
    %v3115 = vmul.f32 %v2950, 1.442695
    %v3116 = vpow.pop %v3115
    %v3117 = vmul.f32 %v2951, 1.442695
    %v3118 = vpow.pop %v3117
    %v3119 = vmul.f32 %v2952, 1.442695
    %v3120 = vpow.pop %v3119
    %v3121 = vmul.f32 %v2953, 1.442695
    %v3122 = vpow.pop %v3121
    %v3123 = vmul.f32 %v2954, 1.442695
    %v3124 = vpow.pop %v3123
    %v3125 = vmul.f32 %v2955, 1.442695
    %v3126 = vpow.pop %v3125
    %v3127 = vmul.f32 %v2956, 1.442695
    %v3128 = vpow.pop %v3127
    %v3129 = vmul.f32 %v2957, 1.442695
    %v3130 = vpow.pop %v3129
    %v3131 = vmul.f32 %v2958, 1.442695
    %v3132 = vpow.pop %v3131
    %v3133 = vmul.f32 %v2959, 1.442695
    %v3134 = vpow.pop %v3133
    %v3135 = vmul.f32 %v2960, 1.442695
    %v3136 = vpow.pop %v3135
    %v3137 = vmul.f32 %v2961, 1.442695
    %v3138 = vpow.pop %v3137
    %v3139 = vmul.f32 %v2962, 1.442695
    %v3140 = vpow.pop %v3139
    %v3141 = vmul.f32 %v2963, 1.442695
    %v3142 = vpow.pop %v3141
    %v3143 = vmul.f32 %v2964, 1.442695
    %v3144 = vpow.pop %v3143
    %v3145 = vmul.f32 %v2965, 1.442695
    %v3146 = vpow.pop %v3145
    %v3147 = vmul.f32 %v2966, 1.442695
    %v3148 = vpow.pop %v3147
    %v3149 = vmul.f32 %v2967, 1.442695
    %v3150 = vpow.pop %v3149
    %v3151 = vmul.f32 %v2968, 1.442695
    %v3152 = vpow.pop %v3151
    %v3153 = vmul.f32 %v2969, 1.442695
    %v3154 = vpow.pop %v3153
    %v3155 = vmul.f32 %v2970, 1.442695
    %v3156 = vpow.pop %v3155
    %v3157 = vmul.f32 %v2971, 1.442695
    %v3158 = vpow.pop %v3157
    %v3159 = vmul.f32 %v2972, 1.442695
    %v3160 = vpow.pop %v3159
    %v3161 = vmul.f32 %v2973, 1.442695
    %v3162 = vpow.pop %v3161
    %v3163 = vmul.f32 %v2974, 1.442695
    %v3164 = vpow.pop %v3163
    %v3165 = vmul.f32 %v2975, 1.442695
    %v3166 = vpow.pop %v3165
    %v3167 = vmul.f32 %v2976, 1.442695
    %v3168 = vpow.pop %v3167
    %v3169 = vmul.f32 %v2977, 1.442695
    %v3170 = vpow.pop %v3169
    %v3171 = vmul.f32 %v2978, 1.442695
    %v3172 = vpow.pop %v3171
    %v3173 = vmul.f32 %v2979, 1.442695
    %v3174 = vpow.pop %v3173
    %v3175 = vmul.f32 %v2980, 1.442695
    %v3176 = vpow.pop %v3175
    %v3177 = vmul.f32 %v2981, 1.442695
    %v3178 = vpow.pop %v3177
    %v3179 = vmul.f32 %v2982, 1.442695
    %v3180 = vpow.pop %v3179
    %v3181 = vmul.f32 %v2983, 1.442695
    %v3182 = vpow.pop %v3181
    %v3183 = vmul.f32 %v2984, 1.442695
    %v3184 = vpow.pop %v3183
    %v3185 = vmul.f32 %v2985, 1.442695
    %v3186 = vpow.pop %v3185
    %v3187 = vmul.f32 %v2986, 1.442695
    %v3188 = vpow.pop %v3187
    %v3189 = vmul.f32 %v2987, 1.442695
    %v3190 = vpow.pop %v3189
    %v3191 = vmul.f32 %v2988, 1.442695
    %v3192 = vpow.pop %v3191
    %v3193 = vmul.f32 %v2989, 1.442695
    %v3194 = vpow.pop %v3193
    %v3195 = vmul.f32 %v2990, 1.442695
    %v3196 = vpow.pop %v3195
    %v3197 = vmul.f32 %v2991, 1.442695
    %v3198 = vpow.pop %v3197
    %v3199 = vmul.f32 %v2992, 1.442695
    %v3200 = vpow.pop %v3199
    %v3201 = vmul.f32 %v2993, 1.442695
    %v3202 = vpow.pop %v3201
    %v3203 = vmul.f32 %v2994, 1.442695
    %v3204 = vpow.pop %v3203
    %v3205 = vmul.f32 %v2995, 1.442695
    %v3206 = vpow.pop %v3205
    %v3207 = vmul.f32 %v2996, 1.442695
    %v3208 = vpow.pop %v3207
    %v3209 = vmul.f32 %v2997, 1.442695
    %v3210 = vpow.pop %v3209
    %v3211 = vmul.f32 %v2998, 1.442695
    %v3212 = vpow.pop %v3211
    %v3213 = vmul.f32 %v2999, 1.442695
    %v3214 = vpow.pop %v3213
    %v3215 = vmul.f32 %v3000, 1.442695
    %v3216 = vpow.pop %v3215
    %v3217 = vmul.f32 %v3001, 1.442695
    %v3218 = vpow.pop %v3217
    %v3219 = vmul.f32 %v3002, 1.442695
    %v3220 = vpow.pop %v3219
    %v3221 = vmul.f32 %v3003, 1.442695
    %v3222 = vpow.pop %v3221
    %v3223 = vmul.f32 %v3004, 1.442695
    %v3224 = vpow.pop %v3223
    %v3225 = vmul.f32 %v3005, 1.442695
    %v3226 = vpow.pop %v3225
    %v3227 = vmul.f32 %v3006, 1.442695
    %v3228 = vpow.pop %v3227
    %v3229 = vmul.f32 %v3007, 1.442695
    %v3230 = vpow.pop %v3229
    %v3231 = vmul.f32 %v3008, 1.442695
    %v3232 = vpow.pop %v3231
    %v3233 = vmul.f32 %v3009, 1.442695
    %v3234 = vpow.pop %v3233
    %v3235 = vmul.f32 %v3010, 1.442695
    %v3236 = vpow.pop %v3235
    %v3237 = vmul.f32 %v3011, 1.442695
    %v3238 = vpow.pop %v3237
    %v3239 = vmul.f32 %v3012, 1.442695
    %v3240 = vpow.pop %v3239
    %v3241 = vmul.f32 %v3013, 1.442695
    %v3242 = vpow.pop %v3241
    %v3243 = vmul.f32 %v3014, 1.442695
    %v3244 = vpow.pop %v3243
    %v3245 = vmul.f32 %v3015, 1.442695
    %v3246 = vpow.pop %v3245
    %v3247 = vmul.f32 %v3016, 1.442695
    %v3248 = vpow.pop %v3247
    %v3249 = vmul.f32 %v3017, 1.442695
    %v3250 = vpow.pop %v3249
    %v3251 = vmul.f32 %v3018, 1.442695
    %v3252 = vpow.pop %v3251
    %v3253 = vmul.f32 %v3019, 1.442695
    %v3254 = vpow.pop %v3253
    %v3255 = vmul.f32 %v3020, 1.442695
    %v3256 = vpow.pop %v3255
    %v3257 = vmul.f32 %v3021, 1.442695
    %v3258 = vpow.pop %v3257
    %v3259 = vmul.f32 %v3022, 1.442695
    %v3260 = vpow.pop %v3259
    %v3261 = vmul.f32 %v3023, 1.442695
    %v3262 = vpow.pop %v3261
    %v3263 = vmul.f32 %v3024, 1.442695
    %v3264 = vpow.pop %v3263
    %v3265 = vmul.f32 %v3025, 1.442695
    %v3266 = vpow.pop %v3265
    %v3267 = vmul.f32 %v3026, 1.442695
    %v3268 = vpow.pop %v3267
    %v3269 = vmul.f32 %v3027, 1.442695
    %v3270 = vpow.pop %v3269
    %v3271 = vmul.f32 %v3028, 1.442695
    %v3272 = vpow.pop %v3271
    %v3273 = vmul.f32 %v3029, 1.442695
    %v3274 = vpow.pop %v3273
    %v3275 = vmul.f32 %v3030, 1.442695
    %v3276 = vpow.pop %v3275
    %v3277 = vmul.f32 %v3031, 1.442695
    %v3278 = vpow.pop %v3277
    %v3279 = vmul.f32 %v3032, 1.442695
    %v3280 = vpow.pop %v3279
    %v3281 = vmul.f32 %v3033, 1.442695
    %v3282 = vpow.pop %v3281
    %v3283 = vmul.f32 %v3034, 1.442695
    %v3284 = vpow.pop %v3283
    %v3285 = vmul.f32 %v3035, 1.442695
    %v3286 = vpow.pop %v3285
    %v3287 = vmul.f32 %v3036, 1.442695
    %v3288 = vpow.pop %v3287
    %v3289 = vmul.f32 %v3037, 1.442695
    %v3290 = vpow.pop %v3289
    %v3291 = vmul.f32 %v3038, 1.442695
    %v3292 = vpow.pop %v3291
    %v3293 = vmul.f32 %v3039, 1.442695
    %v3294 = vpow.pop %v3293
    %v3295 = vmul.f32 %v3040, 1.442695
    %v3296 = vpow.pop %v3295
    %v3297 = vadd.f32 %v3042, 1.0
    %v3298 = vadd.f32 %v3044, 1.0
    %v3299 = vadd.f32 %v3046, 1.0
    %v3300 = vadd.f32 %v3048, 1.0
    %v3301 = vadd.f32 %v3050, 1.0
    %v3302 = vadd.f32 %v3052, 1.0
    %v3303 = vadd.f32 %v3054, 1.0
    %v3304 = vadd.f32 %v3056, 1.0
    %v3305 = vadd.f32 %v3058, 1.0
    %v3306 = vadd.f32 %v3060, 1.0
    %v3307 = vadd.f32 %v3062, 1.0
    %v3308 = vadd.f32 %v3064, 1.0
    %v3309 = vadd.f32 %v3066, 1.0
    %v3310 = vadd.f32 %v3068, 1.0
    %v3311 = vadd.f32 %v3070, 1.0
    %v3312 = vadd.f32 %v3072, 1.0
    %v3313 = vadd.f32 %v3074, 1.0
    %v3314 = vadd.f32 %v3076, 1.0
    %v3315 = vadd.f32 %v3078, 1.0
    %v3316 = vadd.f32 %v3080, 1.0
    %v3317 = vadd.f32 %v3082, 1.0
    %v3318 = vadd.f32 %v3084, 1.0
    %v3319 = vadd.f32 %v3086, 1.0
    %v3320 = vadd.f32 %v3088, 1.0
    %v3321 = vadd.f32 %v3090, 1.0
    %v3322 = vadd.f32 %v3092, 1.0
    %v3323 = vadd.f32 %v3094, 1.0
    %v3324 = vadd.f32 %v3096, 1.0
    %v3325 = vadd.f32 %v3098, 1.0
    %v3326 = vadd.f32 %v3100, 1.0
    %v3327 = vadd.f32 %v3102, 1.0
    %v3328 = vadd.f32 %v3104, 1.0
    %v3329 = vadd.f32 %v3106, 1.0
    %v3330 = vadd.f32 %v3108, 1.0
    %v3331 = vadd.f32 %v3110, 1.0
    %v3332 = vadd.f32 %v3112, 1.0
    %v3333 = vadd.f32 %v3114, 1.0
    %v3334 = vadd.f32 %v3116, 1.0
    %v3335 = vadd.f32 %v3118, 1.0
    %v3336 = vadd.f32 %v3120, 1.0
    %v3337 = vadd.f32 %v3122, 1.0
    %v3338 = vadd.f32 %v3124, 1.0
    %v3339 = vadd.f32 %v3126, 1.0
    %v3340 = vadd.f32 %v3128, 1.0
    %v3341 = vadd.f32 %v3130, 1.0
    %v3342 = vadd.f32 %v3132, 1.0
    %v3343 = vadd.f32 %v3134, 1.0
    %v3344 = vadd.f32 %v3136, 1.0
    %v3345 = vadd.f32 %v3138, 1.0
    %v3346 = vadd.f32 %v3140, 1.0
    %v3347 = vadd.f32 %v3142, 1.0
    %v3348 = vadd.f32 %v3144, 1.0
    %v3349 = vadd.f32 %v3146, 1.0
    %v3350 = vadd.f32 %v3148, 1.0
    %v3351 = vadd.f32 %v3150, 1.0
    %v3352 = vadd.f32 %v3152, 1.0
    %v3353 = vadd.f32 %v3154, 1.0
    %v3354 = vadd.f32 %v3156, 1.0
    %v3355 = vadd.f32 %v3158, 1.0
    %v3356 = vadd.f32 %v3160, 1.0
    %v3357 = vadd.f32 %v3162, 1.0
    %v3358 = vadd.f32 %v3164, 1.0
    %v3359 = vadd.f32 %v3166, 1.0
    %v3360 = vadd.f32 %v3168, 1.0
    %v3361 = vadd.f32 %v3170, 1.0
    %v3362 = vadd.f32 %v3172, 1.0
    %v3363 = vadd.f32 %v3174, 1.0
    %v3364 = vadd.f32 %v3176, 1.0
    %v3365 = vadd.f32 %v3178, 1.0
    %v3366 = vadd.f32 %v3180, 1.0
    %v3367 = vadd.f32 %v3182, 1.0
    %v3368 = vadd.f32 %v3184, 1.0
    %v3369 = vadd.f32 %v3186, 1.0
    %v3370 = vadd.f32 %v3188, 1.0
    %v3371 = vadd.f32 %v3190, 1.0
    %v3372 = vadd.f32 %v3192, 1.0
    %v3373 = vadd.f32 %v3194, 1.0
    %v3374 = vadd.f32 %v3196, 1.0
    %v3375 = vadd.f32 %v3198, 1.0
    %v3376 = vadd.f32 %v3200, 1.0
    %v3377 = vadd.f32 %v3202, 1.0
    %v3378 = vadd.f32 %v3204, 1.0
    %v3379 = vadd.f32 %v3206, 1.0
    %v3380 = vadd.f32 %v3208, 1.0
    %v3381 = vadd.f32 %v3210, 1.0
    %v3382 = vadd.f32 %v3212, 1.0
    %v3383 = vadd.f32 %v3214, 1.0
    %v3384 = vadd.f32 %v3216, 1.0
    %v3385 = vadd.f32 %v3218, 1.0
    %v3386 = vadd.f32 %v3220, 1.0
    %v3387 = vadd.f32 %v3222, 1.0
    %v3388 = vadd.f32 %v3224, 1.0
    %v3389 = vadd.f32 %v3226, 1.0
    %v3390 = vadd.f32 %v3228, 1.0
    %v3391 = vadd.f32 %v3230, 1.0
    %v3392 = vadd.f32 %v3232, 1.0
    %v3393 = vadd.f32 %v3234, 1.0
    %v3394 = vadd.f32 %v3236, 1.0
    %v3395 = vadd.f32 %v3238, 1.0
    %v3396 = vadd.f32 %v3240, 1.0
    %v3397 = vadd.f32 %v3242, 1.0
    %v3398 = vadd.f32 %v3244, 1.0
    %v3399 = vadd.f32 %v3246, 1.0
    %v3400 = vadd.f32 %v3248, 1.0
    %v3401 = vadd.f32 %v3250, 1.0
    %v3402 = vadd.f32 %v3252, 1.0
    %v3403 = vadd.f32 %v3254, 1.0
    %v3404 = vadd.f32 %v3256, 1.0
    %v3405 = vadd.f32 %v3258, 1.0
    %v3406 = vadd.f32 %v3260, 1.0
    %v3407 = vadd.f32 %v3262, 1.0
    %v3408 = vadd.f32 %v3264, 1.0
    %v3409 = vadd.f32 %v3266, 1.0
    %v3410 = vadd.f32 %v3268, 1.0
    %v3411 = vadd.f32 %v3270, 1.0
    %v3412 = vadd.f32 %v3272, 1.0
    %v3413 = vadd.f32 %v3274, 1.0
    %v3414 = vadd.f32 %v3276, 1.0
    %v3415 = vadd.f32 %v3278, 1.0
    %v3416 = vadd.f32 %v3280, 1.0
    %v3417 = vadd.f32 %v3282, 1.0
    %v3418 = vadd.f32 %v3284, 1.0
    %v3419 = vadd.f32 %v3286, 1.0
    %v3420 = vadd.f32 %v3288, 1.0
    %v3421 = vadd.f32 %v3290, 1.0
    %v3422 = vadd.f32 %v3292, 1.0
    %v3423 = vadd.f32 %v3294, 1.0
    %v3424 = vadd.f32 %v3296, 1.0
    %v3425 = vrcp.pop %v3297
    %v3426 = vmul.f32 1.0, %v3425
    %v3427 = vrcp.pop %v3298
    %v3428 = vmul.f32 1.0, %v3427
    %v3429 = vrcp.pop %v3299
    %v3430 = vmul.f32 1.0, %v3429
    %v3431 = vrcp.pop %v3300
    %v3432 = vmul.f32 1.0, %v3431
    %v3433 = vrcp.pop %v3301
    %v3434 = vmul.f32 1.0, %v3433
    %v3435 = vrcp.pop %v3302
    %v3436 = vmul.f32 1.0, %v3435
    %v3437 = vrcp.pop %v3303
    %v3438 = vmul.f32 1.0, %v3437
    %v3439 = vrcp.pop %v3304
    %v3440 = vmul.f32 1.0, %v3439
    %v3441 = vrcp.pop %v3305
    %v3442 = vmul.f32 1.0, %v3441
    %v3443 = vrcp.pop %v3306
    %v3444 = vmul.f32 1.0, %v3443
    %v3445 = vrcp.pop %v3307
    %v3446 = vmul.f32 1.0, %v3445
    %v3447 = vrcp.pop %v3308
    %v3448 = vmul.f32 1.0, %v3447
    %v3449 = vrcp.pop %v3309
    %v3450 = vmul.f32 1.0, %v3449
    %v3451 = vrcp.pop %v3310
    %v3452 = vmul.f32 1.0, %v3451
    %v3453 = vrcp.pop %v3311
    %v3454 = vmul.f32 1.0, %v3453
    %v3455 = vrcp.pop %v3312
    %v3456 = vmul.f32 1.0, %v3455
    %v3457 = vrcp.pop %v3313
    %v3458 = vmul.f32 1.0, %v3457
    %v3459 = vrcp.pop %v3314
    %v3460 = vmul.f32 1.0, %v3459
    %v3461 = vrcp.pop %v3315
    %v3462 = vmul.f32 1.0, %v3461
    %v3463 = vrcp.pop %v3316
    %v3464 = vmul.f32 1.0, %v3463
    %v3465 = vrcp.pop %v3317
    %v3466 = vmul.f32 1.0, %v3465
    %v3467 = vrcp.pop %v3318
    %v3468 = vmul.f32 1.0, %v3467
    %v3469 = vrcp.pop %v3319
    %v3470 = vmul.f32 1.0, %v3469
    %v3471 = vrcp.pop %v3320
    %v3472 = vmul.f32 1.0, %v3471
    %v3473 = vrcp.pop %v3321
    %v3474 = vmul.f32 1.0, %v3473
    %v3475 = vrcp.pop %v3322
    %v3476 = vmul.f32 1.0, %v3475
    %v3477 = vrcp.pop %v3323
    %v3478 = vmul.f32 1.0, %v3477
    %v3479 = vrcp.pop %v3324
    %v3480 = vmul.f32 1.0, %v3479
    %v3481 = vrcp.pop %v3325
    %v3482 = vmul.f32 1.0, %v3481
    %v3483 = vrcp.pop %v3326
    %v3484 = vmul.f32 1.0, %v3483
    %v3485 = vrcp.pop %v3327
    %v3486 = vmul.f32 1.0, %v3485
    %v3487 = vrcp.pop %v3328
    %v3488 = vmul.f32 1.0, %v3487
    %v3489 = vrcp.pop %v3329
    %v3490 = vmul.f32 1.0, %v3489
    %v3491 = vrcp.pop %v3330
    %v3492 = vmul.f32 1.0, %v3491
    %v3493 = vrcp.pop %v3331
    %v3494 = vmul.f32 1.0, %v3493
    %v3495 = vrcp.pop %v3332
    %v3496 = vmul.f32 1.0, %v3495
    %v3497 = vrcp.pop %v3333
    %v3498 = vmul.f32 1.0, %v3497
    %v3499 = vrcp.pop %v3334
    %v3500 = vmul.f32 1.0, %v3499
    %v3501 = vrcp.pop %v3335
    %v3502 = vmul.f32 1.0, %v3501
    %v3503 = vrcp.pop %v3336
    %v3504 = vmul.f32 1.0, %v3503
    %v3505 = vrcp.pop %v3337
    %v3506 = vmul.f32 1.0, %v3505
    %v3507 = vrcp.pop %v3338
    %v3508 = vmul.f32 1.0, %v3507
    %v3509 = vrcp.pop %v3339
    %v3510 = vmul.f32 1.0, %v3509
    %v3511 = vrcp.pop %v3340
    %v3512 = vmul.f32 1.0, %v3511
    %v3513 = vrcp.pop %v3341
    %v3514 = vmul.f32 1.0, %v3513
    %v3515 = vrcp.pop %v3342
    %v3516 = vmul.f32 1.0, %v3515
    %v3517 = vrcp.pop %v3343
    %v3518 = vmul.f32 1.0, %v3517
    %v3519 = vrcp.pop %v3344
    %v3520 = vmul.f32 1.0, %v3519
    %v3521 = vrcp.pop %v3345
    %v3522 = vmul.f32 1.0, %v3521
    %v3523 = vrcp.pop %v3346
    %v3524 = vmul.f32 1.0, %v3523
    %v3525 = vrcp.pop %v3347
    %v3526 = vmul.f32 1.0, %v3525
    %v3527 = vrcp.pop %v3348
    %v3528 = vmul.f32 1.0, %v3527
    %v3529 = vrcp.pop %v3349
    %v3530 = vmul.f32 1.0, %v3529
    %v3531 = vrcp.pop %v3350
    %v3532 = vmul.f32 1.0, %v3531
    %v3533 = vrcp.pop %v3351
    %v3534 = vmul.f32 1.0, %v3533
    %v3535 = vrcp.pop %v3352
    %v3536 = vmul.f32 1.0, %v3535
    %v3537 = vrcp.pop %v3353
    %v3538 = vmul.f32 1.0, %v3537
    %v3539 = vrcp.pop %v3354
    %v3540 = vmul.f32 1.0, %v3539
    %v3541 = vrcp.pop %v3355
    %v3542 = vmul.f32 1.0, %v3541
    %v3543 = vrcp.pop %v3356
    %v3544 = vmul.f32 1.0, %v3543
    %v3545 = vrcp.pop %v3357
    %v3546 = vmul.f32 1.0, %v3545
    %v3547 = vrcp.pop %v3358
    %v3548 = vmul.f32 1.0, %v3547
    %v3549 = vrcp.pop %v3359
    %v3550 = vmul.f32 1.0, %v3549
    %v3551 = vrcp.pop %v3360
    %v3552 = vmul.f32 1.0, %v3551
    %v3553 = vrcp.pop %v3361
    %v3554 = vmul.f32 1.0, %v3553
    %v3555 = vrcp.pop %v3362
    %v3556 = vmul.f32 1.0, %v3555
    %v3557 = vrcp.pop %v3363
    %v3558 = vmul.f32 1.0, %v3557
    %v3559 = vrcp.pop %v3364
    %v3560 = vmul.f32 1.0, %v3559
    %v3561 = vrcp.pop %v3365
    %v3562 = vmul.f32 1.0, %v3561
    %v3563 = vrcp.pop %v3366
    %v3564 = vmul.f32 1.0, %v3563
    %v3565 = vrcp.pop %v3367
    %v3566 = vmul.f32 1.0, %v3565
    %v3567 = vrcp.pop %v3368
    %v3568 = vmul.f32 1.0, %v3567
    %v3569 = vrcp.pop %v3369
    %v3570 = vmul.f32 1.0, %v3569
    %v3571 = vrcp.pop %v3370
    %v3572 = vmul.f32 1.0, %v3571
    %v3573 = vrcp.pop %v3371
    %v3574 = vmul.f32 1.0, %v3573
    %v3575 = vrcp.pop %v3372
    %v3576 = vmul.f32 1.0, %v3575
    %v3577 = vrcp.pop %v3373
    %v3578 = vmul.f32 1.0, %v3577
    %v3579 = vrcp.pop %v3374
    %v3580 = vmul.f32 1.0, %v3579
    %v3581 = vrcp.pop %v3375
    %v3582 = vmul.f32 1.0, %v3581
    %v3583 = vrcp.pop %v3376
    %v3584 = vmul.f32 1.0, %v3583
    %v3585 = vrcp.pop %v3377
    %v3586 = vmul.f32 1.0, %v3585
    %v3587 = vrcp.pop %v3378
    %v3588 = vmul.f32 1.0, %v3587
    %v3589 = vrcp.pop %v3379
    %v3590 = vmul.f32 1.0, %v3589
    %v3591 = vrcp.pop %v3380
    %v3592 = vmul.f32 1.0, %v3591
    %v3593 = vrcp.pop %v3381
    %v3594 = vmul.f32 1.0, %v3593
    %v3595 = vrcp.pop %v3382
    %v3596 = vmul.f32 1.0, %v3595
    %v3597 = vrcp.pop %v3383
    %v3598 = vmul.f32 1.0, %v3597
    %v3599 = vrcp.pop %v3384
    %v3600 = vmul.f32 1.0, %v3599
    %v3601 = vrcp.pop %v3385
    %v3602 = vmul.f32 1.0, %v3601
    %v3603 = vrcp.pop %v3386
    %v3604 = vmul.f32 1.0, %v3603
    %v3605 = vrcp.pop %v3387
    %v3606 = vmul.f32 1.0, %v3605
    %v3607 = vrcp.pop %v3388
    %v3608 = vmul.f32 1.0, %v3607
    %v3609 = vrcp.pop %v3389
    %v3610 = vmul.f32 1.0, %v3609
    %v3611 = vrcp.pop %v3390
    %v3612 = vmul.f32 1.0, %v3611
    %v3613 = vrcp.pop %v3391
    %v3614 = vmul.f32 1.0, %v3613
    %v3615 = vrcp.pop %v3392
    %v3616 = vmul.f32 1.0, %v3615
    %v3617 = vrcp.pop %v3393
    %v3618 = vmul.f32 1.0, %v3617
    %v3619 = vrcp.pop %v3394
    %v3620 = vmul.f32 1.0, %v3619
    %v3621 = vrcp.pop %v3395
    %v3622 = vmul.f32 1.0, %v3621
    %v3623 = vrcp.pop %v3396
    %v3624 = vmul.f32 1.0, %v3623
    %v3625 = vrcp.pop %v3397
    %v3626 = vmul.f32 1.0, %v3625
    %v3627 = vrcp.pop %v3398
    %v3628 = vmul.f32 1.0, %v3627
    %v3629 = vrcp.pop %v3399
    %v3630 = vmul.f32 1.0, %v3629
    %v3631 = vrcp.pop %v3400
    %v3632 = vmul.f32 1.0, %v3631
    %v3633 = vrcp.pop %v3401
    %v3634 = vmul.f32 1.0, %v3633
    %v3635 = vrcp.pop %v3402
    %v3636 = vmul.f32 1.0, %v3635
    %v3637 = vrcp.pop %v3403
    %v3638 = vmul.f32 1.0, %v3637
    %v3639 = vrcp.pop %v3404
    %v3640 = vmul.f32 1.0, %v3639
    %v3641 = vrcp.pop %v3405
    %v3642 = vmul.f32 1.0, %v3641
    %v3643 = vrcp.pop %v3406
    %v3644 = vmul.f32 1.0, %v3643
    %v3645 = vrcp.pop %v3407
    %v3646 = vmul.f32 1.0, %v3645
    %v3647 = vrcp.pop %v3408
    %v3648 = vmul.f32 1.0, %v3647
    %v3649 = vrcp.pop %v3409
    %v3650 = vmul.f32 1.0, %v3649
    %v3651 = vrcp.pop %v3410
    %v3652 = vmul.f32 1.0, %v3651
    %v3653 = vrcp.pop %v3411
    %v3654 = vmul.f32 1.0, %v3653
    %v3655 = vrcp.pop %v3412
    %v3656 = vmul.f32 1.0, %v3655
    %v3657 = vrcp.pop %v3413
    %v3658 = vmul.f32 1.0, %v3657
    %v3659 = vrcp.pop %v3414
    %v3660 = vmul.f32 1.0, %v3659
    %v3661 = vrcp.pop %v3415
    %v3662 = vmul.f32 1.0, %v3661
    %v3663 = vrcp.pop %v3416
    %v3664 = vmul.f32 1.0, %v3663
    %v3665 = vrcp.pop %v3417
    %v3666 = vmul.f32 1.0, %v3665
    %v3667 = vrcp.pop %v3418
    %v3668 = vmul.f32 1.0, %v3667
    %v3669 = vrcp.pop %v3419
    %v3670 = vmul.f32 1.0, %v3669
    %v3671 = vrcp.pop %v3420
    %v3672 = vmul.f32 1.0, %v3671
    %v3673 = vrcp.pop %v3421
    %v3674 = vmul.f32 1.0, %v3673
    %v3675 = vrcp.pop %v3422
    %v3676 = vmul.f32 1.0, %v3675
    %v3677 = vrcp.pop %v3423
    %v3678 = vmul.f32 1.0, %v3677
    %v3679 = vrcp.pop %v3424
    %v3680 = vmul.f32 1.0, %v3679
    %v3681 = vmul.f32 %v2403, %v3426
    %v3682 = vmul.f32 %v2406, %v3428
    %v3683 = vmul.f32 %v2411, %v3430
    %v3684 = vmul.f32 %v2414, %v3432
    %v3685 = vmul.f32 %v2419, %v3434
    %v3686 = vmul.f32 %v2422, %v3436
    %v3687 = vmul.f32 %v2427, %v3438
    %v3688 = vmul.f32 %v2430, %v3440
    %v3689 = vmul.f32 %v2435, %v3442
    %v3690 = vmul.f32 %v2438, %v3444
    %v3691 = vmul.f32 %v2443, %v3446
    %v3692 = vmul.f32 %v2446, %v3448
    %v3693 = vmul.f32 %v2451, %v3450
    %v3694 = vmul.f32 %v2454, %v3452
    %v3695 = vmul.f32 %v2459, %v3454
    %v3696 = vmul.f32 %v2462, %v3456
    %v3697 = vmul.f32 %v2467, %v3458
    %v3698 = vmul.f32 %v2470, %v3460
    %v3699 = vmul.f32 %v2475, %v3462
    %v3700 = vmul.f32 %v2478, %v3464
    %v3701 = vmul.f32 %v2483, %v3466
    %v3702 = vmul.f32 %v2486, %v3468
    %v3703 = vmul.f32 %v2491, %v3470
    %v3704 = vmul.f32 %v2494, %v3472
    %v3705 = vmul.f32 %v2499, %v3474
    %v3706 = vmul.f32 %v2502, %v3476
    %v3707 = vmul.f32 %v2507, %v3478
    %v3708 = vmul.f32 %v2510, %v3480
    %v3709 = vmul.f32 %v2515, %v3482
    %v3710 = vmul.f32 %v2518, %v3484
    %v3711 = vmul.f32 %v2523, %v3486
    %v3712 = vmul.f32 %v2526, %v3488
    %v3713 = vmul.f32 %v2531, %v3490
    %v3714 = vmul.f32 %v2534, %v3492
    %v3715 = vmul.f32 %v2539, %v3494
    %v3716 = vmul.f32 %v2542, %v3496
    %v3717 = vmul.f32 %v2547, %v3498
    %v3718 = vmul.f32 %v2550, %v3500
    %v3719 = vmul.f32 %v2555, %v3502
    %v3720 = vmul.f32 %v2558, %v3504
    %v3721 = vmul.f32 %v2563, %v3506
    %v3722 = vmul.f32 %v2566, %v3508
    %v3723 = vmul.f32 %v2571, %v3510
    %v3724 = vmul.f32 %v2574, %v3512
    %v3725 = vmul.f32 %v2579, %v3514
    %v3726 = vmul.f32 %v2582, %v3516
    %v3727 = vmul.f32 %v2587, %v3518
    %v3728 = vmul.f32 %v2590, %v3520
    %v3729 = vmul.f32 %v2595, %v3522
    %v3730 = vmul.f32 %v2598, %v3524
    %v3731 = vmul.f32 %v2603, %v3526
    %v3732 = vmul.f32 %v2606, %v3528
    %v3733 = vmul.f32 %v2611, %v3530
    %v3734 = vmul.f32 %v2614, %v3532
    %v3735 = vmul.f32 %v2619, %v3534
    %v3736 = vmul.f32 %v2622, %v3536
    %v3737 = vmul.f32 %v2627, %v3538
    %v3738 = vmul.f32 %v2630, %v3540
    %v3739 = vmul.f32 %v2635, %v3542
    %v3740 = vmul.f32 %v2638, %v3544
    %v3741 = vmul.f32 %v2643, %v3546
    %v3742 = vmul.f32 %v2646, %v3548
    %v3743 = vmul.f32 %v2651, %v3550
    %v3744 = vmul.f32 %v2654, %v3552
    %v3745 = vmul.f32 %v2659, %v3554
    %v3746 = vmul.f32 %v2662, %v3556
    %v3747 = vmul.f32 %v2667, %v3558
    %v3748 = vmul.f32 %v2670, %v3560
    %v3749 = vmul.f32 %v2675, %v3562
    %v3750 = vmul.f32 %v2678, %v3564
    %v3751 = vmul.f32 %v2683, %v3566
    %v3752 = vmul.f32 %v2686, %v3568
    %v3753 = vmul.f32 %v2691, %v3570
    %v3754 = vmul.f32 %v2694, %v3572
    %v3755 = vmul.f32 %v2699, %v3574
    %v3756 = vmul.f32 %v2702, %v3576
    %v3757 = vmul.f32 %v2707, %v3578
    %v3758 = vmul.f32 %v2710, %v3580
    %v3759 = vmul.f32 %v2715, %v3582
    %v3760 = vmul.f32 %v2718, %v3584
    %v3761 = vmul.f32 %v2723, %v3586
    %v3762 = vmul.f32 %v2726, %v3588
    %v3763 = vmul.f32 %v2731, %v3590
    %v3764 = vmul.f32 %v2734, %v3592
    %v3765 = vmul.f32 %v2739, %v3594
    %v3766 = vmul.f32 %v2742, %v3596
    %v3767 = vmul.f32 %v2747, %v3598
    %v3768 = vmul.f32 %v2750, %v3600
    %v3769 = vmul.f32 %v2755, %v3602
    %v3770 = vmul.f32 %v2758, %v3604
    %v3771 = vmul.f32 %v2763, %v3606
    %v3772 = vmul.f32 %v2766, %v3608
    %v3773 = vmul.f32 %v2771, %v3610
    %v3774 = vmul.f32 %v2774, %v3612
    %v3775 = vmul.f32 %v2779, %v3614
    %v3776 = vmul.f32 %v2782, %v3616
    %v3777 = vmul.f32 %v2787, %v3618
    %v3778 = vmul.f32 %v2790, %v3620
    %v3779 = vmul.f32 %v2795, %v3622
    %v3780 = vmul.f32 %v2798, %v3624
    %v3781 = vmul.f32 %v2803, %v3626
    %v3782 = vmul.f32 %v2806, %v3628
    %v3783 = vmul.f32 %v2811, %v3630
    %v3784 = vmul.f32 %v2814, %v3632
    %v3785 = vmul.f32 %v2819, %v3634
    %v3786 = vmul.f32 %v2822, %v3636
    %v3787 = vmul.f32 %v2827, %v3638
    %v3788 = vmul.f32 %v2830, %v3640
    %v3789 = vmul.f32 %v2835, %v3642
    %v3790 = vmul.f32 %v2838, %v3644
    %v3791 = vmul.f32 %v2843, %v3646
    %v3792 = vmul.f32 %v2846, %v3648
    %v3793 = vmul.f32 %v2851, %v3650
    %v3794 = vmul.f32 %v2854, %v3652
    %v3795 = vmul.f32 %v2859, %v3654
    %v3796 = vmul.f32 %v2862, %v3656
    %v3797 = vmul.f32 %v2867, %v3658
    %v3798 = vmul.f32 %v2870, %v3660
    %v3799 = vmul.f32 %v2875, %v3662
    %v3800 = vmul.f32 %v2878, %v3664
    %v3801 = vmul.f32 %v2883, %v3666
    %v3802 = vmul.f32 %v2886, %v3668
    %v3803 = vmul.f32 %v2891, %v3670
    %v3804 = vmul.f32 %v2894, %v3672
    %v3805 = vmul.f32 %v2899, %v3674
    %v3806 = vmul.f32 %v2902, %v3676
    %v3807 = vmul.f32 %v2907, %v3678
    %v3808 = vmul.f32 %v2910, %v3680
    %v3809 = vpack.c.bf16 %v3682, %v3681
    %v3810 = vpack.c.bf16 %v3684, %v3683
    %v3811 = vpack.c.bf16 %v3686, %v3685
    %v3812 = vpack.c.bf16 %v3688, %v3687
    %v3813 = vpack.c.bf16 %v3690, %v3689
    %v3814 = vpack.c.bf16 %v3692, %v3691
    %v3815 = vpack.c.bf16 %v3694, %v3693
    %v3816 = vpack.c.bf16 %v3696, %v3695
    %v3817 = vpack.c.bf16 %v3698, %v3697
    %v3818 = vpack.c.bf16 %v3700, %v3699
    %v3819 = vpack.c.bf16 %v3702, %v3701
    %v3820 = vpack.c.bf16 %v3704, %v3703
    %v3821 = vpack.c.bf16 %v3706, %v3705
    %v3822 = vpack.c.bf16 %v3708, %v3707
    %v3823 = vpack.c.bf16 %v3710, %v3709
    %v3824 = vpack.c.bf16 %v3712, %v3711
    %v3825 = vpack.c.bf16 %v3714, %v3713
    %v3826 = vpack.c.bf16 %v3716, %v3715
    %v3827 = vpack.c.bf16 %v3718, %v3717
    %v3828 = vpack.c.bf16 %v3720, %v3719
    %v3829 = vpack.c.bf16 %v3722, %v3721
    %v3830 = vpack.c.bf16 %v3724, %v3723
    %v3831 = vpack.c.bf16 %v3726, %v3725
    %v3832 = vpack.c.bf16 %v3728, %v3727
    %v3833 = vpack.c.bf16 %v3730, %v3729
    %v3834 = vpack.c.bf16 %v3732, %v3731
    %v3835 = vpack.c.bf16 %v3734, %v3733
    %v3836 = vpack.c.bf16 %v3736, %v3735
    %v3837 = vpack.c.bf16 %v3738, %v3737
    %v3838 = vpack.c.bf16 %v3740, %v3739
    %v3839 = vpack.c.bf16 %v3742, %v3741
    %v3840 = vpack.c.bf16 %v3744, %v3743
    %v3841 = vpack.c.bf16 %v3746, %v3745
    %v3842 = vpack.c.bf16 %v3748, %v3747
    %v3843 = vpack.c.bf16 %v3750, %v3749
    %v3844 = vpack.c.bf16 %v3752, %v3751
    %v3845 = vpack.c.bf16 %v3754, %v3753
    %v3846 = vpack.c.bf16 %v3756, %v3755
    %v3847 = vpack.c.bf16 %v3758, %v3757
    %v3848 = vpack.c.bf16 %v3760, %v3759
    %v3849 = vpack.c.bf16 %v3762, %v3761
    %v3850 = vpack.c.bf16 %v3764, %v3763
    %v3851 = vpack.c.bf16 %v3766, %v3765
    %v3852 = vpack.c.bf16 %v3768, %v3767
    %v3853 = vpack.c.bf16 %v3770, %v3769
    %v3854 = vpack.c.bf16 %v3772, %v3771
    %v3855 = vpack.c.bf16 %v3774, %v3773
    %v3856 = vpack.c.bf16 %v3776, %v3775
    %v3857 = vpack.c.bf16 %v3778, %v3777
    %v3858 = vpack.c.bf16 %v3780, %v3779
    %v3859 = vpack.c.bf16 %v3782, %v3781
    %v3860 = vpack.c.bf16 %v3784, %v3783
    %v3861 = vpack.c.bf16 %v3786, %v3785
    %v3862 = vpack.c.bf16 %v3788, %v3787
    %v3863 = vpack.c.bf16 %v3790, %v3789
    %v3864 = vpack.c.bf16 %v3792, %v3791
    %v3865 = vpack.c.bf16 %v3794, %v3793
    %v3866 = vpack.c.bf16 %v3796, %v3795
    %v3867 = vpack.c.bf16 %v3798, %v3797
    %v3868 = vpack.c.bf16 %v3800, %v3799
    %v3869 = vpack.c.bf16 %v3802, %v3801
    %v3870 = vpack.c.bf16 %v3804, %v3803
    %v3871 = vpack.c.bf16 %v3806, %v3805
    %v3872 = vpack.c.bf16 %v3808, %v3807
    %v3873 = vld [vmem:[%s7] sm:$0xf]
    %v3874 = vld [vmem:[%s7 + $0x4] sm:$0xf]
    %v3875 = vld [vmem:[%s7 + $0x8] sm:$0xf]
    %v3876 = vld [vmem:[%s7 + $0xc] sm:$0xf]
    %v3877 = vld [vmem:[%s7 + $0x10] sm:$0xf]
    %v3878 = vld [vmem:[%s7 + $0x14] sm:$0xf]
    %v3879 = vld [vmem:[%s7 + $0x18] sm:$0xf]
    %v3880 = vld [vmem:[%s7 + $0x1c] sm:$0xf]
    %v3881 = vld [vmem:[%s7 + $0x20] sm:$0xf]
    %v3882 = vld [vmem:[%s7 + $0x24] sm:$0xf]
    %v3883 = vld [vmem:[%s7 + $0x28] sm:$0xf]
    %v3884 = vld [vmem:[%s7 + $0x2c] sm:$0xf]
    %v3885 = vld [vmem:[%s7 + $0x30] sm:$0xf]
    %v3886 = vld [vmem:[%s7 + $0x34] sm:$0xf]
    %v3887 = vld [vmem:[%s7 + $0x38] sm:$0xf]
    %v3888 = vld [vmem:[%s7 + $0x3c] sm:$0xf]
    %v3889 = vld [vmem:[%s8] sm:$0x1]
    %v3891 = vlaneseq
    %v3892 = vshrl.u32 %v3891, 7
    %v3893 = vsub.s32 0, %v3892
    %v3894 = vrot.slane %v3889, %v3893
    %v3912 = vunpack.c.l.b16 %v3873
    %v3913 = vunpack.c.l.b16 %v3874
    %v3914 = vunpack.c.l.b16 %v3875
    %v3915 = vunpack.c.l.b16 %v3876
    %v3916 = vunpack.c.l.b16 %v3877
    %v3917 = vunpack.c.l.b16 %v3878
    %v3918 = vunpack.c.l.b16 %v3879
    %v3919 = vunpack.c.l.b16 %v3880
    %v3920 = vunpack.c.l.b16 %v3881
    %v3921 = vunpack.c.l.b16 %v3882
    %v3922 = vunpack.c.l.b16 %v3883
    %v3923 = vunpack.c.l.b16 %v3884
    %v3924 = vunpack.c.l.b16 %v3885
    %v3925 = vunpack.c.l.b16 %v3886
    %v3926 = vunpack.c.l.b16 %v3887
    %v3927 = vunpack.c.l.b16 %v3888
    %v3928 = vpack.c.b16 %v3913, %v3912
    %v3929 = vpack.c.b16 %v3915, %v3914
    %v3930 = vpack.c.b16 %v3917, %v3916
    %v3931 = vpack.c.b16 %v3919, %v3918
    %v3932 = vpack.c.b16 %v3921, %v3920
    %v3933 = vpack.c.b16 %v3923, %v3922
    %v3934 = vpack.c.b16 %v3925, %v3924
    %v3935 = vpack.c.b16 %v3927, %v3926
    %3944 = vmatprep.subr.bf16.mxu0 0
    %3945 = vmatpush1.bf16.msra.mxu0 %v3928
    %3946 = vmatprep.subr.bf16.mxu0 0
    %3947 = vmatpush1.bf16.msra.mxu0 %v3929
    %3948 = vmatprep.subr.bf16.mxu0 0
    %3949 = vmatpush1.bf16.msra.mxu0 %v3930
    %3950 = vmatprep.subr.bf16.mxu0 0
    %3951 = vmatpush1.bf16.msra.mxu0 %v3931
    %3952 = vmatprep.subr.bf16.mxu0 0
    %3953 = vmatpush1.bf16.msra.mxu0 %v3932
    %3954 = vmatprep.subr.bf16.mxu0 0
    %3955 = vmatpush1.bf16.msra.mxu0 %v3933
    %3956 = vmatprep.subr.bf16.mxu0 0
    %3957 = vmatpush1.bf16.msra.mxu0 %v3934
    %3958 = vmatprep.subr.bf16.mxu0 0
    %3959 = vmatpush1.bf16.msra.mxu0 %v3935
    %3960 = vmatprep.subr.bf16.mxu0 0
    %3961 = vmatpush1.bf16.msra.mxu0 0
    %3962 = vmatprep.subr.bf16.mxu0 0
    %3963 = vmatpush1.bf16.msra.mxu0 0
    %3964 = vmatprep.subr.bf16.mxu0 0
    %3965 = vmatpush1.bf16.msra.mxu0 0
    %3966 = vmatprep.subr.bf16.mxu0 0
    %3967 = vmatpush1.bf16.msra.mxu0 0
    %3968 = vmatprep.subr.bf16.mxu0 0
    %3969 = vmatpush1.bf16.msra.mxu0 0
    %3970 = vmatprep.subr.bf16.mxu0 0
    %3971 = vmatpush1.bf16.msra.mxu0 0
    %3972 = vmatprep.subr.bf16.mxu0 0
    %3973 = vmatpush1.bf16.msra.mxu0 0
    %3974 = vmatprep.subr.bf16.mxu0 0
    %3975 = vmatpush1.bf16.msra.mxu0 0
    %3976 = vmatprep.mubr.bf16.mxu0 0
    %3977 = vmatmul.mubr.bf16.gmra.mrb[0].mxu0 %v3809
    %v3978 = vpop.f32.mrb[0].mxu0
    %v3979 = vadd.f32 %v3894, %v3978
    %v3980 = vpop.f32.mrb[0].mxu0
    %v3981 = vpop.f32.mrb[0].mxu0
    %v3982 = vadd.f32 %v3894, %v3981
    %v3983 = vpop.f32.mrb[0].mxu0
    %3984 = vmatprep.mubr.bf16.mxu0 0
    %3985 = vmatmul.mubr.bf16.gmra.mrb[0].mxu0 %v3810
    %v3986 = vpop.f32.mrb[0].mxu0
    %v3987 = vadd.f32 %v3894, %v3986
    %v3988 = vpop.f32.mrb[0].mxu0
    %v3989 = vpop.f32.mrb[0].mxu0
    %v3990 = vadd.f32 %v3894, %v3989
    %v3991 = vpop.f32.mrb[0].mxu0
    %3992 = vmatprep.mubr.bf16.mxu0 0
    %3993 = vmatmul.mubr.bf16.gmra.mrb[0].mxu0 %v3811
    %v3994 = vpop.f32.mrb[0].mxu0
    %v3995 = vadd.f32 %v3894, %v3994
    %v3996 = vpop.f32.mrb[0].mxu0
    %v3997 = vpop.f32.mrb[0].mxu0
    %v3998 = vadd.f32 %v3894, %v3997
    %v3999 = vpop.f32.mrb[0].mxu0
    %4000 = vmatprep.mubr.bf16.mxu0 0
    %4001 = vmatmul.mubr.bf16.gmra.mrb[0].mxu0 %v3812
    %v4002 = vpop.f32.mrb[0].mxu0
    %v4003 = vadd.f32 %v3894, %v4002
    %v4004 = vpop.f32.mrb[0].mxu0
    %v4005 = vpop.f32.mrb[0].mxu0
    %v4006 = vadd.f32 %v3894, %v4005
    %v4007 = vpop.f32.mrb[0].mxu0
    %4008 = vmatprep.mubr.bf16.mxu0 0
    %4009 = vmatmul.mubr.bf16.gmra.mrb[0].mxu0 %v3813
    %v4010 = vpop.f32.mrb[0].mxu0
    %v4011 = vadd.f32 %v3894, %v4010
    %v4012 = vpop.f32.mrb[0].mxu0
    %v4013 = vpop.f32.mrb[0].mxu0
    %v4014 = vadd.f32 %v3894, %v4013
    %v4015 = vpop.f32.mrb[0].mxu0
    %4016 = vmatprep.mubr.bf16.mxu0 0
    %4017 = vmatmul.mubr.bf16.gmra.mrb[0].mxu0 %v3814
    %v4018 = vpop.f32.mrb[0].mxu0
    %v4019 = vadd.f32 %v3894, %v4018
    %v4020 = vpop.f32.mrb[0].mxu0
    %v4021 = vpop.f32.mrb[0].mxu0
    %v4022 = vadd.f32 %v3894, %v4021
    %v4023 = vpop.f32.mrb[0].mxu0
    %4024 = vmatprep.mubr.bf16.mxu0 0
    %4025 = vmatmul.mubr.bf16.gmra.mrb[0].mxu0 %v3815
    %v4026 = vpop.f32.mrb[0].mxu0
    %v4027 = vadd.f32 %v3894, %v4026
    %v4028 = vpop.f32.mrb[0].mxu0
    %v4029 = vpop.f32.mrb[0].mxu0
    %v4030 = vadd.f32 %v3894, %v4029
    %v4031 = vpop.f32.mrb[0].mxu0
    %4032 = vmatprep.mubr.bf16.mxu0 0
    %4033 = vmatmul.mubr.bf16.gmra.mrb[0].mxu0 %v3816
    %v4034 = vpop.f32.mrb[0].mxu0
    %v4035 = vadd.f32 %v3894, %v4034
    %v4036 = vpop.f32.mrb[0].mxu0
    %v4037 = vpop.f32.mrb[0].mxu0
    %v4038 = vadd.f32 %v3894, %v4037
    %v4039 = vpop.f32.mrb[0].mxu0
    %4040 = vmatprep.mubr.bf16.mxu0 0
    %4041 = vmatmul.mubr.bf16.gmra.mrb[0].mxu0 %v3817
    %v4042 = vpop.f32.mrb[0].mxu0
    %v4043 = vadd.f32 %v3894, %v4042
    %v4044 = vpop.f32.mrb[0].mxu0
    %v4045 = vpop.f32.mrb[0].mxu0
    %v4046 = vadd.f32 %v3894, %v4045
    %v4047 = vpop.f32.mrb[0].mxu0
    %4048 = vmatprep.mubr.bf16.mxu0 0
    %4049 = vmatmul.mubr.bf16.gmra.mrb[0].mxu0 %v3818
    %v4050 = vpop.f32.mrb[0].mxu0
    %v4051 = vadd.f32 %v3894, %v4050
    %v4052 = vpop.f32.mrb[0].mxu0
    %v4053 = vpop.f32.mrb[0].mxu0
    %v4054 = vadd.f32 %v3894, %v4053
    %v4055 = vpop.f32.mrb[0].mxu0
    %4056 = vmatprep.mubr.bf16.mxu0 0
    %4057 = vmatmul.mubr.bf16.gmra.mrb[0].mxu0 %v3819
    %v4058 = vpop.f32.mrb[0].mxu0
    %v4059 = vadd.f32 %v3894, %v4058
    %v4060 = vpop.f32.mrb[0].mxu0
    %v4061 = vpop.f32.mrb[0].mxu0
    %v4062 = vadd.f32 %v3894, %v4061
    %v4063 = vpop.f32.mrb[0].mxu0
    %4064 = vmatprep.mubr.bf16.mxu0 0
    %4065 = vmatmul.mubr.bf16.gmra.mrb[0].mxu0 %v3820
    %v4066 = vpop.f32.mrb[0].mxu0
    %v4067 = vadd.f32 %v3894, %v4066
    %v4068 = vpop.f32.mrb[0].mxu0
    %v4069 = vpop.f32.mrb[0].mxu0
    %v4070 = vadd.f32 %v3894, %v4069
    %v4071 = vpop.f32.mrb[0].mxu0
    %4072 = vmatprep.mubr.bf16.mxu0 0
    %4073 = vmatmul.mubr.bf16.gmra.mrb[0].mxu0 %v3821
    %v4074 = vpop.f32.mrb[0].mxu0
    %v4075 = vadd.f32 %v3894, %v4074
    %v4076 = vpop.f32.mrb[0].mxu0
    %v4077 = vpop.f32.mrb[0].mxu0
    %v4078 = vadd.f32 %v3894, %v4077
    %v4079 = vpop.f32.mrb[0].mxu0
    %4080 = vmatprep.mubr.bf16.mxu0 0
    %4081 = vmatmul.mubr.bf16.gmra.mrb[0].mxu0 %v3822
    %v4082 = vpop.f32.mrb[0].mxu0
    %v4083 = vadd.f32 %v3894, %v4082
    %v4084 = vpop.f32.mrb[0].mxu0
    %v4085 = vpop.f32.mrb[0].mxu0
    %v4086 = vadd.f32 %v3894, %v4085
    %v4087 = vpop.f32.mrb[0].mxu0
    %4088 = vmatprep.mubr.bf16.mxu0 0
    %4089 = vmatmul.mubr.bf16.gmra.mrb[0].mxu0 %v3823
    %v4090 = vpop.f32.mrb[0].mxu0
    %v4091 = vadd.f32 %v3894, %v4090
    %v4092 = vpop.f32.mrb[0].mxu0
    %v4093 = vpop.f32.mrb[0].mxu0
    %v4094 = vadd.f32 %v3894, %v4093
    %v4095 = vpop.f32.mrb[0].mxu0
    %4096 = vmatprep.mubr.bf16.mxu0 0
    %4097 = vmatmul.mubr.bf16.gmra.mrb[0].mxu0 %v3824
    %v4098 = vpop.f32.mrb[0].mxu0
    %v4099 = vadd.f32 %v3894, %v4098
    %v4100 = vpop.f32.mrb[0].mxu0
    %v4101 = vpop.f32.mrb[0].mxu0
    %v4102 = vadd.f32 %v3894, %v4101
    %v4103 = vpop.f32.mrb[0].mxu0
    %4104 = vmatprep.mubr.bf16.mxu0 0
    %4105 = vmatmul.mubr.bf16.gmra.mrb[0].mxu0 %v3825
    %v4106 = vpop.f32.mrb[0].mxu0
    %v4107 = vadd.f32 %v3894, %v4106
    %v4108 = vpop.f32.mrb[0].mxu0
    %v4109 = vpop.f32.mrb[0].mxu0
    %v4110 = vadd.f32 %v3894, %v4109
    %v4111 = vpop.f32.mrb[0].mxu0
    %4112 = vmatprep.mubr.bf16.mxu0 0
    %4113 = vmatmul.mubr.bf16.gmra.mrb[0].mxu0 %v3826
    %v4114 = vpop.f32.mrb[0].mxu0
    %v4115 = vadd.f32 %v3894, %v4114
    %v4116 = vpop.f32.mrb[0].mxu0
    %v4117 = vpop.f32.mrb[0].mxu0
    %v4118 = vadd.f32 %v3894, %v4117
    %v4119 = vpop.f32.mrb[0].mxu0
    %4120 = vmatprep.mubr.bf16.mxu0 0
    %4121 = vmatmul.mubr.bf16.gmra.mrb[0].mxu0 %v3827
    %v4122 = vpop.f32.mrb[0].mxu0
    %v4123 = vadd.f32 %v3894, %v4122
    %v4124 = vpop.f32.mrb[0].mxu0
    %v4125 = vpop.f32.mrb[0].mxu0
    %v4126 = vadd.f32 %v3894, %v4125
    %v4127 = vpop.f32.mrb[0].mxu0
    %4128 = vmatprep.mubr.bf16.mxu0 0
    %4129 = vmatmul.mubr.bf16.gmra.mrb[0].mxu0 %v3828
    %v4130 = vpop.f32.mrb[0].mxu0
    %v4131 = vadd.f32 %v3894, %v4130
    %v4132 = vpop.f32.mrb[0].mxu0
    %v4133 = vpop.f32.mrb[0].mxu0
    %v4134 = vadd.f32 %v3894, %v4133
    %v4135 = vpop.f32.mrb[0].mxu0
    %4136 = vmatprep.mubr.bf16.mxu0 0
    %4137 = vmatmul.mubr.bf16.gmra.mrb[0].mxu0 %v3829
    %v4138 = vpop.f32.mrb[0].mxu0
    %v4139 = vadd.f32 %v3894, %v4138
    %v4140 = vpop.f32.mrb[0].mxu0
    %v4141 = vpop.f32.mrb[0].mxu0
    %v4142 = vadd.f32 %v3894, %v4141
    %v4143 = vpop.f32.mrb[0].mxu0
    %4144 = vmatprep.mubr.bf16.mxu0 0
    %4145 = vmatmul.mubr.bf16.gmra.mrb[0].mxu0 %v3830
    %v4146 = vpop.f32.mrb[0].mxu0
    %v4147 = vadd.f32 %v3894, %v4146
    %v4148 = vpop.f32.mrb[0].mxu0
    %v4149 = vpop.f32.mrb[0].mxu0
    %v4150 = vadd.f32 %v3894, %v4149
    %v4151 = vpop.f32.mrb[0].mxu0
    %4152 = vmatprep.mubr.bf16.mxu0 0
    %4153 = vmatmul.mubr.bf16.gmra.mrb[0].mxu0 %v3831
    %v4154 = vpop.f32.mrb[0].mxu0
    %v4155 = vadd.f32 %v3894, %v4154
    %v4156 = vpop.f32.mrb[0].mxu0
    %v4157 = vpop.f32.mrb[0].mxu0
    %v4158 = vadd.f32 %v3894, %v4157
    %v4159 = vpop.f32.mrb[0].mxu0
    %4160 = vmatprep.mubr.bf16.mxu0 0
    %4161 = vmatmul.mubr.bf16.gmra.mrb[0].mxu0 %v3832
    %v4162 = vpop.f32.mrb[0].mxu0
    %v4163 = vadd.f32 %v3894, %v4162
    %v4164 = vpop.f32.mrb[0].mxu0
    %v4165 = vpop.f32.mrb[0].mxu0
    %v4166 = vadd.f32 %v3894, %v4165
    %v4167 = vpop.f32.mrb[0].mxu0
    %4168 = vmatprep.mubr.bf16.mxu0 0
    %4169 = vmatmul.mubr.bf16.gmra.mrb[0].mxu0 %v3833
    %v4170 = vpop.f32.mrb[0].mxu0
    %v4171 = vadd.f32 %v3894, %v4170
    %v4172 = vpop.f32.mrb[0].mxu0
    %v4173 = vpop.f32.mrb[0].mxu0
    %v4174 = vadd.f32 %v3894, %v4173
    %v4175 = vpop.f32.mrb[0].mxu0
    %4176 = vmatprep.mubr.bf16.mxu0 0
    %4177 = vmatmul.mubr.bf16.gmra.mrb[0].mxu0 %v3834
    %v4178 = vpop.f32.mrb[0].mxu0
    %v4179 = vadd.f32 %v3894, %v4178
    %v4180 = vpop.f32.mrb[0].mxu0
    %v4181 = vpop.f32.mrb[0].mxu0
    %v4182 = vadd.f32 %v3894, %v4181
    %v4183 = vpop.f32.mrb[0].mxu0
    %4184 = vmatprep.mubr.bf16.mxu0 0
    %4185 = vmatmul.mubr.bf16.gmra.mrb[0].mxu0 %v3835
    %v4186 = vpop.f32.mrb[0].mxu0
    %v4187 = vadd.f32 %v3894, %v4186
    %v4188 = vpop.f32.mrb[0].mxu0
    %v4189 = vpop.f32.mrb[0].mxu0
    %v4190 = vadd.f32 %v3894, %v4189
    %v4191 = vpop.f32.mrb[0].mxu0
    %4192 = vmatprep.mubr.bf16.mxu0 0
    %4193 = vmatmul.mubr.bf16.gmra.mrb[0].mxu0 %v3836
    %v4194 = vpop.f32.mrb[0].mxu0
    %v4195 = vadd.f32 %v3894, %v4194
    %v4196 = vpop.f32.mrb[0].mxu0
    %v4197 = vpop.f32.mrb[0].mxu0
    %v4198 = vadd.f32 %v3894, %v4197
    %v4199 = vpop.f32.mrb[0].mxu0
    %4200 = vmatprep.mubr.bf16.mxu0 0
    %4201 = vmatmul.mubr.bf16.gmra.mrb[0].mxu0 %v3837
    %v4202 = vpop.f32.mrb[0].mxu0
    %v4203 = vadd.f32 %v3894, %v4202
    %v4204 = vpop.f32.mrb[0].mxu0
    %v4205 = vpop.f32.mrb[0].mxu0
    %v4206 = vadd.f32 %v3894, %v4205
    %v4207 = vpop.f32.mrb[0].mxu0
    %4208 = vmatprep.mubr.bf16.mxu0 0
    %4209 = vmatmul.mubr.bf16.gmra.mrb[0].mxu0 %v3838
    %v4210 = vpop.f32.mrb[0].mxu0
    %v4211 = vadd.f32 %v3894, %v4210
    %v4212 = vpop.f32.mrb[0].mxu0
    %v4213 = vpop.f32.mrb[0].mxu0
    %v4214 = vadd.f32 %v3894, %v4213
    %v4215 = vpop.f32.mrb[0].mxu0
    %4216 = vmatprep.mubr.bf16.mxu0 0
    %4217 = vmatmul.mubr.bf16.gmra.mrb[0].mxu0 %v3839
    %v4218 = vpop.f32.mrb[0].mxu0
    %v4219 = vadd.f32 %v3894, %v4218
    %v4220 = vpop.f32.mrb[0].mxu0
    %v4221 = vpop.f32.mrb[0].mxu0
    %v4222 = vadd.f32 %v3894, %v4221
    %v4223 = vpop.f32.mrb[0].mxu0
    %4224 = vmatprep.mubr.bf16.mxu0 0
    %4225 = vmatmul.mubr.bf16.gmra.mrb[0].mxu0 %v3840
    %v4226 = vpop.f32.mrb[0].mxu0
    %v4227 = vadd.f32 %v3894, %v4226
    %v4228 = vpop.f32.mrb[0].mxu0
    %v4229 = vpop.f32.mrb[0].mxu0
    %v4230 = vadd.f32 %v3894, %v4229
    %v4231 = vpop.f32.mrb[0].mxu0
    %4232 = vmatprep.mubr.bf16.mxu0 0
    %4233 = vmatmul.mubr.bf16.gmra.mrb[0].mxu0 %v3841
    %v4234 = vpop.f32.mrb[0].mxu0
    %v4235 = vadd.f32 %v3894, %v4234
    %v4236 = vpop.f32.mrb[0].mxu0
    %v4237 = vpop.f32.mrb[0].mxu0
    %v4238 = vadd.f32 %v3894, %v4237
    %v4239 = vpop.f32.mrb[0].mxu0
    %4240 = vmatprep.mubr.bf16.mxu0 0
    %4241 = vmatmul.mubr.bf16.gmra.mrb[0].mxu0 %v3842
    %v4242 = vpop.f32.mrb[0].mxu0
    %v4243 = vadd.f32 %v3894, %v4242
    %v4244 = vpop.f32.mrb[0].mxu0
    %v4245 = vpop.f32.mrb[0].mxu0
    %v4246 = vadd.f32 %v3894, %v4245
    %v4247 = vpop.f32.mrb[0].mxu0
    %4248 = vmatprep.mubr.bf16.mxu0 0
    %4249 = vmatmul.mubr.bf16.gmra.mrb[0].mxu0 %v3843
    %v4250 = vpop.f32.mrb[0].mxu0
    %v4251 = vadd.f32 %v3894, %v4250
    %v4252 = vpop.f32.mrb[0].mxu0
    %v4253 = vpop.f32.mrb[0].mxu0
    %v4254 = vadd.f32 %v3894, %v4253
    %v4255 = vpop.f32.mrb[0].mxu0
    %4256 = vmatprep.mubr.bf16.mxu0 0
    %4257 = vmatmul.mubr.bf16.gmra.mrb[0].mxu0 %v3844
    %v4258 = vpop.f32.mrb[0].mxu0
    %v4259 = vadd.f32 %v3894, %v4258
    %v4260 = vpop.f32.mrb[0].mxu0
    %v4261 = vpop.f32.mrb[0].mxu0
    %v4262 = vadd.f32 %v3894, %v4261
    %v4263 = vpop.f32.mrb[0].mxu0
    %4264 = vmatprep.mubr.bf16.mxu0 0
    %4265 = vmatmul.mubr.bf16.gmra.mrb[0].mxu0 %v3845
    %v4266 = vpop.f32.mrb[0].mxu0
    %v4267 = vadd.f32 %v3894, %v4266
    %v4268 = vpop.f32.mrb[0].mxu0
    %v4269 = vpop.f32.mrb[0].mxu0
    %v4270 = vadd.f32 %v3894, %v4269
    %v4271 = vpop.f32.mrb[0].mxu0
    %4272 = vmatprep.mubr.bf16.mxu0 0
    %4273 = vmatmul.mubr.bf16.gmra.mrb[0].mxu0 %v3846
    %v4274 = vpop.f32.mrb[0].mxu0
    %v4275 = vadd.f32 %v3894, %v4274
    %v4276 = vpop.f32.mrb[0].mxu0
    %v4277 = vpop.f32.mrb[0].mxu0
    %v4278 = vadd.f32 %v3894, %v4277
    %v4279 = vpop.f32.mrb[0].mxu0
    %4280 = vmatprep.mubr.bf16.mxu0 0
    %4281 = vmatmul.mubr.bf16.gmra.mrb[0].mxu0 %v3847
    %v4282 = vpop.f32.mrb[0].mxu0
    %v4283 = vadd.f32 %v3894, %v4282
    %v4284 = vpop.f32.mrb[0].mxu0
    %v4285 = vpop.f32.mrb[0].mxu0
    %v4286 = vadd.f32 %v3894, %v4285
    %v4287 = vpop.f32.mrb[0].mxu0
    %4288 = vmatprep.mubr.bf16.mxu0 0
    %4289 = vmatmul.mubr.bf16.gmra.mrb[0].mxu0 %v3848
    %v4290 = vpop.f32.mrb[0].mxu0
    %v4291 = vadd.f32 %v3894, %v4290
    %v4292 = vpop.f32.mrb[0].mxu0
    %v4293 = vpop.f32.mrb[0].mxu0
    %v4294 = vadd.f32 %v3894, %v4293
    %v4295 = vpop.f32.mrb[0].mxu0
    %4296 = vmatprep.mubr.bf16.mxu0 0
    %4297 = vmatmul.mubr.bf16.gmra.mrb[0].mxu0 %v3849
    %v4298 = vpop.f32.mrb[0].mxu0
    %v4299 = vadd.f32 %v3894, %v4298
    %v4300 = vpop.f32.mrb[0].mxu0
    %v4301 = vpop.f32.mrb[0].mxu0
    %v4302 = vadd.f32 %v3894, %v4301
    %v4303 = vpop.f32.mrb[0].mxu0
    %4304 = vmatprep.mubr.bf16.mxu0 0
    %4305 = vmatmul.mubr.bf16.gmra.mrb[0].mxu0 %v3850
    %v4306 = vpop.f32.mrb[0].mxu0
    %v4307 = vadd.f32 %v3894, %v4306
    %v4308 = vpop.f32.mrb[0].mxu0
    %v4309 = vpop.f32.mrb[0].mxu0
    %v4310 = vadd.f32 %v3894, %v4309
    %v4311 = vpop.f32.mrb[0].mxu0
    %4312 = vmatprep.mubr.bf16.mxu0 0
    %4313 = vmatmul.mubr.bf16.gmra.mrb[0].mxu0 %v3851
    %v4314 = vpop.f32.mrb[0].mxu0
    %v4315 = vadd.f32 %v3894, %v4314
    %v4316 = vpop.f32.mrb[0].mxu0
    %v4317 = vpop.f32.mrb[0].mxu0
    %v4318 = vadd.f32 %v3894, %v4317
    %v4319 = vpop.f32.mrb[0].mxu0
    %4320 = vmatprep.mubr.bf16.mxu0 0
    %4321 = vmatmul.mubr.bf16.gmra.mrb[0].mxu0 %v3852
    %v4322 = vpop.f32.mrb[0].mxu0
    %v4323 = vadd.f32 %v3894, %v4322
    %v4324 = vpop.f32.mrb[0].mxu0
    %v4325 = vpop.f32.mrb[0].mxu0
    %v4326 = vadd.f32 %v3894, %v4325
    %v4327 = vpop.f32.mrb[0].mxu0
    %4328 = vmatprep.mubr.bf16.mxu0 0
    %4329 = vmatmul.mubr.bf16.gmra.mrb[0].mxu0 %v3853
    %v4330 = vpop.f32.mrb[0].mxu0
    %v4331 = vadd.f32 %v3894, %v4330
    %v4332 = vpop.f32.mrb[0].mxu0
    %v4333 = vpop.f32.mrb[0].mxu0
    %v4334 = vadd.f32 %v3894, %v4333
    %v4335 = vpop.f32.mrb[0].mxu0
    %4336 = vmatprep.mubr.bf16.mxu0 0
    %4337 = vmatmul.mubr.bf16.gmra.mrb[0].mxu0 %v3854
    %v4338 = vpop.f32.mrb[0].mxu0
    %v4339 = vadd.f32 %v3894, %v4338
    %v4340 = vpop.f32.mrb[0].mxu0
    %v4341 = vpop.f32.mrb[0].mxu0
    %v4342 = vadd.f32 %v3894, %v4341
    %v4343 = vpop.f32.mrb[0].mxu0
    %4344 = vmatprep.mubr.bf16.mxu0 0
    %4345 = vmatmul.mubr.bf16.gmra.mrb[0].mxu0 %v3855
    %v4346 = vpop.f32.mrb[0].mxu0
    %v4347 = vadd.f32 %v3894, %v4346
    %v4348 = vpop.f32.mrb[0].mxu0
    %v4349 = vpop.f32.mrb[0].mxu0
    %v4350 = vadd.f32 %v3894, %v4349
    %v4351 = vpop.f32.mrb[0].mxu0
    %4352 = vmatprep.mubr.bf16.mxu0 0
    %4353 = vmatmul.mubr.bf16.gmra.mrb[0].mxu0 %v3856
    %v4354 = vpop.f32.mrb[0].mxu0
    %v4355 = vadd.f32 %v3894, %v4354
    %v4356 = vpop.f32.mrb[0].mxu0
    %v4357 = vpop.f32.mrb[0].mxu0
    %v4358 = vadd.f32 %v3894, %v4357
    %v4359 = vpop.f32.mrb[0].mxu0
    %4360 = vmatprep.mubr.bf16.mxu0 0
    %4361 = vmatmul.mubr.bf16.gmra.mrb[0].mxu0 %v3857
    %v4362 = vpop.f32.mrb[0].mxu0
    %v4363 = vadd.f32 %v3894, %v4362
    %v4364 = vpop.f32.mrb[0].mxu0
    %v4365 = vpop.f32.mrb[0].mxu0
    %v4366 = vadd.f32 %v3894, %v4365
    %v4367 = vpop.f32.mrb[0].mxu0
    %4368 = vmatprep.mubr.bf16.mxu0 0
    %4369 = vmatmul.mubr.bf16.gmra.mrb[0].mxu0 %v3858
    %v4370 = vpop.f32.mrb[0].mxu0
    %v4371 = vadd.f32 %v3894, %v4370
    %v4372 = vpop.f32.mrb[0].mxu0
    %v4373 = vpop.f32.mrb[0].mxu0
    %v4374 = vadd.f32 %v3894, %v4373
    %v4375 = vpop.f32.mrb[0].mxu0
    %4376 = vmatprep.mubr.bf16.mxu0 0
    %4377 = vmatmul.mubr.bf16.gmra.mrb[0].mxu0 %v3859
    %v4378 = vpop.f32.mrb[0].mxu0
    %v4379 = vadd.f32 %v3894, %v4378
    %v4380 = vpop.f32.mrb[0].mxu0
    %v4381 = vpop.f32.mrb[0].mxu0
    %v4382 = vadd.f32 %v3894, %v4381
    %v4383 = vpop.f32.mrb[0].mxu0
    %4384 = vmatprep.mubr.bf16.mxu0 0
    %4385 = vmatmul.mubr.bf16.gmra.mrb[0].mxu0 %v3860
    %v4386 = vpop.f32.mrb[0].mxu0
    %v4387 = vadd.f32 %v3894, %v4386
    %v4388 = vpop.f32.mrb[0].mxu0
    %v4389 = vpop.f32.mrb[0].mxu0
    %v4390 = vadd.f32 %v3894, %v4389
    %v4391 = vpop.f32.mrb[0].mxu0
    %4392 = vmatprep.mubr.bf16.mxu0 0
    %4393 = vmatmul.mubr.bf16.gmra.mrb[0].mxu0 %v3861
    %v4394 = vpop.f32.mrb[0].mxu0
    %v4395 = vadd.f32 %v3894, %v4394
    %v4396 = vpop.f32.mrb[0].mxu0
    %v4397 = vpop.f32.mrb[0].mxu0
    %v4398 = vadd.f32 %v3894, %v4397
    %v4399 = vpop.f32.mrb[0].mxu0
    %4400 = vmatprep.mubr.bf16.mxu0 0
    %4401 = vmatmul.mubr.bf16.gmra.mrb[0].mxu0 %v3862
    %v4402 = vpop.f32.mrb[0].mxu0
    %v4403 = vadd.f32 %v3894, %v4402
    %v4404 = vpop.f32.mrb[0].mxu0
    %v4405 = vpop.f32.mrb[0].mxu0
    %v4406 = vadd.f32 %v3894, %v4405
    %v4407 = vpop.f32.mrb[0].mxu0
    %4408 = vmatprep.mubr.bf16.mxu0 0
    %4409 = vmatmul.mubr.bf16.gmra.mrb[0].mxu0 %v3863
    %v4410 = vpop.f32.mrb[0].mxu0
    %v4411 = vadd.f32 %v3894, %v4410
    %v4412 = vpop.f32.mrb[0].mxu0
    %v4413 = vpop.f32.mrb[0].mxu0
    %v4414 = vadd.f32 %v3894, %v4413
    %v4415 = vpop.f32.mrb[0].mxu0
    %4416 = vmatprep.mubr.bf16.mxu0 0
    %4417 = vmatmul.mubr.bf16.gmra.mrb[0].mxu0 %v3864
    %v4418 = vpop.f32.mrb[0].mxu0
    %v4419 = vadd.f32 %v3894, %v4418
    %v4420 = vpop.f32.mrb[0].mxu0
    %v4421 = vpop.f32.mrb[0].mxu0
    %v4422 = vadd.f32 %v3894, %v4421
    %v4423 = vpop.f32.mrb[0].mxu0
    %4424 = vmatprep.mubr.bf16.mxu0 0
    %4425 = vmatmul.mubr.bf16.gmra.mrb[0].mxu0 %v3865
    %v4426 = vpop.f32.mrb[0].mxu0
    %v4427 = vadd.f32 %v3894, %v4426
    %v4428 = vpop.f32.mrb[0].mxu0
    %v4429 = vpop.f32.mrb[0].mxu0
    %v4430 = vadd.f32 %v3894, %v4429
    %v4431 = vpop.f32.mrb[0].mxu0
    %4432 = vmatprep.mubr.bf16.mxu0 0
    %4433 = vmatmul.mubr.bf16.gmra.mrb[0].mxu0 %v3866
    %v4434 = vpop.f32.mrb[0].mxu0
    %v4435 = vadd.f32 %v3894, %v4434
    %v4436 = vpop.f32.mrb[0].mxu0
    %v4437 = vpop.f32.mrb[0].mxu0
    %v4438 = vadd.f32 %v3894, %v4437
    %v4439 = vpop.f32.mrb[0].mxu0
    %4440 = vmatprep.mubr.bf16.mxu0 0
    %4441 = vmatmul.mubr.bf16.gmra.mrb[0].mxu0 %v3867
    %v4442 = vpop.f32.mrb[0].mxu0
    %v4443 = vadd.f32 %v3894, %v4442
    %v4444 = vpop.f32.mrb[0].mxu0
    %v4445 = vpop.f32.mrb[0].mxu0
    %v4446 = vadd.f32 %v3894, %v4445
    %v4447 = vpop.f32.mrb[0].mxu0
    %4448 = vmatprep.mubr.bf16.mxu0 0
    %4449 = vmatmul.mubr.bf16.gmra.mrb[0].mxu0 %v3868
    %v4450 = vpop.f32.mrb[0].mxu0
    %v4451 = vadd.f32 %v3894, %v4450
    %v4452 = vpop.f32.mrb[0].mxu0
    %v4453 = vpop.f32.mrb[0].mxu0
    %v4454 = vadd.f32 %v3894, %v4453
    %v4455 = vpop.f32.mrb[0].mxu0
    %4456 = vmatprep.mubr.bf16.mxu0 0
    %4457 = vmatmul.mubr.bf16.gmra.mrb[0].mxu0 %v3869
    %v4458 = vpop.f32.mrb[0].mxu0
    %v4459 = vadd.f32 %v3894, %v4458
    %v4460 = vpop.f32.mrb[0].mxu0
    %v4461 = vpop.f32.mrb[0].mxu0
    %v4462 = vadd.f32 %v3894, %v4461
    %v4463 = vpop.f32.mrb[0].mxu0
    %4464 = vmatprep.mubr.bf16.mxu0 0
    %4465 = vmatmul.mubr.bf16.gmra.mrb[0].mxu0 %v3870
    %v4466 = vpop.f32.mrb[0].mxu0
    %v4467 = vadd.f32 %v3894, %v4466
    %v4468 = vpop.f32.mrb[0].mxu0
    %v4469 = vpop.f32.mrb[0].mxu0
    %v4470 = vadd.f32 %v3894, %v4469
    %v4471 = vpop.f32.mrb[0].mxu0
    %4472 = vmatprep.mubr.bf16.mxu0 0
    %4473 = vmatmul.mubr.bf16.gmra.mrb[0].mxu0 %v3871
    %v4474 = vpop.f32.mrb[0].mxu0
    %v4475 = vadd.f32 %v3894, %v4474
    %v4476 = vpop.f32.mrb[0].mxu0
    %v4477 = vpop.f32.mrb[0].mxu0
    %v4478 = vadd.f32 %v3894, %v4477
    %v4479 = vpop.f32.mrb[0].mxu0
    %4480 = vmatprep.mubr.bf16.mxu0 0
    %4481 = vmatmul.mubr.bf16.gmra.mrb[0].mxu0 %v3872
    %v4482 = vpop.f32.mrb[0].mxu0
    %v4483 = vadd.f32 %v3894, %v4482
    %v4484 = vpop.f32.mrb[0].mxu0
    %v4485 = vpop.f32.mrb[0].mxu0
    %v4486 = vadd.f32 %v3894, %v4485
    %v4487 = vpop.f32.mrb[0].mxu0
    %4488 = vdwg.mxu0
    %v4489 = vxor.u32 %v3979, 2147483648
    %v4490 = vxor.u32 %v3982, 2147483648
    %v4491 = vxor.u32 %v3987, 2147483648
    %v4492 = vxor.u32 %v3990, 2147483648
    %v4493 = vxor.u32 %v3995, 2147483648
    %v4494 = vxor.u32 %v3998, 2147483648
    %v4495 = vxor.u32 %v4003, 2147483648
    %v4496 = vxor.u32 %v4006, 2147483648
    %v4497 = vxor.u32 %v4011, 2147483648
    %v4498 = vxor.u32 %v4014, 2147483648
    %v4499 = vxor.u32 %v4019, 2147483648
    %v4500 = vxor.u32 %v4022, 2147483648
    %v4501 = vxor.u32 %v4027, 2147483648
    %v4502 = vxor.u32 %v4030, 2147483648
    %v4503 = vxor.u32 %v4035, 2147483648
    %v4504 = vxor.u32 %v4038, 2147483648
    %v4505 = vxor.u32 %v4043, 2147483648
    %v4506 = vxor.u32 %v4046, 2147483648
    %v4507 = vxor.u32 %v4051, 2147483648
    %v4508 = vxor.u32 %v4054, 2147483648
    %v4509 = vxor.u32 %v4059, 2147483648
    %v4510 = vxor.u32 %v4062, 2147483648
    %v4511 = vxor.u32 %v4067, 2147483648
    %v4512 = vxor.u32 %v4070, 2147483648
    %v4513 = vxor.u32 %v4075, 2147483648
    %v4514 = vxor.u32 %v4078, 2147483648
    %v4515 = vxor.u32 %v4083, 2147483648
    %v4516 = vxor.u32 %v4086, 2147483648
    %v4517 = vxor.u32 %v4091, 2147483648
    %v4518 = vxor.u32 %v4094, 2147483648
    %v4519 = vxor.u32 %v4099, 2147483648
    %v4520 = vxor.u32 %v4102, 2147483648
    %v4521 = vxor.u32 %v4107, 2147483648
    %v4522 = vxor.u32 %v4110, 2147483648
    %v4523 = vxor.u32 %v4115, 2147483648
    %v4524 = vxor.u32 %v4118, 2147483648
    %v4525 = vxor.u32 %v4123, 2147483648
    %v4526 = vxor.u32 %v4126, 2147483648
    %v4527 = vxor.u32 %v4131, 2147483648
    %v4528 = vxor.u32 %v4134, 2147483648
    %v4529 = vxor.u32 %v4139, 2147483648
    %v4530 = vxor.u32 %v4142, 2147483648
    %v4531 = vxor.u32 %v4147, 2147483648
    %v4532 = vxor.u32 %v4150, 2147483648
    %v4533 = vxor.u32 %v4155, 2147483648
    %v4534 = vxor.u32 %v4158, 2147483648
    %v4535 = vxor.u32 %v4163, 2147483648
    %v4536 = vxor.u32 %v4166, 2147483648
    %v4537 = vxor.u32 %v4171, 2147483648
    %v4538 = vxor.u32 %v4174, 2147483648
    %v4539 = vxor.u32 %v4179, 2147483648
    %v4540 = vxor.u32 %v4182, 2147483648
    %v4541 = vxor.u32 %v4187, 2147483648
    %v4542 = vxor.u32 %v4190, 2147483648
    %v4543 = vxor.u32 %v4195, 2147483648
    %v4544 = vxor.u32 %v4198, 2147483648
    %v4545 = vxor.u32 %v4203, 2147483648
    %v4546 = vxor.u32 %v4206, 2147483648
    %v4547 = vxor.u32 %v4211, 2147483648
    %v4548 = vxor.u32 %v4214, 2147483648
    %v4549 = vxor.u32 %v4219, 2147483648
    %v4550 = vxor.u32 %v4222, 2147483648
    %v4551 = vxor.u32 %v4227, 2147483648
    %v4552 = vxor.u32 %v4230, 2147483648
    %v4553 = vxor.u32 %v4235, 2147483648
    %v4554 = vxor.u32 %v4238, 2147483648
    %v4555 = vxor.u32 %v4243, 2147483648
    %v4556 = vxor.u32 %v4246, 2147483648
    %v4557 = vxor.u32 %v4251, 2147483648
    %v4558 = vxor.u32 %v4254, 2147483648
    %v4559 = vxor.u32 %v4259, 2147483648
    %v4560 = vxor.u32 %v4262, 2147483648
    %v4561 = vxor.u32 %v4267, 2147483648
    %v4562 = vxor.u32 %v4270, 2147483648
    %v4563 = vxor.u32 %v4275, 2147483648
    %v4564 = vxor.u32 %v4278, 2147483648
    %v4565 = vxor.u32 %v4283, 2147483648
    %v4566 = vxor.u32 %v4286, 2147483648
    %v4567 = vxor.u32 %v4291, 2147483648
    %v4568 = vxor.u32 %v4294, 2147483648
    %v4569 = vxor.u32 %v4299, 2147483648
    %v4570 = vxor.u32 %v4302, 2147483648
    %v4571 = vxor.u32 %v4307, 2147483648
    %v4572 = vxor.u32 %v4310, 2147483648
    %v4573 = vxor.u32 %v4315, 2147483648
    %v4574 = vxor.u32 %v4318, 2147483648
    %v4575 = vxor.u32 %v4323, 2147483648
    %v4576 = vxor.u32 %v4326, 2147483648
    %v4577 = vxor.u32 %v4331, 2147483648
    %v4578 = vxor.u32 %v4334, 2147483648
    %v4579 = vxor.u32 %v4339, 2147483648
    %v4580 = vxor.u32 %v4342, 2147483648
    %v4581 = vxor.u32 %v4347, 2147483648
    %v4582 = vxor.u32 %v4350, 2147483648
    %v4583 = vxor.u32 %v4355, 2147483648
    %v4584 = vxor.u32 %v4358, 2147483648
    %v4585 = vxor.u32 %v4363, 2147483648
    %v4586 = vxor.u32 %v4366, 2147483648
    %v4587 = vxor.u32 %v4371, 2147483648
    %v4588 = vxor.u32 %v4374, 2147483648
    %v4589 = vxor.u32 %v4379, 2147483648
    %v4590 = vxor.u32 %v4382, 2147483648
    %v4591 = vxor.u32 %v4387, 2147483648
    %v4592 = vxor.u32 %v4390, 2147483648
    %v4593 = vxor.u32 %v4395, 2147483648
    %v4594 = vxor.u32 %v4398, 2147483648
    %v4595 = vxor.u32 %v4403, 2147483648
    %v4596 = vxor.u32 %v4406, 2147483648
    %v4597 = vxor.u32 %v4411, 2147483648
    %v4598 = vxor.u32 %v4414, 2147483648
    %v4599 = vxor.u32 %v4419, 2147483648
    %v4600 = vxor.u32 %v4422, 2147483648
    %v4601 = vxor.u32 %v4427, 2147483648
    %v4602 = vxor.u32 %v4430, 2147483648
    %v4603 = vxor.u32 %v4435, 2147483648
    %v4604 = vxor.u32 %v4438, 2147483648
    %v4605 = vxor.u32 %v4443, 2147483648
    %v4606 = vxor.u32 %v4446, 2147483648
    %v4607 = vxor.u32 %v4451, 2147483648
    %v4608 = vxor.u32 %v4454, 2147483648
    %v4609 = vxor.u32 %v4459, 2147483648
    %v4610 = vxor.u32 %v4462, 2147483648
    %v4611 = vxor.u32 %v4467, 2147483648
    %v4612 = vxor.u32 %v4470, 2147483648
    %v4613 = vxor.u32 %v4475, 2147483648
    %v4614 = vxor.u32 %v4478, 2147483648
    %v4615 = vxor.u32 %v4483, 2147483648
    %v4616 = vxor.u32 %v4486, 2147483648
    %v4617 = vmul.f32 %v4489, 1.442695
    %v4618 = vpow.pop %v4617
    %v4619 = vmul.f32 %v4490, 1.442695
    %v4620 = vpow.pop %v4619
    %v4621 = vmul.f32 %v4491, 1.442695
    %v4622 = vpow.pop %v4621
    %v4623 = vmul.f32 %v4492, 1.442695
    %v4624 = vpow.pop %v4623
    %v4625 = vmul.f32 %v4493, 1.442695
    %v4626 = vpow.pop %v4625
    %v4627 = vmul.f32 %v4494, 1.442695
    %v4628 = vpow.pop %v4627
    %v4629 = vmul.f32 %v4495, 1.442695
    %v4630 = vpow.pop %v4629
    %v4631 = vmul.f32 %v4496, 1.442695
    %v4632 = vpow.pop %v4631
    %v4633 = vmul.f32 %v4497, 1.442695
    %v4634 = vpow.pop %v4633
    %v4635 = vmul.f32 %v4498, 1.442695
    %v4636 = vpow.pop %v4635
    %v4637 = vmul.f32 %v4499, 1.442695
    %v4638 = vpow.pop %v4637
    %v4639 = vmul.f32 %v4500, 1.442695
    %v4640 = vpow.pop %v4639
    %v4641 = vmul.f32 %v4501, 1.442695
    %v4642 = vpow.pop %v4641
    %v4643 = vmul.f32 %v4502, 1.442695
    %v4644 = vpow.pop %v4643
    %v4645 = vmul.f32 %v4503, 1.442695
    %v4646 = vpow.pop %v4645
    %v4647 = vmul.f32 %v4504, 1.442695
    %v4648 = vpow.pop %v4647
    %v4649 = vmul.f32 %v4505, 1.442695
    %v4650 = vpow.pop %v4649
    %v4651 = vmul.f32 %v4506, 1.442695
    %v4652 = vpow.pop %v4651
    %v4653 = vmul.f32 %v4507, 1.442695
    %v4654 = vpow.pop %v4653
    %v4655 = vmul.f32 %v4508, 1.442695
    %v4656 = vpow.pop %v4655
    %v4657 = vmul.f32 %v4509, 1.442695
    %v4658 = vpow.pop %v4657
    %v4659 = vmul.f32 %v4510, 1.442695
    %v4660 = vpow.pop %v4659
    %v4661 = vmul.f32 %v4511, 1.442695
    %v4662 = vpow.pop %v4661
    %v4663 = vmul.f32 %v4512, 1.442695
    %v4664 = vpow.pop %v4663
    %v4665 = vmul.f32 %v4513, 1.442695
    %v4666 = vpow.pop %v4665
    %v4667 = vmul.f32 %v4514, 1.442695
    %v4668 = vpow.pop %v4667
    %v4669 = vmul.f32 %v4515, 1.442695
    %v4670 = vpow.pop %v4669
    %v4671 = vmul.f32 %v4516, 1.442695
    %v4672 = vpow.pop %v4671
    %v4673 = vmul.f32 %v4517, 1.442695
    %v4674 = vpow.pop %v4673
    %v4675 = vmul.f32 %v4518, 1.442695
    %v4676 = vpow.pop %v4675
    %v4677 = vmul.f32 %v4519, 1.442695
    %v4678 = vpow.pop %v4677
    %v4679 = vmul.f32 %v4520, 1.442695
    %v4680 = vpow.pop %v4679
    %v4681 = vmul.f32 %v4521, 1.442695
    %v4682 = vpow.pop %v4681
    %v4683 = vmul.f32 %v4522, 1.442695
    %v4684 = vpow.pop %v4683
    %v4685 = vmul.f32 %v4523, 1.442695
    %v4686 = vpow.pop %v4685
    %v4687 = vmul.f32 %v4524, 1.442695
    %v4688 = vpow.pop %v4687
    %v4689 = vmul.f32 %v4525, 1.442695
    %v4690 = vpow.pop %v4689
    %v4691 = vmul.f32 %v4526, 1.442695
    %v4692 = vpow.pop %v4691
    %v4693 = vmul.f32 %v4527, 1.442695
    %v4694 = vpow.pop %v4693
    %v4695 = vmul.f32 %v4528, 1.442695
    %v4696 = vpow.pop %v4695
    %v4697 = vmul.f32 %v4529, 1.442695
    %v4698 = vpow.pop %v4697
    %v4699 = vmul.f32 %v4530, 1.442695
    %v4700 = vpow.pop %v4699
    %v4701 = vmul.f32 %v4531, 1.442695
    %v4702 = vpow.pop %v4701
    %v4703 = vmul.f32 %v4532, 1.442695
    %v4704 = vpow.pop %v4703
    %v4705 = vmul.f32 %v4533, 1.442695
    %v4706 = vpow.pop %v4705
    %v4707 = vmul.f32 %v4534, 1.442695
    %v4708 = vpow.pop %v4707
    %v4709 = vmul.f32 %v4535, 1.442695
    %v4710 = vpow.pop %v4709
    %v4711 = vmul.f32 %v4536, 1.442695
    %v4712 = vpow.pop %v4711
    %v4713 = vmul.f32 %v4537, 1.442695
    %v4714 = vpow.pop %v4713
    %v4715 = vmul.f32 %v4538, 1.442695
    %v4716 = vpow.pop %v4715
    %v4717 = vmul.f32 %v4539, 1.442695
    %v4718 = vpow.pop %v4717
    %v4719 = vmul.f32 %v4540, 1.442695
    %v4720 = vpow.pop %v4719
    %v4721 = vmul.f32 %v4541, 1.442695
    %v4722 = vpow.pop %v4721
    %v4723 = vmul.f32 %v4542, 1.442695
    %v4724 = vpow.pop %v4723
    %v4725 = vmul.f32 %v4543, 1.442695
    %v4726 = vpow.pop %v4725
    %v4727 = vmul.f32 %v4544, 1.442695
    %v4728 = vpow.pop %v4727
    %v4729 = vmul.f32 %v4545, 1.442695
    %v4730 = vpow.pop %v4729
    %v4731 = vmul.f32 %v4546, 1.442695
    %v4732 = vpow.pop %v4731
    %v4733 = vmul.f32 %v4547, 1.442695
    %v4734 = vpow.pop %v4733
    %v4735 = vmul.f32 %v4548, 1.442695
    %v4736 = vpow.pop %v4735
    %v4737 = vmul.f32 %v4549, 1.442695
    %v4738 = vpow.pop %v4737
    %v4739 = vmul.f32 %v4550, 1.442695
    %v4740 = vpow.pop %v4739
    %v4741 = vmul.f32 %v4551, 1.442695
    %v4742 = vpow.pop %v4741
    %v4743 = vmul.f32 %v4552, 1.442695
    %v4744 = vpow.pop %v4743
    %v4745 = vmul.f32 %v4553, 1.442695
    %v4746 = vpow.pop %v4745
    %v4747 = vmul.f32 %v4554, 1.442695
    %v4748 = vpow.pop %v4747
    %v4749 = vmul.f32 %v4555, 1.442695
    %v4750 = vpow.pop %v4749
    %v4751 = vmul.f32 %v4556, 1.442695
    %v4752 = vpow.pop %v4751
    %v4753 = vmul.f32 %v4557, 1.442695
    %v4754 = vpow.pop %v4753
    %v4755 = vmul.f32 %v4558, 1.442695
    %v4756 = vpow.pop %v4755
    %v4757 = vmul.f32 %v4559, 1.442695
    %v4758 = vpow.pop %v4757
    %v4759 = vmul.f32 %v4560, 1.442695
    %v4760 = vpow.pop %v4759
    %v4761 = vmul.f32 %v4561, 1.442695
    %v4762 = vpow.pop %v4761
    %v4763 = vmul.f32 %v4562, 1.442695
    %v4764 = vpow.pop %v4763
    %v4765 = vmul.f32 %v4563, 1.442695
    %v4766 = vpow.pop %v4765
    %v4767 = vmul.f32 %v4564, 1.442695
    %v4768 = vpow.pop %v4767
    %v4769 = vmul.f32 %v4565, 1.442695
    %v4770 = vpow.pop %v4769
    %v4771 = vmul.f32 %v4566, 1.442695
    %v4772 = vpow.pop %v4771
    %v4773 = vmul.f32 %v4567, 1.442695
    %v4774 = vpow.pop %v4773
    %v4775 = vmul.f32 %v4568, 1.442695
    %v4776 = vpow.pop %v4775
    %v4777 = vmul.f32 %v4569, 1.442695
    %v4778 = vpow.pop %v4777
    %v4779 = vmul.f32 %v4570, 1.442695
    %v4780 = vpow.pop %v4779
    %v4781 = vmul.f32 %v4571, 1.442695
    %v4782 = vpow.pop %v4781
    %v4783 = vmul.f32 %v4572, 1.442695
    %v4784 = vpow.pop %v4783
    %v4785 = vmul.f32 %v4573, 1.442695
    %v4786 = vpow.pop %v4785
    %v4787 = vmul.f32 %v4574, 1.442695
    %v4788 = vpow.pop %v4787
    %v4789 = vmul.f32 %v4575, 1.442695
    %v4790 = vpow.pop %v4789
    %v4791 = vmul.f32 %v4576, 1.442695
    %v4792 = vpow.pop %v4791
    %v4793 = vmul.f32 %v4577, 1.442695
    %v4794 = vpow.pop %v4793
    %v4795 = vmul.f32 %v4578, 1.442695
    %v4796 = vpow.pop %v4795
    %v4797 = vmul.f32 %v4579, 1.442695
    %v4798 = vpow.pop %v4797
    %v4799 = vmul.f32 %v4580, 1.442695
    %v4800 = vpow.pop %v4799
    %v4801 = vmul.f32 %v4581, 1.442695
    %v4802 = vpow.pop %v4801
    %v4803 = vmul.f32 %v4582, 1.442695
    %v4804 = vpow.pop %v4803
    %v4805 = vmul.f32 %v4583, 1.442695
    %v4806 = vpow.pop %v4805
    %v4807 = vmul.f32 %v4584, 1.442695
    %v4808 = vpow.pop %v4807
    %v4809 = vmul.f32 %v4585, 1.442695
    %v4810 = vpow.pop %v4809
    %v4811 = vmul.f32 %v4586, 1.442695
    %v4812 = vpow.pop %v4811
    %v4813 = vmul.f32 %v4587, 1.442695
    %v4814 = vpow.pop %v4813
    %v4815 = vmul.f32 %v4588, 1.442695
    %v4816 = vpow.pop %v4815
    %v4817 = vmul.f32 %v4589, 1.442695
    %v4818 = vpow.pop %v4817
    %v4819 = vmul.f32 %v4590, 1.442695
    %v4820 = vpow.pop %v4819
    %v4821 = vmul.f32 %v4591, 1.442695
    %v4822 = vpow.pop %v4821
    %v4823 = vmul.f32 %v4592, 1.442695
    %v4824 = vpow.pop %v4823
    %v4825 = vmul.f32 %v4593, 1.442695
    %v4826 = vpow.pop %v4825
    %v4827 = vmul.f32 %v4594, 1.442695
    %v4828 = vpow.pop %v4827
    %v4829 = vmul.f32 %v4595, 1.442695
    %v4830 = vpow.pop %v4829
    %v4831 = vmul.f32 %v4596, 1.442695
    %v4832 = vpow.pop %v4831
    %v4833 = vmul.f32 %v4597, 1.442695
    %v4834 = vpow.pop %v4833
    %v4835 = vmul.f32 %v4598, 1.442695
    %v4836 = vpow.pop %v4835
    %v4837 = vmul.f32 %v4599, 1.442695
    %v4838 = vpow.pop %v4837
    %v4839 = vmul.f32 %v4600, 1.442695
    %v4840 = vpow.pop %v4839
    %v4841 = vmul.f32 %v4601, 1.442695
    %v4842 = vpow.pop %v4841
    %v4843 = vmul.f32 %v4602, 1.442695
    %v4844 = vpow.pop %v4843
    %v4845 = vmul.f32 %v4603, 1.442695
    %v4846 = vpow.pop %v4845
    %v4847 = vmul.f32 %v4604, 1.442695
    %v4848 = vpow.pop %v4847
    %v4849 = vmul.f32 %v4605, 1.442695
    %v4850 = vpow.pop %v4849
    %v4851 = vmul.f32 %v4606, 1.442695
    %v4852 = vpow.pop %v4851
    %v4853 = vmul.f32 %v4607, 1.442695
    %v4854 = vpow.pop %v4853
    %v4855 = vmul.f32 %v4608, 1.442695
    %v4856 = vpow.pop %v4855
    %v4857 = vmul.f32 %v4609, 1.442695
    %v4858 = vpow.pop %v4857
    %v4859 = vmul.f32 %v4610, 1.442695
    %v4860 = vpow.pop %v4859
    %v4861 = vmul.f32 %v4611, 1.442695
    %v4862 = vpow.pop %v4861
    %v4863 = vmul.f32 %v4612, 1.442695
    %v4864 = vpow.pop %v4863
    %v4865 = vmul.f32 %v4613, 1.442695
    %v4866 = vpow.pop %v4865
    %v4867 = vmul.f32 %v4614, 1.442695
    %v4868 = vpow.pop %v4867
    %v4869 = vmul.f32 %v4615, 1.442695
    %v4870 = vpow.pop %v4869
    %v4871 = vmul.f32 %v4616, 1.442695
    %v4872 = vpow.pop %v4871
    %v4873 = vadd.f32 %v4618, 1.0
    %v4874 = vadd.f32 %v4620, 1.0
    %v4875 = vadd.f32 %v4622, 1.0
    %v4876 = vadd.f32 %v4624, 1.0
    %v4877 = vadd.f32 %v4626, 1.0
    %v4878 = vadd.f32 %v4628, 1.0
    %v4879 = vadd.f32 %v4630, 1.0
    %v4880 = vadd.f32 %v4632, 1.0
    %v4881 = vadd.f32 %v4634, 1.0
    %v4882 = vadd.f32 %v4636, 1.0
    %v4883 = vadd.f32 %v4638, 1.0
    %v4884 = vadd.f32 %v4640, 1.0
    %v4885 = vadd.f32 %v4642, 1.0
    %v4886 = vadd.f32 %v4644, 1.0
    %v4887 = vadd.f32 %v4646, 1.0
    %v4888 = vadd.f32 %v4648, 1.0
    %v4889 = vadd.f32 %v4650, 1.0
    %v4890 = vadd.f32 %v4652, 1.0
    %v4891 = vadd.f32 %v4654, 1.0
    %v4892 = vadd.f32 %v4656, 1.0
    %v4893 = vadd.f32 %v4658, 1.0
    %v4894 = vadd.f32 %v4660, 1.0
    %v4895 = vadd.f32 %v4662, 1.0
    %v4896 = vadd.f32 %v4664, 1.0
    %v4897 = vadd.f32 %v4666, 1.0
    %v4898 = vadd.f32 %v4668, 1.0
    %v4899 = vadd.f32 %v4670, 1.0
    %v4900 = vadd.f32 %v4672, 1.0
    %v4901 = vadd.f32 %v4674, 1.0
    %v4902 = vadd.f32 %v4676, 1.0
    %v4903 = vadd.f32 %v4678, 1.0
    %v4904 = vadd.f32 %v4680, 1.0
    %v4905 = vadd.f32 %v4682, 1.0
    %v4906 = vadd.f32 %v4684, 1.0
    %v4907 = vadd.f32 %v4686, 1.0
    %v4908 = vadd.f32 %v4688, 1.0
    %v4909 = vadd.f32 %v4690, 1.0
    %v4910 = vadd.f32 %v4692, 1.0
    %v4911 = vadd.f32 %v4694, 1.0
    %v4912 = vadd.f32 %v4696, 1.0
    %v4913 = vadd.f32 %v4698, 1.0
    %v4914 = vadd.f32 %v4700, 1.0
    %v4915 = vadd.f32 %v4702, 1.0
    %v4916 = vadd.f32 %v4704, 1.0
    %v4917 = vadd.f32 %v4706, 1.0
    %v4918 = vadd.f32 %v4708, 1.0
    %v4919 = vadd.f32 %v4710, 1.0
    %v4920 = vadd.f32 %v4712, 1.0
    %v4921 = vadd.f32 %v4714, 1.0
    %v4922 = vadd.f32 %v4716, 1.0
    %v4923 = vadd.f32 %v4718, 1.0
    %v4924 = vadd.f32 %v4720, 1.0
    %v4925 = vadd.f32 %v4722, 1.0
    %v4926 = vadd.f32 %v4724, 1.0
    %v4927 = vadd.f32 %v4726, 1.0
    %v4928 = vadd.f32 %v4728, 1.0
    %v4929 = vadd.f32 %v4730, 1.0
    %v4930 = vadd.f32 %v4732, 1.0
    %v4931 = vadd.f32 %v4734, 1.0
    %v4932 = vadd.f32 %v4736, 1.0
    %v4933 = vadd.f32 %v4738, 1.0
    %v4934 = vadd.f32 %v4740, 1.0
    %v4935 = vadd.f32 %v4742, 1.0
    %v4936 = vadd.f32 %v4744, 1.0
    %v4937 = vadd.f32 %v4746, 1.0
    %v4938 = vadd.f32 %v4748, 1.0
    %v4939 = vadd.f32 %v4750, 1.0
    %v4940 = vadd.f32 %v4752, 1.0
    %v4941 = vadd.f32 %v4754, 1.0
    %v4942 = vadd.f32 %v4756, 1.0
    %v4943 = vadd.f32 %v4758, 1.0
    %v4944 = vadd.f32 %v4760, 1.0
    %v4945 = vadd.f32 %v4762, 1.0
    %v4946 = vadd.f32 %v4764, 1.0
    %v4947 = vadd.f32 %v4766, 1.0
    %v4948 = vadd.f32 %v4768, 1.0
    %v4949 = vadd.f32 %v4770, 1.0
    %v4950 = vadd.f32 %v4772, 1.0
    %v4951 = vadd.f32 %v4774, 1.0
    %v4952 = vadd.f32 %v4776, 1.0
    %v4953 = vadd.f32 %v4778, 1.0
    %v4954 = vadd.f32 %v4780, 1.0
    %v4955 = vadd.f32 %v4782, 1.0
    %v4956 = vadd.f32 %v4784, 1.0
    %v4957 = vadd.f32 %v4786, 1.0
    %v4958 = vadd.f32 %v4788, 1.0
    %v4959 = vadd.f32 %v4790, 1.0
    %v4960 = vadd.f32 %v4792, 1.0
    %v4961 = vadd.f32 %v4794, 1.0
    %v4962 = vadd.f32 %v4796, 1.0
    %v4963 = vadd.f32 %v4798, 1.0
    %v4964 = vadd.f32 %v4800, 1.0
    %v4965 = vadd.f32 %v4802, 1.0
    %v4966 = vadd.f32 %v4804, 1.0
    %v4967 = vadd.f32 %v4806, 1.0
    %v4968 = vadd.f32 %v4808, 1.0
    %v4969 = vadd.f32 %v4810, 1.0
    %v4970 = vadd.f32 %v4812, 1.0
    %v4971 = vadd.f32 %v4814, 1.0
    %v4972 = vadd.f32 %v4816, 1.0
    %v4973 = vadd.f32 %v4818, 1.0
    %v4974 = vadd.f32 %v4820, 1.0
    %v4975 = vadd.f32 %v4822, 1.0
    %v4976 = vadd.f32 %v4824, 1.0
    %v4977 = vadd.f32 %v4826, 1.0
    %v4978 = vadd.f32 %v4828, 1.0
    %v4979 = vadd.f32 %v4830, 1.0
    %v4980 = vadd.f32 %v4832, 1.0
    %v4981 = vadd.f32 %v4834, 1.0
    %v4982 = vadd.f32 %v4836, 1.0
    %v4983 = vadd.f32 %v4838, 1.0
    %v4984 = vadd.f32 %v4840, 1.0
    %v4985 = vadd.f32 %v4842, 1.0
    %v4986 = vadd.f32 %v4844, 1.0
    %v4987 = vadd.f32 %v4846, 1.0
    %v4988 = vadd.f32 %v4848, 1.0
    %v4989 = vadd.f32 %v4850, 1.0
    %v4990 = vadd.f32 %v4852, 1.0
    %v4991 = vadd.f32 %v4854, 1.0
    %v4992 = vadd.f32 %v4856, 1.0
    %v4993 = vadd.f32 %v4858, 1.0
    %v4994 = vadd.f32 %v4860, 1.0
    %v4995 = vadd.f32 %v4862, 1.0
    %v4996 = vadd.f32 %v4864, 1.0
    %v4997 = vadd.f32 %v4866, 1.0
    %v4998 = vadd.f32 %v4868, 1.0
    %v4999 = vadd.f32 %v4870, 1.0
    %v5000 = vadd.f32 %v4872, 1.0
    %v5001 = vrcp.pop %v4873
    %v5002 = vmul.f32 1.0, %v5001
    %v5003 = vrcp.pop %v4874
    %v5004 = vmul.f32 1.0, %v5003
    %v5005 = vrcp.pop %v4875
    %v5006 = vmul.f32 1.0, %v5005
    %v5007 = vrcp.pop %v4876
    %v5008 = vmul.f32 1.0, %v5007
    %v5009 = vrcp.pop %v4877
    %v5010 = vmul.f32 1.0, %v5009
    %v5011 = vrcp.pop %v4878
    %v5012 = vmul.f32 1.0, %v5011
    %v5013 = vrcp.pop %v4879
    %v5014 = vmul.f32 1.0, %v5013
    %v5015 = vrcp.pop %v4880
    %v5016 = vmul.f32 1.0, %v5015
    %v5017 = vrcp.pop %v4881
    %v5018 = vmul.f32 1.0, %v5017
    %v5019 = vrcp.pop %v4882
    %v5020 = vmul.f32 1.0, %v5019
    %v5021 = vrcp.pop %v4883
    %v5022 = vmul.f32 1.0, %v5021
    %v5023 = vrcp.pop %v4884
    %v5024 = vmul.f32 1.0, %v5023
    %v5025 = vrcp.pop %v4885
    %v5026 = vmul.f32 1.0, %v5025
    %v5027 = vrcp.pop %v4886
    %v5028 = vmul.f32 1.0, %v5027
    %v5029 = vrcp.pop %v4887
    %v5030 = vmul.f32 1.0, %v5029
    %v5031 = vrcp.pop %v4888
    %v5032 = vmul.f32 1.0, %v5031
    %v5033 = vrcp.pop %v4889
    %v5034 = vmul.f32 1.0, %v5033
    %v5035 = vrcp.pop %v4890
    %v5036 = vmul.f32 1.0, %v5035
    %v5037 = vrcp.pop %v4891
    %v5038 = vmul.f32 1.0, %v5037
    %v5039 = vrcp.pop %v4892
    %v5040 = vmul.f32 1.0, %v5039
    %v5041 = vrcp.pop %v4893
    %v5042 = vmul.f32 1.0, %v5041
    %v5043 = vrcp.pop %v4894
    %v5044 = vmul.f32 1.0, %v5043
    %v5045 = vrcp.pop %v4895
    %v5046 = vmul.f32 1.0, %v5045
    %v5047 = vrcp.pop %v4896
    %v5048 = vmul.f32 1.0, %v5047
    %v5049 = vrcp.pop %v4897
    %v5050 = vmul.f32 1.0, %v5049
    %v5051 = vrcp.pop %v4898
    %v5052 = vmul.f32 1.0, %v5051
    %v5053 = vrcp.pop %v4899
    %v5054 = vmul.f32 1.0, %v5053
    %v5055 = vrcp.pop %v4900
    %v5056 = vmul.f32 1.0, %v5055
    %v5057 = vrcp.pop %v4901
    %v5058 = vmul.f32 1.0, %v5057
    %v5059 = vrcp.pop %v4902
    %v5060 = vmul.f32 1.0, %v5059
    %v5061 = vrcp.pop %v4903
    %v5062 = vmul.f32 1.0, %v5061
    %v5063 = vrcp.pop %v4904
    %v5064 = vmul.f32 1.0, %v5063
    %v5065 = vrcp.pop %v4905
    %v5066 = vmul.f32 1.0, %v5065
    %v5067 = vrcp.pop %v4906
    %v5068 = vmul.f32 1.0, %v5067
    %v5069 = vrcp.pop %v4907
    %v5070 = vmul.f32 1.0, %v5069
    %v5071 = vrcp.pop %v4908
    %v5072 = vmul.f32 1.0, %v5071
    %v5073 = vrcp.pop %v4909
    %v5074 = vmul.f32 1.0, %v5073
    %v5075 = vrcp.pop %v4910
    %v5076 = vmul.f32 1.0, %v5075
    %v5077 = vrcp.pop %v4911
    %v5078 = vmul.f32 1.0, %v5077
    %v5079 = vrcp.pop %v4912
    %v5080 = vmul.f32 1.0, %v5079
    %v5081 = vrcp.pop %v4913
    %v5082 = vmul.f32 1.0, %v5081
    %v5083 = vrcp.pop %v4914
    %v5084 = vmul.f32 1.0, %v5083
    %v5085 = vrcp.pop %v4915
    %v5086 = vmul.f32 1.0, %v5085
    %v5087 = vrcp.pop %v4916
    %v5088 = vmul.f32 1.0, %v5087
    %v5089 = vrcp.pop %v4917
    %v5090 = vmul.f32 1.0, %v5089
    %v5091 = vrcp.pop %v4918
    %v5092 = vmul.f32 1.0, %v5091
    %v5093 = vrcp.pop %v4919
    %v5094 = vmul.f32 1.0, %v5093
    %v5095 = vrcp.pop %v4920
    %v5096 = vmul.f32 1.0, %v5095
    %v5097 = vrcp.pop %v4921
    %v5098 = vmul.f32 1.0, %v5097
    %v5099 = vrcp.pop %v4922
    %v5100 = vmul.f32 1.0, %v5099
    %v5101 = vrcp.pop %v4923
    %v5102 = vmul.f32 1.0, %v5101
    %v5103 = vrcp.pop %v4924
    %v5104 = vmul.f32 1.0, %v5103
    %v5105 = vrcp.pop %v4925
    %v5106 = vmul.f32 1.0, %v5105
    %v5107 = vrcp.pop %v4926
    %v5108 = vmul.f32 1.0, %v5107
    %v5109 = vrcp.pop %v4927
    %v5110 = vmul.f32 1.0, %v5109
    %v5111 = vrcp.pop %v4928
    %v5112 = vmul.f32 1.0, %v5111
    %v5113 = vrcp.pop %v4929
    %v5114 = vmul.f32 1.0, %v5113
    %v5115 = vrcp.pop %v4930
    %v5116 = vmul.f32 1.0, %v5115
    %v5117 = vrcp.pop %v4931
    %v5118 = vmul.f32 1.0, %v5117
    %v5119 = vrcp.pop %v4932
    %v5120 = vmul.f32 1.0, %v5119
    %v5121 = vrcp.pop %v4933
    %v5122 = vmul.f32 1.0, %v5121
    %v5123 = vrcp.pop %v4934
    %v5124 = vmul.f32 1.0, %v5123
    %v5125 = vrcp.pop %v4935
    %v5126 = vmul.f32 1.0, %v5125
    %v5127 = vrcp.pop %v4936
    %v5128 = vmul.f32 1.0, %v5127
    %v5129 = vrcp.pop %v4937
    %v5130 = vmul.f32 1.0, %v5129
    %v5131 = vrcp.pop %v4938
    %v5132 = vmul.f32 1.0, %v5131
    %v5133 = vrcp.pop %v4939
    %v5134 = vmul.f32 1.0, %v5133
    %v5135 = vrcp.pop %v4940
    %v5136 = vmul.f32 1.0, %v5135
    %v5137 = vrcp.pop %v4941
    %v5138 = vmul.f32 1.0, %v5137
    %v5139 = vrcp.pop %v4942
    %v5140 = vmul.f32 1.0, %v5139
    %v5141 = vrcp.pop %v4943
    %v5142 = vmul.f32 1.0, %v5141
    %v5143 = vrcp.pop %v4944
    %v5144 = vmul.f32 1.0, %v5143
    %v5145 = vrcp.pop %v4945
    %v5146 = vmul.f32 1.0, %v5145
    %v5147 = vrcp.pop %v4946
    %v5148 = vmul.f32 1.0, %v5147
    %v5149 = vrcp.pop %v4947
    %v5150 = vmul.f32 1.0, %v5149
    %v5151 = vrcp.pop %v4948
    %v5152 = vmul.f32 1.0, %v5151
    %v5153 = vrcp.pop %v4949
    %v5154 = vmul.f32 1.0, %v5153
    %v5155 = vrcp.pop %v4950
    %v5156 = vmul.f32 1.0, %v5155
    %v5157 = vrcp.pop %v4951
    %v5158 = vmul.f32 1.0, %v5157
    %v5159 = vrcp.pop %v4952
    %v5160 = vmul.f32 1.0, %v5159
    %v5161 = vrcp.pop %v4953
    %v5162 = vmul.f32 1.0, %v5161
    %v5163 = vrcp.pop %v4954
    %v5164 = vmul.f32 1.0, %v5163
    %v5165 = vrcp.pop %v4955
    %v5166 = vmul.f32 1.0, %v5165
    %v5167 = vrcp.pop %v4956
    %v5168 = vmul.f32 1.0, %v5167
    %v5169 = vrcp.pop %v4957
    %v5170 = vmul.f32 1.0, %v5169
    %v5171 = vrcp.pop %v4958
    %v5172 = vmul.f32 1.0, %v5171
    %v5173 = vrcp.pop %v4959
    %v5174 = vmul.f32 1.0, %v5173
    %v5175 = vrcp.pop %v4960
    %v5176 = vmul.f32 1.0, %v5175
    %v5177 = vrcp.pop %v4961
    %v5178 = vmul.f32 1.0, %v5177
    %v5179 = vrcp.pop %v4962
    %v5180 = vmul.f32 1.0, %v5179
    %v5181 = vrcp.pop %v4963
    %v5182 = vmul.f32 1.0, %v5181
    %v5183 = vrcp.pop %v4964
    %v5184 = vmul.f32 1.0, %v5183
    %v5185 = vrcp.pop %v4965
    %v5186 = vmul.f32 1.0, %v5185
    %v5187 = vrcp.pop %v4966
    %v5188 = vmul.f32 1.0, %v5187
    %v5189 = vrcp.pop %v4967
    %v5190 = vmul.f32 1.0, %v5189
    %v5191 = vrcp.pop %v4968
    %v5192 = vmul.f32 1.0, %v5191
    %v5193 = vrcp.pop %v4969
    %v5194 = vmul.f32 1.0, %v5193
    %v5195 = vrcp.pop %v4970
    %v5196 = vmul.f32 1.0, %v5195
    %v5197 = vrcp.pop %v4971
    %v5198 = vmul.f32 1.0, %v5197
    %v5199 = vrcp.pop %v4972
    %v5200 = vmul.f32 1.0, %v5199
    %v5201 = vrcp.pop %v4973
    %v5202 = vmul.f32 1.0, %v5201
    %v5203 = vrcp.pop %v4974
    %v5204 = vmul.f32 1.0, %v5203
    %v5205 = vrcp.pop %v4975
    %v5206 = vmul.f32 1.0, %v5205
    %v5207 = vrcp.pop %v4976
    %v5208 = vmul.f32 1.0, %v5207
    %v5209 = vrcp.pop %v4977
    %v5210 = vmul.f32 1.0, %v5209
    %v5211 = vrcp.pop %v4978
    %v5212 = vmul.f32 1.0, %v5211
    %v5213 = vrcp.pop %v4979
    %v5214 = vmul.f32 1.0, %v5213
    %v5215 = vrcp.pop %v4980
    %v5216 = vmul.f32 1.0, %v5215
    %v5217 = vrcp.pop %v4981
    %v5218 = vmul.f32 1.0, %v5217
    %v5219 = vrcp.pop %v4982
    %v5220 = vmul.f32 1.0, %v5219
    %v5221 = vrcp.pop %v4983
    %v5222 = vmul.f32 1.0, %v5221
    %v5223 = vrcp.pop %v4984
    %v5224 = vmul.f32 1.0, %v5223
    %v5225 = vrcp.pop %v4985
    %v5226 = vmul.f32 1.0, %v5225
    %v5227 = vrcp.pop %v4986
    %v5228 = vmul.f32 1.0, %v5227
    %v5229 = vrcp.pop %v4987
    %v5230 = vmul.f32 1.0, %v5229
    %v5231 = vrcp.pop %v4988
    %v5232 = vmul.f32 1.0, %v5231
    %v5233 = vrcp.pop %v4989
    %v5234 = vmul.f32 1.0, %v5233
    %v5235 = vrcp.pop %v4990
    %v5236 = vmul.f32 1.0, %v5235
    %v5237 = vrcp.pop %v4991
    %v5238 = vmul.f32 1.0, %v5237
    %v5239 = vrcp.pop %v4992
    %v5240 = vmul.f32 1.0, %v5239
    %v5241 = vrcp.pop %v4993
    %v5242 = vmul.f32 1.0, %v5241
    %v5243 = vrcp.pop %v4994
    %v5244 = vmul.f32 1.0, %v5243
    %v5245 = vrcp.pop %v4995
    %v5246 = vmul.f32 1.0, %v5245
    %v5247 = vrcp.pop %v4996
    %v5248 = vmul.f32 1.0, %v5247
    %v5249 = vrcp.pop %v4997
    %v5250 = vmul.f32 1.0, %v5249
    %v5251 = vrcp.pop %v4998
    %v5252 = vmul.f32 1.0, %v5251
    %v5253 = vrcp.pop %v4999
    %v5254 = vmul.f32 1.0, %v5253
    %v5255 = vrcp.pop %v5000
    %v5256 = vmul.f32 1.0, %v5255
    %v5257 = vmul.f32 %v3979, %v5002
    %v5258 = vmul.f32 %v3982, %v5004
    %v5259 = vmul.f32 %v3987, %v5006
    %v5260 = vmul.f32 %v3990, %v5008
    %v5261 = vmul.f32 %v3995, %v5010
    %v5262 = vmul.f32 %v3998, %v5012
    %v5263 = vmul.f32 %v4003, %v5014
    %v5264 = vmul.f32 %v4006, %v5016
    %v5265 = vmul.f32 %v4011, %v5018
    %v5266 = vmul.f32 %v4014, %v5020
    %v5267 = vmul.f32 %v4019, %v5022
    %v5268 = vmul.f32 %v4022, %v5024
    %v5269 = vmul.f32 %v4027, %v5026
    %v5270 = vmul.f32 %v4030, %v5028
    %v5271 = vmul.f32 %v4035, %v5030
    %v5272 = vmul.f32 %v4038, %v5032
    %v5273 = vmul.f32 %v4043, %v5034
    %v5274 = vmul.f32 %v4046, %v5036
    %v5275 = vmul.f32 %v4051, %v5038
    %v5276 = vmul.f32 %v4054, %v5040
    %v5277 = vmul.f32 %v4059, %v5042
    %v5278 = vmul.f32 %v4062, %v5044
    %v5279 = vmul.f32 %v4067, %v5046
    %v5280 = vmul.f32 %v4070, %v5048
    %v5281 = vmul.f32 %v4075, %v5050
    %v5282 = vmul.f32 %v4078, %v5052
    %v5283 = vmul.f32 %v4083, %v5054
    %v5284 = vmul.f32 %v4086, %v5056
    %v5285 = vmul.f32 %v4091, %v5058
    %v5286 = vmul.f32 %v4094, %v5060
    %v5287 = vmul.f32 %v4099, %v5062
    %v5288 = vmul.f32 %v4102, %v5064
    %v5289 = vmul.f32 %v4107, %v5066
    %v5290 = vmul.f32 %v4110, %v5068
    %v5291 = vmul.f32 %v4115, %v5070
    %v5292 = vmul.f32 %v4118, %v5072
    %v5293 = vmul.f32 %v4123, %v5074
    %v5294 = vmul.f32 %v4126, %v5076
    %v5295 = vmul.f32 %v4131, %v5078
    %v5296 = vmul.f32 %v4134, %v5080
    %v5297 = vmul.f32 %v4139, %v5082
    %v5298 = vmul.f32 %v4142, %v5084
    %v5299 = vmul.f32 %v4147, %v5086
    %v5300 = vmul.f32 %v4150, %v5088
    %v5301 = vmul.f32 %v4155, %v5090
    %v5302 = vmul.f32 %v4158, %v5092
    %v5303 = vmul.f32 %v4163, %v5094
    %v5304 = vmul.f32 %v4166, %v5096
    %v5305 = vmul.f32 %v4171, %v5098
    %v5306 = vmul.f32 %v4174, %v5100
    %v5307 = vmul.f32 %v4179, %v5102
    %v5308 = vmul.f32 %v4182, %v5104
    %v5309 = vmul.f32 %v4187, %v5106
    %v5310 = vmul.f32 %v4190, %v5108
    %v5311 = vmul.f32 %v4195, %v5110
    %v5312 = vmul.f32 %v4198, %v5112
    %v5313 = vmul.f32 %v4203, %v5114
    %v5314 = vmul.f32 %v4206, %v5116
    %v5315 = vmul.f32 %v4211, %v5118
    %v5316 = vmul.f32 %v4214, %v5120
    %v5317 = vmul.f32 %v4219, %v5122
    %v5318 = vmul.f32 %v4222, %v5124
    %v5319 = vmul.f32 %v4227, %v5126
    %v5320 = vmul.f32 %v4230, %v5128
    %v5321 = vmul.f32 %v4235, %v5130
    %v5322 = vmul.f32 %v4238, %v5132
    %v5323 = vmul.f32 %v4243, %v5134
    %v5324 = vmul.f32 %v4246, %v5136
    %v5325 = vmul.f32 %v4251, %v5138
    %v5326 = vmul.f32 %v4254, %v5140
    %v5327 = vmul.f32 %v4259, %v5142
    %v5328 = vmul.f32 %v4262, %v5144
    %v5329 = vmul.f32 %v4267, %v5146
    %v5330 = vmul.f32 %v4270, %v5148
    %v5331 = vmul.f32 %v4275, %v5150
    %v5332 = vmul.f32 %v4278, %v5152
    %v5333 = vmul.f32 %v4283, %v5154
    %v5334 = vmul.f32 %v4286, %v5156
    %v5335 = vmul.f32 %v4291, %v5158
    %v5336 = vmul.f32 %v4294, %v5160
    %v5337 = vmul.f32 %v4299, %v5162
    %v5338 = vmul.f32 %v4302, %v5164
    %v5339 = vmul.f32 %v4307, %v5166
    %v5340 = vmul.f32 %v4310, %v5168
    %v5341 = vmul.f32 %v4315, %v5170
    %v5342 = vmul.f32 %v4318, %v5172
    %v5343 = vmul.f32 %v4323, %v5174
    %v5344 = vmul.f32 %v4326, %v5176
    %v5345 = vmul.f32 %v4331, %v5178
    %v5346 = vmul.f32 %v4334, %v5180
    %v5347 = vmul.f32 %v4339, %v5182
    %v5348 = vmul.f32 %v4342, %v5184
    %v5349 = vmul.f32 %v4347, %v5186
    %v5350 = vmul.f32 %v4350, %v5188
    %v5351 = vmul.f32 %v4355, %v5190
    %v5352 = vmul.f32 %v4358, %v5192
    %v5353 = vmul.f32 %v4363, %v5194
    %v5354 = vmul.f32 %v4366, %v5196
    %v5355 = vmul.f32 %v4371, %v5198
    %v5356 = vmul.f32 %v4374, %v5200
    %v5357 = vmul.f32 %v4379, %v5202
    %v5358 = vmul.f32 %v4382, %v5204
    %v5359 = vmul.f32 %v4387, %v5206
    %v5360 = vmul.f32 %v4390, %v5208
    %v5361 = vmul.f32 %v4395, %v5210
    %v5362 = vmul.f32 %v4398, %v5212
    %v5363 = vmul.f32 %v4403, %v5214
    %v5364 = vmul.f32 %v4406, %v5216
    %v5365 = vmul.f32 %v4411, %v5218
    %v5366 = vmul.f32 %v4414, %v5220
    %v5367 = vmul.f32 %v4419, %v5222
    %v5368 = vmul.f32 %v4422, %v5224
    %v5369 = vmul.f32 %v4427, %v5226
    %v5370 = vmul.f32 %v4430, %v5228
    %v5371 = vmul.f32 %v4435, %v5230
    %v5372 = vmul.f32 %v4438, %v5232
    %v5373 = vmul.f32 %v4443, %v5234
    %v5374 = vmul.f32 %v4446, %v5236
    %v5375 = vmul.f32 %v4451, %v5238
    %v5376 = vmul.f32 %v4454, %v5240
    %v5377 = vmul.f32 %v4459, %v5242
    %v5378 = vmul.f32 %v4462, %v5244
    %v5379 = vmul.f32 %v4467, %v5246
    %v5380 = vmul.f32 %v4470, %v5248
    %v5381 = vmul.f32 %v4475, %v5250
    %v5382 = vmul.f32 %v4478, %v5252
    %v5383 = vmul.f32 %v4483, %v5254
    %v5384 = vmul.f32 %v4486, %v5256
    %5385 = vst [vmem:[#allocation5] sm:$0xff] %v5257
    %5386 = vst [vmem:[#allocation5 + $0x8] sm:$0xff] %v5258
    %5387 = vst [vmem:[#allocation5 + $0x10] sm:$0xff] %v5259
    %5388 = vst [vmem:[#allocation5 + $0x18] sm:$0xff] %v5260
    %5389 = vst [vmem:[#allocation5 + $0x20] sm:$0xff] %v5261
    %5390 = vst [vmem:[#allocation5 + $0x28] sm:$0xff] %v5262
    %5391 = vst [vmem:[#allocation5 + $0x30] sm:$0xff] %v5263
    %5392 = vst [vmem:[#allocation5 + $0x38] sm:$0xff] %v5264
    %5393 = vst [vmem:[#allocation5 + $0x40] sm:$0xff] %v5265
    %5394 = vst [vmem:[#allocation5 + $0x48] sm:$0xff] %v5266
    %5395 = vst [vmem:[#allocation5 + $0x50] sm:$0xff] %v5267
    %5396 = vst [vmem:[#allocation5 + $0x58] sm:$0xff] %v5268
    %5397 = vst [vmem:[#allocation5 + $0x60] sm:$0xff] %v5269
    %5398 = vst [vmem:[#allocation5 + $0x68] sm:$0xff] %v5270
    %5399 = vst [vmem:[#allocation5 + $0x70] sm:$0xff] %v5271
    %5400 = vst [vmem:[#allocation5 + $0x78] sm:$0xff] %v5272
    %5401 = vst [vmem:[#allocation5 + $0x80] sm:$0xff] %v5273
    %5402 = vst [vmem:[#allocation5 + $0x88] sm:$0xff] %v5274
    %5403 = vst [vmem:[#allocation5 + $0x90] sm:$0xff] %v5275
    %5404 = vst [vmem:[#allocation5 + $0x98] sm:$0xff] %v5276
    %5405 = vst [vmem:[#allocation5 + $0xa0] sm:$0xff] %v5277
    %5406 = vst [vmem:[#allocation5 + $0xa8] sm:$0xff] %v5278
    %5407 = vst [vmem:[#allocation5 + $0xb0] sm:$0xff] %v5279
    %5408 = vst [vmem:[#allocation5 + $0xb8] sm:$0xff] %v5280
    %5409 = vst [vmem:[#allocation5 + $0xc0] sm:$0xff] %v5281
    %5410 = vst [vmem:[#allocation5 + $0xc8] sm:$0xff] %v5282
    %5411 = vst [vmem:[#allocation5 + $0xd0] sm:$0xff] %v5283
    %5412 = vst [vmem:[#allocation5 + $0xd8] sm:$0xff] %v5284
    %5413 = vst [vmem:[#allocation5 + $0xe0] sm:$0xff] %v5285
    %5414 = vst [vmem:[#allocation5 + $0xe8] sm:$0xff] %v5286
    %5415 = vst [vmem:[#allocation5 + $0xf0] sm:$0xff] %v5287
    %5416 = vst [vmem:[#allocation5 + $0xf8] sm:$0xff] %v5288
    %5417 = vst [vmem:[#allocation5 + $0x100] sm:$0xff] %v5289
    %5418 = vst [vmem:[#allocation5 + $0x108] sm:$0xff] %v5290
    %5419 = vst [vmem:[#allocation5 + $0x110] sm:$0xff] %v5291
    %5420 = vst [vmem:[#allocation5 + $0x118] sm:$0xff] %v5292
    %5421 = vst [vmem:[#allocation5 + $0x120] sm:$0xff] %v5293
    %5422 = vst [vmem:[#allocation5 + $0x128] sm:$0xff] %v5294
    %5423 = vst [vmem:[#allocation5 + $0x130] sm:$0xff] %v5295
    %5424 = vst [vmem:[#allocation5 + $0x138] sm:$0xff] %v5296
    %5425 = vst [vmem:[#allocation5 + $0x140] sm:$0xff] %v5297
    %5426 = vst [vmem:[#allocation5 + $0x148] sm:$0xff] %v5298
    %5427 = vst [vmem:[#allocation5 + $0x150] sm:$0xff] %v5299
    %5428 = vst [vmem:[#allocation5 + $0x158] sm:$0xff] %v5300
    %5429 = vst [vmem:[#allocation5 + $0x160] sm:$0xff] %v5301
    %5430 = vst [vmem:[#allocation5 + $0x168] sm:$0xff] %v5302
    %5431 = vst [vmem:[#allocation5 + $0x170] sm:$0xff] %v5303
    %5432 = vst [vmem:[#allocation5 + $0x178] sm:$0xff] %v5304
    %5433 = vst [vmem:[#allocation5 + $0x180] sm:$0xff] %v5305
    %5434 = vst [vmem:[#allocation5 + $0x188] sm:$0xff] %v5306
    %5435 = vst [vmem:[#allocation5 + $0x190] sm:$0xff] %v5307
    %5436 = vst [vmem:[#allocation5 + $0x198] sm:$0xff] %v5308
    %5437 = vst [vmem:[#allocation5 + $0x1a0] sm:$0xff] %v5309
    %5438 = vst [vmem:[#allocation5 + $0x1a8] sm:$0xff] %v5310
    %5439 = vst [vmem:[#allocation5 + $0x1b0] sm:$0xff] %v5311
    %5440 = vst [vmem:[#allocation5 + $0x1b8] sm:$0xff] %v5312
    %5441 = vst [vmem:[#allocation5 + $0x1c0] sm:$0xff] %v5313
    %5442 = vst [vmem:[#allocation5 + $0x1c8] sm:$0xff] %v5314
    %5443 = vst [vmem:[#allocation5 + $0x1d0] sm:$0xff] %v5315
    %5444 = vst [vmem:[#allocation5 + $0x1d8] sm:$0xff] %v5316
    %5445 = vst [vmem:[#allocation5 + $0x1e0] sm:$0xff] %v5317
    %5446 = vst [vmem:[#allocation5 + $0x1e8] sm:$0xff] %v5318
    %5447 = vst [vmem:[#allocation5 + $0x1f0] sm:$0xff] %v5319
    %5448 = vst [vmem:[#allocation5 + $0x1f8] sm:$0xff] %v5320
    %5449 = vst [vmem:[#allocation5 + $0x200] sm:$0xff] %v5321
    %5450 = vst [vmem:[#allocation5 + $0x208] sm:$0xff] %v5322
    %5451 = vst [vmem:[#allocation5 + $0x210] sm:$0xff] %v5323
    %5452 = vst [vmem:[#allocation5 + $0x218] sm:$0xff] %v5324
    %5453 = vst [vmem:[#allocation5 + $0x220] sm:$0xff] %v5325
    %5454 = vst [vmem:[#allocation5 + $0x228] sm:$0xff] %v5326
    %5455 = vst [vmem:[#allocation5 + $0x230] sm:$0xff] %v5327
    %5456 = vst [vmem:[#allocation5 + $0x238] sm:$0xff] %v5328
    %5457 = vst [vmem:[#allocation5 + $0x240] sm:$0xff] %v5329
    %5458 = vst [vmem:[#allocation5 + $0x248] sm:$0xff] %v5330
    %5459 = vst [vmem:[#allocation5 + $0x250] sm:$0xff] %v5331
    %5460 = vst [vmem:[#allocation5 + $0x258] sm:$0xff] %v5332
    %5461 = vst [vmem:[#allocation5 + $0x260] sm:$0xff] %v5333
    %5462 = vst [vmem:[#allocation5 + $0x268] sm:$0xff] %v5334
    %5463 = vst [vmem:[#allocation5 + $0x270] sm:$0xff] %v5335
    %5464 = vst [vmem:[#allocation5 + $0x278] sm:$0xff] %v5336
    %5465 = vst [vmem:[#allocation5 + $0x280] sm:$0xff] %v5337
    %5466 = vst [vmem:[#allocation5 + $0x288] sm:$0xff] %v5338
    %5467 = vst [vmem:[#allocation5 + $0x290] sm:$0xff] %v5339
    %5468 = vst [vmem:[#allocation5 + $0x298] sm:$0xff] %v5340
    %5469 = vst [vmem:[#allocation5 + $0x2a0] sm:$0xff] %v5341
    %5470 = vst [vmem:[#allocation5 + $0x2a8] sm:$0xff] %v5342
    %5471 = vst [vmem:[#allocation5 + $0x2b0] sm:$0xff] %v5343
    %5472 = vst [vmem:[#allocation5 + $0x2b8] sm:$0xff] %v5344
    %5473 = vst [vmem:[#allocation5 + $0x2c0] sm:$0xff] %v5345
    %5474 = vst [vmem:[#allocation5 + $0x2c8] sm:$0xff] %v5346
    %5475 = vst [vmem:[#allocation5 + $0x2d0] sm:$0xff] %v5347
    %5476 = vst [vmem:[#allocation5 + $0x2d8] sm:$0xff] %v5348
    %5477 = vst [vmem:[#allocation5 + $0x2e0] sm:$0xff] %v5349
    %5478 = vst [vmem:[#allocation5 + $0x2e8] sm:$0xff] %v5350
    %5479 = vst [vmem:[#allocation5 + $0x2f0] sm:$0xff] %v5351
    %5480 = vst [vmem:[#allocation5 + $0x2f8] sm:$0xff] %v5352
    %5481 = vst [vmem:[#allocation5 + $0x300] sm:$0xff] %v5353
    %5482 = vst [vmem:[#allocation5 + $0x308] sm:$0xff] %v5354
    %5483 = vst [vmem:[#allocation5 + $0x310] sm:$0xff] %v5355
    %5484 = vst [vmem:[#allocation5 + $0x318] sm:$0xff] %v5356
    %5485 = vst [vmem:[#allocation5 + $0x320] sm:$0xff] %v5357
    %5486 = vst [vmem:[#allocation5 + $0x328] sm:$0xff] %v5358
    %5487 = vst [vmem:[#allocation5 + $0x330] sm:$0xff] %v5359
    %5488 = vst [vmem:[#allocation5 + $0x338] sm:$0xff] %v5360
    %5489 = vst [vmem:[#allocation5 + $0x340] sm:$0xff] %v5361
    %5490 = vst [vmem:[#allocation5 + $0x348] sm:$0xff] %v5362
    %5491 = vst [vmem:[#allocation5 + $0x350] sm:$0xff] %v5363
    %5492 = vst [vmem:[#allocation5 + $0x358] sm:$0xff] %v5364
    %5493 = vst [vmem:[#allocation5 + $0x360] sm:$0xff] %v5365
    %5494 = vst [vmem:[#allocation5 + $0x368] sm:$0xff] %v5366
    %5495 = vst [vmem:[#allocation5 + $0x370] sm:$0xff] %v5367
    %5496 = vst [vmem:[#allocation5 + $0x378] sm:$0xff] %v5368
    %5497 = vst [vmem:[#allocation5 + $0x380] sm:$0xff] %v5369
    %5498 = vst [vmem:[#allocation5 + $0x388] sm:$0xff] %v5370
    %5499 = vst [vmem:[#allocation5 + $0x390] sm:$0xff] %v5371
    %5500 = vst [vmem:[#allocation5 + $0x398] sm:$0xff] %v5372
    %5501 = vst [vmem:[#allocation5 + $0x3a0] sm:$0xff] %v5373
    %5502 = vst [vmem:[#allocation5 + $0x3a8] sm:$0xff] %v5374
    %5503 = vst [vmem:[#allocation5 + $0x3b0] sm:$0xff] %v5375
    %5504 = vst [vmem:[#allocation5 + $0x3b8] sm:$0xff] %v5376
    %5505 = vst [vmem:[#allocation5 + $0x3c0] sm:$0xff] %v5377
    %5506 = vst [vmem:[#allocation5 + $0x3c8] sm:$0xff] %v5378
    %5507 = vst [vmem:[#allocation5 + $0x3d0] sm:$0xff] %v5379
    %5508 = vst [vmem:[#allocation5 + $0x3d8] sm:$0xff] %v5380
    %5509 = vst [vmem:[#allocation5 + $0x3e0] sm:$0xff] %v5381
    %5510 = vst [vmem:[#allocation5 + $0x3e8] sm:$0xff] %v5382
    %5511 = vst [vmem:[#allocation5 + $0x3f0] sm:$0xff] %v5383
    %5512 = vst [vmem:[#allocation5 + $0x3f8] sm:$0xff] %v5384
    %v5513 = vlaneseq
    %v5514 = vshrl.u32 %v5513, 7
    %v5515 = vadd.s32 %v5514, 8
    %v5516 = vadd.s32 %v5514, 16
    %v5517 = vadd.s32 %v5514, 24
    %v5518 = vlaneseq
    %v5519 = vshrl.u32 %v5518, 7
    %v5520 = vsub.s32 0, %v5519
    %v5521 = vrot.slane %v696, %v5520
    %v5522 = vlaneseq
    %v5523 = vshrl.u32 %v5522, 7
    %v5524 = vsub.s32 1, %v5523
    %v5525 = vrot.slane %v696, %v5524
    %v5526 = vlaneseq
    %v5527 = vshrl.u32 %v5526, 7
    %v5528 = vsub.s32 2, %v5527
    %v5529 = vrot.slane %v696, %v5528
    %v5530 = vlaneseq
    %v5531 = vshrl.u32 %v5530, 7
    %v5532 = vsub.s32 3, %v5531
    %v5533 = vrot.slane %v696, %v5532
    %v5534 = vlaneseq
    %v5535 = vshrl.u32 %v5534, 7
    %v5536 = vsub.s32 4, %v5535
    %v5537 = vrot.slane %v696, %v5536
    %v5538 = vlaneseq
    %v5539 = vshrl.u32 %v5538, 7
    %v5540 = vsub.s32 5, %v5539
    %v5541 = vrot.slane %v696, %v5540
    %v5542 = vlaneseq
    %v5543 = vshrl.u32 %v5542, 7
    %v5544 = vsub.s32 6, %v5543
    %v5545 = vrot.slane %v696, %v5544
    %v5546 = vlaneseq
    %v5547 = vshrl.u32 %v5546, 7
    %v5548 = vsub.s32 7, %v5547
    %v5549 = vrot.slane %v696, %v5548
    %vm5550 = vcmp.eq.s32.totalorder %v5514, %v5521
    %vm5551 = vcmp.eq.s32.totalorder %v5514, %v5525
    %vm5552 = vcmp.eq.s32.totalorder %v5514, %v5529
    %vm5553 = vcmp.eq.s32.totalorder %v5514, %v5533
    %vm5554 = vcmp.eq.s32.totalorder %v5514, %v5537
    %vm5555 = vcmp.eq.s32.totalorder %v5514, %v5541
    %vm5556 = vcmp.eq.s32.totalorder %v5514, %v5545
    %vm5557 = vcmp.eq.s32.totalorder %v5514, %v5549
    %vm5558 = vcmp.eq.s32.totalorder %v5515, %v5521
    %vm5559 = vcmp.eq.s32.totalorder %v5515, %v5525
    %vm5560 = vcmp.eq.s32.totalorder %v5515, %v5529
    %vm5561 = vcmp.eq.s32.totalorder %v5515, %v5533
    %vm5562 = vcmp.eq.s32.totalorder %v5515, %v5537
    %vm5563 = vcmp.eq.s32.totalorder %v5515, %v5541
    %vm5564 = vcmp.eq.s32.totalorder %v5515, %v5545
    %vm5565 = vcmp.eq.s32.totalorder %v5515, %v5549
    %vm5566 = vcmp.eq.s32.totalorder %v5516, %v5521
    %vm5567 = vcmp.eq.s32.totalorder %v5516, %v5525
    %vm5568 = vcmp.eq.s32.totalorder %v5516, %v5529
    %vm5569 = vcmp.eq.s32.totalorder %v5516, %v5533
    %vm5570 = vcmp.eq.s32.totalorder %v5516, %v5537
    %vm5571 = vcmp.eq.s32.totalorder %v5516, %v5541
    %vm5572 = vcmp.eq.s32.totalorder %v5516, %v5545
    %vm5573 = vcmp.eq.s32.totalorder %v5516, %v5549
    %vm5574 = vcmp.eq.s32.totalorder %v5517, %v5521
    %vm5575 = vcmp.eq.s32.totalorder %v5517, %v5525
    %vm5576 = vcmp.eq.s32.totalorder %v5517, %v5529
    %vm5577 = vcmp.eq.s32.totalorder %v5517, %v5533
    %vm5578 = vcmp.eq.s32.totalorder %v5517, %v5537
    %vm5579 = vcmp.eq.s32.totalorder %v5517, %v5541
    %vm5580 = vcmp.eq.s32.totalorder %v5517, %v5545
    %vm5581 = vcmp.eq.s32.totalorder %v5517, %v5549
    %v5582 = vsel %vm5550, 1, 0
    %v5583 = vsel %vm5551, 1, 0
    %v5584 = vsel %vm5552, 1, 0
    %v5585 = vsel %vm5553, 1, 0
    %v5586 = vsel %vm5554, 1, 0
    %v5587 = vsel %vm5555, 1, 0
    %v5588 = vsel %vm5556, 1, 0
    %v5589 = vsel %vm5557, 1, 0
    %v5590 = vsel %vm5558, 1, 0
    %v5591 = vsel %vm5559, 1, 0
    %v5592 = vsel %vm5560, 1, 0
    %v5593 = vsel %vm5561, 1, 0
    %v5594 = vsel %vm5562, 1, 0
    %v5595 = vsel %vm5563, 1, 0
    %v5596 = vsel %vm5564, 1, 0
    %v5597 = vsel %vm5565, 1, 0
    %v5598 = vsel %vm5566, 1, 0
    %v5599 = vsel %vm5567, 1, 0
    %v5600 = vsel %vm5568, 1, 0
    %v5601 = vsel %vm5569, 1, 0
    %v5602 = vsel %vm5570, 1, 0
    %v5603 = vsel %vm5571, 1, 0
    %v5604 = vsel %vm5572, 1, 0
    %v5605 = vsel %vm5573, 1, 0
    %v5606 = vsel %vm5574, 1, 0
    %v5607 = vsel %vm5575, 1, 0
    %v5608 = vsel %vm5576, 1, 0
    %v5609 = vsel %vm5577, 1, 0
    %v5610 = vsel %vm5578, 1, 0
    %v5611 = vsel %vm5579, 1, 0
    %v5612 = vsel %vm5580, 1, 0
    %v5613 = vsel %vm5581, 1, 0
    %v5614 = vcvt.s32.f32 %v5582
    %v5615 = vcvt.s32.f32 %v5583
    %v5616 = vcvt.s32.f32 %v5584
    %v5617 = vcvt.s32.f32 %v5585
    %v5618 = vcvt.s32.f32 %v5586
    %v5619 = vcvt.s32.f32 %v5587
    %v5620 = vcvt.s32.f32 %v5588
    %v5621 = vcvt.s32.f32 %v5589
    %v5622 = vcvt.s32.f32 %v5590
    %v5623 = vcvt.s32.f32 %v5591
    %v5624 = vcvt.s32.f32 %v5592
    %v5625 = vcvt.s32.f32 %v5593
    %v5626 = vcvt.s32.f32 %v5594
    %v5627 = vcvt.s32.f32 %v5595
    %v5628 = vcvt.s32.f32 %v5596
    %v5629 = vcvt.s32.f32 %v5597
    %v5630 = vcvt.s32.f32 %v5598
    %v5631 = vcvt.s32.f32 %v5599
    %v5632 = vcvt.s32.f32 %v5600
    %v5633 = vcvt.s32.f32 %v5601
    %v5634 = vcvt.s32.f32 %v5602
    %v5635 = vcvt.s32.f32 %v5603
    %v5636 = vcvt.s32.f32 %v5604
    %v5637 = vcvt.s32.f32 %v5605
    %v5638 = vcvt.s32.f32 %v5606
    %v5639 = vcvt.s32.f32 %v5607
    %v5640 = vcvt.s32.f32 %v5608
    %v5641 = vcvt.s32.f32 %v5609
    %v5642 = vcvt.s32.f32 %v5610
    %v5643 = vcvt.s32.f32 %v5611
    %v5644 = vcvt.s32.f32 %v5612
    %v5645 = vcvt.s32.f32 %v5613
    %v5646 = vpack.c.bf16 %v5622, %v5614
    %v5647 = vpack.c.bf16 %v5623, %v5615
    %v5648 = vpack.c.bf16 %v5624, %v5616
    %v5649 = vpack.c.bf16 %v5625, %v5617
    %v5650 = vpack.c.bf16 %v5626, %v5618
    %v5651 = vpack.c.bf16 %v5627, %v5619
    %v5652 = vpack.c.bf16 %v5628, %v5620
    %v5653 = vpack.c.bf16 %v5629, %v5621
    %v5654 = vpack.c.bf16 %v5638, %v5630
    %v5655 = vpack.c.bf16 %v5639, %v5631
    %v5656 = vpack.c.bf16 %v5640, %v5632
    %v5657 = vpack.c.bf16 %v5641, %v5633
    %v5658 = vpack.c.bf16 %v5642, %v5634
    %v5659 = vpack.c.bf16 %v5643, %v5635
    %v5660 = vpack.c.bf16 %v5644, %v5636
    %v5661 = vpack.c.bf16 %v5645, %v5637
    %v5662 = vld [vmem:[#allocation3] sm:$0xff]
    %v5663 = vld [vmem:[#allocation3 + $0x8] sm:$0xff]
    %v5664 = vld [vmem:[#allocation3 + $0x10] sm:$0xff]
    %v5665 = vld [vmem:[#allocation3 + $0x18] sm:$0xff]
    %v5666 = vpack.c.bf16 %v5258, %v5257
    %v5667 = vpack.c.bf16 %v5260, %v5259
    %v5668 = vpack.c.bf16 %v5262, %v5261
    %v5669 = vpack.c.bf16 %v5264, %v5263
    %v5670 = vpack.c.bf16 %v5266, %v5265
    %v5671 = vpack.c.bf16 %v5268, %v5267
    %v5672 = vpack.c.bf16 %v5270, %v5269
    %v5673 = vpack.c.bf16 %v5272, %v5271
    %v5674 = vpack.c.bf16 %v5274, %v5273
    %v5675 = vpack.c.bf16 %v5276, %v5275
    %v5676 = vpack.c.bf16 %v5278, %v5277
    %v5677 = vpack.c.bf16 %v5280, %v5279
    %v5678 = vpack.c.bf16 %v5282, %v5281
    %v5679 = vpack.c.bf16 %v5284, %v5283
    %v5680 = vpack.c.bf16 %v5286, %v5285
    %v5681 = vpack.c.bf16 %v5288, %v5287
    %v5682 = vpack.c.bf16 %v5290, %v5289
    %v5683 = vpack.c.bf16 %v5292, %v5291
    %v5684 = vpack.c.bf16 %v5294, %v5293
    %v5685 = vpack.c.bf16 %v5296, %v5295
    %v5686 = vpack.c.bf16 %v5298, %v5297
    %v5687 = vpack.c.bf16 %v5300, %v5299
    %v5688 = vpack.c.bf16 %v5302, %v5301
    %v5689 = vpack.c.bf16 %v5304, %v5303
    %v5690 = vpack.c.bf16 %v5306, %v5305
    %v5691 = vpack.c.bf16 %v5308, %v5307
    %v5692 = vpack.c.bf16 %v5310, %v5309
    %v5693 = vpack.c.bf16 %v5312, %v5311
    %v5694 = vpack.c.bf16 %v5314, %v5313
    %v5695 = vpack.c.bf16 %v5316, %v5315
    %v5696 = vpack.c.bf16 %v5318, %v5317
    %v5697 = vpack.c.bf16 %v5320, %v5319
    %v5698 = vpack.c.bf16 %v5322, %v5321
    %v5699 = vpack.c.bf16 %v5324, %v5323
    %v5700 = vpack.c.bf16 %v5326, %v5325
    %v5701 = vpack.c.bf16 %v5328, %v5327
    %v5702 = vpack.c.bf16 %v5330, %v5329
    %v5703 = vpack.c.bf16 %v5332, %v5331
    %v5704 = vpack.c.bf16 %v5334, %v5333
    %v5705 = vpack.c.bf16 %v5336, %v5335
    %v5706 = vpack.c.bf16 %v5338, %v5337
    %v5707 = vpack.c.bf16 %v5340, %v5339
    %v5708 = vpack.c.bf16 %v5342, %v5341
    %v5709 = vpack.c.bf16 %v5344, %v5343
    %v5710 = vpack.c.bf16 %v5346, %v5345
    %v5711 = vpack.c.bf16 %v5348, %v5347
    %v5712 = vpack.c.bf16 %v5350, %v5349
    %v5713 = vpack.c.bf16 %v5352, %v5351
    %v5714 = vpack.c.bf16 %v5354, %v5353
    %v5715 = vpack.c.bf16 %v5356, %v5355
    %v5716 = vpack.c.bf16 %v5358, %v5357
    %v5717 = vpack.c.bf16 %v5360, %v5359
    %v5718 = vpack.c.bf16 %v5362, %v5361
    %v5719 = vpack.c.bf16 %v5364, %v5363
    %v5720 = vpack.c.bf16 %v5366, %v5365
    %v5721 = vpack.c.bf16 %v5368, %v5367
    %v5722 = vpack.c.bf16 %v5370, %v5369
    %v5723 = vpack.c.bf16 %v5372, %v5371
    %v5724 = vpack.c.bf16 %v5374, %v5373
    %v5725 = vpack.c.bf16 %v5376, %v5375
    %v5726 = vpack.c.bf16 %v5378, %v5377
    %v5727 = vpack.c.bf16 %v5380, %v5379
    %v5728 = vpack.c.bf16 %v5382, %v5381
    %v5729 = vpack.c.bf16 %v5384, %v5383
    %5730 = vmatprep.subr.bf16.mxu0 0
    %5731 = vmatpush1.bf16.msra.mxu0 %v5666
    %5732 = vmatprep.subr.bf16.mxu0 0
    %5733 = vmatpush1.bf16.msra.mxu0 %v5667
    %5734 = vmatprep.subr.bf16.mxu0 0
    %5735 = vmatpush1.bf16.msra.mxu0 %v5668
    %5736 = vmatprep.subr.bf16.mxu0 0
    %5737 = vmatpush1.bf16.msra.mxu0 %v5669
    %5738 = vmatprep.subr.bf16.mxu0 0
    %5739 = vmatpush1.bf16.msra.mxu0 %v5670
    %5740 = vmatprep.subr.bf16.mxu0 0
    %5741 = vmatpush1.bf16.msra.mxu0 %v5671
    %5742 = vmatprep.subr.bf16.mxu0 0
    %5743 = vmatpush1.bf16.msra.mxu0 %v5672
    %5744 = vmatprep.subr.bf16.mxu0 0
    %5745 = vmatpush1.bf16.msra.mxu0 %v5673
    %5746 = vmatprep.subr.bf16.mxu0 0
    %5747 = vmatpush1.bf16.msra.mxu0 %v5674
    %5748 = vmatprep.subr.bf16.mxu0 0
    %5749 = vmatpush1.bf16.msra.mxu0 %v5675
    %5750 = vmatprep.subr.bf16.mxu0 0
    %5751 = vmatpush1.bf16.msra.mxu0 %v5676
    %5752 = vmatprep.subr.bf16.mxu0 0
    %5753 = vmatpush1.bf16.msra.mxu0 %v5677
    %5754 = vmatprep.subr.bf16.mxu0 0
    %5755 = vmatpush1.bf16.msra.mxu0 %v5678
    %5756 = vmatprep.subr.bf16.mxu0 0
    %5757 = vmatpush1.bf16.msra.mxu0 %v5679
    %5758 = vmatprep.subr.bf16.mxu0 0
    %5759 = vmatpush1.bf16.msra.mxu0 %v5680
    %5760 = vmatprep.subr.bf16.mxu0 0
    %5761 = vmatpush1.bf16.msra.mxu0 %v5681
    %5762 = vmatprep.mubr.bf16.mxu0 %v5647
    %5763 = vmatmul.mubr.bf16.gmra.mrb[0].mxu0 %v5646
    %v5764 = vpop.f32.mrb[0].mxu0
    %v5765 = vadd.f32 0.0, %v5764
    %v5766 = vpop.f32.mrb[0].mxu0
    %v5767 = vpop.f32.mrb[0].mxu0
    %v5768 = vadd.f32 0.0, %v5767
    %v5769 = vpop.f32.mrb[0].mxu0
    %5770 = vmatprep.mubr.bf16.mxu0 %v5655
    %5771 = vmatmul.mubr.bf16.gmra.mrb[0].mxu0 %v5654
    %v5772 = vpop.f32.mrb[0].mxu0
    %v5773 = vadd.f32 0.0, %v5772
    %v5774 = vpop.f32.mrb[0].mxu0
    %v5775 = vpop.f32.mrb[0].mxu0
    %v5776 = vadd.f32 0.0, %v5775
    %v5777 = vpop.f32.mrb[0].mxu0
    %5778 = vdwg.mxu0
    %5779 = vmatprep.subr.bf16.mxu0 0
    %5780 = vmatpush1.bf16.msra.mxu0 %v5682
    %5781 = vmatprep.subr.bf16.mxu0 0
    %5782 = vmatpush1.bf16.msra.mxu0 %v5683
    %5783 = vmatprep.subr.bf16.mxu0 0
    %5784 = vmatpush1.bf16.msra.mxu0 %v5684
    %5785 = vmatprep.subr.bf16.mxu0 0
    %5786 = vmatpush1.bf16.msra.mxu0 %v5685
    %5787 = vmatprep.subr.bf16.mxu0 0
    %5788 = vmatpush1.bf16.msra.mxu0 %v5686
    %5789 = vmatprep.subr.bf16.mxu0 0
    %5790 = vmatpush1.bf16.msra.mxu0 %v5687
    %5791 = vmatprep.subr.bf16.mxu0 0
    %5792 = vmatpush1.bf16.msra.mxu0 %v5688
    %5793 = vmatprep.subr.bf16.mxu0 0
    %5794 = vmatpush1.bf16.msra.mxu0 %v5689
    %5795 = vmatprep.subr.bf16.mxu0 0
    %5796 = vmatpush1.bf16.msra.mxu0 %v5690
    %5797 = vmatprep.subr.bf16.mxu0 0
    %5798 = vmatpush1.bf16.msra.mxu0 %v5691
    %5799 = vmatprep.subr.bf16.mxu0 0
    %5800 = vmatpush1.bf16.msra.mxu0 %v5692
    %5801 = vmatprep.subr.bf16.mxu0 0
    %5802 = vmatpush1.bf16.msra.mxu0 %v5693
    %5803 = vmatprep.subr.bf16.mxu0 0
    %5804 = vmatpush1.bf16.msra.mxu0 %v5694
    %5805 = vmatprep.subr.bf16.mxu0 0
    %5806 = vmatpush1.bf16.msra.mxu0 %v5695
    %5807 = vmatprep.subr.bf16.mxu0 0
    %5808 = vmatpush1.bf16.msra.mxu0 %v5696
    %5809 = vmatprep.subr.bf16.mxu0 0
    %5810 = vmatpush1.bf16.msra.mxu0 %v5697
    %5811 = vmatprep.mubr.bf16.mxu0 %v5649
    %5812 = vmatmul.mubr.bf16.gmra.mrb[0].mxu0 %v5648
    %v5813 = vpop.f32.mrb[0].mxu0
    %v5814 = vadd.f32 %v5765, %v5813
    %v5815 = vpop.f32.mrb[0].mxu0
    %v5816 = vpop.f32.mrb[0].mxu0
    %v5817 = vadd.f32 %v5768, %v5816
    %v5818 = vpop.f32.mrb[0].mxu0
    %5819 = vmatprep.mubr.bf16.mxu0 %v5657
    %5820 = vmatmul.mubr.bf16.gmra.mrb[0].mxu0 %v5656
    %v5821 = vpop.f32.mrb[0].mxu0
    %v5822 = vadd.f32 %v5773, %v5821
    %v5823 = vpop.f32.mrb[0].mxu0
    %v5824 = vpop.f32.mrb[0].mxu0
    %v5825 = vadd.f32 %v5776, %v5824
    %v5826 = vpop.f32.mrb[0].mxu0
    %5827 = vdwg.mxu0
    %5828 = vmatprep.subr.bf16.mxu0 0
    %5829 = vmatpush1.bf16.msra.mxu0 %v5698
    %5830 = vmatprep.subr.bf16.mxu0 0
    %5831 = vmatpush1.bf16.msra.mxu0 %v5699
    %5832 = vmatprep.subr.bf16.mxu0 0
    %5833 = vmatpush1.bf16.msra.mxu0 %v5700
    %5834 = vmatprep.subr.bf16.mxu0 0
    %5835 = vmatpush1.bf16.msra.mxu0 %v5701
    %5836 = vmatprep.subr.bf16.mxu0 0
    %5837 = vmatpush1.bf16.msra.mxu0 %v5702
    %5838 = vmatprep.subr.bf16.mxu0 0
    %5839 = vmatpush1.bf16.msra.mxu0 %v5703
    %5840 = vmatprep.subr.bf16.mxu0 0
    %5841 = vmatpush1.bf16.msra.mxu0 %v5704
    %5842 = vmatprep.subr.bf16.mxu0 0
    %5843 = vmatpush1.bf16.msra.mxu0 %v5705
    %5844 = vmatprep.subr.bf16.mxu0 0
    %5845 = vmatpush1.bf16.msra.mxu0 %v5706
    %5846 = vmatprep.subr.bf16.mxu0 0
    %5847 = vmatpush1.bf16.msra.mxu0 %v5707
    %5848 = vmatprep.subr.bf16.mxu0 0
    %5849 = vmatpush1.bf16.msra.mxu0 %v5708
    %5850 = vmatprep.subr.bf16.mxu0 0
    %5851 = vmatpush1.bf16.msra.mxu0 %v5709
    %5852 = vmatprep.subr.bf16.mxu0 0
    %5853 = vmatpush1.bf16.msra.mxu0 %v5710
    %5854 = vmatprep.subr.bf16.mxu0 0
    %5855 = vmatpush1.bf16.msra.mxu0 %v5711
    %5856 = vmatprep.subr.bf16.mxu0 0
    %5857 = vmatpush1.bf16.msra.mxu0 %v5712
    %5858 = vmatprep.subr.bf16.mxu0 0
    %5859 = vmatpush1.bf16.msra.mxu0 %v5713
    %5860 = vmatprep.mubr.bf16.mxu0 %v5651
    %5861 = vmatmul.mubr.bf16.gmra.mrb[0].mxu0 %v5650
    %v5862 = vpop.f32.mrb[0].mxu0
    %v5863 = vadd.f32 %v5814, %v5862
    %v5864 = vpop.f32.mrb[0].mxu0
    %v5865 = vpop.f32.mrb[0].mxu0
    %v5866 = vadd.f32 %v5817, %v5865
    %v5867 = vpop.f32.mrb[0].mxu0
    %5868 = vmatprep.mubr.bf16.mxu0 %v5659
    %5869 = vmatmul.mubr.bf16.gmra.mrb[0].mxu0 %v5658
    %v5870 = vpop.f32.mrb[0].mxu0
    %v5871 = vadd.f32 %v5822, %v5870
    %v5872 = vpop.f32.mrb[0].mxu0
    %v5873 = vpop.f32.mrb[0].mxu0
    %v5874 = vadd.f32 %v5825, %v5873
    %v5875 = vpop.f32.mrb[0].mxu0
    %5876 = vdwg.mxu0
    %5877 = vmatprep.subr.bf16.mxu0 0
    %5878 = vmatpush1.bf16.msra.mxu0 %v5714
    %5879 = vmatprep.subr.bf16.mxu0 0
    %5880 = vmatpush1.bf16.msra.mxu0 %v5715
    %5881 = vmatprep.subr.bf16.mxu0 0
    %5882 = vmatpush1.bf16.msra.mxu0 %v5716
    %5883 = vmatprep.subr.bf16.mxu0 0
    %5884 = vmatpush1.bf16.msra.mxu0 %v5717
    %5885 = vmatprep.subr.bf16.mxu0 0
    %5886 = vmatpush1.bf16.msra.mxu0 %v5718
    %5887 = vmatprep.subr.bf16.mxu0 0
    %5888 = vmatpush1.bf16.msra.mxu0 %v5719
    %5889 = vmatprep.subr.bf16.mxu0 0
    %5890 = vmatpush1.bf16.msra.mxu0 %v5720
    %5891 = vmatprep.subr.bf16.mxu0 0
    %5892 = vmatpush1.bf16.msra.mxu0 %v5721
    %5893 = vmatprep.subr.bf16.mxu0 0
    %5894 = vmatpush1.bf16.msra.mxu0 %v5722
    %5895 = vmatprep.subr.bf16.mxu0 0
    %5896 = vmatpush1.bf16.msra.mxu0 %v5723
    %5897 = vmatprep.subr.bf16.mxu0 0
    %5898 = vmatpush1.bf16.msra.mxu0 %v5724
    %5899 = vmatprep.subr.bf16.mxu0 0
    %5900 = vmatpush1.bf16.msra.mxu0 %v5725
    %5901 = vmatprep.subr.bf16.mxu0 0
    %5902 = vmatpush1.bf16.msra.mxu0 %v5726
    %5903 = vmatprep.subr.bf16.mxu0 0
    %5904 = vmatpush1.bf16.msra.mxu0 %v5727
    %5905 = vmatprep.subr.bf16.mxu0 0
    %5906 = vmatpush1.bf16.msra.mxu0 %v5728
    %5907 = vmatprep.subr.bf16.mxu0 0
    %5908 = vmatpush1.bf16.msra.mxu0 %v5729
    %5909 = vmatprep.mubr.bf16.mxu0 %v5653
    %5910 = vmatmul.mubr.bf16.gmra.mrb[0].mxu0 %v5652
    %v5911 = vpop.f32.mrb[0].mxu0
    %v5912 = vadd.f32 %v5863, %v5911
    %v5913 = vpop.f32.mrb[0].mxu0
    %v5914 = vpop.f32.mrb[0].mxu0
    %v5915 = vadd.f32 %v5866, %v5914
    %v5916 = vpop.f32.mrb[0].mxu0
    %5917 = vmatprep.mubr.bf16.mxu0 %v5661
    %5918 = vmatmul.mubr.bf16.gmra.mrb[0].mxu0 %v5660
    %v5919 = vpop.f32.mrb[0].mxu0
    %v5920 = vadd.f32 %v5871, %v5919
    %v5921 = vpop.f32.mrb[0].mxu0
    %v5922 = vpop.f32.mrb[0].mxu0
    %v5923 = vadd.f32 %v5874, %v5922
    %v5924 = vpop.f32.mrb[0].mxu0
    %5925 = vdwg.mxu0
    %v5926 = vadd.f32 %v5662, %v5912
    %v5927 = vadd.f32 %v5663, %v5915
    %v5928 = vadd.f32 %v5664, %v5920
    %v5929 = vadd.f32 %v5665, %v5923
    %5930 = vst [vmem:[#allocation3] sm:$0xff] %v5926
    %5931 = vst [vmem:[#allocation3 + $0x8] sm:$0xff] %v5927
    %5932 = vst [vmem:[#allocation3 + $0x10] sm:$0xff] %v5928
    %5933 = vst [vmem:[#allocation3 + $0x18] sm:$0xff] %v5929
    // Predicated region
    $region62: #{tpu_custom_call.1} parent=1 // pred_check
      %p5934 = pneg %p52
    $region63: #{tpu_custom_call.1} parent=1 // pred_check_branch
      %5936 = sbr.rel (%p5934) target = $region65
    $region64: #{tpu_custom_call.1} parent=1 // pred_region
      %v5937 = vld [vmem:[#allocation3] sm:$0xff]
      %v5938 = vld [vmem:[#allocation3 + $0x8] sm:$0xff]
      %v5939 = vld [vmem:[#allocation3 + $0x10] sm:$0xff]
      %v5940 = vld [vmem:[#allocation3 + $0x18] sm:$0xff]
      %v5941 = vmul.f32 %v5937, 0.01
      %v5942 = vmul.f32 %v5938, 0.01
      %v5943 = vmul.f32 %v5939, 0.01
      %v5944 = vmul.f32 %v5940, 0.01
      %v5945 = vld [vmem:[%s3] sm:$0xff]
      %v5946 = vld [vmem:[%s3 + $0x8] sm:$0xff]
      %v5947 = vld [vmem:[%s3 + $0x10] sm:$0xff]
      %v5948 = vld [vmem:[%s3 + $0x18] sm:$0xff]
      %v5949 = vpack.c.bf16 %v5946, %v5945
      %v5950 = vpack.c.bf16 %v5948, %v5947
      %v5951 = vld [vmem:[%s9] sm:$0xf]
      %v5952 = vld [vmem:[%s9 + $0x4] sm:$0xf]
      %v5953 = vld [vmem:[%s9 + $0x8] sm:$0xf]
      %v5954 = vld [vmem:[%s9 + $0xc] sm:$0xf]
      %v5955 = vld [vmem:[%s9 + $0x10] sm:$0xf]
      %v5956 = vld [vmem:[%s9 + $0x14] sm:$0xf]
      %v5957 = vld [vmem:[%s9 + $0x18] sm:$0xf]
      %v5958 = vld [vmem:[%s9 + $0x1c] sm:$0xf]
      %v5959 = vld [vmem:[%s9 + $0x20] sm:$0xf]
      %v5960 = vld [vmem:[%s9 + $0x24] sm:$0xf]
      %v5961 = vld [vmem:[%s9 + $0x28] sm:$0xf]
      %v5962 = vld [vmem:[%s9 + $0x2c] sm:$0xf]
      %v5963 = vld [vmem:[%s9 + $0x30] sm:$0xf]
      %v5964 = vld [vmem:[%s9 + $0x34] sm:$0xf]
      %v5965 = vld [vmem:[%s9 + $0x38] sm:$0xf]
      %v5966 = vld [vmem:[%s9 + $0x3c] sm:$0xf]
      %v5967 = vpack.c.bf16 %v5942, %v5941
      %v5968 = vpack.c.bf16 %v5944, %v5943
      %v5969 = vld [vmem:[%s10] sm:$0xf]
      %v5970 = vld [vmem:[%s10 + $0x4] sm:$0xf]
      %v5971 = vld [vmem:[%s10 + $0x8] sm:$0xf]
      %v5972 = vld [vmem:[%s10 + $0xc] sm:$0xf]
      %v5973 = vld [vmem:[%s10 + $0x10] sm:$0xf]
      %v5974 = vld [vmem:[%s10 + $0x14] sm:$0xf]
      %v5975 = vld [vmem:[%s10 + $0x18] sm:$0xf]
      %v5976 = vld [vmem:[%s10 + $0x1c] sm:$0xf]
      %v5977 = vld [vmem:[%s10 + $0x20] sm:$0xf]
      %v5978 = vld [vmem:[%s10 + $0x24] sm:$0xf]
      %v5979 = vld [vmem:[%s10 + $0x28] sm:$0xf]
      %v5980 = vld [vmem:[%s10 + $0x2c] sm:$0xf]
      %v5981 = vld [vmem:[%s10 + $0x30] sm:$0xf]
      %v5982 = vld [vmem:[%s10 + $0x34] sm:$0xf]
      %v5983 = vld [vmem:[%s10 + $0x38] sm:$0xf]
      %v5984 = vld [vmem:[%s10 + $0x3c] sm:$0xf]
      %v6001 = vunpack.c.l.b16 %v5969
      %v6002 = vunpack.c.l.b16 %v5970
      %v6003 = vunpack.c.l.b16 %v5971
      %v6004 = vunpack.c.l.b16 %v5972
      %v6005 = vunpack.c.l.b16 %v5973
      %v6006 = vunpack.c.l.b16 %v5974
      %v6007 = vunpack.c.l.b16 %v5975
      %v6008 = vunpack.c.l.b16 %v5976
      %v6009 = vunpack.c.l.b16 %v5977
      %v6010 = vunpack.c.l.b16 %v5978
      %v6011 = vunpack.c.l.b16 %v5979
      %v6012 = vunpack.c.l.b16 %v5980
      %v6013 = vunpack.c.l.b16 %v5981
      %v6014 = vunpack.c.l.b16 %v5982
      %v6015 = vunpack.c.l.b16 %v5983
      %v6016 = vunpack.c.l.b16 %v5984
      %v6017 = vpack.c.b16 %v6002, %v6001
      %v6018 = vpack.c.b16 %v6004, %v6003
      %v6019 = vpack.c.b16 %v6006, %v6005
      %v6020 = vpack.c.b16 %v6008, %v6007
      %v6021 = vpack.c.b16 %v6010, %v6009
      %v6022 = vpack.c.b16 %v6012, %v6011
      %v6023 = vpack.c.b16 %v6014, %v6013
      %v6024 = vpack.c.b16 %v6016, %v6015
      %6033 = vmatprep.subr.bf16.mxu0 0
      %6034 = vmatpush1.bf16.msra.mxu0 %v6017
      %6035 = vmatprep.subr.bf16.mxu0 0
      %6036 = vmatpush1.bf16.msra.mxu0 %v6018
      %6037 = vmatprep.subr.bf16.mxu0 0
      %6038 = vmatpush1.bf16.msra.mxu0 %v6019
      %6039 = vmatprep.subr.bf16.mxu0 0
      %6040 = vmatpush1.bf16.msra.mxu0 %v6020
      %6041 = vmatprep.subr.bf16.mxu0 0
      %6042 = vmatpush1.bf16.msra.mxu0 %v6021
      %6043 = vmatprep.subr.bf16.mxu0 0
      %6044 = vmatpush1.bf16.msra.mxu0 %v6022
      %6045 = vmatprep.subr.bf16.mxu0 0
      %6046 = vmatpush1.bf16.msra.mxu0 %v6023
      %6047 = vmatprep.subr.bf16.mxu0 0
      %6048 = vmatpush1.bf16.msra.mxu0 %v6024
      %6049 = vmatprep.subr.bf16.mxu0 0
      %6050 = vmatpush1.bf16.msra.mxu0 0
      %6051 = vmatprep.subr.bf16.mxu0 0
      %6052 = vmatpush1.bf16.msra.mxu0 0
      %6053 = vmatprep.subr.bf16.mxu0 0
      %6054 = vmatpush1.bf16.msra.mxu0 0
      %6055 = vmatprep.subr.bf16.mxu0 0
      %6056 = vmatpush1.bf16.msra.mxu0 0
      %6057 = vmatprep.subr.bf16.mxu0 0
      %6058 = vmatpush1.bf16.msra.mxu0 0
      %6059 = vmatprep.subr.bf16.mxu0 0
      %6060 = vmatpush1.bf16.msra.mxu0 0
      %6061 = vmatprep.subr.bf16.mxu0 0
      %6062 = vmatpush1.bf16.msra.mxu0 0
      %6063 = vmatprep.subr.bf16.mxu0 0
      %6064 = vmatpush1.bf16.msra.mxu0 0
      %6065 = vmatprep.mubr.bf16.mxu0 0
      %6066 = vmatmul.mubr.bf16.gmra.mrb[0].mxu0 %v5967
      %v6067 = vpop.f32.mrb[0].mxu0
      %v6068 = vadd.f32 0.0, %v6067
      %v6069 = vpop.f32.mrb[0].mxu0
      %v6070 = vpop.f32.mrb[0].mxu0
      %v6071 = vadd.f32 0.0, %v6070
      %v6072 = vpop.f32.mrb[0].mxu0
      %6073 = vmatprep.mubr.bf16.mxu0 0
      %6074 = vmatmul.mubr.bf16.gmra.mrb[0].mxu0 %v5968
      %v6075 = vpop.f32.mrb[0].mxu0
      %v6076 = vadd.f32 0.0, %v6075
      %v6077 = vpop.f32.mrb[0].mxu0
      %v6078 = vpop.f32.mrb[0].mxu0
      %v6079 = vadd.f32 0.0, %v6078
      %v6080 = vpop.f32.mrb[0].mxu0
      %6081 = vdwg.mxu0
      %v6098 = vunpack.c.l.b16 %v5951
      %v6099 = vunpack.c.l.b16 %v5952
      %v6100 = vunpack.c.l.b16 %v5953
      %v6101 = vunpack.c.l.b16 %v5954
      %v6102 = vunpack.c.l.b16 %v5955
      %v6103 = vunpack.c.l.b16 %v5956
      %v6104 = vunpack.c.l.b16 %v5957
      %v6105 = vunpack.c.l.b16 %v5958
      %v6106 = vunpack.c.l.b16 %v5959
      %v6107 = vunpack.c.l.b16 %v5960
      %v6108 = vunpack.c.l.b16 %v5961
      %v6109 = vunpack.c.l.b16 %v5962
      %v6110 = vunpack.c.l.b16 %v5963
      %v6111 = vunpack.c.l.b16 %v5964
      %v6112 = vunpack.c.l.b16 %v5965
      %v6113 = vunpack.c.l.b16 %v5966
      %v6114 = vpack.c.b16 %v6099, %v6098
      %v6115 = vpack.c.b16 %v6101, %v6100
      %v6116 = vpack.c.b16 %v6103, %v6102
      %v6117 = vpack.c.b16 %v6105, %v6104
      %v6118 = vpack.c.b16 %v6107, %v6106
      %v6119 = vpack.c.b16 %v6109, %v6108
      %v6120 = vpack.c.b16 %v6111, %v6110
      %v6121 = vpack.c.b16 %v6113, %v6112
      %6130 = vmatprep.subr.bf16.mxu0 0
      %6131 = vmatpush1.bf16.msra.mxu0 %v6114
      %6132 = vmatprep.subr.bf16.mxu0 0
      %6133 = vmatpush1.bf16.msra.mxu0 %v6115
      %6134 = vmatprep.subr.bf16.mxu0 0
      %6135 = vmatpush1.bf16.msra.mxu0 %v6116
      %6136 = vmatprep.subr.bf16.mxu0 0
      %6137 = vmatpush1.bf16.msra.mxu0 %v6117
      %6138 = vmatprep.subr.bf16.mxu0 0
      %6139 = vmatpush1.bf16.msra.mxu0 %v6118
      %6140 = vmatprep.subr.bf16.mxu0 0
      %6141 = vmatpush1.bf16.msra.mxu0 %v6119
      %6142 = vmatprep.subr.bf16.mxu0 0
      %6143 = vmatpush1.bf16.msra.mxu0 %v6120
      %6144 = vmatprep.subr.bf16.mxu0 0
      %6145 = vmatpush1.bf16.msra.mxu0 %v6121
      %6146 = vmatprep.subr.bf16.mxu0 0
      %6147 = vmatpush1.bf16.msra.mxu0 0
      %6148 = vmatprep.subr.bf16.mxu0 0
      %6149 = vmatpush1.bf16.msra.mxu0 0
      %6150 = vmatprep.subr.bf16.mxu0 0
      %6151 = vmatpush1.bf16.msra.mxu0 0
      %6152 = vmatprep.subr.bf16.mxu0 0
      %6153 = vmatpush1.bf16.msra.mxu0 0
      %6154 = vmatprep.subr.bf16.mxu0 0
      %6155 = vmatpush1.bf16.msra.mxu0 0
      %6156 = vmatprep.subr.bf16.mxu0 0
      %6157 = vmatpush1.bf16.msra.mxu0 0
      %6158 = vmatprep.subr.bf16.mxu0 0
      %6159 = vmatpush1.bf16.msra.mxu0 0
      %6160 = vmatprep.subr.bf16.mxu0 0
      %6161 = vmatpush1.bf16.msra.mxu0 0
      %6162 = vmatprep.mubr.bf16.mxu0 0
      %6163 = vmatmul.mubr.bf16.gmra.mrb[0].mxu0 %v5949
      %v6164 = vpop.f32.mrb[0].mxu0
      %v6165 = vadd.f32 %v6068, %v6164
      %v6166 = vpop.f32.mrb[0].mxu0
      %v6167 = vpop.f32.mrb[0].mxu0
      %v6168 = vadd.f32 %v6071, %v6167
      %v6169 = vpop.f32.mrb[0].mxu0
      %6170 = vmatprep.mubr.bf16.mxu0 0
      %6171 = vmatmul.mubr.bf16.gmra.mrb[0].mxu0 %v5950
      %v6172 = vpop.f32.mrb[0].mxu0
      %v6173 = vadd.f32 %v6076, %v6172
      %v6174 = vpop.f32.mrb[0].mxu0
      %v6175 = vpop.f32.mrb[0].mxu0
      %v6176 = vadd.f32 %v6079, %v6175
      %v6177 = vpop.f32.mrb[0].mxu0
      %6178 = vdwg.mxu0
      %v6179 = vld [vmem:[%s11] sm:$0x1]
      %v6181 = vlaneseq
      %v6182 = vshrl.u32 %v6181, 7
      %v6183 = vsub.s32 0, %v6182
      %v6184 = vrot.slane %v6179, %v6183
      %v6186 = vadd.f32 %v6165, %v6184
      %v6187 = vadd.f32 %v6168, %v6184
      %v6188 = vadd.f32 %v6173, %v6184
      %v6189 = vadd.f32 %v6176, %v6184
      %v6190 = vxor.u32 %v6186, 2147483648
      %v6191 = vxor.u32 %v6187, 2147483648
      %v6192 = vxor.u32 %v6188, 2147483648
      %v6193 = vxor.u32 %v6189, 2147483648
      %v6194 = vmul.f32 %v6190, 1.442695
      %v6195 = vpow.pop %v6194
      %v6196 = vmul.f32 %v6191, 1.442695
      %v6197 = vpow.pop %v6196
      %v6198 = vmul.f32 %v6192, 1.442695
      %v6199 = vpow.pop %v6198
      %v6200 = vmul.f32 %v6193, 1.442695
      %v6201 = vpow.pop %v6200
      %v6202 = vadd.f32 %v6195, 1.0
      %v6203 = vadd.f32 %v6197, 1.0
      %v6204 = vadd.f32 %v6199, 1.0
      %v6205 = vadd.f32 %v6201, 1.0
      %v6206 = vrcp.pop %v6202
      %v6207 = vmul.f32 1.0, %v6206
      %v6208 = vrcp.pop %v6203
      %v6209 = vmul.f32 1.0, %v6208
      %v6210 = vrcp.pop %v6204
      %v6211 = vmul.f32 1.0, %v6210
      %v6212 = vrcp.pop %v6205
      %v6213 = vmul.f32 1.0, %v6212
      %v6214 = vmul.f32 %v6186, %v6207
      %v6215 = vmul.f32 %v6187, %v6209
      %v6216 = vmul.f32 %v6188, %v6211
      %v6217 = vmul.f32 %v6189, %v6213
      %v6218 = vpack.c.bf16 %v6215, %v6214
      %v6219 = vpack.c.bf16 %v6217, %v6216
      %v6220 = vld [vmem:[%s12] sm:$0xf]
      %v6221 = vld [vmem:[%s12 + $0x4] sm:$0xf]
      %v6222 = vld [vmem:[%s12 + $0x8] sm:$0xf]
      %v6223 = vld [vmem:[%s12 + $0xc] sm:$0xf]
      %v6224 = vld [vmem:[%s12 + $0x10] sm:$0xf]
      %v6225 = vld [vmem:[%s12 + $0x14] sm:$0xf]
      %v6226 = vld [vmem:[%s12 + $0x18] sm:$0xf]
      %v6227 = vld [vmem:[%s12 + $0x1c] sm:$0xf]
      %v6228 = vld [vmem:[%s12 + $0x20] sm:$0xf]
      %v6229 = vld [vmem:[%s12 + $0x24] sm:$0xf]
      %v6230 = vld [vmem:[%s12 + $0x28] sm:$0xf]
      %v6231 = vld [vmem:[%s12 + $0x2c] sm:$0xf]
      %v6232 = vld [vmem:[%s12 + $0x30] sm:$0xf]
      %v6233 = vld [vmem:[%s12 + $0x34] sm:$0xf]
      %v6234 = vld [vmem:[%s12 + $0x38] sm:$0xf]
      %v6235 = vld [vmem:[%s12 + $0x3c] sm:$0xf]
      %v6252 = vunpack.c.l.b16 %v6220
      %v6253 = vunpack.c.l.b16 %v6221
      %v6254 = vunpack.c.l.b16 %v6222
      %v6255 = vunpack.c.l.b16 %v6223
      %v6256 = vunpack.c.l.b16 %v6224
      %v6257 = vunpack.c.l.b16 %v6225
      %v6258 = vunpack.c.l.b16 %v6226
      %v6259 = vunpack.c.l.b16 %v6227
      %v6260 = vunpack.c.l.b16 %v6228
      %v6261 = vunpack.c.l.b16 %v6229
      %v6262 = vunpack.c.l.b16 %v6230
      %v6263 = vunpack.c.l.b16 %v6231
      %v6264 = vunpack.c.l.b16 %v6232
      %v6265 = vunpack.c.l.b16 %v6233
      %v6266 = vunpack.c.l.b16 %v6234
      %v6267 = vunpack.c.l.b16 %v6235
      %v6268 = vpack.c.b16 %v6253, %v6252
      %v6269 = vpack.c.b16 %v6255, %v6254
      %v6270 = vpack.c.b16 %v6257, %v6256
      %v6271 = vpack.c.b16 %v6259, %v6258
      %v6272 = vpack.c.b16 %v6261, %v6260
      %v6273 = vpack.c.b16 %v6263, %v6262
      %v6274 = vpack.c.b16 %v6265, %v6264
      %v6275 = vpack.c.b16 %v6267, %v6266
      %6284 = vmatprep.subr.bf16.mxu0 0
      %6285 = vmatpush1.bf16.msra.mxu0 %v6268
      %6286 = vmatprep.subr.bf16.mxu0 0
      %6287 = vmatpush1.bf16.msra.mxu0 %v6269
      %6288 = vmatprep.subr.bf16.mxu0 0
      %6289 = vmatpush1.bf16.msra.mxu0 %v6270
      %6290 = vmatprep.subr.bf16.mxu0 0
      %6291 = vmatpush1.bf16.msra.mxu0 %v6271
      %6292 = vmatprep.subr.bf16.mxu0 0
      %6293 = vmatpush1.bf16.msra.mxu0 %v6272
      %6294 = vmatprep.subr.bf16.mxu0 0
      %6295 = vmatpush1.bf16.msra.mxu0 %v6273
      %6296 = vmatprep.subr.bf16.mxu0 0
      %6297 = vmatpush1.bf16.msra.mxu0 %v6274
      %6298 = vmatprep.subr.bf16.mxu0 0
      %6299 = vmatpush1.bf16.msra.mxu0 %v6275
      %6300 = vmatprep.subr.bf16.mxu0 0
      %6301 = vmatpush1.bf16.msra.mxu0 0
      %6302 = vmatprep.subr.bf16.mxu0 0
      %6303 = vmatpush1.bf16.msra.mxu0 0
      %6304 = vmatprep.subr.bf16.mxu0 0
      %6305 = vmatpush1.bf16.msra.mxu0 0
      %6306 = vmatprep.subr.bf16.mxu0 0
      %6307 = vmatpush1.bf16.msra.mxu0 0
      %6308 = vmatprep.subr.bf16.mxu0 0
      %6309 = vmatpush1.bf16.msra.mxu0 0
      %6310 = vmatprep.subr.bf16.mxu0 0
      %6311 = vmatpush1.bf16.msra.mxu0 0
      %6312 = vmatprep.subr.bf16.mxu0 0
      %6313 = vmatpush1.bf16.msra.mxu0 0
      %6314 = vmatprep.subr.bf16.mxu0 0
      %6315 = vmatpush1.bf16.msra.mxu0 0
      %6316 = vmatprep.mubr.bf16.mxu0 0
      %6317 = vmatmul.mubr.bf16.gmra.mrb[0].mxu0 %v6218
      %v6318 = vpop.f32.mrb[0].mxu0
      %v6319 = vadd.f32 0.0, %v6318
      %v6320 = vpop.f32.mrb[0].mxu0
      %v6321 = vpop.f32.mrb[0].mxu0
      %v6322 = vadd.f32 0.0, %v6321
      %v6323 = vpop.f32.mrb[0].mxu0
      %6324 = vmatprep.mubr.bf16.mxu0 0
      %6325 = vmatmul.mubr.bf16.gmra.mrb[0].mxu0 %v6219
      %v6326 = vpop.f32.mrb[0].mxu0
      %v6327 = vadd.f32 0.0, %v6326
      %v6328 = vpop.f32.mrb[0].mxu0
      %v6329 = vpop.f32.mrb[0].mxu0
      %v6330 = vadd.f32 0.0, %v6329
      %v6331 = vpop.f32.mrb[0].mxu0
      %6332 = vdwg.mxu0
      %v6333 = vadd.f32 %v5945, %v6319
      %v6334 = vadd.f32 %v5946, %v6322
      %v6335 = vadd.f32 %v5947, %v6327
      %v6336 = vadd.f32 %v5948, %v6330
      %v6337 = vld [vmem:[%s13] sm:$0x1]
      %v6339 = vlaneseq
      %v6340 = vshrl.u32 %v6339, 7
      %v6341 = vsub.s32 0, %v6340
      %v6342 = vrot.slane %v6337, %v6341
      %v6344 = vadd.f32 %v6333, %v6342
      %v6345 = vadd.f32 %v6334, %v6342
      %v6346 = vadd.f32 %v6335, %v6342
      %v6347 = vadd.f32 %v6336, %v6342
      %6348 = vst [vmem:[#allocation7] sm:$0xff] %v6344
      %6349 = vst [vmem:[#allocation7 + $0x8] sm:$0xff] %v6345
      %6350 = vst [vmem:[#allocation7 + $0x10] sm:$0xff] %v6346
      %6351 = vst [vmem:[#allocation7 + $0x18] sm:$0xff] %v6347
    $region65: #{tpu_custom_call.1} parent=1 // pred_fallthru
      _
    // Predicated region
    $region66: #{tpu_custom_call.1} parent=1 // pred_check
      _
    $region67: #{tpu_custom_call.1} parent=1 // pred_check_branch
      %6353 = sbr.rel (0) target = $region69
    $region68: #{tpu_custom_call.1} parent=1 // pred_region
      %s6355 = ssub.s32 16384, 16384
      %6356 = vsyncadd [#allocation6], %s6355
      %s6357 = sshll.u32 [#allocation5], 4
      %s6358 = int_to_ptr.vmem [resolvable:$true] %s6357
      %6363 = dma.vmem_to_hbm [thread:$0]  %s6358, 16384, %s14, [#allocation6], 128, 128, 8
    $region69: #{tpu_custom_call.1} parent=1 // pred_fallthru
      _
    // Predicated region
    $region70: #{tpu_custom_call.1} parent=1 // pred_check
      _
    $region71: #{tpu_custom_call.1} parent=1 // pred_check_branch
      %6365 = sbr.rel (0) target = $region73
    $region72: #{tpu_custom_call.1} parent=1 // pred_region
      %s6367 = ssub.s32 512, 512
      %6368 = vsyncadd [#allocation8], %s6367
      %s6369 = sshll.u32 [#allocation7], 4
      %s6370 = int_to_ptr.vmem [resolvable:$true] %s6369
      %6375 = dma.vmem_to_hbm [thread:$0]  %s6370, 512, %s15, [#allocation8], 128, 128, 8
    $region73: #{tpu_custom_call.1} parent=1 // pred_fallthru
      _
    // Predicated region
    $region74: #{tpu_custom_call.1} parent=1 // pred_check
      _
    $region75: #{tpu_custom_call.1} parent=1 // pred_check_branch
      %6377 = sbr.rel (0) target = $region77
    $region76: #{tpu_custom_call.1} parent=1 // pred_region
      %6378 = dma.done [#allocation6], 16384
    $region77: #{tpu_custom_call.1} parent=1 // pred_fallthru
      _
    // Predicated region
    $region78: #{tpu_custom_call.1} parent=1 // pred_check
      _
    $region79: #{tpu_custom_call.1} parent=1 // pred_check_branch
      %6380 = sbr.rel (0) target = $region81
    $region80: #{tpu_custom_call.1} parent=1 // pred_region
      %6381 = dma.done [#allocation8], 512
    $region81: #{tpu_custom_call.1} parent=1 // pred_fallthru
      _
    %6382 = vsyncpa [#allocation6], 1
    %6383 = vsyncpa [#allocation8], 1

</llo_original>
